<compile_context>
chip_gen: v7x
topology: tpu7x:2x2x1
jax: 0.10.0
libtpu: 0.0.40
codegen_flags: <defaults>
</compile_context>

<pallas_src>
import functools

import jax
import jax.numpy as jnp
from jax.experimental import pallas as pl
from jax.experimental.pallas import tpu as pltpu


# --------------------------------------------------------------------------- #
# Kernel
# --------------------------------------------------------------------------- #
def selfatt_circcnn_kernel(
    x_ref,                   # (TB, L, 2)        f32  -- batch-streamed raw input
    w1_ref, b1_ref,          # (K1, 2,  C1) bf16, (1, C1) f32
    w2_ref, b2_ref,          # (K2, C1, C2) bf16, (1, C2) f32
    w3_ref, b3_ref,          # (K3, C2, C3) bf16, (1, C3) f32
    wqkv_ref, bqkv_ref,      # (C3, 2*dqk+C3) bf16, (1, 2*dqk+C3) f32 (fused q|k|v)
    wl_ref,                  # (1, C3) f32       -- classifier weight as a row
    gamma_ref, bl_ref,       # SMEM (1,) f32 scalars
    out_ref,                 # (TB, 1) f32
    *,
    conv_ksizes,             # (K1, K2, K3)
):
    TB, L, _ = x_ref.shape
    C3 = wqkv_ref.shape[0]
    dqk = (wqkv_ref.shape[1] - C3) // 2
    n = TB * L
    mm_dtype = w1_ref.dtype  # bf16 operands, f32 accumulation

    def circular_conv_relu(h, w_ref, b_ref, ksize):
        """Circular 'same' conv + ReLU via roll-and-accumulate.

        h: (TB, L, Cin) f32.  For each tap k the length axis is circularly
        rotated with pltpu.roll (XLU) and fed through one MXU matmul against
        the (Cin, Cout) tap weight; all taps accumulate into one f32 buffer, so
        no im2col slices / lane concatenations are ever materialized.
        """
        cin = h.shape[-1]
        cout = w_ref.shape[-1]
        pad = ksize // 2
        acc = jnp.zeros((n, cout), jnp.float32) + b_ref[...]     # bias broadcast (hoisted)
        for k in range(ksize):
            shift = (pad - k) % L          # rolled[:, l, :] == h[:, (l + k - pad) % L, :]
            hk = pltpu.roll(h, shift, 1) if shift else h
            acc = acc + jnp.dot(hk.reshape(n, cin).astype(mm_dtype), w_ref[k],
                                preferred_element_type=jnp.float32)
        # NOTE: assumes CircularConv1dSame bundles a ReLU activation.
        return jnp.maximum(acc, 0.0).reshape(TB, L, cout)

    k1, k2, k3 = conv_ksizes
    h = circular_conv_relu(x_ref[...], w1_ref, b1_ref, k1)       # (TB, L, C1)
    h = circular_conv_relu(h, w2_ref, b2_ref, k2)                # (TB, L, C2)
    h = circular_conv_relu(h, w3_ref, b3_ref, k3)                # (TB, L, C3)

    # ---- SAGAN-style self attention (fused q|k|v projection, sliced) ----
    qkv = jnp.dot(h.reshape(n, C3).astype(mm_dtype), wqkv_ref[...],
                  preferred_element_type=jnp.float32) + bqkv_ref[...]   # (n, 2*dqk+C3)
    q = qkv[:, :dqk].reshape(TB, L, dqk)
    k = qkv[:, dqk:2 * dqk].reshape(TB, L, dqk)
    v = qkv[:, 2 * dqk:].reshape(TB, L, C3)

    energy = jnp.einsum("bld,bmd->blm", q.astype(mm_dtype), k.astype(mm_dtype),
                        preferred_element_type=jnp.float32)             # (TB, L, L)
    m = jnp.max(energy, axis=-1, keepdims=True)
    e = jnp.exp(energy - m)
    attn = e * pl.reciprocal(jnp.sum(e, axis=-1, keepdims=True), approx=True)
    att_out = jnp.einsum("blm,bmc->blc",
                         attn.astype(mm_dtype), v.astype(mm_dtype),
                         preferred_element_type=jnp.float32)             # (TB, L, C3)
    y = gamma_ref[0] * att_out + h

    # ---- classifier: mean pool -> (C3 -> 1) linear (VPU mul + lane reduce) -> sigmoid ----
    pooled = jnp.sum(y, axis=1) * jnp.float32(1.0 / L)                   # (TB, C3)
    logits = jnp.sum(pooled * wl_ref[...], axis=-1, keepdims=True) + bl_ref[0]
    out_ref[...] = jax.nn.sigmoid(logits)                                # (TB, 1)


# --------------------------------------------------------------------------- #
# Generation-aware tiling
# --------------------------------------------------------------------------- #
def _tpu_generation_plan():
    """Returns (vmem_limit_bytes, tile_budget_bytes, min_parallel_grid)."""
    try:
        vmem_cap = int(pltpu.get_tpu_info().vmem_capacity_bytes)
    except Exception:
        vmem_cap = 128 << 20
    kind = ""
    try:
        kind = jax.devices()[0].device_kind.lower()
    except Exception:
        pass
    # Chips whose TensorCores share the "parallel" grid axis (need >= 2 steps).
    multi_core = any(tag in kind for tag in ("v7", "tpu7", "v4", "v5p"))
    vmem_limit = min((vmem_cap * 3) // 4, 96 << 20)   # compiler headroom
    tile_budget = (vmem_limit * 2) // 3               # double-buffer / temporaries headroom
    return vmem_limit, tile_budget, (2 if multi_core else 1)


def _pick_batch_tile(B, L, cin, hidden, dqk, *, tile_budget_bytes, min_grid=1):
    """Largest batch tile TB such that:
      * TB divides B,
      * the per-tile f32 live set (conv activations, qkv, dense LxL scores,
        double-buffered input block) fits the VMEM tile budget,
      * TB == B or TB % 8 == 0 (only needed by the (TB, 1) output block), and
      * the grid length B // TB covers min_grid (multi-TensorCore chips) when
        possible — larger TB also maximizes MXU row fill (n = TB*L >= 256).
    """
    c1, c2, c3 = hidden
    cmax = max(c1, c2, c3)
    per_row = 4 * L * (
        2 * cin                 # double-buffered streamed input block
        + (c1 + c2 + c3)        # conv activations (f32)
        + 2 * cmax              # rolled view + bf16 matmul operand copies
        + (2 * dqk + c3)        # fused q|k|v
        + 2 * L                 # energy + exp(energy) (dense attention path)
        + 3 * c3                # att_out, y, residual
    )
    cap = max(1, tile_budget_bytes // per_row)
    divisors = [d for d in range(1, B + 1) if B % d == 0]
    aligned = [d for d in divisors if d == B or d % 8 == 0]
    fitting = [d for d in aligned if d <= cap]
    if min_grid > 1 and fitting:
        even = [d for d in fitting if (B // d) % min_grid == 0]
        if even:
            return max(even)
        multi = [d for d in fitting if B // d >= min_grid]
        if multi:
            return max(multi)
    if fitting:
        return max(fitting)
    return min(aligned)   # smallest legal tile; budget estimate was conservative


# --------------------------------------------------------------------------- #
# Parameters + wrapper
# --------------------------------------------------------------------------- #
def init_params(key, hidden=(32, 64, 32), ksizes=(7, 5, 3)):
    """Deterministic synthetic parameters (shapes follow the module __init__)."""
    c_in = 2
    C1, C2, C3 = hidden
    K1, K2, K3 = ksizes
    keys = jax.random.split(key, 16)

    def rnd(k, shape, scale):
        return jax.random.normal(k, shape, jnp.float32) * scale

    params = dict(
        w1=rnd(keys[0], (K1, c_in, C1), 0.3), b1=rnd(keys[1], (1, C1), 0.05),
        w2=rnd(keys[2], (K2, C1, C2), 0.1),   b2=rnd(keys[3], (1, C2), 0.05),
        w3=rnd(keys[4], (K3, C2, C3), 0.1),   b3=rnd(keys[5], (1, C3), 0.05),
        wq=rnd(keys[6], (C3, C3 // 8), 0.1),  bq=rnd(keys[7], (1, C3 // 8), 0.05),
        wk=rnd(keys[8], (C3, C3 // 8), 0.1),  bk=rnd(keys[9], (1, C3 // 8), 0.05),
        wv=rnd(keys[10], (C3, C3), 0.1),      bv=rnd(keys[11], (1, C3), 0.05),
        # torch inits gamma to 0; use a nonzero value so the attention path is exercised.
        gamma=jnp.array([0.5], jnp.float32),
        wl=rnd(keys[12], (C3, 1), 0.1),
        bl=rnd(keys[13], (1,), 0.05),
    )
    return params, ksizes


def selfatt_circcnn_forward(x4, params, ksizes, *, matmul_dtype=jnp.bfloat16):
    """x4: (B, 2, 1, L) input; torch.flatten(x, 1, 2) -> (B, 2, L) conv input."""
    B = x4.shape[0]
    x = x4.reshape(B, 2, -1).astype(jnp.float32)     # flatten(1, 2) + .to(float)
    x = jnp.transpose(x, (0, 2, 1))                  # channels-last (B, L, 2)
    L = x.shape[1]
    k1, k2, k3 = ksizes

    # Matmul operands in bf16; biases / elementwise params kept f32.
    w1 = params["w1"].astype(matmul_dtype)           # (K1, 2,  C1)
    w2 = params["w2"].astype(matmul_dtype)           # (K2, C1, C2)
    w3 = params["w3"].astype(matmul_dtype)           # (K3, C2, C3)
    b1 = params["b1"].astype(jnp.float32)
    b2 = params["b2"].astype(jnp.float32)
    b3 = params["b3"].astype(jnp.float32)
    C1, C2, C3 = w1.shape[-1], w2.shape[-1], w3.shape[-1]
    dqk = params["wq"].shape[1]

    wqkv = jnp.concatenate([params["wq"], params["wk"], params["wv"]],
                           axis=1).astype(matmul_dtype)          # (C3, 2*dqk+C3)
    bqkv = jnp.concatenate([params["bq"], params["bk"], params["bv"]],
                           axis=1).astype(jnp.float32)
    wl = params["wl"].reshape(1, C3).astype(jnp.float32)         # row vector
    gamma = params["gamma"].astype(jnp.float32)                  # SMEM scalar
    bl = params["bl"].astype(jnp.float32)                        # SMEM scalar

    vmem_limit, tile_budget, min_grid = _tpu_generation_plan()
    TB = _pick_batch_tile(B, L, 2, (C1, C2, C3), dqk,
                          tile_budget_bytes=tile_budget, min_grid=min_grid)
    grid = (B // TB,)

    def resident(arr):
        # Full-array block + constant index_map -> stays VMEM-resident across
        # every batch grid step.  (pipeline_mode=pl.Buffered(1) would drop the
        # second buffer; skipped — the resident weights total < 100 KB here.)
        return pl.BlockSpec(arr.shape, lambda *_: (0,) * arr.ndim)

    smem_spec = pl.BlockSpec(memory_space=pltpu.MemorySpace.SMEM)

    out = pl.pallas_call(
        functools.partial(selfatt_circcnn_kernel, conv_ksizes=(k1, k2, k3)),
        out_shape=jax.ShapeDtypeStruct((B, 1), jnp.float32),
        grid=grid,
        in_specs=[
            pl.BlockSpec((TB, L, 2), lambda i: (i, 0, 0)),   # batch-streamed input
            resident(w1), resident(b1),
            resident(w2), resident(b2),
            resident(w3), resident(b3),
            resident(wqkv), resident(bqkv),
            resident(wl),
            smem_spec,   # gamma
            smem_spec,   # bl
        ],
        # (TB, 1) blocks keep the output spec (8, 128)-legal for any TB that is
        # 8-aligned or == B; a lane-dense (1, TB) slab would need TB == B.
        out_specs=pl.BlockSpec((TB, 1), lambda i: (i, 0)),
        compiler_params=pltpu.CompilerParams(
            dimension_semantics=("parallel",),     # shard batch tiles across TCs
            vmem_limit_bytes=int(vmem_limit),
        ),
    )(x, w1, b1, w2, b2, w3, b3, wqkv, bqkv, wl, gamma, bl)

    return out.reshape(-1)  # torch.flatten -> (B,)


# --------------------------------------------------------------------------- #
# Pure-JAX reference (f32) for the self-check
# --------------------------------------------------------------------------- #
def reference_forward(x4, params, ksizes):
    B = x4.shape[0]
    x = jnp.transpose(x4.reshape(B, 2, -1).astype(jnp.float32), (0, 2, 1))

    def circ_conv_relu(h, w, b, ksize):
        pad = ksize // 2
        acc = jnp.zeros(h.shape[:2] + (w.shape[-1],), jnp.float32) + b
        for k in range(ksize):
            acc = acc + jnp.einsum("blc,cd->bld", jnp.roll(h, pad - k, axis=1), w[k])
        return jnp.maximum(acc, 0.0)

    h = circ_conv_relu(x, params["w1"], params["b1"], ksizes[0])
    h = circ_conv_relu(h, params["w2"], params["b2"], ksizes[1])
    h = circ_conv_relu(h, params["w3"], params["b3"], ksizes[2])

    q = jnp.einsum("blc,cd->bld", h, params["wq"]) + params["bq"]
    kk = jnp.einsum("blc,cd->bld", h, params["wk"]) + params["bk"]
    v = jnp.einsum("blc,cd->bld", h, params["wv"]) + params["bv"]
    attn = jax.nn.softmax(jnp.einsum("bld,bmd->blm", q, kk), axis=-1)
    y = params["gamma"][0] * jnp.einsum("blm,bmc->blc", attn, v) + h

    pooled = jnp.mean(y, axis=1)
    logits = pooled @ params["wl"] + params["bl"]
    return jax.nn.sigmoid(logits).reshape(-1)


if __name__ == "__main__":
    key = jax.random.PRNGKey(0)
    kx, kp = jax.random.split(key)

    B, L = 16, 16
    # Input whose flatten(start_dim=1, end_dim=2) yields the 2-channel conv input.
    x4 = jax.random.normal(kx, (B, 2, 1, L), jnp.float32)
    params, ksizes = init_params(kp, hidden=(32, 64, 32), ksizes=(7, 5, 3))

    out = selfatt_circcnn_forward(x4, params, ksizes)
    out = jax.block_until_ready(out)

    assert out.shape == (B,), out.shape
    assert bool(jnp.all(jnp.isfinite(out)))
    assert bool(jnp.all((out >= 0.0) & (out <= 1.0)))   # sigmoid output

    ref = jax.block_until_ready(reference_forward(x4, params, ksizes))
    err = float(jnp.max(jnp.abs(out - ref)))
    # bf16 matmul operands + approx softmax reciprocal -> loose tolerance.
    assert err < 5e-2, f"max |kernel - reference| = {err}"

    print("KERNEL_OK")
</pallas_src>

<mosaic_0001>
module attributes {stable_mosaic.version = 11 : i64} {
  func.func @selfatt_circcnn_kernel(%arg0: i32, %arg1: memref<16x16x2xf32, #tpu.memory_space<vmem>>, %arg2: memref<7x2x32xbf16, #tpu.memory_space<vmem>>, %arg3: memref<1x32xf32, #tpu.memory_space<vmem>>, %arg4: memref<5x32x64xbf16, #tpu.memory_space<vmem>>, %arg5: memref<1x64xf32, #tpu.memory_space<vmem>>, %arg6: memref<3x64x32xbf16, #tpu.memory_space<vmem>>, %arg7: memref<1x32xf32, #tpu.memory_space<vmem>>, %arg8: memref<32x40xbf16, #tpu.memory_space<vmem>>, %arg9: memref<1x40xf32, #tpu.memory_space<vmem>>, %arg10: memref<1x32xf32, #tpu.memory_space<vmem>>, %arg11: memref<1xf32, #tpu.memory_space<smem>>, %arg12: memref<1xf32, #tpu.memory_space<smem>>, %arg13: memref<16x1xf32, #tpu.memory_space<vmem>>) attributes {dimension_semantics = [#tpu.dimension_semantics<parallel>], iteration_bounds = array<i64: 1>, scalar_prefetch = 0 : i64, scratch_operands = 0 : i64, tpu.core_type = #tpu.core_type<tc>, window_params = [{transform_indices = @transform_0, window_bounds = array<i64: 16, 16, 2>}, {pipeline_mode = #tpu.pipeline_mode<synchronous>, transform_indices = @transform_1, window_bounds = array<i64: 7, 2, 32>}, {pipeline_mode = #tpu.pipeline_mode<synchronous>, transform_indices = @transform_2, window_bounds = array<i64: 1, 32>}, {pipeline_mode = #tpu.pipeline_mode<synchronous>, transform_indices = @transform_3, window_bounds = array<i64: 5, 32, 64>}, {pipeline_mode = #tpu.pipeline_mode<synchronous>, transform_indices = @transform_4, window_bounds = array<i64: 1, 64>}, {pipeline_mode = #tpu.pipeline_mode<synchronous>, transform_indices = @transform_5, window_bounds = array<i64: 3, 64, 32>}, {pipeline_mode = #tpu.pipeline_mode<synchronous>, transform_indices = @transform_6, window_bounds = array<i64: 1, 32>}, {pipeline_mode = #tpu.pipeline_mode<synchronous>, transform_indices = @transform_7, window_bounds = array<i64: 32, 40>}, {pipeline_mode = #tpu.pipeline_mode<synchronous>, transform_indices = @transform_8, window_bounds = array<i64: 1, 40>}, {pipeline_mode = #tpu.pipeline_mode<synchronous>, transform_indices = @transform_9, window_bounds = array<i64: 1, 32>}, {transform_indices = @transform_10, window_bounds = array<i64: 1>}, {transform_indices = @transform_11, window_bounds = array<i64: 1>}, {transform_indices = @transform_12, window_bounds = array<i64: 16, 1>}]} {
    %c0 = arith.constant 0 : index
    %c0_0 = arith.constant 0 : index
    %c0_1 = arith.constant 0 : index
    %0 = vector.load %arg1[%c0, %c0_0, %c0_1] : memref<16x16x2xf32, #tpu.memory_space<vmem>>, vector<16x16x2xf32>
    %cst = arith.constant 0.000000e+00 : f32
    %1 = vector.broadcast %cst : f32 to vector<256x32xf32>
    %c0_2 = arith.constant 0 : index
    %c0_3 = arith.constant 0 : index
    %2 = vector.load %arg3[%c0_2, %c0_3] : memref<1x32xf32, #tpu.memory_space<vmem>>, vector<1x32xf32>
    %3 = vector.broadcast %2 : vector<1x32xf32> to vector<256x32xf32>
    %4 = arith.addf %1, %3 : vector<256x32xf32>
    %c3_i32 = arith.constant 3 : i32
    %5 = tpu.dynamic_rotate %0 by %c3_i32 dim 1 : vector<16x16x2xf32>, i32 -> vector<16x16x2xf32>
    %6 = vector.shape_cast %5 : vector<16x16x2xf32> to vector<256x2xf32>
    %7 = arith.truncf %6 : vector<256x2xf32> to vector<256x2xbf16>
    %c0_4 = arith.constant 0 : index
    %c0_5 = arith.constant 0 : index
    %c0_6 = arith.constant 0 : index
    %8 = vector.load %arg2[%c0_4, %c0_5, %c0_6] : memref<7x2x32xbf16, #tpu.memory_space<vmem>>, vector<1x2x32xbf16>
    %9 = vector.shape_cast %8 : vector<1x2x32xbf16> to vector<2x32xbf16>
    %cst_7 = arith.constant dense<0.000000e+00> : vector<256x32xf32>
    %10 = tpu.matmul %7, %9, %cst_7 {dimension_numbers = #tpu.dot_dimension_numbers<[1], [0], [0], [1], [0, 0, 1, 1], [], []>} : vector<256x2xbf16>, vector<2x32xbf16>, vector<256x32xf32> -> vector<256x32xf32>
    %11 = arith.addf %4, %10 : vector<256x32xf32>
    %c2_i32 = arith.constant 2 : i32
    %12 = tpu.dynamic_rotate %0 by %c2_i32 dim 1 : vector<16x16x2xf32>, i32 -> vector<16x16x2xf32>
    %13 = vector.shape_cast %12 : vector<16x16x2xf32> to vector<256x2xf32>
    %14 = arith.truncf %13 : vector<256x2xf32> to vector<256x2xbf16>
    %c1 = arith.constant 1 : index
    %c0_8 = arith.constant 0 : index
    %c0_9 = arith.constant 0 : index
    %15 = vector.load %arg2[%c1, %c0_8, %c0_9] : memref<7x2x32xbf16, #tpu.memory_space<vmem>>, vector<1x2x32xbf16>
    %16 = vector.shape_cast %15 : vector<1x2x32xbf16> to vector<2x32xbf16>
    %cst_10 = arith.constant dense<0.000000e+00> : vector<256x32xf32>
    %17 = tpu.matmul %14, %16, %cst_10 {dimension_numbers = #tpu.dot_dimension_numbers<[1], [0], [0], [1], [0, 0, 1, 1], [], []>} : vector<256x2xbf16>, vector<2x32xbf16>, vector<256x32xf32> -> vector<256x32xf32>
    %18 = arith.addf %11, %17 : vector<256x32xf32>
    %c1_i32 = arith.constant 1 : i32
    %19 = tpu.dynamic_rotate %0 by %c1_i32 dim 1 : vector<16x16x2xf32>, i32 -> vector<16x16x2xf32>
    %20 = vector.shape_cast %19 : vector<16x16x2xf32> to vector<256x2xf32>
    %21 = arith.truncf %20 : vector<256x2xf32> to vector<256x2xbf16>
    %c2 = arith.constant 2 : index
    %c0_11 = arith.constant 0 : index
    %c0_12 = arith.constant 0 : index
    %22 = vector.load %arg2[%c2, %c0_11, %c0_12] : memref<7x2x32xbf16, #tpu.memory_space<vmem>>, vector<1x2x32xbf16>
    %23 = vector.shape_cast %22 : vector<1x2x32xbf16> to vector<2x32xbf16>
    %cst_13 = arith.constant dense<0.000000e+00> : vector<256x32xf32>
    %24 = tpu.matmul %21, %23, %cst_13 {dimension_numbers = #tpu.dot_dimension_numbers<[1], [0], [0], [1], [0, 0, 1, 1], [], []>} : vector<256x2xbf16>, vector<2x32xbf16>, vector<256x32xf32> -> vector<256x32xf32>
    %25 = arith.addf %18, %24 : vector<256x32xf32>
    %26 = vector.shape_cast %0 : vector<16x16x2xf32> to vector<256x2xf32>
    %27 = arith.truncf %26 : vector<256x2xf32> to vector<256x2xbf16>
    %c3 = arith.constant 3 : index
    %c0_14 = arith.constant 0 : index
    %c0_15 = arith.constant 0 : index
    %28 = vector.load %arg2[%c3, %c0_14, %c0_15] : memref<7x2x32xbf16, #tpu.memory_space<vmem>>, vector<1x2x32xbf16>
    %29 = vector.shape_cast %28 : vector<1x2x32xbf16> to vector<2x32xbf16>
    %cst_16 = arith.constant dense<0.000000e+00> : vector<256x32xf32>
    %30 = tpu.matmul %27, %29, %cst_16 {dimension_numbers = #tpu.dot_dimension_numbers<[1], [0], [0], [1], [0, 0, 1, 1], [], []>} : vector<256x2xbf16>, vector<2x32xbf16>, vector<256x32xf32> -> vector<256x32xf32>
    %31 = arith.addf %25, %30 : vector<256x32xf32>
    %c15_i32 = arith.constant 15 : i32
    %32 = tpu.dynamic_rotate %0 by %c15_i32 dim 1 : vector<16x16x2xf32>, i32 -> vector<16x16x2xf32>
    %33 = vector.shape_cast %32 : vector<16x16x2xf32> to vector<256x2xf32>
    %34 = arith.truncf %33 : vector<256x2xf32> to vector<256x2xbf16>
    %c4 = arith.constant 4 : index
    %c0_17 = arith.constant 0 : index
    %c0_18 = arith.constant 0 : index
    %35 = vector.load %arg2[%c4, %c0_17, %c0_18] : memref<7x2x32xbf16, #tpu.memory_space<vmem>>, vector<1x2x32xbf16>
    %36 = vector.shape_cast %35 : vector<1x2x32xbf16> to vector<2x32xbf16>
    %cst_19 = arith.constant dense<0.000000e+00> : vector<256x32xf32>
    %37 = tpu.matmul %34, %36, %cst_19 {dimension_numbers = #tpu.dot_dimension_numbers<[1], [0], [0], [1], [0, 0, 1, 1], [], []>} : vector<256x2xbf16>, vector<2x32xbf16>, vector<256x32xf32> -> vector<256x32xf32>
    %38 = arith.addf %31, %37 : vector<256x32xf32>
    %c14_i32 = arith.constant 14 : i32
    %39 = tpu.dynamic_rotate %0 by %c14_i32 dim 1 : vector<16x16x2xf32>, i32 -> vector<16x16x2xf32>
    %40 = vector.shape_cast %39 : vector<16x16x2xf32> to vector<256x2xf32>
    %41 = arith.truncf %40 : vector<256x2xf32> to vector<256x2xbf16>
    %c5 = arith.constant 5 : index
    %c0_20 = arith.constant 0 : index
    %c0_21 = arith.constant 0 : index
    %42 = vector.load %arg2[%c5, %c0_20, %c0_21] : memref<7x2x32xbf16, #tpu.memory_space<vmem>>, vector<1x2x32xbf16>
    %43 = vector.shape_cast %42 : vector<1x2x32xbf16> to vector<2x32xbf16>
    %cst_22 = arith.constant dense<0.000000e+00> : vector<256x32xf32>
    %44 = tpu.matmul %41, %43, %cst_22 {dimension_numbers = #tpu.dot_dimension_numbers<[1], [0], [0], [1], [0, 0, 1, 1], [], []>} : vector<256x2xbf16>, vector<2x32xbf16>, vector<256x32xf32> -> vector<256x32xf32>
    %45 = arith.addf %38, %44 : vector<256x32xf32>
    %c13_i32 = arith.constant 13 : i32
    %46 = tpu.dynamic_rotate %0 by %c13_i32 dim 1 : vector<16x16x2xf32>, i32 -> vector<16x16x2xf32>
    %47 = vector.shape_cast %46 : vector<16x16x2xf32> to vector<256x2xf32>
    %48 = arith.truncf %47 : vector<256x2xf32> to vector<256x2xbf16>
    %c6 = arith.constant 6 : index
    %c0_23 = arith.constant 0 : index
    %c0_24 = arith.constant 0 : index
    %49 = vector.load %arg2[%c6, %c0_23, %c0_24] : memref<7x2x32xbf16, #tpu.memory_space<vmem>>, vector<1x2x32xbf16>
    %50 = vector.shape_cast %49 : vector<1x2x32xbf16> to vector<2x32xbf16>
    %cst_25 = arith.constant dense<0.000000e+00> : vector<256x32xf32>
    %51 = tpu.matmul %48, %50, %cst_25 {dimension_numbers = #tpu.dot_dimension_numbers<[1], [0], [0], [1], [0, 0, 1, 1], [], []>} : vector<256x2xbf16>, vector<2x32xbf16>, vector<256x32xf32> -> vector<256x32xf32>
    %52 = arith.addf %45, %51 : vector<256x32xf32>
    %cst_26 = arith.constant 0.000000e+00 : f32
    %53 = vector.broadcast %cst_26 : f32 to vector<256x32xf32>
    %54 = arith.maximumf %52, %53 : vector<256x32xf32>
    %55 = vector.shape_cast %54 : vector<256x32xf32> to vector<16x16x32xf32>
    %cst_27 = arith.constant 0.000000e+00 : f32
    %56 = vector.broadcast %cst_27 : f32 to vector<256x64xf32>
    %c0_28 = arith.constant 0 : index
    %c0_29 = arith.constant 0 : index
    %57 = vector.load %arg5[%c0_28, %c0_29] : memref<1x64xf32, #tpu.memory_space<vmem>>, vector<1x64xf32>
    %58 = vector.broadcast %57 : vector<1x64xf32> to vector<256x64xf32>
    %59 = arith.addf %56, %58 : vector<256x64xf32>
    %c2_i32_30 = arith.constant 2 : i32
    %60 = tpu.dynamic_rotate %55 by %c2_i32_30 dim 1 : vector<16x16x32xf32>, i32 -> vector<16x16x32xf32>
    %61 = vector.shape_cast %60 : vector<16x16x32xf32> to vector<256x32xf32>
    %62 = arith.truncf %61 : vector<256x32xf32> to vector<256x32xbf16>
    %c0_31 = arith.constant 0 : index
    %c0_32 = arith.constant 0 : index
    %c0_33 = arith.constant 0 : index
    %63 = vector.load %arg4[%c0_31, %c0_32, %c0_33] : memref<5x32x64xbf16, #tpu.memory_space<vmem>>, vector<1x32x64xbf16>
    %64 = vector.shape_cast %63 : vector<1x32x64xbf16> to vector<32x64xbf16>
    %cst_34 = arith.constant dense<0.000000e+00> : vector<256x64xf32>
    %65 = tpu.matmul %62, %64, %cst_34 {dimension_numbers = #tpu.dot_dimension_numbers<[1], [0], [0], [1], [0, 0, 1, 1], [], []>} : vector<256x32xbf16>, vector<32x64xbf16>, vector<256x64xf32> -> vector<256x64xf32>
    %66 = arith.addf %59, %65 : vector<256x64xf32>
    %c1_i32_35 = arith.constant 1 : i32
    %67 = tpu.dynamic_rotate %55 by %c1_i32_35 dim 1 : vector<16x16x32xf32>, i32 -> vector<16x16x32xf32>
    %68 = vector.shape_cast %67 : vector<16x16x32xf32> to vector<256x32xf32>
    %69 = arith.truncf %68 : vector<256x32xf32> to vector<256x32xbf16>
    %c1_36 = arith.constant 1 : index
    %c0_37 = arith.constant 0 : index
    %c0_38 = arith.constant 0 : index
    %70 = vector.load %arg4[%c1_36, %c0_37, %c0_38] : memref<5x32x64xbf16, #tpu.memory_space<vmem>>, vector<1x32x64xbf16>
    %71 = vector.shape_cast %70 : vector<1x32x64xbf16> to vector<32x64xbf16>
    %cst_39 = arith.constant dense<0.000000e+00> : vector<256x64xf32>
    %72 = tpu.matmul %69, %71, %cst_39 {dimension_numbers = #tpu.dot_dimension_numbers<[1], [0], [0], [1], [0, 0, 1, 1], [], []>} : vector<256x32xbf16>, vector<32x64xbf16>, vector<256x64xf32> -> vector<256x64xf32>
    %73 = arith.addf %66, %72 : vector<256x64xf32>
    %74 = vector.shape_cast %55 : vector<16x16x32xf32> to vector<256x32xf32>
    %75 = arith.truncf %74 : vector<256x32xf32> to vector<256x32xbf16>
    %c2_40 = arith.constant 2 : index
    %c0_41 = arith.constant 0 : index
    %c0_42 = arith.constant 0 : index
    %76 = vector.load %arg4[%c2_40, %c0_41, %c0_42] : memref<5x32x64xbf16, #tpu.memory_space<vmem>>, vector<1x32x64xbf16>
    %77 = vector.shape_cast %76 : vector<1x32x64xbf16> to vector<32x64xbf16>
    %cst_43 = arith.constant dense<0.000000e+00> : vector<256x64xf32>
    %78 = tpu.matmul %75, %77, %cst_43 {dimension_numbers = #tpu.dot_dimension_numbers<[1], [0], [0], [1], [0, 0, 1, 1], [], []>} : vector<256x32xbf16>, vector<32x64xbf16>, vector<256x64xf32> -> vector<256x64xf32>
    %79 = arith.addf %73, %78 : vector<256x64xf32>
    %c15_i32_44 = arith.constant 15 : i32
    %80 = tpu.dynamic_rotate %55 by %c15_i32_44 dim 1 : vector<16x16x32xf32>, i32 -> vector<16x16x32xf32>
    %81 = vector.shape_cast %80 : vector<16x16x32xf32> to vector<256x32xf32>
    %82 = arith.truncf %81 : vector<256x32xf32> to vector<256x32xbf16>
    %c3_45 = arith.constant 3 : index
    %c0_46 = arith.constant 0 : index
    %c0_47 = arith.constant 0 : index
    %83 = vector.load %arg4[%c3_45, %c0_46, %c0_47] : memref<5x32x64xbf16, #tpu.memory_space<vmem>>, vector<1x32x64xbf16>
    %84 = vector.shape_cast %83 : vector<1x32x64xbf16> to vector<32x64xbf16>
    %cst_48 = arith.constant dense<0.000000e+00> : vector<256x64xf32>
    %85 = tpu.matmul %82, %84, %cst_48 {dimension_numbers = #tpu.dot_dimension_numbers<[1], [0], [0], [1], [0, 0, 1, 1], [], []>} : vector<256x32xbf16>, vector<32x64xbf16>, vector<256x64xf32> -> vector<256x64xf32>
    %86 = arith.addf %79, %85 : vector<256x64xf32>
    %c14_i32_49 = arith.constant 14 : i32
    %87 = tpu.dynamic_rotate %55 by %c14_i32_49 dim 1 : vector<16x16x32xf32>, i32 -> vector<16x16x32xf32>
    %88 = vector.shape_cast %87 : vector<16x16x32xf32> to vector<256x32xf32>
    %89 = arith.truncf %88 : vector<256x32xf32> to vector<256x32xbf16>
    %c4_50 = arith.constant 4 : index
    %c0_51 = arith.constant 0 : index
    %c0_52 = arith.constant 0 : index
    %90 = vector.load %arg4[%c4_50, %c0_51, %c0_52] : memref<5x32x64xbf16, #tpu.memory_space<vmem>>, vector<1x32x64xbf16>
    %91 = vector.shape_cast %90 : vector<1x32x64xbf16> to vector<32x64xbf16>
    %cst_53 = arith.constant dense<0.000000e+00> : vector<256x64xf32>
    %92 = tpu.matmul %89, %91, %cst_53 {dimension_numbers = #tpu.dot_dimension_numbers<[1], [0], [0], [1], [0, 0, 1, 1], [], []>} : vector<256x32xbf16>, vector<32x64xbf16>, vector<256x64xf32> -> vector<256x64xf32>
    %93 = arith.addf %86, %92 : vector<256x64xf32>
    %cst_54 = arith.constant 0.000000e+00 : f32
    %94 = vector.broadcast %cst_54 : f32 to vector<256x64xf32>
    %95 = arith.maximumf %93, %94 : vector<256x64xf32>
    %96 = vector.shape_cast %95 : vector<256x64xf32> to vector<16x16x64xf32>
    %cst_55 = arith.constant 0.000000e+00 : f32
    %97 = vector.broadcast %cst_55 : f32 to vector<256x32xf32>
    %c0_56 = arith.constant 0 : index
    %c0_57 = arith.constant 0 : index
    %98 = vector.load %arg7[%c0_56, %c0_57] : memref<1x32xf32, #tpu.memory_space<vmem>>, vector<1x32xf32>
    %99 = vector.broadcast %98 : vector<1x32xf32> to vector<256x32xf32>
    %100 = arith.addf %97, %99 : vector<256x32xf32>
    %c1_i32_58 = arith.constant 1 : i32
    %101 = tpu.dynamic_rotate %96 by %c1_i32_58 dim 1 : vector<16x16x64xf32>, i32 -> vector<16x16x64xf32>
    %102 = vector.shape_cast %101 : vector<16x16x64xf32> to vector<256x64xf32>
    %103 = arith.truncf %102 : vector<256x64xf32> to vector<256x64xbf16>
    %c0_59 = arith.constant 0 : index
    %c0_60 = arith.constant 0 : index
    %c0_61 = arith.constant 0 : index
    %104 = vector.load %arg6[%c0_59, %c0_60, %c0_61] : memref<3x64x32xbf16, #tpu.memory_space<vmem>>, vector<1x64x32xbf16>
    %105 = vector.shape_cast %104 : vector<1x64x32xbf16> to vector<64x32xbf16>
    %cst_62 = arith.constant dense<0.000000e+00> : vector<256x32xf32>
    %106 = tpu.matmul %103, %105, %cst_62 {dimension_numbers = #tpu.dot_dimension_numbers<[1], [0], [0], [1], [0, 0, 1, 1], [], []>} : vector<256x64xbf16>, vector<64x32xbf16>, vector<256x32xf32> -> vector<256x32xf32>
    %107 = arith.addf %100, %106 : vector<256x32xf32>
    %108 = vector.shape_cast %96 : vector<16x16x64xf32> to vector<256x64xf32>
    %109 = arith.truncf %108 : vector<256x64xf32> to vector<256x64xbf16>
    %c1_63 = arith.constant 1 : index
    %c0_64 = arith.constant 0 : index
    %c0_65 = arith.constant 0 : index
    %110 = vector.load %arg6[%c1_63, %c0_64, %c0_65] : memref<3x64x32xbf16, #tpu.memory_space<vmem>>, vector<1x64x32xbf16>
    %111 = vector.shape_cast %110 : vector<1x64x32xbf16> to vector<64x32xbf16>
    %cst_66 = arith.constant dense<0.000000e+00> : vector<256x32xf32>
    %112 = tpu.matmul %109, %111, %cst_66 {dimension_numbers = #tpu.dot_dimension_numbers<[1], [0], [0], [1], [0, 0, 1, 1], [], []>} : vector<256x64xbf16>, vector<64x32xbf16>, vector<256x32xf32> -> vector<256x32xf32>
    %113 = arith.addf %107, %112 : vector<256x32xf32>
    %c15_i32_67 = arith.constant 15 : i32
    %114 = tpu.dynamic_rotate %96 by %c15_i32_67 dim 1 : vector<16x16x64xf32>, i32 -> vector<16x16x64xf32>
    %115 = vector.shape_cast %114 : vector<16x16x64xf32> to vector<256x64xf32>
    %116 = arith.truncf %115 : vector<256x64xf32> to vector<256x64xbf16>
    %c2_68 = arith.constant 2 : index
    %c0_69 = arith.constant 0 : index
    %c0_70 = arith.constant 0 : index
    %117 = vector.load %arg6[%c2_68, %c0_69, %c0_70] : memref<3x64x32xbf16, #tpu.memory_space<vmem>>, vector<1x64x32xbf16>
    %118 = vector.shape_cast %117 : vector<1x64x32xbf16> to vector<64x32xbf16>
    %cst_71 = arith.constant dense<0.000000e+00> : vector<256x32xf32>
    %119 = tpu.matmul %116, %118, %cst_71 {dimension_numbers = #tpu.dot_dimension_numbers<[1], [0], [0], [1], [0, 0, 1, 1], [], []>} : vector<256x64xbf16>, vector<64x32xbf16>, vector<256x32xf32> -> vector<256x32xf32>
    %120 = arith.addf %113, %119 : vector<256x32xf32>
    %cst_72 = arith.constant 0.000000e+00 : f32
    %121 = vector.broadcast %cst_72 : f32 to vector<256x32xf32>
    %122 = arith.maximumf %120, %121 : vector<256x32xf32>
    %123 = vector.shape_cast %122 : vector<256x32xf32> to vector<16x16x32xf32>
    %124 = vector.shape_cast %123 : vector<16x16x32xf32> to vector<256x32xf32>
    %125 = arith.truncf %124 : vector<256x32xf32> to vector<256x32xbf16>
    %c0_73 = arith.constant 0 : index
    %c0_74 = arith.constant 0 : index
    %126 = vector.load %arg8[%c0_73, %c0_74] : memref<32x40xbf16, #tpu.memory_space<vmem>>, vector<32x40xbf16>
    %cst_75 = arith.constant dense<0.000000e+00> : vector<256x40xf32>
    %127 = tpu.matmul %125, %126, %cst_75 {dimension_numbers = #tpu.dot_dimension_numbers<[1], [0], [0], [1], [0, 0, 1, 1], [], []>} : vector<256x32xbf16>, vector<32x40xbf16>, vector<256x40xf32> -> vector<256x40xf32>
    %c0_76 = arith.constant 0 : index
    %c0_77 = arith.constant 0 : index
    %128 = vector.load %arg9[%c0_76, %c0_77] : memref<1x40xf32, #tpu.memory_space<vmem>>, vector<1x40xf32>
    %129 = vector.broadcast %128 : vector<1x40xf32> to vector<256x40xf32>
    %130 = arith.addf %127, %129 : vector<256x40xf32>
    %131 = vector.extract_strided_slice %130 {offsets = [0, 0], sizes = [256, 4], strides = [1, 1]} : vector<256x40xf32> to vector<256x4xf32>
    %132 = vector.shape_cast %131 : vector<256x4xf32> to vector<16x16x4xf32>
    %133 = vector.extract_strided_slice %130 {offsets = [0, 4], sizes = [256, 4], strides = [1, 1]} : vector<256x40xf32> to vector<256x4xf32>
    %134 = vector.shape_cast %133 : vector<256x4xf32> to vector<16x16x4xf32>
    %135 = vector.extract_strided_slice %130 {offsets = [0, 8], sizes = [256, 32], strides = [1, 1]} : vector<256x40xf32> to vector<256x32xf32>
    %136 = vector.shape_cast %135 : vector<256x32xf32> to vector<16x16x32xf32>
    %137 = arith.truncf %132 : vector<16x16x4xf32> to vector<16x16x4xbf16>
    %138 = arith.truncf %134 : vector<16x16x4xf32> to vector<16x16x4xbf16>
    "tpu.trace_start"() <{level = 10 : i32, message = "bld,bmd->blm"}> : () -> ()
    %cst_78 = arith.constant dense<0.000000e+00> : vector<16x16x16xf32>
    %139 = tpu.matmul %137, %138, %cst_78 {dimension_numbers = #tpu.dot_dimension_numbers<[2], [2], [1], [1], [0, 0, 0, 1, 1, 1], [0], [0]>} : vector<16x16x4xbf16>, vector<16x16x4xbf16>, vector<16x16x16xf32> -> vector<16x16x16xf32>
    "tpu.trace_stop"() : () -> ()
    %cst_79 = arith.constant dense<0xFF800000> : vector<16x16xf32>
    %140 = vector.multi_reduction <maximumf>, %139, %cst_79 [2] : vector<16x16x16xf32> to vector<16x16xf32>
    %141 = vector.shape_cast %140 : vector<16x16xf32> to vector<16x16x1xf32>
    %142 = vector.broadcast %141 : vector<16x16x1xf32> to vector<16x16x16xf32>
    %143 = arith.subf %139, %142 : vector<16x16x16xf32>
    %144 = math.exp %143 : vector<16x16x16xf32>
    %cst_80 = arith.constant dense<0.000000e+00> : vector<16x16xf32>
    %145 = vector.multi_reduction <add>, %144, %cst_80 [2] : vector<16x16x16xf32> to vector<16x16xf32>
    %146 = vector.shape_cast %145 : vector<16x16xf32> to vector<16x16x1xf32>
    %147 = tpu.reciprocal %146 {approx = true} : vector<16x16x1xf32> -> vector<16x16x1xf32>
    %148 = vector.broadcast %147 : vector<16x16x1xf32> to vector<16x16x16xf32>
    %149 = arith.mulf %144, %148 : vector<16x16x16xf32>
    %150 = arith.truncf %149 : vector<16x16x16xf32> to vector<16x16x16xbf16>
    %151 = arith.truncf %136 : vector<16x16x32xf32> to vector<16x16x32xbf16>
    "tpu.trace_start"() <{level = 10 : i32, message = "blm,bmc->blc"}> : () -> ()
    %cst_81 = arith.constant dense<0.000000e+00> : vector<16x16x32xf32>
    %152 = tpu.matmul %150, %151, %cst_81 {dimension_numbers = #tpu.dot_dimension_numbers<[2], [1], [1], [2], [0, 0, 0, 1, 1, 2], [0], [0]>} : vector<16x16x16xbf16>, vector<16x16x32xbf16>, vector<16x16x32xf32> -> vector<16x16x32xf32>
    "tpu.trace_stop"() : () -> ()
    %c0_82 = arith.constant 0 : index
    %153 = memref.load %arg11[%c0_82] : memref<1xf32, #tpu.memory_space<smem>>
    %154 = vector.broadcast %153 : f32 to vector<16x16x32xf32>
    %155 = arith.mulf %154, %152 : vector<16x16x32xf32>
    %156 = arith.addf %155, %123 : vector<16x16x32xf32>
    %cst_83 = arith.constant dense<0.000000e+00> : vector<16x32xf32>
    %157 = vector.multi_reduction <add>, %156, %cst_83 [1] : vector<16x16x32xf32> to vector<16x32xf32>
    %cst_84 = arith.constant 6.250000e-02 : f32
    %158 = vector.broadcast %cst_84 : f32 to vector<16x32xf32>
    %159 = arith.mulf %157, %158 : vector<16x32xf32>
    %c0_85 = arith.constant 0 : index
    %c0_86 = arith.constant 0 : index
    %160 = vector.load %arg10[%c0_85, %c0_86] : memref<1x32xf32, #tpu.memory_space<vmem>>, vector<1x32xf32>
    %161 = vector.broadcast %160 : vector<1x32xf32> to vector<16x32xf32>
    %162 = arith.mulf %159, %161 : vector<16x32xf32>
    %cst_87 = arith.constant dense<0.000000e+00> : vector<16xf32>
    %163 = vector.multi_reduction <add>, %162, %cst_87 [1] : vector<16x32xf32> to vector<16xf32>
    %164 = vector.shape_cast %163 : vector<16xf32> to vector<16x1xf32>
    %c0_88 = arith.constant 0 : index
    %165 = memref.load %arg12[%c0_88] : memref<1xf32, #tpu.memory_space<smem>>
    %166 = vector.broadcast %165 : f32 to vector<16x1xf32>
    %167 = arith.addf %164, %166 : vector<16x1xf32>
    %168 = arith.negf %167 : vector<16x1xf32>
    %169 = math.exp %168 : vector<16x1xf32>
    %cst_89 = arith.constant 1.000000e+00 : f32
    %170 = vector.broadcast %cst_89 : f32 to vector<16x1xf32>
    %171 = arith.addf %170, %169 : vector<16x1xf32>
    %172 = arith.divf %170, %171 : vector<16x1xf32>
    %c0_90 = arith.constant 0 : index
    %c0_91 = arith.constant 0 : index
    %173 = vector.load %arg13[%c0_90, %c0_91] : memref<16x1xf32, #tpu.memory_space<vmem>>, vector<16x1xf32>
    tpu.vector_store %arg13[%c0_90, %c0_91], %172 {strides = array<i32>} : memref<16x1xf32, #tpu.memory_space<vmem>>, vector<16x1xf32>,
    return
  }
  func.func @transform_0(%arg0: i32) -> (i32, i32, i32) {
    %c0_i32 = arith.constant 0 : i32
    %c0_i32_0 = arith.constant 0 : i32
    %c0_i32_1 = arith.constant 0 : i32
    return %arg0, %c0_i32, %c0_i32_0 : i32, i32, i32
  }
  func.func @transform_1(%arg0: i32) -> (i32, i32, i32) {
    %c0_i32 = arith.constant 0 : i32
    %c0_i32_0 = arith.constant 0 : i32
    %c0_i32_1 = arith.constant 0 : i32
    %c0_i32_2 = arith.constant 0 : i32
    return %c0_i32, %c0_i32_0, %c0_i32_1 : i32, i32, i32
  }
  func.func @transform_2(%arg0: i32) -> (i32, i32) {
    %c0_i32 = arith.constant 0 : i32
    %c0_i32_0 = arith.constant 0 : i32
    %c0_i32_1 = arith.constant 0 : i32
    return %c0_i32, %c0_i32_0 : i32, i32
  }
  func.func @transform_3(%arg0: i32) -> (i32, i32, i32) {
    %c0_i32 = arith.constant 0 : i32
    %c0_i32_0 = arith.constant 0 : i32
    %c0_i32_1 = arith.constant 0 : i32
    %c0_i32_2 = arith.constant 0 : i32
    return %c0_i32, %c0_i32_0, %c0_i32_1 : i32, i32, i32
  }
  func.func @transform_4(%arg0: i32) -> (i32, i32) {
    %c0_i32 = arith.constant 0 : i32
    %c0_i32_0 = arith.constant 0 : i32
    %c0_i32_1 = arith.constant 0 : i32
    return %c0_i32, %c0_i32_0 : i32, i32
  }
  func.func @transform_5(%arg0: i32) -> (i32, i32, i32) {
    %c0_i32 = arith.constant 0 : i32
    %c0_i32_0 = arith.constant 0 : i32
    %c0_i32_1 = arith.constant 0 : i32
    %c0_i32_2 = arith.constant 0 : i32
    return %c0_i32, %c0_i32_0, %c0_i32_1 : i32, i32, i32
  }
  func.func @transform_6(%arg0: i32) -> (i32, i32) {
    %c0_i32 = arith.constant 0 : i32
    %c0_i32_0 = arith.constant 0 : i32
    %c0_i32_1 = arith.constant 0 : i32
    return %c0_i32, %c0_i32_0 : i32, i32
  }
  func.func @transform_7(%arg0: i32) -> (i32, i32) {
    %c0_i32 = arith.constant 0 : i32
    %c0_i32_0 = arith.constant 0 : i32
    %c0_i32_1 = arith.constant 0 : i32
    return %c0_i32, %c0_i32_0 : i32, i32
  }
  func.func @transform_8(%arg0: i32) -> (i32, i32) {
    %c0_i32 = arith.constant 0 : i32
    %c0_i32_0 = arith.constant 0 : i32
    %c0_i32_1 = arith.constant 0 : i32
    return %c0_i32, %c0_i32_0 : i32, i32
  }
  func.func @transform_9(%arg0: i32) -> (i32, i32) {
    %c0_i32 = arith.constant 0 : i32
    %c0_i32_0 = arith.constant 0 : i32
    %c0_i32_1 = arith.constant 0 : i32
    return %c0_i32, %c0_i32_0 : i32, i32
  }
  func.func @transform_10(%arg0: i32) -> i32 {
    %c0_i32 = arith.constant 0 : i32
    %c0_i32_0 = arith.constant 0 : i32
    return %c0_i32 : i32
  }
  func.func @transform_11(%arg0: i32) -> i32 {
    %c0_i32 = arith.constant 0 : i32
    %c0_i32_0 = arith.constant 0 : i32
    return %c0_i32 : i32
  }
  func.func @transform_12(%arg0: i32) -> (i32, i32) {
    %c0_i32 = arith.constant 0 : i32
    %c0_i32_0 = arith.constant 0 : i32
    return %arg0, %c0_i32 : i32, i32
  }
}

</mosaic_0001>

<llo_original>
// kernel: tpu_custom_call.1
$region0: #{tpu_custom_call.1}
  #allocation0 [shape = 'u32[]', space=smem, size = 0x4, offset = 0x4, fixed_abs, tag = 'smem constant byte address 0x4 - core index']
  #allocation1 [shape = 'u32[144,128]{1,0:T(1,128)}', space=vmem, size = 0x12000, scoped, tag = 'internal scratch']
  #allocation2 [shape = 'f32[1]{0:T(128)S(6)}', space=smem, size = 0x200, scoped, tag = 'scoped memory for tpu_custom_call.1']
  #allocation3 [shape = 'f32[1]{0:T(128)S(6)}', space=smem, size = 0x200, scoped, tag = 'scoped memory for tpu_custom_call.1']
  %s0 = inlined_call_operand.hbm [shape: f32[16,16,2], index: 0, kind: input, shape index: {}]
  %s1 = inlined_call_operand.hbm [shape: bf16[7,2,32], index: 1, kind: input, shape index: {}]
  %s2 = inlined_call_operand.hbm [shape: f32[1,32], index: 2, kind: input, shape index: {}]
  %s3 = inlined_call_operand.hbm [shape: bf16[5,32,64], index: 3, kind: input, shape index: {}]
  %s4 = inlined_call_operand.hbm [shape: f32[1,64], index: 4, kind: input, shape index: {}]
  %s5 = inlined_call_operand.hbm [shape: bf16[3,64,32], index: 5, kind: input, shape index: {}]
  %s6 = inlined_call_operand.hbm [shape: f32[1,32], index: 6, kind: input, shape index: {}]
  %s7 = inlined_call_operand.hbm [shape: bf16[32,40], index: 7, kind: input, shape index: {}]
  %s8 = inlined_call_operand.hbm [shape: f32[1,40], index: 8, kind: input, shape index: {}]
  %s9 = inlined_call_operand.hbm [shape: f32[1,32], index: 9, kind: input, shape index: {}]
  %s10 = inlined_call_operand.<no memory space> [shape: f32[1], index: 10, kind: input, shape index: {}]
  %s11 = inlined_call_operand.<no memory space> [shape: f32[1], index: 11, kind: input, shape index: {}]
  %s12 = inlined_call_operand.hbm [shape: f32[16,1], index: 12, kind: output, shape index: {}]
  %s13 = sld [smem:[#allocation0]]
  $region98: #{tpu_custom_call.1} parent=0
    _
  %s15 = ssub.s32 1, %s13
  %s16 = scalar_select 0, %s15, %s13
  %17 = sst [smem:[#allocation2]] %s10
  %18 = sst [smem:[#allocation3]] %s11
  $region1: #{tpu_custom_call.1} parent=0
    #allocation4 [shape = 'u8[131072]{0}', space=vmem, size = 0x20000, scoped, tag = 'input window, operand 0, single buffered']
    #allocation5 [shape = 's32[1]{0}', space=sflag, size = 0x4, scoped, tag = 'scoped memory for tpu_custom_call.1']
    #allocation6 [shape = 's32[1]{0}', space=sflag, size = 0x4, scoped, tag = 'scoped memory for tpu_custom_call.1']
    #allocation7 [shape = 'u8[3584]{0}', space=vmem, size = 0x1000, scoped, tag = 'input window, operand 1, single buffered']
    #allocation8 [shape = 's32[1]{0}', space=sflag, size = 0x4, scoped, tag = 'scoped memory for tpu_custom_call.1']
    #allocation9 [shape = 'u8[512]{0}', space=vmem, size = 0x400, scoped, tag = 'input window, operand 2, single buffered']
    #allocation10 [shape = 'u8[40960]{0}', space=vmem, size = 0xa000, scoped, tag = 'input window, operand 3, single buffered']
    #allocation11 [shape = 's32[1]{0}', space=sflag, size = 0x4, scoped, tag = 'scoped memory for tpu_custom_call.1']
    #allocation12 [shape = 'u8[512]{0}', space=vmem, size = 0x400, scoped, tag = 'input window, operand 4, single buffered']
    #allocation13 [shape = 'u8[49152]{0}', space=vmem, size = 0xc000, scoped, tag = 'input window, operand 5, single buffered']
    #allocation14 [shape = 's32[1]{0}', space=sflag, size = 0x4, scoped, tag = 'scoped memory for tpu_custom_call.1']
    #allocation15 [shape = 'u8[512]{0}', space=vmem, size = 0x400, scoped, tag = 'input window, operand 6, single buffered']
    #allocation16 [shape = 'u8[8192]{0}', space=vmem, size = 0x2000, scoped, tag = 'input window, operand 7, single buffered']
    #allocation17 [shape = 's32[1]{0}', space=sflag, size = 0x4, scoped, tag = 'scoped memory for tpu_custom_call.1']
    #allocation18 [shape = 'u8[512]{0}', space=vmem, size = 0x400, scoped, tag = 'input window, operand 8, single buffered']
    #allocation19 [shape = 'u8[512]{0}', space=vmem, size = 0x400, scoped, tag = 'input window, operand 9, single buffered']
    #allocation20 [shape = 's32[1]{0}', space=sflag, size = 0x4, scoped, tag = 'scoped memory for tpu_custom_call.1']
    #allocation21 [shape = 'u8[8192]{0}', space=vmem, size = 0x2000, scoped, tag = 'output window, operand 0, single buffered']
    %19 = vsyncpa [#allocation5], 0
    %20 = vsyncpa [#allocation8], 0
    %21 = vsyncpa [#allocation11], 0
    %22 = vsyncpa [#allocation14], 0
    %23 = vsyncpa [#allocation17], 0
    %24 = vsyncpa [#allocation20], 0
    %25 = vsyncpa [#allocation6], 0
    // Predicated region
    $region2: #{tpu_custom_call.1} parent=1 // pred_check
      _
    $region3: #{tpu_custom_call.1} parent=1 // pred_check_branch
      %27 = sbr.rel (0) target = $region5
    $region4: #{tpu_custom_call.1} parent=1 // pred_region
      %s29 = ssub.s32 4096, 4096
      %30 = vsyncadd [#allocation5], %s29
      %s31 = sshll.u32 [#allocation4], 4
      %s32 = int_to_ptr.vmem [resolvable:$true] %s31
      %37 = dma.hbm_to_vmem [thread:$0]  %s0, 4096, %s32, [#allocation5], 128, 128, 8
    $region5: #{tpu_custom_call.1} parent=1 // pred_fallthru
      _
    // Predicated region
    $region6: #{tpu_custom_call.1} parent=1 // pred_check
      _
    $region7: #{tpu_custom_call.1} parent=1 // pred_check_branch
      %39 = sbr.rel (0) target = $region9
    $region8: #{tpu_custom_call.1} parent=1 // pred_region
      %s41 = ssub.s32 112, 112
      %42 = vsyncadd [#allocation8], %s41
      %s43 = sshll.u32 [#allocation7], 4
      %s44 = int_to_ptr.vmem [resolvable:$true] %s43
      %49 = dma.hbm_to_vmem [thread:$0]  %s1, 112, %s44, [#allocation8], 16, 16, 1
    $region9: #{tpu_custom_call.1} parent=1 // pred_fallthru
      _
    // Predicated region
    $region10: #{tpu_custom_call.1} parent=1 // pred_check
      _
    $region11: #{tpu_custom_call.1} parent=1 // pred_check_branch
      %51 = sbr.rel (0) target = $region13
    $region12: #{tpu_custom_call.1} parent=1 // pred_region
      %s53 = ssub.s32 16, 16
      %54 = vsyncadd [#allocation8], %s53
      %s56 = sshll.u32 [#allocation9], 4
      %s57 = int_to_ptr.vmem [resolvable:$true] %s56
      %59 = dma.hbm_to_vmem [thread:$0]  %s2, 16, %s57, [#allocation8]
    $region13: #{tpu_custom_call.1} parent=1 // pred_fallthru
      _
    // Predicated region
    $region14: #{tpu_custom_call.1} parent=1 // pred_check
      _
    $region15: #{tpu_custom_call.1} parent=1 // pred_check_branch
      %61 = sbr.rel (0) target = $region17
    $region16: #{tpu_custom_call.1} parent=1 // pred_region
      %s63 = ssub.s32 1280, 1280
      %64 = vsyncadd [#allocation11], %s63
      %s65 = sshll.u32 [#allocation10], 4
      %s66 = int_to_ptr.vmem [resolvable:$true] %s65
      %71 = dma.hbm_to_vmem [thread:$0]  %s3, 1280, %s66, [#allocation11], 64, 64, 4
    $region17: #{tpu_custom_call.1} parent=1 // pred_fallthru
      _
    // Predicated region
    $region18: #{tpu_custom_call.1} parent=1 // pred_check
      _
    $region19: #{tpu_custom_call.1} parent=1 // pred_check_branch
      %73 = sbr.rel (0) target = $region21
    $region20: #{tpu_custom_call.1} parent=1 // pred_region
      %s75 = ssub.s32 16, 16
      %76 = vsyncadd [#allocation11], %s75
      %s78 = sshll.u32 [#allocation12], 4
      %s79 = int_to_ptr.vmem [resolvable:$true] %s78
      %81 = dma.hbm_to_vmem [thread:$0]  %s4, 16, %s79, [#allocation11]
    $region21: #{tpu_custom_call.1} parent=1 // pred_fallthru
      _
    // Predicated region
    $region22: #{tpu_custom_call.1} parent=1 // pred_check
      _
    $region23: #{tpu_custom_call.1} parent=1 // pred_check_branch
      %83 = sbr.rel (0) target = $region25
    $region24: #{tpu_custom_call.1} parent=1 // pred_region
      %s85 = ssub.s32 1536, 1536
      %86 = vsyncadd [#allocation14], %s85
      %s87 = sshll.u32 [#allocation13], 4
      %s88 = int_to_ptr.vmem [resolvable:$true] %s87
      %93 = dma.hbm_to_vmem [thread:$0]  %s5, 1536, %s88, [#allocation14], 64, 64, 4
    $region25: #{tpu_custom_call.1} parent=1 // pred_fallthru
      _
    // Predicated region
    $region26: #{tpu_custom_call.1} parent=1 // pred_check
      _
    $region27: #{tpu_custom_call.1} parent=1 // pred_check_branch
      %95 = sbr.rel (0) target = $region29
    $region28: #{tpu_custom_call.1} parent=1 // pred_region
      %s97 = ssub.s32 16, 16
      %98 = vsyncadd [#allocation14], %s97
      %s100 = sshll.u32 [#allocation15], 4
      %s101 = int_to_ptr.vmem [resolvable:$true] %s100
      %103 = dma.hbm_to_vmem [thread:$0]  %s6, 16, %s101, [#allocation14]
    $region29: #{tpu_custom_call.1} parent=1 // pred_fallthru
      _
    // Predicated region
    $region30: #{tpu_custom_call.1} parent=1 // pred_check
      _
    $region31: #{tpu_custom_call.1} parent=1 // pred_check_branch
      %105 = sbr.rel (0) target = $region33
    $region32: #{tpu_custom_call.1} parent=1 // pred_region
      %s107 = ssub.s32 256, 256
      %108 = vsyncadd [#allocation17], %s107
      %s109 = sshll.u32 [#allocation16], 4
      %s110 = int_to_ptr.vmem [resolvable:$true] %s109
      %115 = dma.hbm_to_vmem [thread:$0]  %s7, 256, %s110, [#allocation17], 64, 64, 4
    $region33: #{tpu_custom_call.1} parent=1 // pred_fallthru
      _
    // Predicated region
    $region34: #{tpu_custom_call.1} parent=1 // pred_check
      _
    $region35: #{tpu_custom_call.1} parent=1 // pred_check_branch
      %117 = sbr.rel (0) target = $region37
    $region36: #{tpu_custom_call.1} parent=1 // pred_region
      %s119 = ssub.s32 16, 16
      %120 = vsyncadd [#allocation17], %s119
      %s122 = sshll.u32 [#allocation18], 4
      %s123 = int_to_ptr.vmem [resolvable:$true] %s122
      %125 = dma.hbm_to_vmem [thread:$0]  %s8, 16, %s123, [#allocation17]
    $region37: #{tpu_custom_call.1} parent=1 // pred_fallthru
      _
    // Predicated region
    $region38: #{tpu_custom_call.1} parent=1 // pred_check
      _
    $region39: #{tpu_custom_call.1} parent=1 // pred_check_branch
      %127 = sbr.rel (0) target = $region41
    $region40: #{tpu_custom_call.1} parent=1 // pred_region
      %s129 = ssub.s32 16, 16
      %130 = vsyncadd [#allocation20], %s129
      %s132 = sshll.u32 [#allocation19], 4
      %s133 = int_to_ptr.vmem [resolvable:$true] %s132
      %135 = dma.hbm_to_vmem [thread:$0]  %s9, 16, %s133, [#allocation20]
    $region41: #{tpu_custom_call.1} parent=1 // pred_fallthru
      _
    // Predicated region
    $region42: #{tpu_custom_call.1} parent=1 // pred_check
      _
    $region43: #{tpu_custom_call.1} parent=1 // pred_check_branch
      %137 = sbr.rel (0) target = $region45
    $region44: #{tpu_custom_call.1} parent=1 // pred_region
      _
    $region45: #{tpu_custom_call.1} parent=1 // pred_fallthru
      _
    // Predicated region
    $region46: #{tpu_custom_call.1} parent=1 // pred_check
      _
    $region47: #{tpu_custom_call.1} parent=1 // pred_check_branch
      %139 = sbr.rel (0) target = $region49
    $region48: #{tpu_custom_call.1} parent=1 // pred_region
      _
    $region49: #{tpu_custom_call.1} parent=1 // pred_fallthru
      _
    // Predicated region
    $region50: #{tpu_custom_call.1} parent=1 // pred_check
      _
    $region51: #{tpu_custom_call.1} parent=1 // pred_check_branch
      %141 = sbr.rel (0) target = $region53
    $region52: #{tpu_custom_call.1} parent=1 // pred_region
      %142 = dma.done [#allocation5], 4096
    $region53: #{tpu_custom_call.1} parent=1 // pred_fallthru
      _
    // Predicated region
    $region54: #{tpu_custom_call.1} parent=1 // pred_check
      _
    $region55: #{tpu_custom_call.1} parent=1 // pred_check_branch
      %144 = sbr.rel (0) target = $region57
    $region56: #{tpu_custom_call.1} parent=1 // pred_region
      %145 = dma.done [#allocation8], 112
    $region57: #{tpu_custom_call.1} parent=1 // pred_fallthru
      _
    // Predicated region
    $region58: #{tpu_custom_call.1} parent=1 // pred_check
      _
    $region59: #{tpu_custom_call.1} parent=1 // pred_check_branch
      %147 = sbr.rel (0) target = $region61
    $region60: #{tpu_custom_call.1} parent=1 // pred_region
      %148 = dma.done [#allocation8], 16
    $region61: #{tpu_custom_call.1} parent=1 // pred_fallthru
      _
    // Predicated region
    $region62: #{tpu_custom_call.1} parent=1 // pred_check
      _
    $region63: #{tpu_custom_call.1} parent=1 // pred_check_branch
      %150 = sbr.rel (0) target = $region65
    $region64: #{tpu_custom_call.1} parent=1 // pred_region
      %151 = dma.done [#allocation11], 1280
    $region65: #{tpu_custom_call.1} parent=1 // pred_fallthru
      _
    // Predicated region
    $region66: #{tpu_custom_call.1} parent=1 // pred_check
      _
    $region67: #{tpu_custom_call.1} parent=1 // pred_check_branch
      %153 = sbr.rel (0) target = $region69
    $region68: #{tpu_custom_call.1} parent=1 // pred_region
      %154 = dma.done [#allocation11], 16
    $region69: #{tpu_custom_call.1} parent=1 // pred_fallthru
      _
    // Predicated region
    $region70: #{tpu_custom_call.1} parent=1 // pred_check
      _
    $region71: #{tpu_custom_call.1} parent=1 // pred_check_branch
      %156 = sbr.rel (0) target = $region73
    $region72: #{tpu_custom_call.1} parent=1 // pred_region
      %157 = dma.done [#allocation14], 1536
    $region73: #{tpu_custom_call.1} parent=1 // pred_fallthru
      _
    // Predicated region
    $region74: #{tpu_custom_call.1} parent=1 // pred_check
      _
    $region75: #{tpu_custom_call.1} parent=1 // pred_check_branch
      %159 = sbr.rel (0) target = $region77
    $region76: #{tpu_custom_call.1} parent=1 // pred_region
      %160 = dma.done [#allocation14], 16
    $region77: #{tpu_custom_call.1} parent=1 // pred_fallthru
      _
    // Predicated region
    $region78: #{tpu_custom_call.1} parent=1 // pred_check
      _
    $region79: #{tpu_custom_call.1} parent=1 // pred_check_branch
      %162 = sbr.rel (0) target = $region81
    $region80: #{tpu_custom_call.1} parent=1 // pred_region
      %163 = dma.done [#allocation17], 256
    $region81: #{tpu_custom_call.1} parent=1 // pred_fallthru
      _
    // Predicated region
    $region82: #{tpu_custom_call.1} parent=1 // pred_check
      _
    $region83: #{tpu_custom_call.1} parent=1 // pred_check_branch
      %165 = sbr.rel (0) target = $region85
    $region84: #{tpu_custom_call.1} parent=1 // pred_region
      %166 = dma.done [#allocation17], 16
    $region85: #{tpu_custom_call.1} parent=1 // pred_fallthru
      _
    // Predicated region
    $region86: #{tpu_custom_call.1} parent=1 // pred_check
      _
    $region87: #{tpu_custom_call.1} parent=1 // pred_check_branch
      %168 = sbr.rel (0) target = $region89
    $region88: #{tpu_custom_call.1} parent=1 // pred_region
      %169 = dma.done [#allocation20], 16
    $region89: #{tpu_custom_call.1} parent=1 // pred_fallthru
      _
    %v171 = vld [vmem:[#allocation4] sm:$0xff]
    %v172 = vld [vmem:[#allocation4 + $0x8] sm:$0xff]
    %v173 = vld [vmem:[#allocation4 + $0x10] sm:$0xff]
    %v174 = vld [vmem:[#allocation4 + $0x18] sm:$0xff]
    %v175 = vld [vmem:[#allocation4 + $0x20] sm:$0xff]
    %v176 = vld [vmem:[#allocation4 + $0x28] sm:$0xff]
    %v177 = vld [vmem:[#allocation4 + $0x30] sm:$0xff]
    %v178 = vld [vmem:[#allocation4 + $0x38] sm:$0xff]
    %v179 = vld [vmem:[#allocation4 + $0x40] sm:$0xff]
    %v180 = vld [vmem:[#allocation4 + $0x48] sm:$0xff]
    %v181 = vld [vmem:[#allocation4 + $0x50] sm:$0xff]
    %v182 = vld [vmem:[#allocation4 + $0x58] sm:$0xff]
    %v183 = vld [vmem:[#allocation4 + $0x60] sm:$0xff]
    %v184 = vld [vmem:[#allocation4 + $0x68] sm:$0xff]
    %v185 = vld [vmem:[#allocation4 + $0x70] sm:$0xff]
    %v186 = vld [vmem:[#allocation4 + $0x78] sm:$0xff]
    %v187 = vld [vmem:[#allocation4 + $0x80] sm:$0xff]
    %v188 = vld [vmem:[#allocation4 + $0x88] sm:$0xff]
    %v189 = vld [vmem:[#allocation4 + $0x90] sm:$0xff]
    %v190 = vld [vmem:[#allocation4 + $0x98] sm:$0xff]
    %v191 = vld [vmem:[#allocation4 + $0xa0] sm:$0xff]
    %v192 = vld [vmem:[#allocation4 + $0xa8] sm:$0xff]
    %v193 = vld [vmem:[#allocation4 + $0xb0] sm:$0xff]
    %v194 = vld [vmem:[#allocation4 + $0xb8] sm:$0xff]
    %v195 = vld [vmem:[#allocation4 + $0xc0] sm:$0xff]
    %v196 = vld [vmem:[#allocation4 + $0xc8] sm:$0xff]
    %v197 = vld [vmem:[#allocation4 + $0xd0] sm:$0xff]
    %v198 = vld [vmem:[#allocation4 + $0xd8] sm:$0xff]
    %v199 = vld [vmem:[#allocation4 + $0xe0] sm:$0xff]
    %v200 = vld [vmem:[#allocation4 + $0xe8] sm:$0xff]
    %v201 = vld [vmem:[#allocation4 + $0xf0] sm:$0xff]
    %v202 = vld [vmem:[#allocation4 + $0xf8] sm:$0xff]
    %v203 = vld [vmem:[#allocation9] sm:$0x1]
    %v205 = vlaneseq
    %v206 = vshrl.u32 %v205, 7
    %v207 = vsub.s32 0, %v206
    %v208 = vrot.slane %v203, %v207
    %v210 = vadd.f32 %v208, 0.0
    %v211 = vrot.slane %v171, 5
    %v212 = vrot.slane %v173, 5
    %v213 = vrot.slane %v175, 5
    %v214 = vrot.slane %v177, 5
    %v215 = vrot.slane %v179, 5
    %v216 = vrot.slane %v181, 5
    %v217 = vrot.slane %v183, 5
    %v218 = vrot.slane %v185, 5
    %v219 = vrot.slane %v187, 5
    %v220 = vrot.slane %v189, 5
    %v221 = vrot.slane %v191, 5
    %v222 = vrot.slane %v193, 5
    %v223 = vrot.slane %v195, 5
    %v224 = vrot.slane %v197, 5
    %v225 = vrot.slane %v199, 5
    %v226 = vrot.slane %v201, 5
    %v227 = vrot.slane %v172, 5
    %v228 = vrot.slane %v174, 5
    %v229 = vrot.slane %v176, 5
    %v230 = vrot.slane %v178, 5
    %v231 = vrot.slane %v180, 5
    %v232 = vrot.slane %v182, 5
    %v233 = vrot.slane %v184, 5
    %v234 = vrot.slane %v186, 5
    %v235 = vrot.slane %v188, 5
    %v236 = vrot.slane %v190, 5
    %v237 = vrot.slane %v192, 5
    %v238 = vrot.slane %v194, 5
    %v239 = vrot.slane %v196, 5
    %v240 = vrot.slane %v198, 5
    %v241 = vrot.slane %v200, 5
    %v242 = vrot.slane %v202, 5
    %v243 = vlaneseq
    %v244 = vshrl.u32 %v243, 7
    %vm245 = vcmp.lt.s32.totalorder %v244, 3
    %v246 = vsel %vm245, %v211, %v227
    %v247 = vsel %vm245, %v212, %v228
    %v248 = vsel %vm245, %v213, %v229
    %v249 = vsel %vm245, %v214, %v230
    %v250 = vsel %vm245, %v215, %v231
    %v251 = vsel %vm245, %v216, %v232
    %v252 = vsel %vm245, %v217, %v233
    %v253 = vsel %vm245, %v218, %v234
    %v254 = vsel %vm245, %v219, %v235
    %v255 = vsel %vm245, %v220, %v236
    %v256 = vsel %vm245, %v221, %v237
    %v257 = vsel %vm245, %v222, %v238
    %v258 = vsel %vm245, %v223, %v239
    %v259 = vsel %vm245, %v224, %v240
    %v260 = vsel %vm245, %v225, %v241
    %v261 = vsel %vm245, %v226, %v242
    %v262 = vsel %vm245, %v227, %v211
    %v263 = vsel %vm245, %v228, %v212
    %v264 = vsel %vm245, %v229, %v213
    %v265 = vsel %vm245, %v230, %v214
    %v266 = vsel %vm245, %v231, %v215
    %v267 = vsel %vm245, %v232, %v216
    %v268 = vsel %vm245, %v233, %v217
    %v269 = vsel %vm245, %v234, %v218
    %v270 = vsel %vm245, %v235, %v219
    %v271 = vsel %vm245, %v236, %v220
    %v272 = vsel %vm245, %v237, %v221
    %v273 = vsel %vm245, %v238, %v222
    %v274 = vsel %vm245, %v239, %v223
    %v275 = vsel %vm245, %v240, %v224
    %v276 = vsel %vm245, %v241, %v225
    %v277 = vsel %vm245, %v242, %v226
    %v278 = vpack.c.bf16 %v246, %v262
    %v279 = vpack.c.bf16 %v247, %v263
    %v280 = vpack.c.bf16 %v248, %v264
    %v281 = vpack.c.bf16 %v249, %v265
    %v282 = vpack.c.bf16 %v250, %v266
    %v283 = vpack.c.bf16 %v251, %v267
    %v284 = vpack.c.bf16 %v252, %v268
    %v285 = vpack.c.bf16 %v253, %v269
    %v286 = vpack.c.bf16 %v254, %v270
    %v287 = vpack.c.bf16 %v255, %v271
    %v288 = vpack.c.bf16 %v256, %v272
    %v289 = vpack.c.bf16 %v257, %v273
    %v290 = vpack.c.bf16 %v258, %v274
    %v291 = vpack.c.bf16 %v259, %v275
    %v292 = vpack.c.bf16 %v260, %v276
    %v293 = vpack.c.bf16 %v261, %v277
    %v294 = vld [vmem:[#allocation7] sm:$0x1]
    %vm295 = vcmask 15360
    %v297 = vsel %vm295, %v278, 0
    %v300 = vsel %vm295, %v279, 0
    %v303 = vsel %vm295, %v280, 0
    %v306 = vsel %vm295, %v281, 0
    %v309 = vsel %vm295, %v282, 0
    %v312 = vsel %vm295, %v283, 0
    %v315 = vsel %vm295, %v284, 0
    %v318 = vsel %vm295, %v285, 0
    %v321 = vsel %vm295, %v286, 0
    %v324 = vsel %vm295, %v287, 0
    %v327 = vsel %vm295, %v288, 0
    %v330 = vsel %vm295, %v289, 0
    %v333 = vsel %vm295, %v290, 0
    %v336 = vsel %vm295, %v291, 0
    %v339 = vsel %vm295, %v292, 0
    %v342 = vsel %vm295, %v293, 0
    %vm344 = vcmask 1040384
    %v346 = vsel %vm344, %v294, 0
    %348 = vmatprep.subr.bf16.mxu0 0
    %349 = vmatpush1.bf16.msra.mxu0 %v346
    %350 = vmatprep.subr.bf16.mxu0 0
    %351 = vmatpush1.bf16.msra.mxu0 0
    %352 = vmatprep.subr.bf16.mxu0 0
    %353 = vmatpush1.bf16.msra.mxu0 0
    %354 = vmatprep.subr.bf16.mxu0 0
    %355 = vmatpush1.bf16.msra.mxu0 0
    %356 = vmatprep.subr.bf16.mxu0 0
    %357 = vmatpush1.bf16.msra.mxu0 0
    %358 = vmatprep.subr.bf16.mxu0 0
    %359 = vmatpush1.bf16.msra.mxu0 0
    %360 = vmatprep.subr.bf16.mxu0 0
    %361 = vmatpush1.bf16.msra.mxu0 0
    %362 = vmatprep.subr.bf16.mxu0 0
    %363 = vmatpush1.bf16.msra.mxu0 0
    %364 = vmatprep.subr.bf16.mxu0 0
    %365 = vmatpush1.bf16.msra.mxu0 0
    %366 = vmatprep.subr.bf16.mxu0 0
    %367 = vmatpush1.bf16.msra.mxu0 0
    %368 = vmatprep.subr.bf16.mxu0 0
    %369 = vmatpush1.bf16.msra.mxu0 0
    %370 = vmatprep.subr.bf16.mxu0 0
    %371 = vmatpush1.bf16.msra.mxu0 0
    %372 = vmatprep.subr.bf16.mxu0 0
    %373 = vmatpush1.bf16.msra.mxu0 0
    %374 = vmatprep.subr.bf16.mxu0 0
    %375 = vmatpush1.bf16.msra.mxu0 0
    %376 = vmatprep.subr.bf16.mxu0 0
    %377 = vmatpush1.bf16.msra.mxu0 0
    %378 = vmatprep.subr.bf16.mxu0 0
    %379 = vmatpush1.bf16.msra.mxu0 0
    %380 = vmatprep.mubr.bf16.mxu0 0
    %381 = vmatmul.mubr.bf16.gmra.mrb[0].mxu0 %v297
    %v382 = vpop.f32.mrb[0].mxu0
    %v383 = vadd.f32 0.0, %v382
    %v384 = vpop.f32.mrb[0].mxu0
    %v385 = vpop.f32.mrb[0].mxu0
    %v386 = vadd.f32 0.0, %v385
    %v387 = vpop.f32.mrb[0].mxu0
    %388 = vmatprep.mubr.bf16.mxu0 0
    %389 = vmatmul.mubr.bf16.gmra.mrb[0].mxu0 %v300
    %v390 = vpop.f32.mrb[0].mxu0
    %v391 = vadd.f32 0.0, %v390
    %v392 = vpop.f32.mrb[0].mxu0
    %v393 = vpop.f32.mrb[0].mxu0
    %v394 = vadd.f32 0.0, %v393
    %v395 = vpop.f32.mrb[0].mxu0
    %396 = vmatprep.mubr.bf16.mxu0 0
    %397 = vmatmul.mubr.bf16.gmra.mrb[0].mxu0 %v303
    %v398 = vpop.f32.mrb[0].mxu0
    %v399 = vadd.f32 0.0, %v398
    %v400 = vpop.f32.mrb[0].mxu0
    %v401 = vpop.f32.mrb[0].mxu0
    %v402 = vadd.f32 0.0, %v401
    %v403 = vpop.f32.mrb[0].mxu0
    %404 = vmatprep.mubr.bf16.mxu0 0
    %405 = vmatmul.mubr.bf16.gmra.mrb[0].mxu0 %v306
    %v406 = vpop.f32.mrb[0].mxu0
    %v407 = vadd.f32 0.0, %v406
    %v408 = vpop.f32.mrb[0].mxu0
    %v409 = vpop.f32.mrb[0].mxu0
    %v410 = vadd.f32 0.0, %v409
    %v411 = vpop.f32.mrb[0].mxu0
    %412 = vmatprep.mubr.bf16.mxu0 0
    %413 = vmatmul.mubr.bf16.gmra.mrb[0].mxu0 %v309
    %v414 = vpop.f32.mrb[0].mxu0
    %v415 = vadd.f32 0.0, %v414
    %v416 = vpop.f32.mrb[0].mxu0
    %v417 = vpop.f32.mrb[0].mxu0
    %v418 = vadd.f32 0.0, %v417
    %v419 = vpop.f32.mrb[0].mxu0
    %420 = vmatprep.mubr.bf16.mxu0 0
    %421 = vmatmul.mubr.bf16.gmra.mrb[0].mxu0 %v312
    %v422 = vpop.f32.mrb[0].mxu0
    %v423 = vadd.f32 0.0, %v422
    %v424 = vpop.f32.mrb[0].mxu0
    %v425 = vpop.f32.mrb[0].mxu0
    %v426 = vadd.f32 0.0, %v425
    %v427 = vpop.f32.mrb[0].mxu0
    %428 = vmatprep.mubr.bf16.mxu0 0
    %429 = vmatmul.mubr.bf16.gmra.mrb[0].mxu0 %v315
    %v430 = vpop.f32.mrb[0].mxu0
    %v431 = vadd.f32 0.0, %v430
    %v432 = vpop.f32.mrb[0].mxu0
    %v433 = vpop.f32.mrb[0].mxu0
    %v434 = vadd.f32 0.0, %v433
    %v435 = vpop.f32.mrb[0].mxu0
    %436 = vmatprep.mubr.bf16.mxu0 0
    %437 = vmatmul.mubr.bf16.gmra.mrb[0].mxu0 %v318
    %v438 = vpop.f32.mrb[0].mxu0
    %v439 = vadd.f32 0.0, %v438
    %v440 = vpop.f32.mrb[0].mxu0
    %v441 = vpop.f32.mrb[0].mxu0
    %v442 = vadd.f32 0.0, %v441
    %v443 = vpop.f32.mrb[0].mxu0
    %444 = vmatprep.mubr.bf16.mxu0 0
    %445 = vmatmul.mubr.bf16.gmra.mrb[0].mxu0 %v321
    %v446 = vpop.f32.mrb[0].mxu0
    %v447 = vadd.f32 0.0, %v446
    %v448 = vpop.f32.mrb[0].mxu0
    %v449 = vpop.f32.mrb[0].mxu0
    %v450 = vadd.f32 0.0, %v449
    %v451 = vpop.f32.mrb[0].mxu0
    %452 = vmatprep.mubr.bf16.mxu0 0
    %453 = vmatmul.mubr.bf16.gmra.mrb[0].mxu0 %v324
    %v454 = vpop.f32.mrb[0].mxu0
    %v455 = vadd.f32 0.0, %v454
    %v456 = vpop.f32.mrb[0].mxu0
    %v457 = vpop.f32.mrb[0].mxu0
    %v458 = vadd.f32 0.0, %v457
    %v459 = vpop.f32.mrb[0].mxu0
    %460 = vmatprep.mubr.bf16.mxu0 0
    %461 = vmatmul.mubr.bf16.gmra.mrb[0].mxu0 %v327
    %v462 = vpop.f32.mrb[0].mxu0
    %v463 = vadd.f32 0.0, %v462
    %v464 = vpop.f32.mrb[0].mxu0
    %v465 = vpop.f32.mrb[0].mxu0
    %v466 = vadd.f32 0.0, %v465
    %v467 = vpop.f32.mrb[0].mxu0
    %468 = vmatprep.mubr.bf16.mxu0 0
    %469 = vmatmul.mubr.bf16.gmra.mrb[0].mxu0 %v330
    %v470 = vpop.f32.mrb[0].mxu0
    %v471 = vadd.f32 0.0, %v470
    %v472 = vpop.f32.mrb[0].mxu0
    %v473 = vpop.f32.mrb[0].mxu0
    %v474 = vadd.f32 0.0, %v473
    %v475 = vpop.f32.mrb[0].mxu0
    %476 = vmatprep.mubr.bf16.mxu0 0
    %477 = vmatmul.mubr.bf16.gmra.mrb[0].mxu0 %v333
    %v478 = vpop.f32.mrb[0].mxu0
    %v479 = vadd.f32 0.0, %v478
    %v480 = vpop.f32.mrb[0].mxu0
    %v481 = vpop.f32.mrb[0].mxu0
    %v482 = vadd.f32 0.0, %v481
    %v483 = vpop.f32.mrb[0].mxu0
    %484 = vmatprep.mubr.bf16.mxu0 0
    %485 = vmatmul.mubr.bf16.gmra.mrb[0].mxu0 %v336
    %v486 = vpop.f32.mrb[0].mxu0
    %v487 = vadd.f32 0.0, %v486
    %v488 = vpop.f32.mrb[0].mxu0
    %v489 = vpop.f32.mrb[0].mxu0
    %v490 = vadd.f32 0.0, %v489
    %v491 = vpop.f32.mrb[0].mxu0
    %492 = vmatprep.mubr.bf16.mxu0 0
    %493 = vmatmul.mubr.bf16.gmra.mrb[0].mxu0 %v339
    %v494 = vpop.f32.mrb[0].mxu0
    %v495 = vadd.f32 0.0, %v494
    %v496 = vpop.f32.mrb[0].mxu0
    %v497 = vpop.f32.mrb[0].mxu0
    %v498 = vadd.f32 0.0, %v497
    %v499 = vpop.f32.mrb[0].mxu0
    %500 = vmatprep.mubr.bf16.mxu0 0
    %501 = vmatmul.mubr.bf16.gmra.mrb[0].mxu0 %v342
    %v502 = vpop.f32.mrb[0].mxu0
    %v503 = vadd.f32 0.0, %v502
    %v504 = vpop.f32.mrb[0].mxu0
    %v505 = vpop.f32.mrb[0].mxu0
    %v506 = vadd.f32 0.0, %v505
    %v507 = vpop.f32.mrb[0].mxu0
    %508 = vdwg.mxu0
    %v509 = vadd.f32 %v210, %v383
    %v510 = vadd.f32 %v210, %v386
    %v511 = vadd.f32 %v210, %v391
    %v512 = vadd.f32 %v210, %v394
    %v513 = vadd.f32 %v210, %v399
    %v514 = vadd.f32 %v210, %v402
    %v515 = vadd.f32 %v210, %v407
    %v516 = vadd.f32 %v210, %v410
    %v517 = vadd.f32 %v210, %v415
    %v518 = vadd.f32 %v210, %v418
    %v519 = vadd.f32 %v210, %v423
    %v520 = vadd.f32 %v210, %v426
    %v521 = vadd.f32 %v210, %v431
    %v522 = vadd.f32 %v210, %v434
    %v523 = vadd.f32 %v210, %v439
    %v524 = vadd.f32 %v210, %v442
    %v525 = vadd.f32 %v210, %v447
    %v526 = vadd.f32 %v210, %v450
    %v527 = vadd.f32 %v210, %v455
    %v528 = vadd.f32 %v210, %v458
    %v529 = vadd.f32 %v210, %v463
    %v530 = vadd.f32 %v210, %v466
    %v531 = vadd.f32 %v210, %v471
    %v532 = vadd.f32 %v210, %v474
    %v533 = vadd.f32 %v210, %v479
    %v534 = vadd.f32 %v210, %v482
    %v535 = vadd.f32 %v210, %v487
    %v536 = vadd.f32 %v210, %v490
    %v537 = vadd.f32 %v210, %v495
    %v538 = vadd.f32 %v210, %v498
    %v539 = vadd.f32 %v210, %v503
    %v540 = vadd.f32 %v210, %v506
    %v541 = vrot.slane %v171, 6
    %v542 = vrot.slane %v173, 6
    %v543 = vrot.slane %v175, 6
    %v544 = vrot.slane %v177, 6
    %v545 = vrot.slane %v179, 6
    %v546 = vrot.slane %v181, 6
    %v547 = vrot.slane %v183, 6
    %v548 = vrot.slane %v185, 6
    %v549 = vrot.slane %v187, 6
    %v550 = vrot.slane %v189, 6
    %v551 = vrot.slane %v191, 6
    %v552 = vrot.slane %v193, 6
    %v553 = vrot.slane %v195, 6
    %v554 = vrot.slane %v197, 6
    %v555 = vrot.slane %v199, 6
    %v556 = vrot.slane %v201, 6
    %v557 = vrot.slane %v172, 6
    %v558 = vrot.slane %v174, 6
    %v559 = vrot.slane %v176, 6
    %v560 = vrot.slane %v178, 6
    %v561 = vrot.slane %v180, 6
    %v562 = vrot.slane %v182, 6
    %v563 = vrot.slane %v184, 6
    %v564 = vrot.slane %v186, 6
    %v565 = vrot.slane %v188, 6
    %v566 = vrot.slane %v190, 6
    %v567 = vrot.slane %v192, 6
    %v568 = vrot.slane %v194, 6
    %v569 = vrot.slane %v196, 6
    %v570 = vrot.slane %v198, 6
    %v571 = vrot.slane %v200, 6
    %v572 = vrot.slane %v202, 6
    %vm573 = vcmp.lt.s32.totalorder %v244, 2
    %v574 = vsel %vm573, %v541, %v557
    %v575 = vsel %vm573, %v542, %v558
    %v576 = vsel %vm573, %v543, %v559
    %v577 = vsel %vm573, %v544, %v560
    %v578 = vsel %vm573, %v545, %v561
    %v579 = vsel %vm573, %v546, %v562
    %v580 = vsel %vm573, %v547, %v563
    %v581 = vsel %vm573, %v548, %v564
    %v582 = vsel %vm573, %v549, %v565
    %v583 = vsel %vm573, %v550, %v566
    %v584 = vsel %vm573, %v551, %v567
    %v585 = vsel %vm573, %v552, %v568
    %v586 = vsel %vm573, %v553, %v569
    %v587 = vsel %vm573, %v554, %v570
    %v588 = vsel %vm573, %v555, %v571
    %v589 = vsel %vm573, %v556, %v572
    %v590 = vsel %vm573, %v557, %v541
    %v591 = vsel %vm573, %v558, %v542
    %v592 = vsel %vm573, %v559, %v543
    %v593 = vsel %vm573, %v560, %v544
    %v594 = vsel %vm573, %v561, %v545
    %v595 = vsel %vm573, %v562, %v546
    %v596 = vsel %vm573, %v563, %v547
    %v597 = vsel %vm573, %v564, %v548
    %v598 = vsel %vm573, %v565, %v549
    %v599 = vsel %vm573, %v566, %v550
    %v600 = vsel %vm573, %v567, %v551
    %v601 = vsel %vm573, %v568, %v552
    %v602 = vsel %vm573, %v569, %v553
    %v603 = vsel %vm573, %v570, %v554
    %v604 = vsel %vm573, %v571, %v555
    %v605 = vsel %vm573, %v572, %v556
    %v606 = vpack.c.bf16 %v574, %v590
    %v607 = vpack.c.bf16 %v575, %v591
    %v608 = vpack.c.bf16 %v576, %v592
    %v609 = vpack.c.bf16 %v577, %v593
    %v610 = vpack.c.bf16 %v578, %v594
    %v611 = vpack.c.bf16 %v579, %v595
    %v612 = vpack.c.bf16 %v580, %v596
    %v613 = vpack.c.bf16 %v581, %v597
    %v614 = vpack.c.bf16 %v582, %v598
    %v615 = vpack.c.bf16 %v583, %v599
    %v616 = vpack.c.bf16 %v584, %v600
    %v617 = vpack.c.bf16 %v585, %v601
    %v618 = vpack.c.bf16 %v586, %v602
    %v619 = vpack.c.bf16 %v587, %v603
    %v620 = vpack.c.bf16 %v588, %v604
    %v621 = vpack.c.bf16 %v589, %v605
    %s622 = scalar_lea.vmem [#allocation7], 1
    %v623 = vld [vmem:[%s622] sm:$0x1]
    %v625 = vsel %vm295, %v606, 0
    %v628 = vsel %vm295, %v607, 0
    %v631 = vsel %vm295, %v608, 0
    %v634 = vsel %vm295, %v609, 0
    %v637 = vsel %vm295, %v610, 0
    %v640 = vsel %vm295, %v611, 0
    %v643 = vsel %vm295, %v612, 0
    %v646 = vsel %vm295, %v613, 0
    %v649 = vsel %vm295, %v614, 0
    %v652 = vsel %vm295, %v615, 0
    %v655 = vsel %vm295, %v616, 0
    %v658 = vsel %vm295, %v617, 0
    %v661 = vsel %vm295, %v618, 0
    %v664 = vsel %vm295, %v619, 0
    %v667 = vsel %vm295, %v620, 0
    %v670 = vsel %vm295, %v621, 0
    %v673 = vsel %vm344, %v623, 0
    %675 = vmatprep.subr.bf16.mxu0 0
    %676 = vmatpush1.bf16.msra.mxu0 %v673
    %677 = vmatprep.subr.bf16.mxu0 0
    %678 = vmatpush1.bf16.msra.mxu0 0
    %679 = vmatprep.subr.bf16.mxu0 0
    %680 = vmatpush1.bf16.msra.mxu0 0
    %681 = vmatprep.subr.bf16.mxu0 0
    %682 = vmatpush1.bf16.msra.mxu0 0
    %683 = vmatprep.subr.bf16.mxu0 0
    %684 = vmatpush1.bf16.msra.mxu0 0
    %685 = vmatprep.subr.bf16.mxu0 0
    %686 = vmatpush1.bf16.msra.mxu0 0
    %687 = vmatprep.subr.bf16.mxu0 0
    %688 = vmatpush1.bf16.msra.mxu0 0
    %689 = vmatprep.subr.bf16.mxu0 0
    %690 = vmatpush1.bf16.msra.mxu0 0
    %691 = vmatprep.subr.bf16.mxu0 0
    %692 = vmatpush1.bf16.msra.mxu0 0
    %693 = vmatprep.subr.bf16.mxu0 0
    %694 = vmatpush1.bf16.msra.mxu0 0
    %695 = vmatprep.subr.bf16.mxu0 0
    %696 = vmatpush1.bf16.msra.mxu0 0
    %697 = vmatprep.subr.bf16.mxu0 0
    %698 = vmatpush1.bf16.msra.mxu0 0
    %699 = vmatprep.subr.bf16.mxu0 0
    %700 = vmatpush1.bf16.msra.mxu0 0
    %701 = vmatprep.subr.bf16.mxu0 0
    %702 = vmatpush1.bf16.msra.mxu0 0
    %703 = vmatprep.subr.bf16.mxu0 0
    %704 = vmatpush1.bf16.msra.mxu0 0
    %705 = vmatprep.subr.bf16.mxu0 0
    %706 = vmatpush1.bf16.msra.mxu0 0
    %707 = vmatprep.mubr.bf16.mxu0 0
    %708 = vmatmul.mubr.bf16.gmra.mrb[0].mxu0 %v625
    %v709 = vpop.f32.mrb[0].mxu0
    %v710 = vadd.f32 0.0, %v709
    %v711 = vpop.f32.mrb[0].mxu0
    %v712 = vpop.f32.mrb[0].mxu0
    %v713 = vadd.f32 0.0, %v712
    %v714 = vpop.f32.mrb[0].mxu0
    %715 = vmatprep.mubr.bf16.mxu0 0
    %716 = vmatmul.mubr.bf16.gmra.mrb[0].mxu0 %v628
    %v717 = vpop.f32.mrb[0].mxu0
    %v718 = vadd.f32 0.0, %v717
    %v719 = vpop.f32.mrb[0].mxu0
    %v720 = vpop.f32.mrb[0].mxu0
    %v721 = vadd.f32 0.0, %v720
    %v722 = vpop.f32.mrb[0].mxu0
    %723 = vmatprep.mubr.bf16.mxu0 0
    %724 = vmatmul.mubr.bf16.gmra.mrb[0].mxu0 %v631
    %v725 = vpop.f32.mrb[0].mxu0
    %v726 = vadd.f32 0.0, %v725
    %v727 = vpop.f32.mrb[0].mxu0
    %v728 = vpop.f32.mrb[0].mxu0
    %v729 = vadd.f32 0.0, %v728
    %v730 = vpop.f32.mrb[0].mxu0
    %731 = vmatprep.mubr.bf16.mxu0 0
    %732 = vmatmul.mubr.bf16.gmra.mrb[0].mxu0 %v634
    %v733 = vpop.f32.mrb[0].mxu0
    %v734 = vadd.f32 0.0, %v733
    %v735 = vpop.f32.mrb[0].mxu0
    %v736 = vpop.f32.mrb[0].mxu0
    %v737 = vadd.f32 0.0, %v736
    %v738 = vpop.f32.mrb[0].mxu0
    %739 = vmatprep.mubr.bf16.mxu0 0
    %740 = vmatmul.mubr.bf16.gmra.mrb[0].mxu0 %v637
    %v741 = vpop.f32.mrb[0].mxu0
    %v742 = vadd.f32 0.0, %v741
    %v743 = vpop.f32.mrb[0].mxu0
    %v744 = vpop.f32.mrb[0].mxu0
    %v745 = vadd.f32 0.0, %v744
    %v746 = vpop.f32.mrb[0].mxu0
    %747 = vmatprep.mubr.bf16.mxu0 0
    %748 = vmatmul.mubr.bf16.gmra.mrb[0].mxu0 %v640
    %v749 = vpop.f32.mrb[0].mxu0
    %v750 = vadd.f32 0.0, %v749
    %v751 = vpop.f32.mrb[0].mxu0
    %v752 = vpop.f32.mrb[0].mxu0
    %v753 = vadd.f32 0.0, %v752
    %v754 = vpop.f32.mrb[0].mxu0
    %755 = vmatprep.mubr.bf16.mxu0 0
    %756 = vmatmul.mubr.bf16.gmra.mrb[0].mxu0 %v643
    %v757 = vpop.f32.mrb[0].mxu0
    %v758 = vadd.f32 0.0, %v757
    %v759 = vpop.f32.mrb[0].mxu0
    %v760 = vpop.f32.mrb[0].mxu0
    %v761 = vadd.f32 0.0, %v760
    %v762 = vpop.f32.mrb[0].mxu0
    %763 = vmatprep.mubr.bf16.mxu0 0
    %764 = vmatmul.mubr.bf16.gmra.mrb[0].mxu0 %v646
    %v765 = vpop.f32.mrb[0].mxu0
    %v766 = vadd.f32 0.0, %v765
    %v767 = vpop.f32.mrb[0].mxu0
    %v768 = vpop.f32.mrb[0].mxu0
    %v769 = vadd.f32 0.0, %v768
    %v770 = vpop.f32.mrb[0].mxu0
    %771 = vmatprep.mubr.bf16.mxu0 0
    %772 = vmatmul.mubr.bf16.gmra.mrb[0].mxu0 %v649
    %v773 = vpop.f32.mrb[0].mxu0
    %v774 = vadd.f32 0.0, %v773
    %v775 = vpop.f32.mrb[0].mxu0
    %v776 = vpop.f32.mrb[0].mxu0
    %v777 = vadd.f32 0.0, %v776
    %v778 = vpop.f32.mrb[0].mxu0
    %779 = vmatprep.mubr.bf16.mxu0 0
    %780 = vmatmul.mubr.bf16.gmra.mrb[0].mxu0 %v652
    %v781 = vpop.f32.mrb[0].mxu0
    %v782 = vadd.f32 0.0, %v781
    %v783 = vpop.f32.mrb[0].mxu0
    %v784 = vpop.f32.mrb[0].mxu0
    %v785 = vadd.f32 0.0, %v784
    %v786 = vpop.f32.mrb[0].mxu0
    %787 = vmatprep.mubr.bf16.mxu0 0
    %788 = vmatmul.mubr.bf16.gmra.mrb[0].mxu0 %v655
    %v789 = vpop.f32.mrb[0].mxu0
    %v790 = vadd.f32 0.0, %v789
    %v791 = vpop.f32.mrb[0].mxu0
    %v792 = vpop.f32.mrb[0].mxu0
    %v793 = vadd.f32 0.0, %v792
    %v794 = vpop.f32.mrb[0].mxu0
    %795 = vmatprep.mubr.bf16.mxu0 0
    %796 = vmatmul.mubr.bf16.gmra.mrb[0].mxu0 %v658
    %v797 = vpop.f32.mrb[0].mxu0
    %v798 = vadd.f32 0.0, %v797
    %v799 = vpop.f32.mrb[0].mxu0
    %v800 = vpop.f32.mrb[0].mxu0
    %v801 = vadd.f32 0.0, %v800
    %v802 = vpop.f32.mrb[0].mxu0
    %803 = vmatprep.mubr.bf16.mxu0 0
    %804 = vmatmul.mubr.bf16.gmra.mrb[0].mxu0 %v661
    %v805 = vpop.f32.mrb[0].mxu0
    %v806 = vadd.f32 0.0, %v805
    %v807 = vpop.f32.mrb[0].mxu0
    %v808 = vpop.f32.mrb[0].mxu0
    %v809 = vadd.f32 0.0, %v808
    %v810 = vpop.f32.mrb[0].mxu0
    %811 = vmatprep.mubr.bf16.mxu0 0
    %812 = vmatmul.mubr.bf16.gmra.mrb[0].mxu0 %v664
    %v813 = vpop.f32.mrb[0].mxu0
    %v814 = vadd.f32 0.0, %v813
    %v815 = vpop.f32.mrb[0].mxu0
    %v816 = vpop.f32.mrb[0].mxu0
    %v817 = vadd.f32 0.0, %v816
    %v818 = vpop.f32.mrb[0].mxu0
    %819 = vmatprep.mubr.bf16.mxu0 0
    %820 = vmatmul.mubr.bf16.gmra.mrb[0].mxu0 %v667
    %v821 = vpop.f32.mrb[0].mxu0
    %v822 = vadd.f32 0.0, %v821
    %v823 = vpop.f32.mrb[0].mxu0
    %v824 = vpop.f32.mrb[0].mxu0
    %v825 = vadd.f32 0.0, %v824
    %v826 = vpop.f32.mrb[0].mxu0
    %827 = vmatprep.mubr.bf16.mxu0 0
    %828 = vmatmul.mubr.bf16.gmra.mrb[0].mxu0 %v670
    %v829 = vpop.f32.mrb[0].mxu0
    %v830 = vadd.f32 0.0, %v829
    %v831 = vpop.f32.mrb[0].mxu0
    %v832 = vpop.f32.mrb[0].mxu0
    %v833 = vadd.f32 0.0, %v832
    %v834 = vpop.f32.mrb[0].mxu0
    %835 = vdwg.mxu0
    %v836 = vadd.f32 %v509, %v710
    %v837 = vadd.f32 %v510, %v713
    %v838 = vadd.f32 %v511, %v718
    %v839 = vadd.f32 %v512, %v721
    %v840 = vadd.f32 %v513, %v726
    %v841 = vadd.f32 %v514, %v729
    %v842 = vadd.f32 %v515, %v734
    %v843 = vadd.f32 %v516, %v737
    %v844 = vadd.f32 %v517, %v742
    %v845 = vadd.f32 %v518, %v745
    %v846 = vadd.f32 %v519, %v750
    %v847 = vadd.f32 %v520, %v753
    %v848 = vadd.f32 %v521, %v758
    %v849 = vadd.f32 %v522, %v761
    %v850 = vadd.f32 %v523, %v766
    %v851 = vadd.f32 %v524, %v769
    %v852 = vadd.f32 %v525, %v774
    %v853 = vadd.f32 %v526, %v777
    %v854 = vadd.f32 %v527, %v782
    %v855 = vadd.f32 %v528, %v785
    %v856 = vadd.f32 %v529, %v790
    %v857 = vadd.f32 %v530, %v793
    %v858 = vadd.f32 %v531, %v798
    %v859 = vadd.f32 %v532, %v801
    %v860 = vadd.f32 %v533, %v806
    %v861 = vadd.f32 %v534, %v809
    %v862 = vadd.f32 %v535, %v814
    %v863 = vadd.f32 %v536, %v817
    %v864 = vadd.f32 %v537, %v822
    %v865 = vadd.f32 %v538, %v825
    %v866 = vadd.f32 %v539, %v830
    %v867 = vadd.f32 %v540, %v833
    %v868 = vrot.slane %v171, 7
    %v869 = vrot.slane %v173, 7
    %v870 = vrot.slane %v175, 7
    %v871 = vrot.slane %v177, 7
    %v872 = vrot.slane %v179, 7
    %v873 = vrot.slane %v181, 7
    %v874 = vrot.slane %v183, 7
    %v875 = vrot.slane %v185, 7
    %v876 = vrot.slane %v187, 7
    %v877 = vrot.slane %v189, 7
    %v878 = vrot.slane %v191, 7
    %v879 = vrot.slane %v193, 7
    %v880 = vrot.slane %v195, 7
    %v881 = vrot.slane %v197, 7
    %v882 = vrot.slane %v199, 7
    %v883 = vrot.slane %v201, 7
    %v884 = vrot.slane %v172, 7
    %v885 = vrot.slane %v174, 7
    %v886 = vrot.slane %v176, 7
    %v887 = vrot.slane %v178, 7
    %v888 = vrot.slane %v180, 7
    %v889 = vrot.slane %v182, 7
    %v890 = vrot.slane %v184, 7
    %v891 = vrot.slane %v186, 7
    %v892 = vrot.slane %v188, 7
    %v893 = vrot.slane %v190, 7
    %v894 = vrot.slane %v192, 7
    %v895 = vrot.slane %v194, 7
    %v896 = vrot.slane %v196, 7
    %v897 = vrot.slane %v198, 7
    %v898 = vrot.slane %v200, 7
    %v899 = vrot.slane %v202, 7
    %vm900 = vcmp.lt.s32.totalorder %v244, 1
    %v901 = vsel %vm900, %v868, %v884
    %v902 = vsel %vm900, %v869, %v885
    %v903 = vsel %vm900, %v870, %v886
    %v904 = vsel %vm900, %v871, %v887
    %v905 = vsel %vm900, %v872, %v888
    %v906 = vsel %vm900, %v873, %v889
    %v907 = vsel %vm900, %v874, %v890
    %v908 = vsel %vm900, %v875, %v891
    %v909 = vsel %vm900, %v876, %v892
    %v910 = vsel %vm900, %v877, %v893
    %v911 = vsel %vm900, %v878, %v894
    %v912 = vsel %vm900, %v879, %v895
    %v913 = vsel %vm900, %v880, %v896
    %v914 = vsel %vm900, %v881, %v897
    %v915 = vsel %vm900, %v882, %v898
    %v916 = vsel %vm900, %v883, %v899
    %v917 = vsel %vm900, %v884, %v868
    %v918 = vsel %vm900, %v885, %v869
    %v919 = vsel %vm900, %v886, %v870
    %v920 = vsel %vm900, %v887, %v871
    %v921 = vsel %vm900, %v888, %v872
    %v922 = vsel %vm900, %v889, %v873
    %v923 = vsel %vm900, %v890, %v874
    %v924 = vsel %vm900, %v891, %v875
    %v925 = vsel %vm900, %v892, %v876
    %v926 = vsel %vm900, %v893, %v877
    %v927 = vsel %vm900, %v894, %v878
    %v928 = vsel %vm900, %v895, %v879
    %v929 = vsel %vm900, %v896, %v880
    %v930 = vsel %vm900, %v897, %v881
    %v931 = vsel %vm900, %v898, %v882
    %v932 = vsel %vm900, %v899, %v883
    %v933 = vpack.c.bf16 %v901, %v917
    %v934 = vpack.c.bf16 %v902, %v918
    %v935 = vpack.c.bf16 %v903, %v919
    %v936 = vpack.c.bf16 %v904, %v920
    %v937 = vpack.c.bf16 %v905, %v921
    %v938 = vpack.c.bf16 %v906, %v922
    %v939 = vpack.c.bf16 %v907, %v923
    %v940 = vpack.c.bf16 %v908, %v924
    %v941 = vpack.c.bf16 %v909, %v925
    %v942 = vpack.c.bf16 %v910, %v926
    %v943 = vpack.c.bf16 %v911, %v927
    %v944 = vpack.c.bf16 %v912, %v928
    %v945 = vpack.c.bf16 %v913, %v929
    %v946 = vpack.c.bf16 %v914, %v930
    %v947 = vpack.c.bf16 %v915, %v931
    %v948 = vpack.c.bf16 %v916, %v932
    %s949 = scalar_lea.vmem [#allocation7], 2
    %v950 = vld [vmem:[%s949] sm:$0x1]
    %v952 = vsel %vm295, %v933, 0
    %v955 = vsel %vm295, %v934, 0
    %v958 = vsel %vm295, %v935, 0
    %v961 = vsel %vm295, %v936, 0
    %v964 = vsel %vm295, %v937, 0
    %v967 = vsel %vm295, %v938, 0
    %v970 = vsel %vm295, %v939, 0
    %v973 = vsel %vm295, %v940, 0
    %v976 = vsel %vm295, %v941, 0
    %v979 = vsel %vm295, %v942, 0
    %v982 = vsel %vm295, %v943, 0
    %v985 = vsel %vm295, %v944, 0
    %v988 = vsel %vm295, %v945, 0
    %v991 = vsel %vm295, %v946, 0
    %v994 = vsel %vm295, %v947, 0
    %v997 = vsel %vm295, %v948, 0
    %v1000 = vsel %vm344, %v950, 0
    %1002 = vmatprep.subr.bf16.mxu0 0
    %1003 = vmatpush1.bf16.msra.mxu0 %v1000
    %1004 = vmatprep.subr.bf16.mxu0 0
    %1005 = vmatpush1.bf16.msra.mxu0 0
    %1006 = vmatprep.subr.bf16.mxu0 0
    %1007 = vmatpush1.bf16.msra.mxu0 0
    %1008 = vmatprep.subr.bf16.mxu0 0
    %1009 = vmatpush1.bf16.msra.mxu0 0
    %1010 = vmatprep.subr.bf16.mxu0 0
    %1011 = vmatpush1.bf16.msra.mxu0 0
    %1012 = vmatprep.subr.bf16.mxu0 0
    %1013 = vmatpush1.bf16.msra.mxu0 0
    %1014 = vmatprep.subr.bf16.mxu0 0
    %1015 = vmatpush1.bf16.msra.mxu0 0
    %1016 = vmatprep.subr.bf16.mxu0 0
    %1017 = vmatpush1.bf16.msra.mxu0 0
    %1018 = vmatprep.subr.bf16.mxu0 0
    %1019 = vmatpush1.bf16.msra.mxu0 0
    %1020 = vmatprep.subr.bf16.mxu0 0
    %1021 = vmatpush1.bf16.msra.mxu0 0
    %1022 = vmatprep.subr.bf16.mxu0 0
    %1023 = vmatpush1.bf16.msra.mxu0 0
    %1024 = vmatprep.subr.bf16.mxu0 0
    %1025 = vmatpush1.bf16.msra.mxu0 0
    %1026 = vmatprep.subr.bf16.mxu0 0
    %1027 = vmatpush1.bf16.msra.mxu0 0
    %1028 = vmatprep.subr.bf16.mxu0 0
    %1029 = vmatpush1.bf16.msra.mxu0 0
    %1030 = vmatprep.subr.bf16.mxu0 0
    %1031 = vmatpush1.bf16.msra.mxu0 0
    %1032 = vmatprep.subr.bf16.mxu0 0
    %1033 = vmatpush1.bf16.msra.mxu0 0
    %1034 = vmatprep.mubr.bf16.mxu0 0
    %1035 = vmatmul.mubr.bf16.gmra.mrb[0].mxu0 %v952
    %v1036 = vpop.f32.mrb[0].mxu0
    %v1037 = vadd.f32 0.0, %v1036
    %v1038 = vpop.f32.mrb[0].mxu0
    %v1039 = vpop.f32.mrb[0].mxu0
    %v1040 = vadd.f32 0.0, %v1039
    %v1041 = vpop.f32.mrb[0].mxu0
    %1042 = vmatprep.mubr.bf16.mxu0 0
    %1043 = vmatmul.mubr.bf16.gmra.mrb[0].mxu0 %v955
    %v1044 = vpop.f32.mrb[0].mxu0
    %v1045 = vadd.f32 0.0, %v1044
    %v1046 = vpop.f32.mrb[0].mxu0
    %v1047 = vpop.f32.mrb[0].mxu0
    %v1048 = vadd.f32 0.0, %v1047
    %v1049 = vpop.f32.mrb[0].mxu0
    %1050 = vmatprep.mubr.bf16.mxu0 0
    %1051 = vmatmul.mubr.bf16.gmra.mrb[0].mxu0 %v958
    %v1052 = vpop.f32.mrb[0].mxu0
    %v1053 = vadd.f32 0.0, %v1052
    %v1054 = vpop.f32.mrb[0].mxu0
    %v1055 = vpop.f32.mrb[0].mxu0
    %v1056 = vadd.f32 0.0, %v1055
    %v1057 = vpop.f32.mrb[0].mxu0
    %1058 = vmatprep.mubr.bf16.mxu0 0
    %1059 = vmatmul.mubr.bf16.gmra.mrb[0].mxu0 %v961
    %v1060 = vpop.f32.mrb[0].mxu0
    %v1061 = vadd.f32 0.0, %v1060
    %v1062 = vpop.f32.mrb[0].mxu0
    %v1063 = vpop.f32.mrb[0].mxu0
    %v1064 = vadd.f32 0.0, %v1063
    %v1065 = vpop.f32.mrb[0].mxu0
    %1066 = vmatprep.mubr.bf16.mxu0 0
    %1067 = vmatmul.mubr.bf16.gmra.mrb[0].mxu0 %v964
    %v1068 = vpop.f32.mrb[0].mxu0
    %v1069 = vadd.f32 0.0, %v1068
    %v1070 = vpop.f32.mrb[0].mxu0
    %v1071 = vpop.f32.mrb[0].mxu0
    %v1072 = vadd.f32 0.0, %v1071
    %v1073 = vpop.f32.mrb[0].mxu0
    %1074 = vmatprep.mubr.bf16.mxu0 0
    %1075 = vmatmul.mubr.bf16.gmra.mrb[0].mxu0 %v967
    %v1076 = vpop.f32.mrb[0].mxu0
    %v1077 = vadd.f32 0.0, %v1076
    %v1078 = vpop.f32.mrb[0].mxu0
    %v1079 = vpop.f32.mrb[0].mxu0
    %v1080 = vadd.f32 0.0, %v1079
    %v1081 = vpop.f32.mrb[0].mxu0
    %1082 = vmatprep.mubr.bf16.mxu0 0
    %1083 = vmatmul.mubr.bf16.gmra.mrb[0].mxu0 %v970
    %v1084 = vpop.f32.mrb[0].mxu0
    %v1085 = vadd.f32 0.0, %v1084
    %v1086 = vpop.f32.mrb[0].mxu0
    %v1087 = vpop.f32.mrb[0].mxu0
    %v1088 = vadd.f32 0.0, %v1087
    %v1089 = vpop.f32.mrb[0].mxu0
    %1090 = vmatprep.mubr.bf16.mxu0 0
    %1091 = vmatmul.mubr.bf16.gmra.mrb[0].mxu0 %v973
    %v1092 = vpop.f32.mrb[0].mxu0
    %v1093 = vadd.f32 0.0, %v1092
    %v1094 = vpop.f32.mrb[0].mxu0
    %v1095 = vpop.f32.mrb[0].mxu0
    %v1096 = vadd.f32 0.0, %v1095
    %v1097 = vpop.f32.mrb[0].mxu0
    %1098 = vmatprep.mubr.bf16.mxu0 0
    %1099 = vmatmul.mubr.bf16.gmra.mrb[0].mxu0 %v976
    %v1100 = vpop.f32.mrb[0].mxu0
    %v1101 = vadd.f32 0.0, %v1100
    %v1102 = vpop.f32.mrb[0].mxu0
    %v1103 = vpop.f32.mrb[0].mxu0
    %v1104 = vadd.f32 0.0, %v1103
    %v1105 = vpop.f32.mrb[0].mxu0
    %1106 = vmatprep.mubr.bf16.mxu0 0
    %1107 = vmatmul.mubr.bf16.gmra.mrb[0].mxu0 %v979
    %v1108 = vpop.f32.mrb[0].mxu0
    %v1109 = vadd.f32 0.0, %v1108
    %v1110 = vpop.f32.mrb[0].mxu0
    %v1111 = vpop.f32.mrb[0].mxu0
    %v1112 = vadd.f32 0.0, %v1111
    %v1113 = vpop.f32.mrb[0].mxu0
    %1114 = vmatprep.mubr.bf16.mxu0 0
    %1115 = vmatmul.mubr.bf16.gmra.mrb[0].mxu0 %v982
    %v1116 = vpop.f32.mrb[0].mxu0
    %v1117 = vadd.f32 0.0, %v1116
    %v1118 = vpop.f32.mrb[0].mxu0
    %v1119 = vpop.f32.mrb[0].mxu0
    %v1120 = vadd.f32 0.0, %v1119
    %v1121 = vpop.f32.mrb[0].mxu0
    %1122 = vmatprep.mubr.bf16.mxu0 0
    %1123 = vmatmul.mubr.bf16.gmra.mrb[0].mxu0 %v985
    %v1124 = vpop.f32.mrb[0].mxu0
    %v1125 = vadd.f32 0.0, %v1124
    %v1126 = vpop.f32.mrb[0].mxu0
    %v1127 = vpop.f32.mrb[0].mxu0
    %v1128 = vadd.f32 0.0, %v1127
    %v1129 = vpop.f32.mrb[0].mxu0
    %1130 = vmatprep.mubr.bf16.mxu0 0
    %1131 = vmatmul.mubr.bf16.gmra.mrb[0].mxu0 %v988
    %v1132 = vpop.f32.mrb[0].mxu0
    %v1133 = vadd.f32 0.0, %v1132
    %v1134 = vpop.f32.mrb[0].mxu0
    %v1135 = vpop.f32.mrb[0].mxu0
    %v1136 = vadd.f32 0.0, %v1135
    %v1137 = vpop.f32.mrb[0].mxu0
    %1138 = vmatprep.mubr.bf16.mxu0 0
    %1139 = vmatmul.mubr.bf16.gmra.mrb[0].mxu0 %v991
    %v1140 = vpop.f32.mrb[0].mxu0
    %v1141 = vadd.f32 0.0, %v1140
    %v1142 = vpop.f32.mrb[0].mxu0
    %v1143 = vpop.f32.mrb[0].mxu0
    %v1144 = vadd.f32 0.0, %v1143
    %v1145 = vpop.f32.mrb[0].mxu0
    %1146 = vmatprep.mubr.bf16.mxu0 0
    %1147 = vmatmul.mubr.bf16.gmra.mrb[0].mxu0 %v994
    %v1148 = vpop.f32.mrb[0].mxu0
    %v1149 = vadd.f32 0.0, %v1148
    %v1150 = vpop.f32.mrb[0].mxu0
    %v1151 = vpop.f32.mrb[0].mxu0
    %v1152 = vadd.f32 0.0, %v1151
    %v1153 = vpop.f32.mrb[0].mxu0
    %1154 = vmatprep.mubr.bf16.mxu0 0
    %1155 = vmatmul.mubr.bf16.gmra.mrb[0].mxu0 %v997
    %v1156 = vpop.f32.mrb[0].mxu0
    %v1157 = vadd.f32 0.0, %v1156
    %v1158 = vpop.f32.mrb[0].mxu0
    %v1159 = vpop.f32.mrb[0].mxu0
    %v1160 = vadd.f32 0.0, %v1159
    %v1161 = vpop.f32.mrb[0].mxu0
    %1162 = vdwg.mxu0
    %v1163 = vadd.f32 %v836, %v1037
    %v1164 = vadd.f32 %v837, %v1040
    %v1165 = vadd.f32 %v838, %v1045
    %v1166 = vadd.f32 %v839, %v1048
    %v1167 = vadd.f32 %v840, %v1053
    %v1168 = vadd.f32 %v841, %v1056
    %v1169 = vadd.f32 %v842, %v1061
    %v1170 = vadd.f32 %v843, %v1064
    %v1171 = vadd.f32 %v844, %v1069
    %v1172 = vadd.f32 %v845, %v1072
    %v1173 = vadd.f32 %v846, %v1077
    %v1174 = vadd.f32 %v847, %v1080
    %v1175 = vadd.f32 %v848, %v1085
    %v1176 = vadd.f32 %v849, %v1088
    %v1177 = vadd.f32 %v850, %v1093
    %v1178 = vadd.f32 %v851, %v1096
    %v1179 = vadd.f32 %v852, %v1101
    %v1180 = vadd.f32 %v853, %v1104
    %v1181 = vadd.f32 %v854, %v1109
    %v1182 = vadd.f32 %v855, %v1112
    %v1183 = vadd.f32 %v856, %v1117
    %v1184 = vadd.f32 %v857, %v1120
    %v1185 = vadd.f32 %v858, %v1125
    %v1186 = vadd.f32 %v859, %v1128
    %v1187 = vadd.f32 %v860, %v1133
    %v1188 = vadd.f32 %v861, %v1136
    %v1189 = vadd.f32 %v862, %v1141
    %v1190 = vadd.f32 %v863, %v1144
    %v1191 = vadd.f32 %v864, %v1149
    %v1192 = vadd.f32 %v865, %v1152
    %v1193 = vadd.f32 %v866, %v1157
    %v1194 = vadd.f32 %v867, %v1160
    %v1195 = vpack.c.bf16 %v172, %v171
    %v1196 = vpack.c.bf16 %v174, %v173
    %v1197 = vpack.c.bf16 %v176, %v175
    %v1198 = vpack.c.bf16 %v178, %v177
    %v1199 = vpack.c.bf16 %v180, %v179
    %v1200 = vpack.c.bf16 %v182, %v181
    %v1201 = vpack.c.bf16 %v184, %v183
    %v1202 = vpack.c.bf16 %v186, %v185
    %v1203 = vpack.c.bf16 %v188, %v187
    %v1204 = vpack.c.bf16 %v190, %v189
    %v1205 = vpack.c.bf16 %v192, %v191
    %v1206 = vpack.c.bf16 %v194, %v193
    %v1207 = vpack.c.bf16 %v196, %v195
    %v1208 = vpack.c.bf16 %v198, %v197
    %v1209 = vpack.c.bf16 %v200, %v199
    %v1210 = vpack.c.bf16 %v202, %v201
    %s1211 = scalar_lea.vmem [#allocation7], 3
    %v1212 = vld [vmem:[%s1211] sm:$0x1]
    %v1214 = vsel %vm295, %v1195, 0
    %v1217 = vsel %vm295, %v1196, 0
    %v1220 = vsel %vm295, %v1197, 0
    %v1223 = vsel %vm295, %v1198, 0
    %v1226 = vsel %vm295, %v1199, 0
    %v1229 = vsel %vm295, %v1200, 0
    %v1232 = vsel %vm295, %v1201, 0
    %v1235 = vsel %vm295, %v1202, 0
    %v1238 = vsel %vm295, %v1203, 0
    %v1241 = vsel %vm295, %v1204, 0
    %v1244 = vsel %vm295, %v1205, 0
    %v1247 = vsel %vm295, %v1206, 0
    %v1250 = vsel %vm295, %v1207, 0
    %v1253 = vsel %vm295, %v1208, 0
    %v1256 = vsel %vm295, %v1209, 0
    %v1259 = vsel %vm295, %v1210, 0
    %v1262 = vsel %vm344, %v1212, 0
    %1264 = vmatprep.subr.bf16.mxu0 0
    %1265 = vmatpush1.bf16.msra.mxu0 %v1262
    %1266 = vmatprep.subr.bf16.mxu0 0
    %1267 = vmatpush1.bf16.msra.mxu0 0
    %1268 = vmatprep.subr.bf16.mxu0 0
    %1269 = vmatpush1.bf16.msra.mxu0 0
    %1270 = vmatprep.subr.bf16.mxu0 0
    %1271 = vmatpush1.bf16.msra.mxu0 0
    %1272 = vmatprep.subr.bf16.mxu0 0
    %1273 = vmatpush1.bf16.msra.mxu0 0
    %1274 = vmatprep.subr.bf16.mxu0 0
    %1275 = vmatpush1.bf16.msra.mxu0 0
    %1276 = vmatprep.subr.bf16.mxu0 0
    %1277 = vmatpush1.bf16.msra.mxu0 0
    %1278 = vmatprep.subr.bf16.mxu0 0
    %1279 = vmatpush1.bf16.msra.mxu0 0
    %1280 = vmatprep.subr.bf16.mxu0 0
    %1281 = vmatpush1.bf16.msra.mxu0 0
    %1282 = vmatprep.subr.bf16.mxu0 0
    %1283 = vmatpush1.bf16.msra.mxu0 0
    %1284 = vmatprep.subr.bf16.mxu0 0
    %1285 = vmatpush1.bf16.msra.mxu0 0
    %1286 = vmatprep.subr.bf16.mxu0 0
    %1287 = vmatpush1.bf16.msra.mxu0 0
    %1288 = vmatprep.subr.bf16.mxu0 0
    %1289 = vmatpush1.bf16.msra.mxu0 0
    %1290 = vmatprep.subr.bf16.mxu0 0
    %1291 = vmatpush1.bf16.msra.mxu0 0
    %1292 = vmatprep.subr.bf16.mxu0 0
    %1293 = vmatpush1.bf16.msra.mxu0 0
    %1294 = vmatprep.subr.bf16.mxu0 0
    %1295 = vmatpush1.bf16.msra.mxu0 0
    %1296 = vmatprep.mubr.bf16.mxu0 0
    %1297 = vmatmul.mubr.bf16.gmra.mrb[0].mxu0 %v1214
    %v1298 = vpop.f32.mrb[0].mxu0
    %v1299 = vadd.f32 0.0, %v1298
    %v1300 = vpop.f32.mrb[0].mxu0
    %v1301 = vpop.f32.mrb[0].mxu0
    %v1302 = vadd.f32 0.0, %v1301
    %v1303 = vpop.f32.mrb[0].mxu0
    %1304 = vmatprep.mubr.bf16.mxu0 0
    %1305 = vmatmul.mubr.bf16.gmra.mrb[0].mxu0 %v1217
    %v1306 = vpop.f32.mrb[0].mxu0
    %v1307 = vadd.f32 0.0, %v1306
    %v1308 = vpop.f32.mrb[0].mxu0
    %v1309 = vpop.f32.mrb[0].mxu0
    %v1310 = vadd.f32 0.0, %v1309
    %v1311 = vpop.f32.mrb[0].mxu0
    %1312 = vmatprep.mubr.bf16.mxu0 0
    %1313 = vmatmul.mubr.bf16.gmra.mrb[0].mxu0 %v1220
    %v1314 = vpop.f32.mrb[0].mxu0
    %v1315 = vadd.f32 0.0, %v1314
    %v1316 = vpop.f32.mrb[0].mxu0
    %v1317 = vpop.f32.mrb[0].mxu0
    %v1318 = vadd.f32 0.0, %v1317
    %v1319 = vpop.f32.mrb[0].mxu0
    %1320 = vmatprep.mubr.bf16.mxu0 0
    %1321 = vmatmul.mubr.bf16.gmra.mrb[0].mxu0 %v1223
    %v1322 = vpop.f32.mrb[0].mxu0
    %v1323 = vadd.f32 0.0, %v1322
    %v1324 = vpop.f32.mrb[0].mxu0
    %v1325 = vpop.f32.mrb[0].mxu0
    %v1326 = vadd.f32 0.0, %v1325
    %v1327 = vpop.f32.mrb[0].mxu0
    %1328 = vmatprep.mubr.bf16.mxu0 0
    %1329 = vmatmul.mubr.bf16.gmra.mrb[0].mxu0 %v1226
    %v1330 = vpop.f32.mrb[0].mxu0
    %v1331 = vadd.f32 0.0, %v1330
    %v1332 = vpop.f32.mrb[0].mxu0
    %v1333 = vpop.f32.mrb[0].mxu0
    %v1334 = vadd.f32 0.0, %v1333
    %v1335 = vpop.f32.mrb[0].mxu0
    %1336 = vmatprep.mubr.bf16.mxu0 0
    %1337 = vmatmul.mubr.bf16.gmra.mrb[0].mxu0 %v1229
    %v1338 = vpop.f32.mrb[0].mxu0
    %v1339 = vadd.f32 0.0, %v1338
    %v1340 = vpop.f32.mrb[0].mxu0
    %v1341 = vpop.f32.mrb[0].mxu0
    %v1342 = vadd.f32 0.0, %v1341
    %v1343 = vpop.f32.mrb[0].mxu0
    %1344 = vmatprep.mubr.bf16.mxu0 0
    %1345 = vmatmul.mubr.bf16.gmra.mrb[0].mxu0 %v1232
    %v1346 = vpop.f32.mrb[0].mxu0
    %v1347 = vadd.f32 0.0, %v1346
    %v1348 = vpop.f32.mrb[0].mxu0
    %v1349 = vpop.f32.mrb[0].mxu0
    %v1350 = vadd.f32 0.0, %v1349
    %v1351 = vpop.f32.mrb[0].mxu0
    %1352 = vmatprep.mubr.bf16.mxu0 0
    %1353 = vmatmul.mubr.bf16.gmra.mrb[0].mxu0 %v1235
    %v1354 = vpop.f32.mrb[0].mxu0
    %v1355 = vadd.f32 0.0, %v1354
    %v1356 = vpop.f32.mrb[0].mxu0
    %v1357 = vpop.f32.mrb[0].mxu0
    %v1358 = vadd.f32 0.0, %v1357
    %v1359 = vpop.f32.mrb[0].mxu0
    %1360 = vmatprep.mubr.bf16.mxu0 0
    %1361 = vmatmul.mubr.bf16.gmra.mrb[0].mxu0 %v1238
    %v1362 = vpop.f32.mrb[0].mxu0
    %v1363 = vadd.f32 0.0, %v1362
    %v1364 = vpop.f32.mrb[0].mxu0
    %v1365 = vpop.f32.mrb[0].mxu0
    %v1366 = vadd.f32 0.0, %v1365
    %v1367 = vpop.f32.mrb[0].mxu0
    %1368 = vmatprep.mubr.bf16.mxu0 0
    %1369 = vmatmul.mubr.bf16.gmra.mrb[0].mxu0 %v1241
    %v1370 = vpop.f32.mrb[0].mxu0
    %v1371 = vadd.f32 0.0, %v1370
    %v1372 = vpop.f32.mrb[0].mxu0
    %v1373 = vpop.f32.mrb[0].mxu0
    %v1374 = vadd.f32 0.0, %v1373
    %v1375 = vpop.f32.mrb[0].mxu0
    %1376 = vmatprep.mubr.bf16.mxu0 0
    %1377 = vmatmul.mubr.bf16.gmra.mrb[0].mxu0 %v1244
    %v1378 = vpop.f32.mrb[0].mxu0
    %v1379 = vadd.f32 0.0, %v1378
    %v1380 = vpop.f32.mrb[0].mxu0
    %v1381 = vpop.f32.mrb[0].mxu0
    %v1382 = vadd.f32 0.0, %v1381
    %v1383 = vpop.f32.mrb[0].mxu0
    %1384 = vmatprep.mubr.bf16.mxu0 0
    %1385 = vmatmul.mubr.bf16.gmra.mrb[0].mxu0 %v1247
    %v1386 = vpop.f32.mrb[0].mxu0
    %v1387 = vadd.f32 0.0, %v1386
    %v1388 = vpop.f32.mrb[0].mxu0
    %v1389 = vpop.f32.mrb[0].mxu0
    %v1390 = vadd.f32 0.0, %v1389
    %v1391 = vpop.f32.mrb[0].mxu0
    %1392 = vmatprep.mubr.bf16.mxu0 0
    %1393 = vmatmul.mubr.bf16.gmra.mrb[0].mxu0 %v1250
    %v1394 = vpop.f32.mrb[0].mxu0
    %v1395 = vadd.f32 0.0, %v1394
    %v1396 = vpop.f32.mrb[0].mxu0
    %v1397 = vpop.f32.mrb[0].mxu0
    %v1398 = vadd.f32 0.0, %v1397
    %v1399 = vpop.f32.mrb[0].mxu0
    %1400 = vmatprep.mubr.bf16.mxu0 0
    %1401 = vmatmul.mubr.bf16.gmra.mrb[0].mxu0 %v1253
    %v1402 = vpop.f32.mrb[0].mxu0
    %v1403 = vadd.f32 0.0, %v1402
    %v1404 = vpop.f32.mrb[0].mxu0
    %v1405 = vpop.f32.mrb[0].mxu0
    %v1406 = vadd.f32 0.0, %v1405
    %v1407 = vpop.f32.mrb[0].mxu0
    %1408 = vmatprep.mubr.bf16.mxu0 0
    %1409 = vmatmul.mubr.bf16.gmra.mrb[0].mxu0 %v1256
    %v1410 = vpop.f32.mrb[0].mxu0
    %v1411 = vadd.f32 0.0, %v1410
    %v1412 = vpop.f32.mrb[0].mxu0
    %v1413 = vpop.f32.mrb[0].mxu0
    %v1414 = vadd.f32 0.0, %v1413
    %v1415 = vpop.f32.mrb[0].mxu0
    %1416 = vmatprep.mubr.bf16.mxu0 0
    %1417 = vmatmul.mubr.bf16.gmra.mrb[0].mxu0 %v1259
    %v1418 = vpop.f32.mrb[0].mxu0
    %v1419 = vadd.f32 0.0, %v1418
    %v1420 = vpop.f32.mrb[0].mxu0
    %v1421 = vpop.f32.mrb[0].mxu0
    %v1422 = vadd.f32 0.0, %v1421
    %v1423 = vpop.f32.mrb[0].mxu0
    %1424 = vdwg.mxu0
    %v1425 = vadd.f32 %v1163, %v1299
    %v1426 = vadd.f32 %v1164, %v1302
    %v1427 = vadd.f32 %v1165, %v1307
    %v1428 = vadd.f32 %v1166, %v1310
    %v1429 = vadd.f32 %v1167, %v1315
    %v1430 = vadd.f32 %v1168, %v1318
    %v1431 = vadd.f32 %v1169, %v1323
    %v1432 = vadd.f32 %v1170, %v1326
    %v1433 = vadd.f32 %v1171, %v1331
    %v1434 = vadd.f32 %v1172, %v1334
    %v1435 = vadd.f32 %v1173, %v1339
    %v1436 = vadd.f32 %v1174, %v1342
    %v1437 = vadd.f32 %v1175, %v1347
    %v1438 = vadd.f32 %v1176, %v1350
    %v1439 = vadd.f32 %v1177, %v1355
    %v1440 = vadd.f32 %v1178, %v1358
    %v1441 = vadd.f32 %v1179, %v1363
    %v1442 = vadd.f32 %v1180, %v1366
    %v1443 = vadd.f32 %v1181, %v1371
    %v1444 = vadd.f32 %v1182, %v1374
    %v1445 = vadd.f32 %v1183, %v1379
    %v1446 = vadd.f32 %v1184, %v1382
    %v1447 = vadd.f32 %v1185, %v1387
    %v1448 = vadd.f32 %v1186, %v1390
    %v1449 = vadd.f32 %v1187, %v1395
    %v1450 = vadd.f32 %v1188, %v1398
    %v1451 = vadd.f32 %v1189, %v1403
    %v1452 = vadd.f32 %v1190, %v1406
    %v1453 = vadd.f32 %v1191, %v1411
    %v1454 = vadd.f32 %v1192, %v1414
    %v1455 = vadd.f32 %v1193, %v1419
    %v1456 = vadd.f32 %v1194, %v1422
    %v1457 = vrot.slane %v171, 1
    %v1458 = vrot.slane %v173, 1
    %v1459 = vrot.slane %v175, 1
    %v1460 = vrot.slane %v177, 1
    %v1461 = vrot.slane %v179, 1
    %v1462 = vrot.slane %v181, 1
    %v1463 = vrot.slane %v183, 1
    %v1464 = vrot.slane %v185, 1
    %v1465 = vrot.slane %v187, 1
    %v1466 = vrot.slane %v189, 1
    %v1467 = vrot.slane %v191, 1
    %v1468 = vrot.slane %v193, 1
    %v1469 = vrot.slane %v195, 1
    %v1470 = vrot.slane %v197, 1
    %v1471 = vrot.slane %v199, 1
    %v1472 = vrot.slane %v201, 1
    %v1473 = vrot.slane %v172, 1
    %v1474 = vrot.slane %v174, 1
    %v1475 = vrot.slane %v176, 1
    %v1476 = vrot.slane %v178, 1
    %v1477 = vrot.slane %v180, 1
    %v1478 = vrot.slane %v182, 1
    %v1479 = vrot.slane %v184, 1
    %v1480 = vrot.slane %v186, 1
    %v1481 = vrot.slane %v188, 1
    %v1482 = vrot.slane %v190, 1
    %v1483 = vrot.slane %v192, 1
    %v1484 = vrot.slane %v194, 1
    %v1485 = vrot.slane %v196, 1
    %v1486 = vrot.slane %v198, 1
    %v1487 = vrot.slane %v200, 1
    %v1488 = vrot.slane %v202, 1
    %vm1489 = vcmp.lt.s32.totalorder %v244, 7
    %v1490 = vsel %vm1489, %v1457, %v1473
    %v1491 = vsel %vm1489, %v1458, %v1474
    %v1492 = vsel %vm1489, %v1459, %v1475
    %v1493 = vsel %vm1489, %v1460, %v1476
    %v1494 = vsel %vm1489, %v1461, %v1477
    %v1495 = vsel %vm1489, %v1462, %v1478
    %v1496 = vsel %vm1489, %v1463, %v1479
    %v1497 = vsel %vm1489, %v1464, %v1480
    %v1498 = vsel %vm1489, %v1465, %v1481
    %v1499 = vsel %vm1489, %v1466, %v1482
    %v1500 = vsel %vm1489, %v1467, %v1483
    %v1501 = vsel %vm1489, %v1468, %v1484
    %v1502 = vsel %vm1489, %v1469, %v1485
    %v1503 = vsel %vm1489, %v1470, %v1486
    %v1504 = vsel %vm1489, %v1471, %v1487
    %v1505 = vsel %vm1489, %v1472, %v1488
    %v1506 = vsel %vm1489, %v1473, %v1457
    %v1507 = vsel %vm1489, %v1474, %v1458
    %v1508 = vsel %vm1489, %v1475, %v1459
    %v1509 = vsel %vm1489, %v1476, %v1460
    %v1510 = vsel %vm1489, %v1477, %v1461
    %v1511 = vsel %vm1489, %v1478, %v1462
    %v1512 = vsel %vm1489, %v1479, %v1463
    %v1513 = vsel %vm1489, %v1480, %v1464
    %v1514 = vsel %vm1489, %v1481, %v1465
    %v1515 = vsel %vm1489, %v1482, %v1466
    %v1516 = vsel %vm1489, %v1483, %v1467
    %v1517 = vsel %vm1489, %v1484, %v1468
    %v1518 = vsel %vm1489, %v1485, %v1469
    %v1519 = vsel %vm1489, %v1486, %v1470
    %v1520 = vsel %vm1489, %v1487, %v1471
    %v1521 = vsel %vm1489, %v1488, %v1472
    %v1522 = vpack.c.bf16 %v1506, %v1490
    %v1523 = vpack.c.bf16 %v1507, %v1491
    %v1524 = vpack.c.bf16 %v1508, %v1492
    %v1525 = vpack.c.bf16 %v1509, %v1493
    %v1526 = vpack.c.bf16 %v1510, %v1494
    %v1527 = vpack.c.bf16 %v1511, %v1495
    %v1528 = vpack.c.bf16 %v1512, %v1496
    %v1529 = vpack.c.bf16 %v1513, %v1497
    %v1530 = vpack.c.bf16 %v1514, %v1498
    %v1531 = vpack.c.bf16 %v1515, %v1499
    %v1532 = vpack.c.bf16 %v1516, %v1500
    %v1533 = vpack.c.bf16 %v1517, %v1501
    %v1534 = vpack.c.bf16 %v1518, %v1502
    %v1535 = vpack.c.bf16 %v1519, %v1503
    %v1536 = vpack.c.bf16 %v1520, %v1504
    %v1537 = vpack.c.bf16 %v1521, %v1505
    %s1538 = scalar_lea.vmem [#allocation7], 4
    %v1539 = vld [vmem:[%s1538] sm:$0x1]
    %v1541 = vsel %vm295, %v1522, 0
    %v1544 = vsel %vm295, %v1523, 0
    %v1547 = vsel %vm295, %v1524, 0
    %v1550 = vsel %vm295, %v1525, 0
    %v1553 = vsel %vm295, %v1526, 0
    %v1556 = vsel %vm295, %v1527, 0
    %v1559 = vsel %vm295, %v1528, 0
    %v1562 = vsel %vm295, %v1529, 0
    %v1565 = vsel %vm295, %v1530, 0
    %v1568 = vsel %vm295, %v1531, 0
    %v1571 = vsel %vm295, %v1532, 0
    %v1574 = vsel %vm295, %v1533, 0
    %v1577 = vsel %vm295, %v1534, 0
    %v1580 = vsel %vm295, %v1535, 0
    %v1583 = vsel %vm295, %v1536, 0
    %v1586 = vsel %vm295, %v1537, 0
    %v1589 = vsel %vm344, %v1539, 0
    %1591 = vmatprep.subr.bf16.mxu0 0
    %1592 = vmatpush1.bf16.msra.mxu0 %v1589
    %1593 = vmatprep.subr.bf16.mxu0 0
    %1594 = vmatpush1.bf16.msra.mxu0 0
    %1595 = vmatprep.subr.bf16.mxu0 0
    %1596 = vmatpush1.bf16.msra.mxu0 0
    %1597 = vmatprep.subr.bf16.mxu0 0
    %1598 = vmatpush1.bf16.msra.mxu0 0
    %1599 = vmatprep.subr.bf16.mxu0 0
    %1600 = vmatpush1.bf16.msra.mxu0 0
    %1601 = vmatprep.subr.bf16.mxu0 0
    %1602 = vmatpush1.bf16.msra.mxu0 0
    %1603 = vmatprep.subr.bf16.mxu0 0
    %1604 = vmatpush1.bf16.msra.mxu0 0
    %1605 = vmatprep.subr.bf16.mxu0 0
    %1606 = vmatpush1.bf16.msra.mxu0 0
    %1607 = vmatprep.subr.bf16.mxu0 0
    %1608 = vmatpush1.bf16.msra.mxu0 0
    %1609 = vmatprep.subr.bf16.mxu0 0
    %1610 = vmatpush1.bf16.msra.mxu0 0
    %1611 = vmatprep.subr.bf16.mxu0 0
    %1612 = vmatpush1.bf16.msra.mxu0 0
    %1613 = vmatprep.subr.bf16.mxu0 0
    %1614 = vmatpush1.bf16.msra.mxu0 0
    %1615 = vmatprep.subr.bf16.mxu0 0
    %1616 = vmatpush1.bf16.msra.mxu0 0
    %1617 = vmatprep.subr.bf16.mxu0 0
    %1618 = vmatpush1.bf16.msra.mxu0 0
    %1619 = vmatprep.subr.bf16.mxu0 0
    %1620 = vmatpush1.bf16.msra.mxu0 0
    %1621 = vmatprep.subr.bf16.mxu0 0
    %1622 = vmatpush1.bf16.msra.mxu0 0
    %1623 = vmatprep.mubr.bf16.mxu0 0
    %1624 = vmatmul.mubr.bf16.gmra.mrb[0].mxu0 %v1541
    %v1625 = vpop.f32.mrb[0].mxu0
    %v1626 = vadd.f32 0.0, %v1625
    %v1627 = vpop.f32.mrb[0].mxu0
    %v1628 = vpop.f32.mrb[0].mxu0
    %v1629 = vadd.f32 0.0, %v1628
    %v1630 = vpop.f32.mrb[0].mxu0
    %1631 = vmatprep.mubr.bf16.mxu0 0
    %1632 = vmatmul.mubr.bf16.gmra.mrb[0].mxu0 %v1544
    %v1633 = vpop.f32.mrb[0].mxu0
    %v1634 = vadd.f32 0.0, %v1633
    %v1635 = vpop.f32.mrb[0].mxu0
    %v1636 = vpop.f32.mrb[0].mxu0
    %v1637 = vadd.f32 0.0, %v1636
    %v1638 = vpop.f32.mrb[0].mxu0
    %1639 = vmatprep.mubr.bf16.mxu0 0
    %1640 = vmatmul.mubr.bf16.gmra.mrb[0].mxu0 %v1547
    %v1641 = vpop.f32.mrb[0].mxu0
    %v1642 = vadd.f32 0.0, %v1641
    %v1643 = vpop.f32.mrb[0].mxu0
    %v1644 = vpop.f32.mrb[0].mxu0
    %v1645 = vadd.f32 0.0, %v1644
    %v1646 = vpop.f32.mrb[0].mxu0
    %1647 = vmatprep.mubr.bf16.mxu0 0
    %1648 = vmatmul.mubr.bf16.gmra.mrb[0].mxu0 %v1550
    %v1649 = vpop.f32.mrb[0].mxu0
    %v1650 = vadd.f32 0.0, %v1649
    %v1651 = vpop.f32.mrb[0].mxu0
    %v1652 = vpop.f32.mrb[0].mxu0
    %v1653 = vadd.f32 0.0, %v1652
    %v1654 = vpop.f32.mrb[0].mxu0
    %1655 = vmatprep.mubr.bf16.mxu0 0
    %1656 = vmatmul.mubr.bf16.gmra.mrb[0].mxu0 %v1553
    %v1657 = vpop.f32.mrb[0].mxu0
    %v1658 = vadd.f32 0.0, %v1657
    %v1659 = vpop.f32.mrb[0].mxu0
    %v1660 = vpop.f32.mrb[0].mxu0
    %v1661 = vadd.f32 0.0, %v1660
    %v1662 = vpop.f32.mrb[0].mxu0
    %1663 = vmatprep.mubr.bf16.mxu0 0
    %1664 = vmatmul.mubr.bf16.gmra.mrb[0].mxu0 %v1556
    %v1665 = vpop.f32.mrb[0].mxu0
    %v1666 = vadd.f32 0.0, %v1665
    %v1667 = vpop.f32.mrb[0].mxu0
    %v1668 = vpop.f32.mrb[0].mxu0
    %v1669 = vadd.f32 0.0, %v1668
    %v1670 = vpop.f32.mrb[0].mxu0
    %1671 = vmatprep.mubr.bf16.mxu0 0
    %1672 = vmatmul.mubr.bf16.gmra.mrb[0].mxu0 %v1559
    %v1673 = vpop.f32.mrb[0].mxu0
    %v1674 = vadd.f32 0.0, %v1673
    %v1675 = vpop.f32.mrb[0].mxu0
    %v1676 = vpop.f32.mrb[0].mxu0
    %v1677 = vadd.f32 0.0, %v1676
    %v1678 = vpop.f32.mrb[0].mxu0
    %1679 = vmatprep.mubr.bf16.mxu0 0
    %1680 = vmatmul.mubr.bf16.gmra.mrb[0].mxu0 %v1562
    %v1681 = vpop.f32.mrb[0].mxu0
    %v1682 = vadd.f32 0.0, %v1681
    %v1683 = vpop.f32.mrb[0].mxu0
    %v1684 = vpop.f32.mrb[0].mxu0
    %v1685 = vadd.f32 0.0, %v1684
    %v1686 = vpop.f32.mrb[0].mxu0
    %1687 = vmatprep.mubr.bf16.mxu0 0
    %1688 = vmatmul.mubr.bf16.gmra.mrb[0].mxu0 %v1565
    %v1689 = vpop.f32.mrb[0].mxu0
    %v1690 = vadd.f32 0.0, %v1689
    %v1691 = vpop.f32.mrb[0].mxu0
    %v1692 = vpop.f32.mrb[0].mxu0
    %v1693 = vadd.f32 0.0, %v1692
    %v1694 = vpop.f32.mrb[0].mxu0
    %1695 = vmatprep.mubr.bf16.mxu0 0
    %1696 = vmatmul.mubr.bf16.gmra.mrb[0].mxu0 %v1568
    %v1697 = vpop.f32.mrb[0].mxu0
    %v1698 = vadd.f32 0.0, %v1697
    %v1699 = vpop.f32.mrb[0].mxu0
    %v1700 = vpop.f32.mrb[0].mxu0
    %v1701 = vadd.f32 0.0, %v1700
    %v1702 = vpop.f32.mrb[0].mxu0
    %1703 = vmatprep.mubr.bf16.mxu0 0
    %1704 = vmatmul.mubr.bf16.gmra.mrb[0].mxu0 %v1571
    %v1705 = vpop.f32.mrb[0].mxu0
    %v1706 = vadd.f32 0.0, %v1705
    %v1707 = vpop.f32.mrb[0].mxu0
    %v1708 = vpop.f32.mrb[0].mxu0
    %v1709 = vadd.f32 0.0, %v1708
    %v1710 = vpop.f32.mrb[0].mxu0
    %1711 = vmatprep.mubr.bf16.mxu0 0
    %1712 = vmatmul.mubr.bf16.gmra.mrb[0].mxu0 %v1574
    %v1713 = vpop.f32.mrb[0].mxu0
    %v1714 = vadd.f32 0.0, %v1713
    %v1715 = vpop.f32.mrb[0].mxu0
    %v1716 = vpop.f32.mrb[0].mxu0
    %v1717 = vadd.f32 0.0, %v1716
    %v1718 = vpop.f32.mrb[0].mxu0
    %1719 = vmatprep.mubr.bf16.mxu0 0
    %1720 = vmatmul.mubr.bf16.gmra.mrb[0].mxu0 %v1577
    %v1721 = vpop.f32.mrb[0].mxu0
    %v1722 = vadd.f32 0.0, %v1721
    %v1723 = vpop.f32.mrb[0].mxu0
    %v1724 = vpop.f32.mrb[0].mxu0
    %v1725 = vadd.f32 0.0, %v1724
    %v1726 = vpop.f32.mrb[0].mxu0
    %1727 = vmatprep.mubr.bf16.mxu0 0
    %1728 = vmatmul.mubr.bf16.gmra.mrb[0].mxu0 %v1580
    %v1729 = vpop.f32.mrb[0].mxu0
    %v1730 = vadd.f32 0.0, %v1729
    %v1731 = vpop.f32.mrb[0].mxu0
    %v1732 = vpop.f32.mrb[0].mxu0
    %v1733 = vadd.f32 0.0, %v1732
    %v1734 = vpop.f32.mrb[0].mxu0
    %1735 = vmatprep.mubr.bf16.mxu0 0
    %1736 = vmatmul.mubr.bf16.gmra.mrb[0].mxu0 %v1583
    %v1737 = vpop.f32.mrb[0].mxu0
    %v1738 = vadd.f32 0.0, %v1737
    %v1739 = vpop.f32.mrb[0].mxu0
    %v1740 = vpop.f32.mrb[0].mxu0
    %v1741 = vadd.f32 0.0, %v1740
    %v1742 = vpop.f32.mrb[0].mxu0
    %1743 = vmatprep.mubr.bf16.mxu0 0
    %1744 = vmatmul.mubr.bf16.gmra.mrb[0].mxu0 %v1586
    %v1745 = vpop.f32.mrb[0].mxu0
    %v1746 = vadd.f32 0.0, %v1745
    %v1747 = vpop.f32.mrb[0].mxu0
    %v1748 = vpop.f32.mrb[0].mxu0
    %v1749 = vadd.f32 0.0, %v1748
    %v1750 = vpop.f32.mrb[0].mxu0
    %1751 = vdwg.mxu0
    %v1752 = vadd.f32 %v1425, %v1626
    %v1753 = vadd.f32 %v1426, %v1629
    %v1754 = vadd.f32 %v1427, %v1634
    %v1755 = vadd.f32 %v1428, %v1637
    %v1756 = vadd.f32 %v1429, %v1642
    %v1757 = vadd.f32 %v1430, %v1645
    %v1758 = vadd.f32 %v1431, %v1650
    %v1759 = vadd.f32 %v1432, %v1653
    %v1760 = vadd.f32 %v1433, %v1658
    %v1761 = vadd.f32 %v1434, %v1661
    %v1762 = vadd.f32 %v1435, %v1666
    %v1763 = vadd.f32 %v1436, %v1669
    %v1764 = vadd.f32 %v1437, %v1674
    %v1765 = vadd.f32 %v1438, %v1677
    %v1766 = vadd.f32 %v1439, %v1682
    %v1767 = vadd.f32 %v1440, %v1685
    %v1768 = vadd.f32 %v1441, %v1690
    %v1769 = vadd.f32 %v1442, %v1693
    %v1770 = vadd.f32 %v1443, %v1698
    %v1771 = vadd.f32 %v1444, %v1701
    %v1772 = vadd.f32 %v1445, %v1706
    %v1773 = vadd.f32 %v1446, %v1709
    %v1774 = vadd.f32 %v1447, %v1714
    %v1775 = vadd.f32 %v1448, %v1717
    %v1776 = vadd.f32 %v1449, %v1722
    %v1777 = vadd.f32 %v1450, %v1725
    %v1778 = vadd.f32 %v1451, %v1730
    %v1779 = vadd.f32 %v1452, %v1733
    %v1780 = vadd.f32 %v1453, %v1738
    %v1781 = vadd.f32 %v1454, %v1741
    %v1782 = vadd.f32 %v1455, %v1746
    %v1783 = vadd.f32 %v1456, %v1749
    %v1784 = vrot.slane %v171, 2
    %v1785 = vrot.slane %v173, 2
    %v1786 = vrot.slane %v175, 2
    %v1787 = vrot.slane %v177, 2
    %v1788 = vrot.slane %v179, 2
    %v1789 = vrot.slane %v181, 2
    %v1790 = vrot.slane %v183, 2
    %v1791 = vrot.slane %v185, 2
    %v1792 = vrot.slane %v187, 2
    %v1793 = vrot.slane %v189, 2
    %v1794 = vrot.slane %v191, 2
    %v1795 = vrot.slane %v193, 2
    %v1796 = vrot.slane %v195, 2
    %v1797 = vrot.slane %v197, 2
    %v1798 = vrot.slane %v199, 2
    %v1799 = vrot.slane %v201, 2
    %v1800 = vrot.slane %v172, 2
    %v1801 = vrot.slane %v174, 2
    %v1802 = vrot.slane %v176, 2
    %v1803 = vrot.slane %v178, 2
    %v1804 = vrot.slane %v180, 2
    %v1805 = vrot.slane %v182, 2
    %v1806 = vrot.slane %v184, 2
    %v1807 = vrot.slane %v186, 2
    %v1808 = vrot.slane %v188, 2
    %v1809 = vrot.slane %v190, 2
    %v1810 = vrot.slane %v192, 2
    %v1811 = vrot.slane %v194, 2
    %v1812 = vrot.slane %v196, 2
    %v1813 = vrot.slane %v198, 2
    %v1814 = vrot.slane %v200, 2
    %v1815 = vrot.slane %v202, 2
    %vm1816 = vcmp.lt.s32.totalorder %v244, 6
    %v1817 = vsel %vm1816, %v1784, %v1800
    %v1818 = vsel %vm1816, %v1785, %v1801
    %v1819 = vsel %vm1816, %v1786, %v1802
    %v1820 = vsel %vm1816, %v1787, %v1803
    %v1821 = vsel %vm1816, %v1788, %v1804
    %v1822 = vsel %vm1816, %v1789, %v1805
    %v1823 = vsel %vm1816, %v1790, %v1806
    %v1824 = vsel %vm1816, %v1791, %v1807
    %v1825 = vsel %vm1816, %v1792, %v1808
    %v1826 = vsel %vm1816, %v1793, %v1809
    %v1827 = vsel %vm1816, %v1794, %v1810
    %v1828 = vsel %vm1816, %v1795, %v1811
    %v1829 = vsel %vm1816, %v1796, %v1812
    %v1830 = vsel %vm1816, %v1797, %v1813
    %v1831 = vsel %vm1816, %v1798, %v1814
    %v1832 = vsel %vm1816, %v1799, %v1815
    %v1833 = vsel %vm1816, %v1800, %v1784
    %v1834 = vsel %vm1816, %v1801, %v1785
    %v1835 = vsel %vm1816, %v1802, %v1786
    %v1836 = vsel %vm1816, %v1803, %v1787
    %v1837 = vsel %vm1816, %v1804, %v1788
    %v1838 = vsel %vm1816, %v1805, %v1789
    %v1839 = vsel %vm1816, %v1806, %v1790
    %v1840 = vsel %vm1816, %v1807, %v1791
    %v1841 = vsel %vm1816, %v1808, %v1792
    %v1842 = vsel %vm1816, %v1809, %v1793
    %v1843 = vsel %vm1816, %v1810, %v1794
    %v1844 = vsel %vm1816, %v1811, %v1795
    %v1845 = vsel %vm1816, %v1812, %v1796
    %v1846 = vsel %vm1816, %v1813, %v1797
    %v1847 = vsel %vm1816, %v1814, %v1798
    %v1848 = vsel %vm1816, %v1815, %v1799
    %v1849 = vpack.c.bf16 %v1833, %v1817
    %v1850 = vpack.c.bf16 %v1834, %v1818
    %v1851 = vpack.c.bf16 %v1835, %v1819
    %v1852 = vpack.c.bf16 %v1836, %v1820
    %v1853 = vpack.c.bf16 %v1837, %v1821
    %v1854 = vpack.c.bf16 %v1838, %v1822
    %v1855 = vpack.c.bf16 %v1839, %v1823
    %v1856 = vpack.c.bf16 %v1840, %v1824
    %v1857 = vpack.c.bf16 %v1841, %v1825
    %v1858 = vpack.c.bf16 %v1842, %v1826
    %v1859 = vpack.c.bf16 %v1843, %v1827
    %v1860 = vpack.c.bf16 %v1844, %v1828
    %v1861 = vpack.c.bf16 %v1845, %v1829
    %v1862 = vpack.c.bf16 %v1846, %v1830
    %v1863 = vpack.c.bf16 %v1847, %v1831
    %v1864 = vpack.c.bf16 %v1848, %v1832
    %s1865 = scalar_lea.vmem [#allocation7], 5
    %v1866 = vld [vmem:[%s1865] sm:$0x1]
    %v1868 = vsel %vm295, %v1849, 0
    %v1871 = vsel %vm295, %v1850, 0
    %v1874 = vsel %vm295, %v1851, 0
    %v1877 = vsel %vm295, %v1852, 0
    %v1880 = vsel %vm295, %v1853, 0
    %v1883 = vsel %vm295, %v1854, 0
    %v1886 = vsel %vm295, %v1855, 0
    %v1889 = vsel %vm295, %v1856, 0
    %v1892 = vsel %vm295, %v1857, 0
    %v1895 = vsel %vm295, %v1858, 0
    %v1898 = vsel %vm295, %v1859, 0
    %v1901 = vsel %vm295, %v1860, 0
    %v1904 = vsel %vm295, %v1861, 0
    %v1907 = vsel %vm295, %v1862, 0
    %v1910 = vsel %vm295, %v1863, 0
    %v1913 = vsel %vm295, %v1864, 0
    %v1916 = vsel %vm344, %v1866, 0
    %1918 = vmatprep.subr.bf16.mxu0 0
    %1919 = vmatpush1.bf16.msra.mxu0 %v1916
    %1920 = vmatprep.subr.bf16.mxu0 0
    %1921 = vmatpush1.bf16.msra.mxu0 0
    %1922 = vmatprep.subr.bf16.mxu0 0
    %1923 = vmatpush1.bf16.msra.mxu0 0
    %1924 = vmatprep.subr.bf16.mxu0 0
    %1925 = vmatpush1.bf16.msra.mxu0 0
    %1926 = vmatprep.subr.bf16.mxu0 0
    %1927 = vmatpush1.bf16.msra.mxu0 0
    %1928 = vmatprep.subr.bf16.mxu0 0
    %1929 = vmatpush1.bf16.msra.mxu0 0
    %1930 = vmatprep.subr.bf16.mxu0 0
    %1931 = vmatpush1.bf16.msra.mxu0 0
    %1932 = vmatprep.subr.bf16.mxu0 0
    %1933 = vmatpush1.bf16.msra.mxu0 0
    %1934 = vmatprep.subr.bf16.mxu0 0
    %1935 = vmatpush1.bf16.msra.mxu0 0
    %1936 = vmatprep.subr.bf16.mxu0 0
    %1937 = vmatpush1.bf16.msra.mxu0 0
    %1938 = vmatprep.subr.bf16.mxu0 0
    %1939 = vmatpush1.bf16.msra.mxu0 0
    %1940 = vmatprep.subr.bf16.mxu0 0
    %1941 = vmatpush1.bf16.msra.mxu0 0
    %1942 = vmatprep.subr.bf16.mxu0 0
    %1943 = vmatpush1.bf16.msra.mxu0 0
    %1944 = vmatprep.subr.bf16.mxu0 0
    %1945 = vmatpush1.bf16.msra.mxu0 0
    %1946 = vmatprep.subr.bf16.mxu0 0
    %1947 = vmatpush1.bf16.msra.mxu0 0
    %1948 = vmatprep.subr.bf16.mxu0 0
    %1949 = vmatpush1.bf16.msra.mxu0 0
    %1950 = vmatprep.mubr.bf16.mxu0 0
    %1951 = vmatmul.mubr.bf16.gmra.mrb[0].mxu0 %v1868
    %v1952 = vpop.f32.mrb[0].mxu0
    %v1953 = vadd.f32 0.0, %v1952
    %v1954 = vpop.f32.mrb[0].mxu0
    %v1955 = vpop.f32.mrb[0].mxu0
    %v1956 = vadd.f32 0.0, %v1955
    %v1957 = vpop.f32.mrb[0].mxu0
    %1958 = vmatprep.mubr.bf16.mxu0 0
    %1959 = vmatmul.mubr.bf16.gmra.mrb[0].mxu0 %v1871
    %v1960 = vpop.f32.mrb[0].mxu0
    %v1961 = vadd.f32 0.0, %v1960
    %v1962 = vpop.f32.mrb[0].mxu0
    %v1963 = vpop.f32.mrb[0].mxu0
    %v1964 = vadd.f32 0.0, %v1963
    %v1965 = vpop.f32.mrb[0].mxu0
    %1966 = vmatprep.mubr.bf16.mxu0 0
    %1967 = vmatmul.mubr.bf16.gmra.mrb[0].mxu0 %v1874
    %v1968 = vpop.f32.mrb[0].mxu0
    %v1969 = vadd.f32 0.0, %v1968
    %v1970 = vpop.f32.mrb[0].mxu0
    %v1971 = vpop.f32.mrb[0].mxu0
    %v1972 = vadd.f32 0.0, %v1971
    %v1973 = vpop.f32.mrb[0].mxu0
    %1974 = vmatprep.mubr.bf16.mxu0 0
    %1975 = vmatmul.mubr.bf16.gmra.mrb[0].mxu0 %v1877
    %v1976 = vpop.f32.mrb[0].mxu0
    %v1977 = vadd.f32 0.0, %v1976
    %v1978 = vpop.f32.mrb[0].mxu0
    %v1979 = vpop.f32.mrb[0].mxu0
    %v1980 = vadd.f32 0.0, %v1979
    %v1981 = vpop.f32.mrb[0].mxu0
    %1982 = vmatprep.mubr.bf16.mxu0 0
    %1983 = vmatmul.mubr.bf16.gmra.mrb[0].mxu0 %v1880
    %v1984 = vpop.f32.mrb[0].mxu0
    %v1985 = vadd.f32 0.0, %v1984
    %v1986 = vpop.f32.mrb[0].mxu0
    %v1987 = vpop.f32.mrb[0].mxu0
    %v1988 = vadd.f32 0.0, %v1987
    %v1989 = vpop.f32.mrb[0].mxu0
    %1990 = vmatprep.mubr.bf16.mxu0 0
    %1991 = vmatmul.mubr.bf16.gmra.mrb[0].mxu0 %v1883
    %v1992 = vpop.f32.mrb[0].mxu0
    %v1993 = vadd.f32 0.0, %v1992
    %v1994 = vpop.f32.mrb[0].mxu0
    %v1995 = vpop.f32.mrb[0].mxu0
    %v1996 = vadd.f32 0.0, %v1995
    %v1997 = vpop.f32.mrb[0].mxu0
    %1998 = vmatprep.mubr.bf16.mxu0 0
    %1999 = vmatmul.mubr.bf16.gmra.mrb[0].mxu0 %v1886
    %v2000 = vpop.f32.mrb[0].mxu0
    %v2001 = vadd.f32 0.0, %v2000
    %v2002 = vpop.f32.mrb[0].mxu0
    %v2003 = vpop.f32.mrb[0].mxu0
    %v2004 = vadd.f32 0.0, %v2003
    %v2005 = vpop.f32.mrb[0].mxu0
    %2006 = vmatprep.mubr.bf16.mxu0 0
    %2007 = vmatmul.mubr.bf16.gmra.mrb[0].mxu0 %v1889
    %v2008 = vpop.f32.mrb[0].mxu0
    %v2009 = vadd.f32 0.0, %v2008
    %v2010 = vpop.f32.mrb[0].mxu0
    %v2011 = vpop.f32.mrb[0].mxu0
    %v2012 = vadd.f32 0.0, %v2011
    %v2013 = vpop.f32.mrb[0].mxu0
    %2014 = vmatprep.mubr.bf16.mxu0 0
    %2015 = vmatmul.mubr.bf16.gmra.mrb[0].mxu0 %v1892
    %v2016 = vpop.f32.mrb[0].mxu0
    %v2017 = vadd.f32 0.0, %v2016
    %v2018 = vpop.f32.mrb[0].mxu0
    %v2019 = vpop.f32.mrb[0].mxu0
    %v2020 = vadd.f32 0.0, %v2019
    %v2021 = vpop.f32.mrb[0].mxu0
    %2022 = vmatprep.mubr.bf16.mxu0 0
    %2023 = vmatmul.mubr.bf16.gmra.mrb[0].mxu0 %v1895
    %v2024 = vpop.f32.mrb[0].mxu0
    %v2025 = vadd.f32 0.0, %v2024
    %v2026 = vpop.f32.mrb[0].mxu0
    %v2027 = vpop.f32.mrb[0].mxu0
    %v2028 = vadd.f32 0.0, %v2027
    %v2029 = vpop.f32.mrb[0].mxu0
    %2030 = vmatprep.mubr.bf16.mxu0 0
    %2031 = vmatmul.mubr.bf16.gmra.mrb[0].mxu0 %v1898
    %v2032 = vpop.f32.mrb[0].mxu0
    %v2033 = vadd.f32 0.0, %v2032
    %v2034 = vpop.f32.mrb[0].mxu0
    %v2035 = vpop.f32.mrb[0].mxu0
    %v2036 = vadd.f32 0.0, %v2035
    %v2037 = vpop.f32.mrb[0].mxu0
    %2038 = vmatprep.mubr.bf16.mxu0 0
    %2039 = vmatmul.mubr.bf16.gmra.mrb[0].mxu0 %v1901
    %v2040 = vpop.f32.mrb[0].mxu0
    %v2041 = vadd.f32 0.0, %v2040
    %v2042 = vpop.f32.mrb[0].mxu0
    %v2043 = vpop.f32.mrb[0].mxu0
    %v2044 = vadd.f32 0.0, %v2043
    %v2045 = vpop.f32.mrb[0].mxu0
    %2046 = vmatprep.mubr.bf16.mxu0 0
    %2047 = vmatmul.mubr.bf16.gmra.mrb[0].mxu0 %v1904
    %v2048 = vpop.f32.mrb[0].mxu0
    %v2049 = vadd.f32 0.0, %v2048
    %v2050 = vpop.f32.mrb[0].mxu0
    %v2051 = vpop.f32.mrb[0].mxu0
    %v2052 = vadd.f32 0.0, %v2051
    %v2053 = vpop.f32.mrb[0].mxu0
    %2054 = vmatprep.mubr.bf16.mxu0 0
    %2055 = vmatmul.mubr.bf16.gmra.mrb[0].mxu0 %v1907
    %v2056 = vpop.f32.mrb[0].mxu0
    %v2057 = vadd.f32 0.0, %v2056
    %v2058 = vpop.f32.mrb[0].mxu0
    %v2059 = vpop.f32.mrb[0].mxu0
    %v2060 = vadd.f32 0.0, %v2059
    %v2061 = vpop.f32.mrb[0].mxu0
    %2062 = vmatprep.mubr.bf16.mxu0 0
    %2063 = vmatmul.mubr.bf16.gmra.mrb[0].mxu0 %v1910
    %v2064 = vpop.f32.mrb[0].mxu0
    %v2065 = vadd.f32 0.0, %v2064
    %v2066 = vpop.f32.mrb[0].mxu0
    %v2067 = vpop.f32.mrb[0].mxu0
    %v2068 = vadd.f32 0.0, %v2067
    %v2069 = vpop.f32.mrb[0].mxu0
    %2070 = vmatprep.mubr.bf16.mxu0 0
    %2071 = vmatmul.mubr.bf16.gmra.mrb[0].mxu0 %v1913
    %v2072 = vpop.f32.mrb[0].mxu0
    %v2073 = vadd.f32 0.0, %v2072
    %v2074 = vpop.f32.mrb[0].mxu0
    %v2075 = vpop.f32.mrb[0].mxu0
    %v2076 = vadd.f32 0.0, %v2075
    %v2077 = vpop.f32.mrb[0].mxu0
    %2078 = vdwg.mxu0
    %v2079 = vadd.f32 %v1752, %v1953
    %v2080 = vadd.f32 %v1753, %v1956
    %v2081 = vadd.f32 %v1754, %v1961
    %v2082 = vadd.f32 %v1755, %v1964
    %v2083 = vadd.f32 %v1756, %v1969
    %v2084 = vadd.f32 %v1757, %v1972
    %v2085 = vadd.f32 %v1758, %v1977
    %v2086 = vadd.f32 %v1759, %v1980
    %v2087 = vadd.f32 %v1760, %v1985
    %v2088 = vadd.f32 %v1761, %v1988
    %v2089 = vadd.f32 %v1762, %v1993
    %v2090 = vadd.f32 %v1763, %v1996
    %v2091 = vadd.f32 %v1764, %v2001
    %v2092 = vadd.f32 %v1765, %v2004
    %v2093 = vadd.f32 %v1766, %v2009
    %v2094 = vadd.f32 %v1767, %v2012
    %v2095 = vadd.f32 %v1768, %v2017
    %v2096 = vadd.f32 %v1769, %v2020
    %v2097 = vadd.f32 %v1770, %v2025
    %v2098 = vadd.f32 %v1771, %v2028
    %v2099 = vadd.f32 %v1772, %v2033
    %v2100 = vadd.f32 %v1773, %v2036
    %v2101 = vadd.f32 %v1774, %v2041
    %v2102 = vadd.f32 %v1775, %v2044
    %v2103 = vadd.f32 %v1776, %v2049
    %v2104 = vadd.f32 %v1777, %v2052
    %v2105 = vadd.f32 %v1778, %v2057
    %v2106 = vadd.f32 %v1779, %v2060
    %v2107 = vadd.f32 %v1780, %v2065
    %v2108 = vadd.f32 %v1781, %v2068
    %v2109 = vadd.f32 %v1782, %v2073
    %v2110 = vadd.f32 %v1783, %v2076
    %v2111 = vrot.slane %v171, 3
    %v2112 = vrot.slane %v173, 3
    %v2113 = vrot.slane %v175, 3
    %v2114 = vrot.slane %v177, 3
    %v2115 = vrot.slane %v179, 3
    %v2116 = vrot.slane %v181, 3
    %v2117 = vrot.slane %v183, 3
    %v2118 = vrot.slane %v185, 3
    %v2119 = vrot.slane %v187, 3
    %v2120 = vrot.slane %v189, 3
    %v2121 = vrot.slane %v191, 3
    %v2122 = vrot.slane %v193, 3
    %v2123 = vrot.slane %v195, 3
    %v2124 = vrot.slane %v197, 3
    %v2125 = vrot.slane %v199, 3
    %v2126 = vrot.slane %v201, 3
    %v2127 = vrot.slane %v172, 3
    %v2128 = vrot.slane %v174, 3
    %v2129 = vrot.slane %v176, 3
    %v2130 = vrot.slane %v178, 3
    %v2131 = vrot.slane %v180, 3
    %v2132 = vrot.slane %v182, 3
    %v2133 = vrot.slane %v184, 3
    %v2134 = vrot.slane %v186, 3
    %v2135 = vrot.slane %v188, 3
    %v2136 = vrot.slane %v190, 3
    %v2137 = vrot.slane %v192, 3
    %v2138 = vrot.slane %v194, 3
    %v2139 = vrot.slane %v196, 3
    %v2140 = vrot.slane %v198, 3
    %v2141 = vrot.slane %v200, 3
    %v2142 = vrot.slane %v202, 3
    %vm2143 = vcmp.lt.s32.totalorder %v244, 5
    %v2144 = vsel %vm2143, %v2111, %v2127
    %v2145 = vsel %vm2143, %v2112, %v2128
    %v2146 = vsel %vm2143, %v2113, %v2129
    %v2147 = vsel %vm2143, %v2114, %v2130
    %v2148 = vsel %vm2143, %v2115, %v2131
    %v2149 = vsel %vm2143, %v2116, %v2132
    %v2150 = vsel %vm2143, %v2117, %v2133
    %v2151 = vsel %vm2143, %v2118, %v2134
    %v2152 = vsel %vm2143, %v2119, %v2135
    %v2153 = vsel %vm2143, %v2120, %v2136
    %v2154 = vsel %vm2143, %v2121, %v2137
    %v2155 = vsel %vm2143, %v2122, %v2138
    %v2156 = vsel %vm2143, %v2123, %v2139
    %v2157 = vsel %vm2143, %v2124, %v2140
    %v2158 = vsel %vm2143, %v2125, %v2141
    %v2159 = vsel %vm2143, %v2126, %v2142
    %v2160 = vsel %vm2143, %v2127, %v2111
    %v2161 = vsel %vm2143, %v2128, %v2112
    %v2162 = vsel %vm2143, %v2129, %v2113
    %v2163 = vsel %vm2143, %v2130, %v2114
    %v2164 = vsel %vm2143, %v2131, %v2115
    %v2165 = vsel %vm2143, %v2132, %v2116
    %v2166 = vsel %vm2143, %v2133, %v2117
    %v2167 = vsel %vm2143, %v2134, %v2118
    %v2168 = vsel %vm2143, %v2135, %v2119
    %v2169 = vsel %vm2143, %v2136, %v2120
    %v2170 = vsel %vm2143, %v2137, %v2121
    %v2171 = vsel %vm2143, %v2138, %v2122
    %v2172 = vsel %vm2143, %v2139, %v2123
    %v2173 = vsel %vm2143, %v2140, %v2124
    %v2174 = vsel %vm2143, %v2141, %v2125
    %v2175 = vsel %vm2143, %v2142, %v2126
    %v2176 = vpack.c.bf16 %v2160, %v2144
    %v2177 = vpack.c.bf16 %v2161, %v2145
    %v2178 = vpack.c.bf16 %v2162, %v2146
    %v2179 = vpack.c.bf16 %v2163, %v2147
    %v2180 = vpack.c.bf16 %v2164, %v2148
    %v2181 = vpack.c.bf16 %v2165, %v2149
    %v2182 = vpack.c.bf16 %v2166, %v2150
    %v2183 = vpack.c.bf16 %v2167, %v2151
    %v2184 = vpack.c.bf16 %v2168, %v2152
    %v2185 = vpack.c.bf16 %v2169, %v2153
    %v2186 = vpack.c.bf16 %v2170, %v2154
    %v2187 = vpack.c.bf16 %v2171, %v2155
    %v2188 = vpack.c.bf16 %v2172, %v2156
    %v2189 = vpack.c.bf16 %v2173, %v2157
    %v2190 = vpack.c.bf16 %v2174, %v2158
    %v2191 = vpack.c.bf16 %v2175, %v2159
    %s2192 = scalar_lea.vmem [#allocation7], 6
    %v2193 = vld [vmem:[%s2192] sm:$0x1]
    %v2195 = vsel %vm295, %v2176, 0
    %v2198 = vsel %vm295, %v2177, 0
    %v2201 = vsel %vm295, %v2178, 0
    %v2204 = vsel %vm295, %v2179, 0
    %v2207 = vsel %vm295, %v2180, 0
    %v2210 = vsel %vm295, %v2181, 0
    %v2213 = vsel %vm295, %v2182, 0
    %v2216 = vsel %vm295, %v2183, 0
    %v2219 = vsel %vm295, %v2184, 0
    %v2222 = vsel %vm295, %v2185, 0
    %v2225 = vsel %vm295, %v2186, 0
    %v2228 = vsel %vm295, %v2187, 0
    %v2231 = vsel %vm295, %v2188, 0
    %v2234 = vsel %vm295, %v2189, 0
    %v2237 = vsel %vm295, %v2190, 0
    %v2240 = vsel %vm295, %v2191, 0
    %v2243 = vsel %vm344, %v2193, 0
    %2245 = vmatprep.subr.bf16.mxu0 0
    %2246 = vmatpush1.bf16.msra.mxu0 %v2243
    %2247 = vmatprep.subr.bf16.mxu0 0
    %2248 = vmatpush1.bf16.msra.mxu0 0
    %2249 = vmatprep.subr.bf16.mxu0 0
    %2250 = vmatpush1.bf16.msra.mxu0 0
    %2251 = vmatprep.subr.bf16.mxu0 0
    %2252 = vmatpush1.bf16.msra.mxu0 0
    %2253 = vmatprep.subr.bf16.mxu0 0
    %2254 = vmatpush1.bf16.msra.mxu0 0
    %2255 = vmatprep.subr.bf16.mxu0 0
    %2256 = vmatpush1.bf16.msra.mxu0 0
    %2257 = vmatprep.subr.bf16.mxu0 0
    %2258 = vmatpush1.bf16.msra.mxu0 0
    %2259 = vmatprep.subr.bf16.mxu0 0
    %2260 = vmatpush1.bf16.msra.mxu0 0
    %2261 = vmatprep.subr.bf16.mxu0 0
    %2262 = vmatpush1.bf16.msra.mxu0 0
    %2263 = vmatprep.subr.bf16.mxu0 0
    %2264 = vmatpush1.bf16.msra.mxu0 0
    %2265 = vmatprep.subr.bf16.mxu0 0
    %2266 = vmatpush1.bf16.msra.mxu0 0
    %2267 = vmatprep.subr.bf16.mxu0 0
    %2268 = vmatpush1.bf16.msra.mxu0 0
    %2269 = vmatprep.subr.bf16.mxu0 0
    %2270 = vmatpush1.bf16.msra.mxu0 0
    %2271 = vmatprep.subr.bf16.mxu0 0
    %2272 = vmatpush1.bf16.msra.mxu0 0
    %2273 = vmatprep.subr.bf16.mxu0 0
    %2274 = vmatpush1.bf16.msra.mxu0 0
    %2275 = vmatprep.subr.bf16.mxu0 0
    %2276 = vmatpush1.bf16.msra.mxu0 0
    %2277 = vmatprep.mubr.bf16.mxu0 0
    %2278 = vmatmul.mubr.bf16.gmra.mrb[0].mxu0 %v2195
    %v2279 = vpop.f32.mrb[0].mxu0
    %v2280 = vadd.f32 0.0, %v2279
    %v2281 = vpop.f32.mrb[0].mxu0
    %v2282 = vpop.f32.mrb[0].mxu0
    %v2283 = vadd.f32 0.0, %v2282
    %v2284 = vpop.f32.mrb[0].mxu0
    %2285 = vmatprep.mubr.bf16.mxu0 0
    %2286 = vmatmul.mubr.bf16.gmra.mrb[0].mxu0 %v2198
    %v2287 = vpop.f32.mrb[0].mxu0
    %v2288 = vadd.f32 0.0, %v2287
    %v2289 = vpop.f32.mrb[0].mxu0
    %v2290 = vpop.f32.mrb[0].mxu0
    %v2291 = vadd.f32 0.0, %v2290
    %v2292 = vpop.f32.mrb[0].mxu0
    %2293 = vmatprep.mubr.bf16.mxu0 0
    %2294 = vmatmul.mubr.bf16.gmra.mrb[0].mxu0 %v2201
    %v2295 = vpop.f32.mrb[0].mxu0
    %v2296 = vadd.f32 0.0, %v2295
    %v2297 = vpop.f32.mrb[0].mxu0
    %v2298 = vpop.f32.mrb[0].mxu0
    %v2299 = vadd.f32 0.0, %v2298
    %v2300 = vpop.f32.mrb[0].mxu0
    %2301 = vmatprep.mubr.bf16.mxu0 0
    %2302 = vmatmul.mubr.bf16.gmra.mrb[0].mxu0 %v2204
    %v2303 = vpop.f32.mrb[0].mxu0
    %v2304 = vadd.f32 0.0, %v2303
    %v2305 = vpop.f32.mrb[0].mxu0
    %v2306 = vpop.f32.mrb[0].mxu0
    %v2307 = vadd.f32 0.0, %v2306
    %v2308 = vpop.f32.mrb[0].mxu0
    %2309 = vmatprep.mubr.bf16.mxu0 0
    %2310 = vmatmul.mubr.bf16.gmra.mrb[0].mxu0 %v2207
    %v2311 = vpop.f32.mrb[0].mxu0
    %v2312 = vadd.f32 0.0, %v2311
    %v2313 = vpop.f32.mrb[0].mxu0
    %v2314 = vpop.f32.mrb[0].mxu0
    %v2315 = vadd.f32 0.0, %v2314
    %v2316 = vpop.f32.mrb[0].mxu0
    %2317 = vmatprep.mubr.bf16.mxu0 0
    %2318 = vmatmul.mubr.bf16.gmra.mrb[0].mxu0 %v2210
    %v2319 = vpop.f32.mrb[0].mxu0
    %v2320 = vadd.f32 0.0, %v2319
    %v2321 = vpop.f32.mrb[0].mxu0
    %v2322 = vpop.f32.mrb[0].mxu0
    %v2323 = vadd.f32 0.0, %v2322
    %v2324 = vpop.f32.mrb[0].mxu0
    %2325 = vmatprep.mubr.bf16.mxu0 0
    %2326 = vmatmul.mubr.bf16.gmra.mrb[0].mxu0 %v2213
    %v2327 = vpop.f32.mrb[0].mxu0
    %v2328 = vadd.f32 0.0, %v2327
    %v2329 = vpop.f32.mrb[0].mxu0
    %v2330 = vpop.f32.mrb[0].mxu0
    %v2331 = vadd.f32 0.0, %v2330
    %v2332 = vpop.f32.mrb[0].mxu0
    %2333 = vmatprep.mubr.bf16.mxu0 0
    %2334 = vmatmul.mubr.bf16.gmra.mrb[0].mxu0 %v2216
    %v2335 = vpop.f32.mrb[0].mxu0
    %v2336 = vadd.f32 0.0, %v2335
    %v2337 = vpop.f32.mrb[0].mxu0
    %v2338 = vpop.f32.mrb[0].mxu0
    %v2339 = vadd.f32 0.0, %v2338
    %v2340 = vpop.f32.mrb[0].mxu0
    %2341 = vmatprep.mubr.bf16.mxu0 0
    %2342 = vmatmul.mubr.bf16.gmra.mrb[0].mxu0 %v2219
    %v2343 = vpop.f32.mrb[0].mxu0
    %v2344 = vadd.f32 0.0, %v2343
    %v2345 = vpop.f32.mrb[0].mxu0
    %v2346 = vpop.f32.mrb[0].mxu0
    %v2347 = vadd.f32 0.0, %v2346
    %v2348 = vpop.f32.mrb[0].mxu0
    %2349 = vmatprep.mubr.bf16.mxu0 0
    %2350 = vmatmul.mubr.bf16.gmra.mrb[0].mxu0 %v2222
    %v2351 = vpop.f32.mrb[0].mxu0
    %v2352 = vadd.f32 0.0, %v2351
    %v2353 = vpop.f32.mrb[0].mxu0
    %v2354 = vpop.f32.mrb[0].mxu0
    %v2355 = vadd.f32 0.0, %v2354
    %v2356 = vpop.f32.mrb[0].mxu0
    %2357 = vmatprep.mubr.bf16.mxu0 0
    %2358 = vmatmul.mubr.bf16.gmra.mrb[0].mxu0 %v2225
    %v2359 = vpop.f32.mrb[0].mxu0
    %v2360 = vadd.f32 0.0, %v2359
    %v2361 = vpop.f32.mrb[0].mxu0
    %v2362 = vpop.f32.mrb[0].mxu0
    %v2363 = vadd.f32 0.0, %v2362
    %v2364 = vpop.f32.mrb[0].mxu0
    %2365 = vmatprep.mubr.bf16.mxu0 0
    %2366 = vmatmul.mubr.bf16.gmra.mrb[0].mxu0 %v2228
    %v2367 = vpop.f32.mrb[0].mxu0
    %v2368 = vadd.f32 0.0, %v2367
    %v2369 = vpop.f32.mrb[0].mxu0
    %v2370 = vpop.f32.mrb[0].mxu0
    %v2371 = vadd.f32 0.0, %v2370
    %v2372 = vpop.f32.mrb[0].mxu0
    %2373 = vmatprep.mubr.bf16.mxu0 0
    %2374 = vmatmul.mubr.bf16.gmra.mrb[0].mxu0 %v2231
    %v2375 = vpop.f32.mrb[0].mxu0
    %v2376 = vadd.f32 0.0, %v2375
    %v2377 = vpop.f32.mrb[0].mxu0
    %v2378 = vpop.f32.mrb[0].mxu0
    %v2379 = vadd.f32 0.0, %v2378
    %v2380 = vpop.f32.mrb[0].mxu0
    %2381 = vmatprep.mubr.bf16.mxu0 0
    %2382 = vmatmul.mubr.bf16.gmra.mrb[0].mxu0 %v2234
    %v2383 = vpop.f32.mrb[0].mxu0
    %v2384 = vadd.f32 0.0, %v2383
    %v2385 = vpop.f32.mrb[0].mxu0
    %v2386 = vpop.f32.mrb[0].mxu0
    %v2387 = vadd.f32 0.0, %v2386
    %v2388 = vpop.f32.mrb[0].mxu0
    %2389 = vmatprep.mubr.bf16.mxu0 0
    %2390 = vmatmul.mubr.bf16.gmra.mrb[0].mxu0 %v2237
    %v2391 = vpop.f32.mrb[0].mxu0
    %v2392 = vadd.f32 0.0, %v2391
    %v2393 = vpop.f32.mrb[0].mxu0
    %v2394 = vpop.f32.mrb[0].mxu0
    %v2395 = vadd.f32 0.0, %v2394
    %v2396 = vpop.f32.mrb[0].mxu0
    %2397 = vmatprep.mubr.bf16.mxu0 0
    %2398 = vmatmul.mubr.bf16.gmra.mrb[0].mxu0 %v2240
    %v2399 = vpop.f32.mrb[0].mxu0
    %v2400 = vadd.f32 0.0, %v2399
    %v2401 = vpop.f32.mrb[0].mxu0
    %v2402 = vpop.f32.mrb[0].mxu0
    %v2403 = vadd.f32 0.0, %v2402
    %v2404 = vpop.f32.mrb[0].mxu0
    %2405 = vdwg.mxu0
    %v2406 = vadd.f32 %v2079, %v2280
    %v2407 = vadd.f32 %v2080, %v2283
    %v2408 = vadd.f32 %v2081, %v2288
    %v2409 = vadd.f32 %v2082, %v2291
    %v2410 = vadd.f32 %v2083, %v2296
    %v2411 = vadd.f32 %v2084, %v2299
    %v2412 = vadd.f32 %v2085, %v2304
    %v2413 = vadd.f32 %v2086, %v2307
    %v2414 = vadd.f32 %v2087, %v2312
    %v2415 = vadd.f32 %v2088, %v2315
    %v2416 = vadd.f32 %v2089, %v2320
    %v2417 = vadd.f32 %v2090, %v2323
    %v2418 = vadd.f32 %v2091, %v2328
    %v2419 = vadd.f32 %v2092, %v2331
    %v2420 = vadd.f32 %v2093, %v2336
    %v2421 = vadd.f32 %v2094, %v2339
    %v2422 = vadd.f32 %v2095, %v2344
    %v2423 = vadd.f32 %v2096, %v2347
    %v2424 = vadd.f32 %v2097, %v2352
    %v2425 = vadd.f32 %v2098, %v2355
    %v2426 = vadd.f32 %v2099, %v2360
    %v2427 = vadd.f32 %v2100, %v2363
    %v2428 = vadd.f32 %v2101, %v2368
    %v2429 = vadd.f32 %v2102, %v2371
    %v2430 = vadd.f32 %v2103, %v2376
    %v2431 = vadd.f32 %v2104, %v2379
    %v2432 = vadd.f32 %v2105, %v2384
    %v2433 = vadd.f32 %v2106, %v2387
    %v2434 = vadd.f32 %v2107, %v2392
    %v2435 = vadd.f32 %v2108, %v2395
    %v2436 = vadd.f32 %v2109, %v2400
    %v2437 = vadd.f32 %v2110, %v2403
    %v2438 = vmax.f32 %v2406, 0.0
    %v2439 = vmax.f32 %v2407, 0.0
    %v2440 = vmax.f32 %v2408, 0.0
    %v2441 = vmax.f32 %v2409, 0.0
    %v2442 = vmax.f32 %v2410, 0.0
    %v2443 = vmax.f32 %v2411, 0.0
    %v2444 = vmax.f32 %v2412, 0.0
    %v2445 = vmax.f32 %v2413, 0.0
    %v2446 = vmax.f32 %v2414, 0.0
    %v2447 = vmax.f32 %v2415, 0.0
    %v2448 = vmax.f32 %v2416, 0.0
    %v2449 = vmax.f32 %v2417, 0.0
    %v2450 = vmax.f32 %v2418, 0.0
    %v2451 = vmax.f32 %v2419, 0.0
    %v2452 = vmax.f32 %v2420, 0.0
    %v2453 = vmax.f32 %v2421, 0.0
    %v2454 = vmax.f32 %v2422, 0.0
    %v2455 = vmax.f32 %v2423, 0.0
    %v2456 = vmax.f32 %v2424, 0.0
    %v2457 = vmax.f32 %v2425, 0.0
    %v2458 = vmax.f32 %v2426, 0.0
    %v2459 = vmax.f32 %v2427, 0.0
    %v2460 = vmax.f32 %v2428, 0.0
    %v2461 = vmax.f32 %v2429, 0.0
    %v2462 = vmax.f32 %v2430, 0.0
    %v2463 = vmax.f32 %v2431, 0.0
    %v2464 = vmax.f32 %v2432, 0.0
    %v2465 = vmax.f32 %v2433, 0.0
    %v2466 = vmax.f32 %v2434, 0.0
    %v2467 = vmax.f32 %v2435, 0.0
    %v2468 = vmax.f32 %v2436, 0.0
    %v2469 = vmax.f32 %v2437, 0.0
    %v2470 = vld [vmem:[#allocation12] sm:$0x1]
    %v2472 = vlaneseq
    %v2473 = vshrl.u32 %v2472, 7
    %v2474 = vsub.s32 0, %v2473
    %v2475 = vrot.slane %v2470, %v2474
    %v2477 = vadd.f32 %v2475, 0.0
    %v2478 = vrot.slane %v2438, 6
    %v2479 = vrot.slane %v2440, 6
    %v2480 = vrot.slane %v2442, 6
    %v2481 = vrot.slane %v2444, 6
    %v2482 = vrot.slane %v2446, 6
    %v2483 = vrot.slane %v2448, 6
    %v2484 = vrot.slane %v2450, 6
    %v2485 = vrot.slane %v2452, 6
    %v2486 = vrot.slane %v2454, 6
    %v2487 = vrot.slane %v2456, 6
    %v2488 = vrot.slane %v2458, 6
    %v2489 = vrot.slane %v2460, 6
    %v2490 = vrot.slane %v2462, 6
    %v2491 = vrot.slane %v2464, 6
    %v2492 = vrot.slane %v2466, 6
    %v2493 = vrot.slane %v2468, 6
    %v2494 = vrot.slane %v2439, 6
    %v2495 = vrot.slane %v2441, 6
    %v2496 = vrot.slane %v2443, 6
    %v2497 = vrot.slane %v2445, 6
    %v2498 = vrot.slane %v2447, 6
    %v2499 = vrot.slane %v2449, 6
    %v2500 = vrot.slane %v2451, 6
    %v2501 = vrot.slane %v2453, 6
    %v2502 = vrot.slane %v2455, 6
    %v2503 = vrot.slane %v2457, 6
    %v2504 = vrot.slane %v2459, 6
    %v2505 = vrot.slane %v2461, 6
    %v2506 = vrot.slane %v2463, 6
    %v2507 = vrot.slane %v2465, 6
    %v2508 = vrot.slane %v2467, 6
    %v2509 = vrot.slane %v2469, 6
    %v2510 = vsel %vm573, %v2478, %v2494
    %v2511 = vsel %vm573, %v2479, %v2495
    %v2512 = vsel %vm573, %v2480, %v2496
    %v2513 = vsel %vm573, %v2481, %v2497
    %v2514 = vsel %vm573, %v2482, %v2498
    %v2515 = vsel %vm573, %v2483, %v2499
    %v2516 = vsel %vm573, %v2484, %v2500
    %v2517 = vsel %vm573, %v2485, %v2501
    %v2518 = vsel %vm573, %v2486, %v2502
    %v2519 = vsel %vm573, %v2487, %v2503
    %v2520 = vsel %vm573, %v2488, %v2504
    %v2521 = vsel %vm573, %v2489, %v2505
    %v2522 = vsel %vm573, %v2490, %v2506
    %v2523 = vsel %vm573, %v2491, %v2507
    %v2524 = vsel %vm573, %v2492, %v2508
    %v2525 = vsel %vm573, %v2493, %v2509
    %v2526 = vsel %vm573, %v2494, %v2478
    %v2527 = vsel %vm573, %v2495, %v2479
    %v2528 = vsel %vm573, %v2496, %v2480
    %v2529 = vsel %vm573, %v2497, %v2481
    %v2530 = vsel %vm573, %v2498, %v2482
    %v2531 = vsel %vm573, %v2499, %v2483
    %v2532 = vsel %vm573, %v2500, %v2484
    %v2533 = vsel %vm573, %v2501, %v2485
    %v2534 = vsel %vm573, %v2502, %v2486
    %v2535 = vsel %vm573, %v2503, %v2487
    %v2536 = vsel %vm573, %v2504, %v2488
    %v2537 = vsel %vm573, %v2505, %v2489
    %v2538 = vsel %vm573, %v2506, %v2490
    %v2539 = vsel %vm573, %v2507, %v2491
    %v2540 = vsel %vm573, %v2508, %v2492
    %v2541 = vsel %vm573, %v2509, %v2493
    %v2542 = vpack.c.bf16 %v2510, %v2526
    %v2543 = vpack.c.bf16 %v2511, %v2527
    %v2544 = vpack.c.bf16 %v2512, %v2528
    %v2545 = vpack.c.bf16 %v2513, %v2529
    %v2546 = vpack.c.bf16 %v2514, %v2530
    %v2547 = vpack.c.bf16 %v2515, %v2531
    %v2548 = vpack.c.bf16 %v2516, %v2532
    %v2549 = vpack.c.bf16 %v2517, %v2533
    %v2550 = vpack.c.bf16 %v2518, %v2534
    %v2551 = vpack.c.bf16 %v2519, %v2535
    %v2552 = vpack.c.bf16 %v2520, %v2536
    %v2553 = vpack.c.bf16 %v2521, %v2537
    %v2554 = vpack.c.bf16 %v2522, %v2538
    %v2555 = vpack.c.bf16 %v2523, %v2539
    %v2556 = vpack.c.bf16 %v2524, %v2540
    %v2557 = vpack.c.bf16 %v2525, %v2541
    %v2558 = vld [vmem:[#allocation10] sm:$0xf]
    %v2559 = vld [vmem:[#allocation10 + $0x4] sm:$0xf]
    %v2560 = vld [vmem:[#allocation10 + $0x8] sm:$0xf]
    %v2561 = vld [vmem:[#allocation10 + $0xc] sm:$0xf]
    %v2566 = vunpack.c.l.b16 %v2558
    %v2567 = vunpack.c.l.b16 %v2559
    %v2568 = vunpack.c.l.b16 %v2560
    %v2569 = vunpack.c.l.b16 %v2561
    %v2570 = vpack.c.b16 %v2567, %v2566
    %v2571 = vpack.c.b16 %v2569, %v2568
    %vm2574 = vcmask 261120
    %v2576 = vsel %vm2574, %v2542, 0
    %v2579 = vsel %vm2574, %v2543, 0
    %v2582 = vsel %vm2574, %v2544, 0
    %v2585 = vsel %vm2574, %v2545, 0
    %v2588 = vsel %vm2574, %v2546, 0
    %v2591 = vsel %vm2574, %v2547, 0
    %v2594 = vsel %vm2574, %v2548, 0
    %v2597 = vsel %vm2574, %v2549, 0
    %v2600 = vsel %vm2574, %v2550, 0
    %v2603 = vsel %vm2574, %v2551, 0
    %v2606 = vsel %vm2574, %v2552, 0
    %v2609 = vsel %vm2574, %v2553, 0
    %v2612 = vsel %vm2574, %v2554, 0
    %v2615 = vsel %vm2574, %v2555, 0
    %v2618 = vsel %vm2574, %v2556, 0
    %v2621 = vsel %vm2574, %v2557, 0
    %2623 = vmatprep.subr.bf16.mxu0 0
    %2624 = vmatpush1.bf16.msra.mxu0 %v2570
    %2625 = vmatprep.subr.bf16.mxu0 0
    %2626 = vmatpush1.bf16.msra.mxu0 %v2571
    %2627 = vmatprep.subr.bf16.mxu0 0
    %2628 = vmatpush1.bf16.msra.mxu0 0
    %2629 = vmatprep.subr.bf16.mxu0 0
    %2630 = vmatpush1.bf16.msra.mxu0 0
    %2631 = vmatprep.subr.bf16.mxu0 0
    %2632 = vmatpush1.bf16.msra.mxu0 0
    %2633 = vmatprep.subr.bf16.mxu0 0
    %2634 = vmatpush1.bf16.msra.mxu0 0
    %2635 = vmatprep.subr.bf16.mxu0 0
    %2636 = vmatpush1.bf16.msra.mxu0 0
    %2637 = vmatprep.subr.bf16.mxu0 0
    %2638 = vmatpush1.bf16.msra.mxu0 0
    %2639 = vmatprep.subr.bf16.mxu0 0
    %2640 = vmatpush1.bf16.msra.mxu0 0
    %2641 = vmatprep.subr.bf16.mxu0 0
    %2642 = vmatpush1.bf16.msra.mxu0 0
    %2643 = vmatprep.subr.bf16.mxu0 0
    %2644 = vmatpush1.bf16.msra.mxu0 0
    %2645 = vmatprep.subr.bf16.mxu0 0
    %2646 = vmatpush1.bf16.msra.mxu0 0
    %2647 = vmatprep.subr.bf16.mxu0 0
    %2648 = vmatpush1.bf16.msra.mxu0 0
    %2649 = vmatprep.subr.bf16.mxu0 0
    %2650 = vmatpush1.bf16.msra.mxu0 0
    %2651 = vmatprep.subr.bf16.mxu0 0
    %2652 = vmatpush1.bf16.msra.mxu0 0
    %2653 = vmatprep.subr.bf16.mxu0 0
    %2654 = vmatpush1.bf16.msra.mxu0 0
    %2655 = vmatprep.mubr.bf16.mxu0 0
    %2656 = vmatmul.mubr.bf16.gmra.mrb[0].mxu0 %v2576
    %v2657 = vpop.f32.mrb[0].mxu0
    %v2658 = vadd.f32 0.0, %v2657
    %v2659 = vpop.f32.mrb[0].mxu0
    %v2660 = vpop.f32.mrb[0].mxu0
    %v2661 = vadd.f32 0.0, %v2660
    %v2662 = vpop.f32.mrb[0].mxu0
    %2663 = vmatprep.mubr.bf16.mxu0 0
    %2664 = vmatmul.mubr.bf16.gmra.mrb[0].mxu0 %v2579
    %v2665 = vpop.f32.mrb[0].mxu0
    %v2666 = vadd.f32 0.0, %v2665
    %v2667 = vpop.f32.mrb[0].mxu0
    %v2668 = vpop.f32.mrb[0].mxu0
    %v2669 = vadd.f32 0.0, %v2668
    %v2670 = vpop.f32.mrb[0].mxu0
    %2671 = vmatprep.mubr.bf16.mxu0 0
    %2672 = vmatmul.mubr.bf16.gmra.mrb[0].mxu0 %v2582
    %v2673 = vpop.f32.mrb[0].mxu0
    %v2674 = vadd.f32 0.0, %v2673
    %v2675 = vpop.f32.mrb[0].mxu0
    %v2676 = vpop.f32.mrb[0].mxu0
    %v2677 = vadd.f32 0.0, %v2676
    %v2678 = vpop.f32.mrb[0].mxu0
    %2679 = vmatprep.mubr.bf16.mxu0 0
    %2680 = vmatmul.mubr.bf16.gmra.mrb[0].mxu0 %v2585
    %v2681 = vpop.f32.mrb[0].mxu0
    %v2682 = vadd.f32 0.0, %v2681
    %v2683 = vpop.f32.mrb[0].mxu0
    %v2684 = vpop.f32.mrb[0].mxu0
    %v2685 = vadd.f32 0.0, %v2684
    %v2686 = vpop.f32.mrb[0].mxu0
    %2687 = vmatprep.mubr.bf16.mxu0 0
    %2688 = vmatmul.mubr.bf16.gmra.mrb[0].mxu0 %v2588
    %v2689 = vpop.f32.mrb[0].mxu0
    %v2690 = vadd.f32 0.0, %v2689
    %v2691 = vpop.f32.mrb[0].mxu0
    %v2692 = vpop.f32.mrb[0].mxu0
    %v2693 = vadd.f32 0.0, %v2692
    %v2694 = vpop.f32.mrb[0].mxu0
    %2695 = vmatprep.mubr.bf16.mxu0 0
    %2696 = vmatmul.mubr.bf16.gmra.mrb[0].mxu0 %v2591
    %v2697 = vpop.f32.mrb[0].mxu0
    %v2698 = vadd.f32 0.0, %v2697
    %v2699 = vpop.f32.mrb[0].mxu0
    %v2700 = vpop.f32.mrb[0].mxu0
    %v2701 = vadd.f32 0.0, %v2700
    %v2702 = vpop.f32.mrb[0].mxu0
    %2703 = vmatprep.mubr.bf16.mxu0 0
    %2704 = vmatmul.mubr.bf16.gmra.mrb[0].mxu0 %v2594
    %v2705 = vpop.f32.mrb[0].mxu0
    %v2706 = vadd.f32 0.0, %v2705
    %v2707 = vpop.f32.mrb[0].mxu0
    %v2708 = vpop.f32.mrb[0].mxu0
    %v2709 = vadd.f32 0.0, %v2708
    %v2710 = vpop.f32.mrb[0].mxu0
    %2711 = vmatprep.mubr.bf16.mxu0 0
    %2712 = vmatmul.mubr.bf16.gmra.mrb[0].mxu0 %v2597
    %v2713 = vpop.f32.mrb[0].mxu0
    %v2714 = vadd.f32 0.0, %v2713
    %v2715 = vpop.f32.mrb[0].mxu0
    %v2716 = vpop.f32.mrb[0].mxu0
    %v2717 = vadd.f32 0.0, %v2716
    %v2718 = vpop.f32.mrb[0].mxu0
    %2719 = vmatprep.mubr.bf16.mxu0 0
    %2720 = vmatmul.mubr.bf16.gmra.mrb[0].mxu0 %v2600
    %v2721 = vpop.f32.mrb[0].mxu0
    %v2722 = vadd.f32 0.0, %v2721
    %v2723 = vpop.f32.mrb[0].mxu0
    %v2724 = vpop.f32.mrb[0].mxu0
    %v2725 = vadd.f32 0.0, %v2724
    %v2726 = vpop.f32.mrb[0].mxu0
    %2727 = vmatprep.mubr.bf16.mxu0 0
    %2728 = vmatmul.mubr.bf16.gmra.mrb[0].mxu0 %v2603
    %v2729 = vpop.f32.mrb[0].mxu0
    %v2730 = vadd.f32 0.0, %v2729
    %v2731 = vpop.f32.mrb[0].mxu0
    %v2732 = vpop.f32.mrb[0].mxu0
    %v2733 = vadd.f32 0.0, %v2732
    %v2734 = vpop.f32.mrb[0].mxu0
    %2735 = vmatprep.mubr.bf16.mxu0 0
    %2736 = vmatmul.mubr.bf16.gmra.mrb[0].mxu0 %v2606
    %v2737 = vpop.f32.mrb[0].mxu0
    %v2738 = vadd.f32 0.0, %v2737
    %v2739 = vpop.f32.mrb[0].mxu0
    %v2740 = vpop.f32.mrb[0].mxu0
    %v2741 = vadd.f32 0.0, %v2740
    %v2742 = vpop.f32.mrb[0].mxu0
    %2743 = vmatprep.mubr.bf16.mxu0 0
    %2744 = vmatmul.mubr.bf16.gmra.mrb[0].mxu0 %v2609
    %v2745 = vpop.f32.mrb[0].mxu0
    %v2746 = vadd.f32 0.0, %v2745
    %v2747 = vpop.f32.mrb[0].mxu0
    %v2748 = vpop.f32.mrb[0].mxu0
    %v2749 = vadd.f32 0.0, %v2748
    %v2750 = vpop.f32.mrb[0].mxu0
    %2751 = vmatprep.mubr.bf16.mxu0 0
    %2752 = vmatmul.mubr.bf16.gmra.mrb[0].mxu0 %v2612
    %v2753 = vpop.f32.mrb[0].mxu0
    %v2754 = vadd.f32 0.0, %v2753
    %v2755 = vpop.f32.mrb[0].mxu0
    %v2756 = vpop.f32.mrb[0].mxu0
    %v2757 = vadd.f32 0.0, %v2756
    %v2758 = vpop.f32.mrb[0].mxu0
    %2759 = vmatprep.mubr.bf16.mxu0 0
    %2760 = vmatmul.mubr.bf16.gmra.mrb[0].mxu0 %v2615
    %v2761 = vpop.f32.mrb[0].mxu0
    %v2762 = vadd.f32 0.0, %v2761
    %v2763 = vpop.f32.mrb[0].mxu0
    %v2764 = vpop.f32.mrb[0].mxu0
    %v2765 = vadd.f32 0.0, %v2764
    %v2766 = vpop.f32.mrb[0].mxu0
    %2767 = vmatprep.mubr.bf16.mxu0 0
    %2768 = vmatmul.mubr.bf16.gmra.mrb[0].mxu0 %v2618
    %v2769 = vpop.f32.mrb[0].mxu0
    %v2770 = vadd.f32 0.0, %v2769
    %v2771 = vpop.f32.mrb[0].mxu0
    %v2772 = vpop.f32.mrb[0].mxu0
    %v2773 = vadd.f32 0.0, %v2772
    %v2774 = vpop.f32.mrb[0].mxu0
    %2775 = vmatprep.mubr.bf16.mxu0 0
    %2776 = vmatmul.mubr.bf16.gmra.mrb[0].mxu0 %v2621
    %v2777 = vpop.f32.mrb[0].mxu0
    %v2778 = vadd.f32 0.0, %v2777
    %v2779 = vpop.f32.mrb[0].mxu0
    %v2780 = vpop.f32.mrb[0].mxu0
    %v2781 = vadd.f32 0.0, %v2780
    %v2782 = vpop.f32.mrb[0].mxu0
    %2783 = vdwg.mxu0
    %v2784 = vadd.f32 %v2477, %v2658
    %v2785 = vadd.f32 %v2477, %v2661
    %v2786 = vadd.f32 %v2477, %v2666
    %v2787 = vadd.f32 %v2477, %v2669
    %v2788 = vadd.f32 %v2477, %v2674
    %v2789 = vadd.f32 %v2477, %v2677
    %v2790 = vadd.f32 %v2477, %v2682
    %v2791 = vadd.f32 %v2477, %v2685
    %v2792 = vadd.f32 %v2477, %v2690
    %v2793 = vadd.f32 %v2477, %v2693
    %v2794 = vadd.f32 %v2477, %v2698
    %v2795 = vadd.f32 %v2477, %v2701
    %v2796 = vadd.f32 %v2477, %v2706
    %v2797 = vadd.f32 %v2477, %v2709
    %v2798 = vadd.f32 %v2477, %v2714
    %v2799 = vadd.f32 %v2477, %v2717
    %v2800 = vadd.f32 %v2477, %v2722
    %v2801 = vadd.f32 %v2477, %v2725
    %v2802 = vadd.f32 %v2477, %v2730
    %v2803 = vadd.f32 %v2477, %v2733
    %v2804 = vadd.f32 %v2477, %v2738
    %v2805 = vadd.f32 %v2477, %v2741
    %v2806 = vadd.f32 %v2477, %v2746
    %v2807 = vadd.f32 %v2477, %v2749
    %v2808 = vadd.f32 %v2477, %v2754
    %v2809 = vadd.f32 %v2477, %v2757
    %v2810 = vadd.f32 %v2477, %v2762
    %v2811 = vadd.f32 %v2477, %v2765
    %v2812 = vadd.f32 %v2477, %v2770
    %v2813 = vadd.f32 %v2477, %v2773
    %v2814 = vadd.f32 %v2477, %v2778
    %v2815 = vadd.f32 %v2477, %v2781
    %v2816 = vrot.slane %v2438, 7
    %v2817 = vrot.slane %v2440, 7
    %v2818 = vrot.slane %v2442, 7
    %v2819 = vrot.slane %v2444, 7
    %v2820 = vrot.slane %v2446, 7
    %v2821 = vrot.slane %v2448, 7
    %v2822 = vrot.slane %v2450, 7
    %v2823 = vrot.slane %v2452, 7
    %v2824 = vrot.slane %v2454, 7
    %v2825 = vrot.slane %v2456, 7
    %v2826 = vrot.slane %v2458, 7
    %v2827 = vrot.slane %v2460, 7
    %v2828 = vrot.slane %v2462, 7
    %v2829 = vrot.slane %v2464, 7
    %v2830 = vrot.slane %v2466, 7
    %v2831 = vrot.slane %v2468, 7
    %v2832 = vrot.slane %v2439, 7
    %v2833 = vrot.slane %v2441, 7
    %v2834 = vrot.slane %v2443, 7
    %v2835 = vrot.slane %v2445, 7
    %v2836 = vrot.slane %v2447, 7
    %v2837 = vrot.slane %v2449, 7
    %v2838 = vrot.slane %v2451, 7
    %v2839 = vrot.slane %v2453, 7
    %v2840 = vrot.slane %v2455, 7
    %v2841 = vrot.slane %v2457, 7
    %v2842 = vrot.slane %v2459, 7
    %v2843 = vrot.slane %v2461, 7
    %v2844 = vrot.slane %v2463, 7
    %v2845 = vrot.slane %v2465, 7
    %v2846 = vrot.slane %v2467, 7
    %v2847 = vrot.slane %v2469, 7
    %v2848 = vsel %vm900, %v2816, %v2832
    %v2849 = vsel %vm900, %v2817, %v2833
    %v2850 = vsel %vm900, %v2818, %v2834
    %v2851 = vsel %vm900, %v2819, %v2835
    %v2852 = vsel %vm900, %v2820, %v2836
    %v2853 = vsel %vm900, %v2821, %v2837
    %v2854 = vsel %vm900, %v2822, %v2838
    %v2855 = vsel %vm900, %v2823, %v2839
    %v2856 = vsel %vm900, %v2824, %v2840
    %v2857 = vsel %vm900, %v2825, %v2841
    %v2858 = vsel %vm900, %v2826, %v2842
    %v2859 = vsel %vm900, %v2827, %v2843
    %v2860 = vsel %vm900, %v2828, %v2844
    %v2861 = vsel %vm900, %v2829, %v2845
    %v2862 = vsel %vm900, %v2830, %v2846
    %v2863 = vsel %vm900, %v2831, %v2847
    %v2864 = vsel %vm900, %v2832, %v2816
    %v2865 = vsel %vm900, %v2833, %v2817
    %v2866 = vsel %vm900, %v2834, %v2818
    %v2867 = vsel %vm900, %v2835, %v2819
    %v2868 = vsel %vm900, %v2836, %v2820
    %v2869 = vsel %vm900, %v2837, %v2821
    %v2870 = vsel %vm900, %v2838, %v2822
    %v2871 = vsel %vm900, %v2839, %v2823
    %v2872 = vsel %vm900, %v2840, %v2824
    %v2873 = vsel %vm900, %v2841, %v2825
    %v2874 = vsel %vm900, %v2842, %v2826
    %v2875 = vsel %vm900, %v2843, %v2827
    %v2876 = vsel %vm900, %v2844, %v2828
    %v2877 = vsel %vm900, %v2845, %v2829
    %v2878 = vsel %vm900, %v2846, %v2830
    %v2879 = vsel %vm900, %v2847, %v2831
    %v2880 = vpack.c.bf16 %v2848, %v2864
    %v2881 = vpack.c.bf16 %v2849, %v2865
    %v2882 = vpack.c.bf16 %v2850, %v2866
    %v2883 = vpack.c.bf16 %v2851, %v2867
    %v2884 = vpack.c.bf16 %v2852, %v2868
    %v2885 = vpack.c.bf16 %v2853, %v2869
    %v2886 = vpack.c.bf16 %v2854, %v2870
    %v2887 = vpack.c.bf16 %v2855, %v2871
    %v2888 = vpack.c.bf16 %v2856, %v2872
    %v2889 = vpack.c.bf16 %v2857, %v2873
    %v2890 = vpack.c.bf16 %v2858, %v2874
    %v2891 = vpack.c.bf16 %v2859, %v2875
    %v2892 = vpack.c.bf16 %v2860, %v2876
    %v2893 = vpack.c.bf16 %v2861, %v2877
    %v2894 = vpack.c.bf16 %v2862, %v2878
    %v2895 = vpack.c.bf16 %v2863, %v2879
    %s2896 = scalar_lea.vmem [#allocation10], 16
    %v2897 = vld [vmem:[%s2896] sm:$0xf]
    %v2898 = vld [vmem:[%s2896 + $0x4] sm:$0xf]
    %v2899 = vld [vmem:[%s2896 + $0x8] sm:$0xf]
    %v2900 = vld [vmem:[%s2896 + $0xc] sm:$0xf]
    %v2905 = vunpack.c.l.b16 %v2897
    %v2906 = vunpack.c.l.b16 %v2898
    %v2907 = vunpack.c.l.b16 %v2899
    %v2908 = vunpack.c.l.b16 %v2900
    %v2909 = vpack.c.b16 %v2906, %v2905
    %v2910 = vpack.c.b16 %v2908, %v2907
    %v2914 = vsel %vm2574, %v2880, 0
    %v2917 = vsel %vm2574, %v2881, 0
    %v2920 = vsel %vm2574, %v2882, 0
    %v2923 = vsel %vm2574, %v2883, 0
    %v2926 = vsel %vm2574, %v2884, 0
    %v2929 = vsel %vm2574, %v2885, 0
    %v2932 = vsel %vm2574, %v2886, 0
    %v2935 = vsel %vm2574, %v2887, 0
    %v2938 = vsel %vm2574, %v2888, 0
    %v2941 = vsel %vm2574, %v2889, 0
    %v2944 = vsel %vm2574, %v2890, 0
    %v2947 = vsel %vm2574, %v2891, 0
    %v2950 = vsel %vm2574, %v2892, 0
    %v2953 = vsel %vm2574, %v2893, 0
    %v2956 = vsel %vm2574, %v2894, 0
    %v2959 = vsel %vm2574, %v2895, 0
    %2961 = vmatprep.subr.bf16.mxu0 0
    %2962 = vmatpush1.bf16.msra.mxu0 %v2909
    %2963 = vmatprep.subr.bf16.mxu0 0
    %2964 = vmatpush1.bf16.msra.mxu0 %v2910
    %2965 = vmatprep.subr.bf16.mxu0 0
    %2966 = vmatpush1.bf16.msra.mxu0 0
    %2967 = vmatprep.subr.bf16.mxu0 0
    %2968 = vmatpush1.bf16.msra.mxu0 0
    %2969 = vmatprep.subr.bf16.mxu0 0
    %2970 = vmatpush1.bf16.msra.mxu0 0
    %2971 = vmatprep.subr.bf16.mxu0 0
    %2972 = vmatpush1.bf16.msra.mxu0 0
    %2973 = vmatprep.subr.bf16.mxu0 0
    %2974 = vmatpush1.bf16.msra.mxu0 0
    %2975 = vmatprep.subr.bf16.mxu0 0
    %2976 = vmatpush1.bf16.msra.mxu0 0
    %2977 = vmatprep.subr.bf16.mxu0 0
    %2978 = vmatpush1.bf16.msra.mxu0 0
    %2979 = vmatprep.subr.bf16.mxu0 0
    %2980 = vmatpush1.bf16.msra.mxu0 0
    %2981 = vmatprep.subr.bf16.mxu0 0
    %2982 = vmatpush1.bf16.msra.mxu0 0
    %2983 = vmatprep.subr.bf16.mxu0 0
    %2984 = vmatpush1.bf16.msra.mxu0 0
    %2985 = vmatprep.subr.bf16.mxu0 0
    %2986 = vmatpush1.bf16.msra.mxu0 0
    %2987 = vmatprep.subr.bf16.mxu0 0
    %2988 = vmatpush1.bf16.msra.mxu0 0
    %2989 = vmatprep.subr.bf16.mxu0 0
    %2990 = vmatpush1.bf16.msra.mxu0 0
    %2991 = vmatprep.subr.bf16.mxu0 0
    %2992 = vmatpush1.bf16.msra.mxu0 0
    %2993 = vmatprep.mubr.bf16.mxu0 0
    %2994 = vmatmul.mubr.bf16.gmra.mrb[0].mxu0 %v2914
    %v2995 = vpop.f32.mrb[0].mxu0
    %v2996 = vadd.f32 0.0, %v2995
    %v2997 = vpop.f32.mrb[0].mxu0
    %v2998 = vpop.f32.mrb[0].mxu0
    %v2999 = vadd.f32 0.0, %v2998
    %v3000 = vpop.f32.mrb[0].mxu0
    %3001 = vmatprep.mubr.bf16.mxu0 0
    %3002 = vmatmul.mubr.bf16.gmra.mrb[0].mxu0 %v2917
    %v3003 = vpop.f32.mrb[0].mxu0
    %v3004 = vadd.f32 0.0, %v3003
    %v3005 = vpop.f32.mrb[0].mxu0
    %v3006 = vpop.f32.mrb[0].mxu0
    %v3007 = vadd.f32 0.0, %v3006
    %v3008 = vpop.f32.mrb[0].mxu0
    %3009 = vmatprep.mubr.bf16.mxu0 0
    %3010 = vmatmul.mubr.bf16.gmra.mrb[0].mxu0 %v2920
    %v3011 = vpop.f32.mrb[0].mxu0
    %v3012 = vadd.f32 0.0, %v3011
    %v3013 = vpop.f32.mrb[0].mxu0
    %v3014 = vpop.f32.mrb[0].mxu0
    %v3015 = vadd.f32 0.0, %v3014
    %v3016 = vpop.f32.mrb[0].mxu0
    %3017 = vmatprep.mubr.bf16.mxu0 0
    %3018 = vmatmul.mubr.bf16.gmra.mrb[0].mxu0 %v2923
    %v3019 = vpop.f32.mrb[0].mxu0
    %v3020 = vadd.f32 0.0, %v3019
    %v3021 = vpop.f32.mrb[0].mxu0
    %v3022 = vpop.f32.mrb[0].mxu0
    %v3023 = vadd.f32 0.0, %v3022
    %v3024 = vpop.f32.mrb[0].mxu0
    %3025 = vmatprep.mubr.bf16.mxu0 0
    %3026 = vmatmul.mubr.bf16.gmra.mrb[0].mxu0 %v2926
    %v3027 = vpop.f32.mrb[0].mxu0
    %v3028 = vadd.f32 0.0, %v3027
    %v3029 = vpop.f32.mrb[0].mxu0
    %v3030 = vpop.f32.mrb[0].mxu0
    %v3031 = vadd.f32 0.0, %v3030
    %v3032 = vpop.f32.mrb[0].mxu0
    %3033 = vmatprep.mubr.bf16.mxu0 0
    %3034 = vmatmul.mubr.bf16.gmra.mrb[0].mxu0 %v2929
    %v3035 = vpop.f32.mrb[0].mxu0
    %v3036 = vadd.f32 0.0, %v3035
    %v3037 = vpop.f32.mrb[0].mxu0
    %v3038 = vpop.f32.mrb[0].mxu0
    %v3039 = vadd.f32 0.0, %v3038
    %v3040 = vpop.f32.mrb[0].mxu0
    %3041 = vmatprep.mubr.bf16.mxu0 0
    %3042 = vmatmul.mubr.bf16.gmra.mrb[0].mxu0 %v2932
    %v3043 = vpop.f32.mrb[0].mxu0
    %v3044 = vadd.f32 0.0, %v3043
    %v3045 = vpop.f32.mrb[0].mxu0
    %v3046 = vpop.f32.mrb[0].mxu0
    %v3047 = vadd.f32 0.0, %v3046
    %v3048 = vpop.f32.mrb[0].mxu0
    %3049 = vmatprep.mubr.bf16.mxu0 0
    %3050 = vmatmul.mubr.bf16.gmra.mrb[0].mxu0 %v2935
    %v3051 = vpop.f32.mrb[0].mxu0
    %v3052 = vadd.f32 0.0, %v3051
    %v3053 = vpop.f32.mrb[0].mxu0
    %v3054 = vpop.f32.mrb[0].mxu0
    %v3055 = vadd.f32 0.0, %v3054
    %v3056 = vpop.f32.mrb[0].mxu0
    %3057 = vmatprep.mubr.bf16.mxu0 0
    %3058 = vmatmul.mubr.bf16.gmra.mrb[0].mxu0 %v2938
    %v3059 = vpop.f32.mrb[0].mxu0
    %v3060 = vadd.f32 0.0, %v3059
    %v3061 = vpop.f32.mrb[0].mxu0
    %v3062 = vpop.f32.mrb[0].mxu0
    %v3063 = vadd.f32 0.0, %v3062
    %v3064 = vpop.f32.mrb[0].mxu0
    %3065 = vmatprep.mubr.bf16.mxu0 0
    %3066 = vmatmul.mubr.bf16.gmra.mrb[0].mxu0 %v2941
    %v3067 = vpop.f32.mrb[0].mxu0
    %v3068 = vadd.f32 0.0, %v3067
    %v3069 = vpop.f32.mrb[0].mxu0
    %v3070 = vpop.f32.mrb[0].mxu0
    %v3071 = vadd.f32 0.0, %v3070
    %v3072 = vpop.f32.mrb[0].mxu0
    %3073 = vmatprep.mubr.bf16.mxu0 0
    %3074 = vmatmul.mubr.bf16.gmra.mrb[0].mxu0 %v2944
    %v3075 = vpop.f32.mrb[0].mxu0
    %v3076 = vadd.f32 0.0, %v3075
    %v3077 = vpop.f32.mrb[0].mxu0
    %v3078 = vpop.f32.mrb[0].mxu0
    %v3079 = vadd.f32 0.0, %v3078
    %v3080 = vpop.f32.mrb[0].mxu0
    %3081 = vmatprep.mubr.bf16.mxu0 0
    %3082 = vmatmul.mubr.bf16.gmra.mrb[0].mxu0 %v2947
    %v3083 = vpop.f32.mrb[0].mxu0
    %v3084 = vadd.f32 0.0, %v3083
    %v3085 = vpop.f32.mrb[0].mxu0
    %v3086 = vpop.f32.mrb[0].mxu0
    %v3087 = vadd.f32 0.0, %v3086
    %v3088 = vpop.f32.mrb[0].mxu0
    %3089 = vmatprep.mubr.bf16.mxu0 0
    %3090 = vmatmul.mubr.bf16.gmra.mrb[0].mxu0 %v2950
    %v3091 = vpop.f32.mrb[0].mxu0
    %v3092 = vadd.f32 0.0, %v3091
    %v3093 = vpop.f32.mrb[0].mxu0
    %v3094 = vpop.f32.mrb[0].mxu0
    %v3095 = vadd.f32 0.0, %v3094
    %v3096 = vpop.f32.mrb[0].mxu0
    %3097 = vmatprep.mubr.bf16.mxu0 0
    %3098 = vmatmul.mubr.bf16.gmra.mrb[0].mxu0 %v2953
    %v3099 = vpop.f32.mrb[0].mxu0
    %v3100 = vadd.f32 0.0, %v3099
    %v3101 = vpop.f32.mrb[0].mxu0
    %v3102 = vpop.f32.mrb[0].mxu0
    %v3103 = vadd.f32 0.0, %v3102
    %v3104 = vpop.f32.mrb[0].mxu0
    %3105 = vmatprep.mubr.bf16.mxu0 0
    %3106 = vmatmul.mubr.bf16.gmra.mrb[0].mxu0 %v2956
    %v3107 = vpop.f32.mrb[0].mxu0
    %v3108 = vadd.f32 0.0, %v3107
    %v3109 = vpop.f32.mrb[0].mxu0
    %v3110 = vpop.f32.mrb[0].mxu0
    %v3111 = vadd.f32 0.0, %v3110
    %v3112 = vpop.f32.mrb[0].mxu0
    %3113 = vmatprep.mubr.bf16.mxu0 0
    %3114 = vmatmul.mubr.bf16.gmra.mrb[0].mxu0 %v2959
    %v3115 = vpop.f32.mrb[0].mxu0
    %v3116 = vadd.f32 0.0, %v3115
    %v3117 = vpop.f32.mrb[0].mxu0
    %v3118 = vpop.f32.mrb[0].mxu0
    %v3119 = vadd.f32 0.0, %v3118
    %v3120 = vpop.f32.mrb[0].mxu0
    %3121 = vdwg.mxu0
    %v3122 = vadd.f32 %v2784, %v2996
    %v3123 = vadd.f32 %v2785, %v2999
    %v3124 = vadd.f32 %v2786, %v3004
    %v3125 = vadd.f32 %v2787, %v3007
    %v3126 = vadd.f32 %v2788, %v3012
    %v3127 = vadd.f32 %v2789, %v3015
    %v3128 = vadd.f32 %v2790, %v3020
    %v3129 = vadd.f32 %v2791, %v3023
    %v3130 = vadd.f32 %v2792, %v3028
    %v3131 = vadd.f32 %v2793, %v3031
    %v3132 = vadd.f32 %v2794, %v3036
    %v3133 = vadd.f32 %v2795, %v3039
    %v3134 = vadd.f32 %v2796, %v3044
    %v3135 = vadd.f32 %v2797, %v3047
    %v3136 = vadd.f32 %v2798, %v3052
    %v3137 = vadd.f32 %v2799, %v3055
    %v3138 = vadd.f32 %v2800, %v3060
    %v3139 = vadd.f32 %v2801, %v3063
    %v3140 = vadd.f32 %v2802, %v3068
    %v3141 = vadd.f32 %v2803, %v3071
    %v3142 = vadd.f32 %v2804, %v3076
    %v3143 = vadd.f32 %v2805, %v3079
    %v3144 = vadd.f32 %v2806, %v3084
    %v3145 = vadd.f32 %v2807, %v3087
    %v3146 = vadd.f32 %v2808, %v3092
    %v3147 = vadd.f32 %v2809, %v3095
    %v3148 = vadd.f32 %v2810, %v3100
    %v3149 = vadd.f32 %v2811, %v3103
    %v3150 = vadd.f32 %v2812, %v3108
    %v3151 = vadd.f32 %v2813, %v3111
    %v3152 = vadd.f32 %v2814, %v3116
    %v3153 = vadd.f32 %v2815, %v3119
    %v3154 = vpack.c.bf16 %v2439, %v2438
    %v3155 = vpack.c.bf16 %v2441, %v2440
    %v3156 = vpack.c.bf16 %v2443, %v2442
    %v3157 = vpack.c.bf16 %v2445, %v2444
    %v3158 = vpack.c.bf16 %v2447, %v2446
    %v3159 = vpack.c.bf16 %v2449, %v2448
    %v3160 = vpack.c.bf16 %v2451, %v2450
    %v3161 = vpack.c.bf16 %v2453, %v2452
    %v3162 = vpack.c.bf16 %v2455, %v2454
    %v3163 = vpack.c.bf16 %v2457, %v2456
    %v3164 = vpack.c.bf16 %v2459, %v2458
    %v3165 = vpack.c.bf16 %v2461, %v2460
    %v3166 = vpack.c.bf16 %v2463, %v2462
    %v3167 = vpack.c.bf16 %v2465, %v2464
    %v3168 = vpack.c.bf16 %v2467, %v2466
    %v3169 = vpack.c.bf16 %v2469, %v2468
    %s3170 = scalar_lea.vmem [#allocation10], 32
    %v3171 = vld [vmem:[%s3170] sm:$0xf]
    %v3172 = vld [vmem:[%s3170 + $0x4] sm:$0xf]
    %v3173 = vld [vmem:[%s3170 + $0x8] sm:$0xf]
    %v3174 = vld [vmem:[%s3170 + $0xc] sm:$0xf]
    %v3179 = vunpack.c.l.b16 %v3171
    %v3180 = vunpack.c.l.b16 %v3172
    %v3181 = vunpack.c.l.b16 %v3173
    %v3182 = vunpack.c.l.b16 %v3174
    %v3183 = vpack.c.b16 %v3180, %v3179
    %v3184 = vpack.c.b16 %v3182, %v3181
    %v3188 = vsel %vm2574, %v3154, 0
    %v3191 = vsel %vm2574, %v3155, 0
    %v3194 = vsel %vm2574, %v3156, 0
    %v3197 = vsel %vm2574, %v3157, 0
    %v3200 = vsel %vm2574, %v3158, 0
    %v3203 = vsel %vm2574, %v3159, 0
    %v3206 = vsel %vm2574, %v3160, 0
    %v3209 = vsel %vm2574, %v3161, 0
    %v3212 = vsel %vm2574, %v3162, 0
    %v3215 = vsel %vm2574, %v3163, 0
    %v3218 = vsel %vm2574, %v3164, 0
    %v3221 = vsel %vm2574, %v3165, 0
    %v3224 = vsel %vm2574, %v3166, 0
    %v3227 = vsel %vm2574, %v3167, 0
    %v3230 = vsel %vm2574, %v3168, 0
    %v3233 = vsel %vm2574, %v3169, 0
    %3235 = vmatprep.subr.bf16.mxu0 0
    %3236 = vmatpush1.bf16.msra.mxu0 %v3183
    %3237 = vmatprep.subr.bf16.mxu0 0
    %3238 = vmatpush1.bf16.msra.mxu0 %v3184
    %3239 = vmatprep.subr.bf16.mxu0 0
    %3240 = vmatpush1.bf16.msra.mxu0 0
    %3241 = vmatprep.subr.bf16.mxu0 0
    %3242 = vmatpush1.bf16.msra.mxu0 0
    %3243 = vmatprep.subr.bf16.mxu0 0
    %3244 = vmatpush1.bf16.msra.mxu0 0
    %3245 = vmatprep.subr.bf16.mxu0 0
    %3246 = vmatpush1.bf16.msra.mxu0 0
    %3247 = vmatprep.subr.bf16.mxu0 0
    %3248 = vmatpush1.bf16.msra.mxu0 0
    %3249 = vmatprep.subr.bf16.mxu0 0
    %3250 = vmatpush1.bf16.msra.mxu0 0
    %3251 = vmatprep.subr.bf16.mxu0 0
    %3252 = vmatpush1.bf16.msra.mxu0 0
    %3253 = vmatprep.subr.bf16.mxu0 0
    %3254 = vmatpush1.bf16.msra.mxu0 0
    %3255 = vmatprep.subr.bf16.mxu0 0
    %3256 = vmatpush1.bf16.msra.mxu0 0
    %3257 = vmatprep.subr.bf16.mxu0 0
    %3258 = vmatpush1.bf16.msra.mxu0 0
    %3259 = vmatprep.subr.bf16.mxu0 0
    %3260 = vmatpush1.bf16.msra.mxu0 0
    %3261 = vmatprep.subr.bf16.mxu0 0
    %3262 = vmatpush1.bf16.msra.mxu0 0
    %3263 = vmatprep.subr.bf16.mxu0 0
    %3264 = vmatpush1.bf16.msra.mxu0 0
    %3265 = vmatprep.subr.bf16.mxu0 0
    %3266 = vmatpush1.bf16.msra.mxu0 0
    %3267 = vmatprep.mubr.bf16.mxu0 0
    %3268 = vmatmul.mubr.bf16.gmra.mrb[0].mxu0 %v3188
    %v3269 = vpop.f32.mrb[0].mxu0
    %v3270 = vadd.f32 0.0, %v3269
    %v3271 = vpop.f32.mrb[0].mxu0
    %v3272 = vpop.f32.mrb[0].mxu0
    %v3273 = vadd.f32 0.0, %v3272
    %v3274 = vpop.f32.mrb[0].mxu0
    %3275 = vmatprep.mubr.bf16.mxu0 0
    %3276 = vmatmul.mubr.bf16.gmra.mrb[0].mxu0 %v3191
    %v3277 = vpop.f32.mrb[0].mxu0
    %v3278 = vadd.f32 0.0, %v3277
    %v3279 = vpop.f32.mrb[0].mxu0
    %v3280 = vpop.f32.mrb[0].mxu0
    %v3281 = vadd.f32 0.0, %v3280
    %v3282 = vpop.f32.mrb[0].mxu0
    %3283 = vmatprep.mubr.bf16.mxu0 0
    %3284 = vmatmul.mubr.bf16.gmra.mrb[0].mxu0 %v3194
    %v3285 = vpop.f32.mrb[0].mxu0
    %v3286 = vadd.f32 0.0, %v3285
    %v3287 = vpop.f32.mrb[0].mxu0
    %v3288 = vpop.f32.mrb[0].mxu0
    %v3289 = vadd.f32 0.0, %v3288
    %v3290 = vpop.f32.mrb[0].mxu0
    %3291 = vmatprep.mubr.bf16.mxu0 0
    %3292 = vmatmul.mubr.bf16.gmra.mrb[0].mxu0 %v3197
    %v3293 = vpop.f32.mrb[0].mxu0
    %v3294 = vadd.f32 0.0, %v3293
    %v3295 = vpop.f32.mrb[0].mxu0
    %v3296 = vpop.f32.mrb[0].mxu0
    %v3297 = vadd.f32 0.0, %v3296
    %v3298 = vpop.f32.mrb[0].mxu0
    %3299 = vmatprep.mubr.bf16.mxu0 0
    %3300 = vmatmul.mubr.bf16.gmra.mrb[0].mxu0 %v3200
    %v3301 = vpop.f32.mrb[0].mxu0
    %v3302 = vadd.f32 0.0, %v3301
    %v3303 = vpop.f32.mrb[0].mxu0
    %v3304 = vpop.f32.mrb[0].mxu0
    %v3305 = vadd.f32 0.0, %v3304
    %v3306 = vpop.f32.mrb[0].mxu0
    %3307 = vmatprep.mubr.bf16.mxu0 0
    %3308 = vmatmul.mubr.bf16.gmra.mrb[0].mxu0 %v3203
    %v3309 = vpop.f32.mrb[0].mxu0
    %v3310 = vadd.f32 0.0, %v3309
    %v3311 = vpop.f32.mrb[0].mxu0
    %v3312 = vpop.f32.mrb[0].mxu0
    %v3313 = vadd.f32 0.0, %v3312
    %v3314 = vpop.f32.mrb[0].mxu0
    %3315 = vmatprep.mubr.bf16.mxu0 0
    %3316 = vmatmul.mubr.bf16.gmra.mrb[0].mxu0 %v3206
    %v3317 = vpop.f32.mrb[0].mxu0
    %v3318 = vadd.f32 0.0, %v3317
    %v3319 = vpop.f32.mrb[0].mxu0
    %v3320 = vpop.f32.mrb[0].mxu0
    %v3321 = vadd.f32 0.0, %v3320
    %v3322 = vpop.f32.mrb[0].mxu0
    %3323 = vmatprep.mubr.bf16.mxu0 0
    %3324 = vmatmul.mubr.bf16.gmra.mrb[0].mxu0 %v3209
    %v3325 = vpop.f32.mrb[0].mxu0
    %v3326 = vadd.f32 0.0, %v3325
    %v3327 = vpop.f32.mrb[0].mxu0
    %v3328 = vpop.f32.mrb[0].mxu0
    %v3329 = vadd.f32 0.0, %v3328
    %v3330 = vpop.f32.mrb[0].mxu0
    %3331 = vmatprep.mubr.bf16.mxu0 0
    %3332 = vmatmul.mubr.bf16.gmra.mrb[0].mxu0 %v3212
    %v3333 = vpop.f32.mrb[0].mxu0
    %v3334 = vadd.f32 0.0, %v3333
    %v3335 = vpop.f32.mrb[0].mxu0
    %v3336 = vpop.f32.mrb[0].mxu0
    %v3337 = vadd.f32 0.0, %v3336
    %v3338 = vpop.f32.mrb[0].mxu0
    %3339 = vmatprep.mubr.bf16.mxu0 0
    %3340 = vmatmul.mubr.bf16.gmra.mrb[0].mxu0 %v3215
    %v3341 = vpop.f32.mrb[0].mxu0
    %v3342 = vadd.f32 0.0, %v3341
    %v3343 = vpop.f32.mrb[0].mxu0
    %v3344 = vpop.f32.mrb[0].mxu0
    %v3345 = vadd.f32 0.0, %v3344
    %v3346 = vpop.f32.mrb[0].mxu0
    %3347 = vmatprep.mubr.bf16.mxu0 0
    %3348 = vmatmul.mubr.bf16.gmra.mrb[0].mxu0 %v3218
    %v3349 = vpop.f32.mrb[0].mxu0
    %v3350 = vadd.f32 0.0, %v3349
    %v3351 = vpop.f32.mrb[0].mxu0
    %v3352 = vpop.f32.mrb[0].mxu0
    %v3353 = vadd.f32 0.0, %v3352
    %v3354 = vpop.f32.mrb[0].mxu0
    %3355 = vmatprep.mubr.bf16.mxu0 0
    %3356 = vmatmul.mubr.bf16.gmra.mrb[0].mxu0 %v3221
    %v3357 = vpop.f32.mrb[0].mxu0
    %v3358 = vadd.f32 0.0, %v3357
    %v3359 = vpop.f32.mrb[0].mxu0
    %v3360 = vpop.f32.mrb[0].mxu0
    %v3361 = vadd.f32 0.0, %v3360
    %v3362 = vpop.f32.mrb[0].mxu0
    %3363 = vmatprep.mubr.bf16.mxu0 0
    %3364 = vmatmul.mubr.bf16.gmra.mrb[0].mxu0 %v3224
    %v3365 = vpop.f32.mrb[0].mxu0
    %v3366 = vadd.f32 0.0, %v3365
    %v3367 = vpop.f32.mrb[0].mxu0
    %v3368 = vpop.f32.mrb[0].mxu0
    %v3369 = vadd.f32 0.0, %v3368
    %v3370 = vpop.f32.mrb[0].mxu0
    %3371 = vmatprep.mubr.bf16.mxu0 0
    %3372 = vmatmul.mubr.bf16.gmra.mrb[0].mxu0 %v3227
    %v3373 = vpop.f32.mrb[0].mxu0
    %v3374 = vadd.f32 0.0, %v3373
    %v3375 = vpop.f32.mrb[0].mxu0
    %v3376 = vpop.f32.mrb[0].mxu0
    %v3377 = vadd.f32 0.0, %v3376
    %v3378 = vpop.f32.mrb[0].mxu0
    %3379 = vmatprep.mubr.bf16.mxu0 0
    %3380 = vmatmul.mubr.bf16.gmra.mrb[0].mxu0 %v3230
    %v3381 = vpop.f32.mrb[0].mxu0
    %v3382 = vadd.f32 0.0, %v3381
    %v3383 = vpop.f32.mrb[0].mxu0
    %v3384 = vpop.f32.mrb[0].mxu0
    %v3385 = vadd.f32 0.0, %v3384
    %v3386 = vpop.f32.mrb[0].mxu0
    %3387 = vmatprep.mubr.bf16.mxu0 0
    %3388 = vmatmul.mubr.bf16.gmra.mrb[0].mxu0 %v3233
    %v3389 = vpop.f32.mrb[0].mxu0
    %v3390 = vadd.f32 0.0, %v3389
    %v3391 = vpop.f32.mrb[0].mxu0
    %v3392 = vpop.f32.mrb[0].mxu0
    %v3393 = vadd.f32 0.0, %v3392
    %v3394 = vpop.f32.mrb[0].mxu0
    %3395 = vdwg.mxu0
    %v3396 = vadd.f32 %v3122, %v3270
    %v3397 = vadd.f32 %v3123, %v3273
    %v3398 = vadd.f32 %v3124, %v3278
    %v3399 = vadd.f32 %v3125, %v3281
    %v3400 = vadd.f32 %v3126, %v3286
    %v3401 = vadd.f32 %v3127, %v3289
    %v3402 = vadd.f32 %v3128, %v3294
    %v3403 = vadd.f32 %v3129, %v3297
    %v3404 = vadd.f32 %v3130, %v3302
    %v3405 = vadd.f32 %v3131, %v3305
    %v3406 = vadd.f32 %v3132, %v3310
    %v3407 = vadd.f32 %v3133, %v3313
    %v3408 = vadd.f32 %v3134, %v3318
    %v3409 = vadd.f32 %v3135, %v3321
    %v3410 = vadd.f32 %v3136, %v3326
    %v3411 = vadd.f32 %v3137, %v3329
    %v3412 = vadd.f32 %v3138, %v3334
    %v3413 = vadd.f32 %v3139, %v3337
    %v3414 = vadd.f32 %v3140, %v3342
    %v3415 = vadd.f32 %v3141, %v3345
    %v3416 = vadd.f32 %v3142, %v3350
    %v3417 = vadd.f32 %v3143, %v3353
    %v3418 = vadd.f32 %v3144, %v3358
    %v3419 = vadd.f32 %v3145, %v3361
    %v3420 = vadd.f32 %v3146, %v3366
    %v3421 = vadd.f32 %v3147, %v3369
    %v3422 = vadd.f32 %v3148, %v3374
    %v3423 = vadd.f32 %v3149, %v3377
    %v3424 = vadd.f32 %v3150, %v3382
    %v3425 = vadd.f32 %v3151, %v3385
    %v3426 = vadd.f32 %v3152, %v3390
    %v3427 = vadd.f32 %v3153, %v3393
    %v3428 = vrot.slane %v2438, 1
    %v3429 = vrot.slane %v2440, 1
    %v3430 = vrot.slane %v2442, 1
    %v3431 = vrot.slane %v2444, 1
    %v3432 = vrot.slane %v2446, 1
    %v3433 = vrot.slane %v2448, 1
    %v3434 = vrot.slane %v2450, 1
    %v3435 = vrot.slane %v2452, 1
    %v3436 = vrot.slane %v2454, 1
    %v3437 = vrot.slane %v2456, 1
    %v3438 = vrot.slane %v2458, 1
    %v3439 = vrot.slane %v2460, 1
    %v3440 = vrot.slane %v2462, 1
    %v3441 = vrot.slane %v2464, 1
    %v3442 = vrot.slane %v2466, 1
    %v3443 = vrot.slane %v2468, 1
    %v3444 = vrot.slane %v2439, 1
    %v3445 = vrot.slane %v2441, 1
    %v3446 = vrot.slane %v2443, 1
    %v3447 = vrot.slane %v2445, 1
    %v3448 = vrot.slane %v2447, 1
    %v3449 = vrot.slane %v2449, 1
    %v3450 = vrot.slane %v2451, 1
    %v3451 = vrot.slane %v2453, 1
    %v3452 = vrot.slane %v2455, 1
    %v3453 = vrot.slane %v2457, 1
    %v3454 = vrot.slane %v2459, 1
    %v3455 = vrot.slane %v2461, 1
    %v3456 = vrot.slane %v2463, 1
    %v3457 = vrot.slane %v2465, 1
    %v3458 = vrot.slane %v2467, 1
    %v3459 = vrot.slane %v2469, 1
    %v3460 = vsel %vm1489, %v3428, %v3444
    %v3461 = vsel %vm1489, %v3429, %v3445
    %v3462 = vsel %vm1489, %v3430, %v3446
    %v3463 = vsel %vm1489, %v3431, %v3447
    %v3464 = vsel %vm1489, %v3432, %v3448
    %v3465 = vsel %vm1489, %v3433, %v3449
    %v3466 = vsel %vm1489, %v3434, %v3450
    %v3467 = vsel %vm1489, %v3435, %v3451
    %v3468 = vsel %vm1489, %v3436, %v3452
    %v3469 = vsel %vm1489, %v3437, %v3453
    %v3470 = vsel %vm1489, %v3438, %v3454
    %v3471 = vsel %vm1489, %v3439, %v3455
    %v3472 = vsel %vm1489, %v3440, %v3456
    %v3473 = vsel %vm1489, %v3441, %v3457
    %v3474 = vsel %vm1489, %v3442, %v3458
    %v3475 = vsel %vm1489, %v3443, %v3459
    %v3476 = vsel %vm1489, %v3444, %v3428
    %v3477 = vsel %vm1489, %v3445, %v3429
    %v3478 = vsel %vm1489, %v3446, %v3430
    %v3479 = vsel %vm1489, %v3447, %v3431
    %v3480 = vsel %vm1489, %v3448, %v3432
    %v3481 = vsel %vm1489, %v3449, %v3433
    %v3482 = vsel %vm1489, %v3450, %v3434
    %v3483 = vsel %vm1489, %v3451, %v3435
    %v3484 = vsel %vm1489, %v3452, %v3436
    %v3485 = vsel %vm1489, %v3453, %v3437
    %v3486 = vsel %vm1489, %v3454, %v3438
    %v3487 = vsel %vm1489, %v3455, %v3439
    %v3488 = vsel %vm1489, %v3456, %v3440
    %v3489 = vsel %vm1489, %v3457, %v3441
    %v3490 = vsel %vm1489, %v3458, %v3442
    %v3491 = vsel %vm1489, %v3459, %v3443
    %v3492 = vpack.c.bf16 %v3476, %v3460
    %v3493 = vpack.c.bf16 %v3477, %v3461
    %v3494 = vpack.c.bf16 %v3478, %v3462
    %v3495 = vpack.c.bf16 %v3479, %v3463
    %v3496 = vpack.c.bf16 %v3480, %v3464
    %v3497 = vpack.c.bf16 %v3481, %v3465
    %v3498 = vpack.c.bf16 %v3482, %v3466
    %v3499 = vpack.c.bf16 %v3483, %v3467
    %v3500 = vpack.c.bf16 %v3484, %v3468
    %v3501 = vpack.c.bf16 %v3485, %v3469
    %v3502 = vpack.c.bf16 %v3486, %v3470
    %v3503 = vpack.c.bf16 %v3487, %v3471
    %v3504 = vpack.c.bf16 %v3488, %v3472
    %v3505 = vpack.c.bf16 %v3489, %v3473
    %v3506 = vpack.c.bf16 %v3490, %v3474
    %v3507 = vpack.c.bf16 %v3491, %v3475
    %s3508 = scalar_lea.vmem [#allocation10], 48
    %v3509 = vld [vmem:[%s3508] sm:$0xf]
    %v3510 = vld [vmem:[%s3508 + $0x4] sm:$0xf]
    %v3511 = vld [vmem:[%s3508 + $0x8] sm:$0xf]
    %v3512 = vld [vmem:[%s3508 + $0xc] sm:$0xf]
    %v3517 = vunpack.c.l.b16 %v3509
    %v3518 = vunpack.c.l.b16 %v3510
    %v3519 = vunpack.c.l.b16 %v3511
    %v3520 = vunpack.c.l.b16 %v3512
    %v3521 = vpack.c.b16 %v3518, %v3517
    %v3522 = vpack.c.b16 %v3520, %v3519
    %v3526 = vsel %vm2574, %v3492, 0
    %v3529 = vsel %vm2574, %v3493, 0
    %v3532 = vsel %vm2574, %v3494, 0
    %v3535 = vsel %vm2574, %v3495, 0
    %v3538 = vsel %vm2574, %v3496, 0
    %v3541 = vsel %vm2574, %v3497, 0
    %v3544 = vsel %vm2574, %v3498, 0
    %v3547 = vsel %vm2574, %v3499, 0
    %v3550 = vsel %vm2574, %v3500, 0
    %v3553 = vsel %vm2574, %v3501, 0
    %v3556 = vsel %vm2574, %v3502, 0
    %v3559 = vsel %vm2574, %v3503, 0
    %v3562 = vsel %vm2574, %v3504, 0
    %v3565 = vsel %vm2574, %v3505, 0
    %v3568 = vsel %vm2574, %v3506, 0
    %v3571 = vsel %vm2574, %v3507, 0
    %3573 = vmatprep.subr.bf16.mxu0 0
    %3574 = vmatpush1.bf16.msra.mxu0 %v3521
    %3575 = vmatprep.subr.bf16.mxu0 0
    %3576 = vmatpush1.bf16.msra.mxu0 %v3522
    %3577 = vmatprep.subr.bf16.mxu0 0
    %3578 = vmatpush1.bf16.msra.mxu0 0
    %3579 = vmatprep.subr.bf16.mxu0 0
    %3580 = vmatpush1.bf16.msra.mxu0 0
    %3581 = vmatprep.subr.bf16.mxu0 0
    %3582 = vmatpush1.bf16.msra.mxu0 0
    %3583 = vmatprep.subr.bf16.mxu0 0
    %3584 = vmatpush1.bf16.msra.mxu0 0
    %3585 = vmatprep.subr.bf16.mxu0 0
    %3586 = vmatpush1.bf16.msra.mxu0 0
    %3587 = vmatprep.subr.bf16.mxu0 0
    %3588 = vmatpush1.bf16.msra.mxu0 0
    %3589 = vmatprep.subr.bf16.mxu0 0
    %3590 = vmatpush1.bf16.msra.mxu0 0
    %3591 = vmatprep.subr.bf16.mxu0 0
    %3592 = vmatpush1.bf16.msra.mxu0 0
    %3593 = vmatprep.subr.bf16.mxu0 0
    %3594 = vmatpush1.bf16.msra.mxu0 0
    %3595 = vmatprep.subr.bf16.mxu0 0
    %3596 = vmatpush1.bf16.msra.mxu0 0
    %3597 = vmatprep.subr.bf16.mxu0 0
    %3598 = vmatpush1.bf16.msra.mxu0 0
    %3599 = vmatprep.subr.bf16.mxu0 0
    %3600 = vmatpush1.bf16.msra.mxu0 0
    %3601 = vmatprep.subr.bf16.mxu0 0
    %3602 = vmatpush1.bf16.msra.mxu0 0
    %3603 = vmatprep.subr.bf16.mxu0 0
    %3604 = vmatpush1.bf16.msra.mxu0 0
    %3605 = vmatprep.mubr.bf16.mxu0 0
    %3606 = vmatmul.mubr.bf16.gmra.mrb[0].mxu0 %v3526
    %v3607 = vpop.f32.mrb[0].mxu0
    %v3608 = vadd.f32 0.0, %v3607
    %v3609 = vpop.f32.mrb[0].mxu0
    %v3610 = vpop.f32.mrb[0].mxu0
    %v3611 = vadd.f32 0.0, %v3610
    %v3612 = vpop.f32.mrb[0].mxu0
    %3613 = vmatprep.mubr.bf16.mxu0 0
    %3614 = vmatmul.mubr.bf16.gmra.mrb[0].mxu0 %v3529
    %v3615 = vpop.f32.mrb[0].mxu0
    %v3616 = vadd.f32 0.0, %v3615
    %v3617 = vpop.f32.mrb[0].mxu0
    %v3618 = vpop.f32.mrb[0].mxu0
    %v3619 = vadd.f32 0.0, %v3618
    %v3620 = vpop.f32.mrb[0].mxu0
    %3621 = vmatprep.mubr.bf16.mxu0 0
    %3622 = vmatmul.mubr.bf16.gmra.mrb[0].mxu0 %v3532
    %v3623 = vpop.f32.mrb[0].mxu0
    %v3624 = vadd.f32 0.0, %v3623
    %v3625 = vpop.f32.mrb[0].mxu0
    %v3626 = vpop.f32.mrb[0].mxu0
    %v3627 = vadd.f32 0.0, %v3626
    %v3628 = vpop.f32.mrb[0].mxu0
    %3629 = vmatprep.mubr.bf16.mxu0 0
    %3630 = vmatmul.mubr.bf16.gmra.mrb[0].mxu0 %v3535
    %v3631 = vpop.f32.mrb[0].mxu0
    %v3632 = vadd.f32 0.0, %v3631
    %v3633 = vpop.f32.mrb[0].mxu0
    %v3634 = vpop.f32.mrb[0].mxu0
    %v3635 = vadd.f32 0.0, %v3634
    %v3636 = vpop.f32.mrb[0].mxu0
    %3637 = vmatprep.mubr.bf16.mxu0 0
    %3638 = vmatmul.mubr.bf16.gmra.mrb[0].mxu0 %v3538
    %v3639 = vpop.f32.mrb[0].mxu0
    %v3640 = vadd.f32 0.0, %v3639
    %v3641 = vpop.f32.mrb[0].mxu0
    %v3642 = vpop.f32.mrb[0].mxu0
    %v3643 = vadd.f32 0.0, %v3642
    %v3644 = vpop.f32.mrb[0].mxu0
    %3645 = vmatprep.mubr.bf16.mxu0 0
    %3646 = vmatmul.mubr.bf16.gmra.mrb[0].mxu0 %v3541
    %v3647 = vpop.f32.mrb[0].mxu0
    %v3648 = vadd.f32 0.0, %v3647
    %v3649 = vpop.f32.mrb[0].mxu0
    %v3650 = vpop.f32.mrb[0].mxu0
    %v3651 = vadd.f32 0.0, %v3650
    %v3652 = vpop.f32.mrb[0].mxu0
    %3653 = vmatprep.mubr.bf16.mxu0 0
    %3654 = vmatmul.mubr.bf16.gmra.mrb[0].mxu0 %v3544
    %v3655 = vpop.f32.mrb[0].mxu0
    %v3656 = vadd.f32 0.0, %v3655
    %v3657 = vpop.f32.mrb[0].mxu0
    %v3658 = vpop.f32.mrb[0].mxu0
    %v3659 = vadd.f32 0.0, %v3658
    %v3660 = vpop.f32.mrb[0].mxu0
    %3661 = vmatprep.mubr.bf16.mxu0 0
    %3662 = vmatmul.mubr.bf16.gmra.mrb[0].mxu0 %v3547
    %v3663 = vpop.f32.mrb[0].mxu0
    %v3664 = vadd.f32 0.0, %v3663
    %v3665 = vpop.f32.mrb[0].mxu0
    %v3666 = vpop.f32.mrb[0].mxu0
    %v3667 = vadd.f32 0.0, %v3666
    %v3668 = vpop.f32.mrb[0].mxu0
    %3669 = vmatprep.mubr.bf16.mxu0 0
    %3670 = vmatmul.mubr.bf16.gmra.mrb[0].mxu0 %v3550
    %v3671 = vpop.f32.mrb[0].mxu0
    %v3672 = vadd.f32 0.0, %v3671
    %v3673 = vpop.f32.mrb[0].mxu0
    %v3674 = vpop.f32.mrb[0].mxu0
    %v3675 = vadd.f32 0.0, %v3674
    %v3676 = vpop.f32.mrb[0].mxu0
    %3677 = vmatprep.mubr.bf16.mxu0 0
    %3678 = vmatmul.mubr.bf16.gmra.mrb[0].mxu0 %v3553
    %v3679 = vpop.f32.mrb[0].mxu0
    %v3680 = vadd.f32 0.0, %v3679
    %v3681 = vpop.f32.mrb[0].mxu0
    %v3682 = vpop.f32.mrb[0].mxu0
    %v3683 = vadd.f32 0.0, %v3682
    %v3684 = vpop.f32.mrb[0].mxu0
    %3685 = vmatprep.mubr.bf16.mxu0 0
    %3686 = vmatmul.mubr.bf16.gmra.mrb[0].mxu0 %v3556
    %v3687 = vpop.f32.mrb[0].mxu0
    %v3688 = vadd.f32 0.0, %v3687
    %v3689 = vpop.f32.mrb[0].mxu0
    %v3690 = vpop.f32.mrb[0].mxu0
    %v3691 = vadd.f32 0.0, %v3690
    %v3692 = vpop.f32.mrb[0].mxu0
    %3693 = vmatprep.mubr.bf16.mxu0 0
    %3694 = vmatmul.mubr.bf16.gmra.mrb[0].mxu0 %v3559
    %v3695 = vpop.f32.mrb[0].mxu0
    %v3696 = vadd.f32 0.0, %v3695
    %v3697 = vpop.f32.mrb[0].mxu0
    %v3698 = vpop.f32.mrb[0].mxu0
    %v3699 = vadd.f32 0.0, %v3698
    %v3700 = vpop.f32.mrb[0].mxu0
    %3701 = vmatprep.mubr.bf16.mxu0 0
    %3702 = vmatmul.mubr.bf16.gmra.mrb[0].mxu0 %v3562
    %v3703 = vpop.f32.mrb[0].mxu0
    %v3704 = vadd.f32 0.0, %v3703
    %v3705 = vpop.f32.mrb[0].mxu0
    %v3706 = vpop.f32.mrb[0].mxu0
    %v3707 = vadd.f32 0.0, %v3706
    %v3708 = vpop.f32.mrb[0].mxu0
    %3709 = vmatprep.mubr.bf16.mxu0 0
    %3710 = vmatmul.mubr.bf16.gmra.mrb[0].mxu0 %v3565
    %v3711 = vpop.f32.mrb[0].mxu0
    %v3712 = vadd.f32 0.0, %v3711
    %v3713 = vpop.f32.mrb[0].mxu0
    %v3714 = vpop.f32.mrb[0].mxu0
    %v3715 = vadd.f32 0.0, %v3714
    %v3716 = vpop.f32.mrb[0].mxu0
    %3717 = vmatprep.mubr.bf16.mxu0 0
    %3718 = vmatmul.mubr.bf16.gmra.mrb[0].mxu0 %v3568
    %v3719 = vpop.f32.mrb[0].mxu0
    %v3720 = vadd.f32 0.0, %v3719
    %v3721 = vpop.f32.mrb[0].mxu0
    %v3722 = vpop.f32.mrb[0].mxu0
    %v3723 = vadd.f32 0.0, %v3722
    %v3724 = vpop.f32.mrb[0].mxu0
    %3725 = vmatprep.mubr.bf16.mxu0 0
    %3726 = vmatmul.mubr.bf16.gmra.mrb[0].mxu0 %v3571
    %v3727 = vpop.f32.mrb[0].mxu0
    %v3728 = vadd.f32 0.0, %v3727
    %v3729 = vpop.f32.mrb[0].mxu0
    %v3730 = vpop.f32.mrb[0].mxu0
    %v3731 = vadd.f32 0.0, %v3730
    %v3732 = vpop.f32.mrb[0].mxu0
    %3733 = vdwg.mxu0
    %v3734 = vadd.f32 %v3396, %v3608
    %v3735 = vadd.f32 %v3397, %v3611
    %v3736 = vadd.f32 %v3398, %v3616
    %v3737 = vadd.f32 %v3399, %v3619
    %v3738 = vadd.f32 %v3400, %v3624
    %v3739 = vadd.f32 %v3401, %v3627
    %v3740 = vadd.f32 %v3402, %v3632
    %v3741 = vadd.f32 %v3403, %v3635
    %v3742 = vadd.f32 %v3404, %v3640
    %v3743 = vadd.f32 %v3405, %v3643
    %v3744 = vadd.f32 %v3406, %v3648
    %v3745 = vadd.f32 %v3407, %v3651
    %v3746 = vadd.f32 %v3408, %v3656
    %v3747 = vadd.f32 %v3409, %v3659
    %v3748 = vadd.f32 %v3410, %v3664
    %v3749 = vadd.f32 %v3411, %v3667
    %v3750 = vadd.f32 %v3412, %v3672
    %v3751 = vadd.f32 %v3413, %v3675
    %v3752 = vadd.f32 %v3414, %v3680
    %v3753 = vadd.f32 %v3415, %v3683
    %v3754 = vadd.f32 %v3416, %v3688
    %v3755 = vadd.f32 %v3417, %v3691
    %v3756 = vadd.f32 %v3418, %v3696
    %v3757 = vadd.f32 %v3419, %v3699
    %v3758 = vadd.f32 %v3420, %v3704
    %v3759 = vadd.f32 %v3421, %v3707
    %v3760 = vadd.f32 %v3422, %v3712
    %v3761 = vadd.f32 %v3423, %v3715
    %v3762 = vadd.f32 %v3424, %v3720
    %v3763 = vadd.f32 %v3425, %v3723
    %v3764 = vadd.f32 %v3426, %v3728
    %v3765 = vadd.f32 %v3427, %v3731
    %v3766 = vrot.slane %v2438, 2
    %v3767 = vrot.slane %v2440, 2
    %v3768 = vrot.slane %v2442, 2
    %v3769 = vrot.slane %v2444, 2
    %v3770 = vrot.slane %v2446, 2
    %v3771 = vrot.slane %v2448, 2
    %v3772 = vrot.slane %v2450, 2
    %v3773 = vrot.slane %v2452, 2
    %v3774 = vrot.slane %v2454, 2
    %v3775 = vrot.slane %v2456, 2
    %v3776 = vrot.slane %v2458, 2
    %v3777 = vrot.slane %v2460, 2
    %v3778 = vrot.slane %v2462, 2
    %v3779 = vrot.slane %v2464, 2
    %v3780 = vrot.slane %v2466, 2
    %v3781 = vrot.slane %v2468, 2
    %v3782 = vrot.slane %v2439, 2
    %v3783 = vrot.slane %v2441, 2
    %v3784 = vrot.slane %v2443, 2
    %v3785 = vrot.slane %v2445, 2
    %v3786 = vrot.slane %v2447, 2
    %v3787 = vrot.slane %v2449, 2
    %v3788 = vrot.slane %v2451, 2
    %v3789 = vrot.slane %v2453, 2
    %v3790 = vrot.slane %v2455, 2
    %v3791 = vrot.slane %v2457, 2
    %v3792 = vrot.slane %v2459, 2
    %v3793 = vrot.slane %v2461, 2
    %v3794 = vrot.slane %v2463, 2
    %v3795 = vrot.slane %v2465, 2
    %v3796 = vrot.slane %v2467, 2
    %v3797 = vrot.slane %v2469, 2
    %v3798 = vsel %vm1816, %v3766, %v3782
    %v3799 = vsel %vm1816, %v3767, %v3783
    %v3800 = vsel %vm1816, %v3768, %v3784
    %v3801 = vsel %vm1816, %v3769, %v3785
    %v3802 = vsel %vm1816, %v3770, %v3786
    %v3803 = vsel %vm1816, %v3771, %v3787
    %v3804 = vsel %vm1816, %v3772, %v3788
    %v3805 = vsel %vm1816, %v3773, %v3789
    %v3806 = vsel %vm1816, %v3774, %v3790
    %v3807 = vsel %vm1816, %v3775, %v3791
    %v3808 = vsel %vm1816, %v3776, %v3792
    %v3809 = vsel %vm1816, %v3777, %v3793
    %v3810 = vsel %vm1816, %v3778, %v3794
    %v3811 = vsel %vm1816, %v3779, %v3795
    %v3812 = vsel %vm1816, %v3780, %v3796
    %v3813 = vsel %vm1816, %v3781, %v3797
    %v3814 = vsel %vm1816, %v3782, %v3766
    %v3815 = vsel %vm1816, %v3783, %v3767
    %v3816 = vsel %vm1816, %v3784, %v3768
    %v3817 = vsel %vm1816, %v3785, %v3769
    %v3818 = vsel %vm1816, %v3786, %v3770
    %v3819 = vsel %vm1816, %v3787, %v3771
    %v3820 = vsel %vm1816, %v3788, %v3772
    %v3821 = vsel %vm1816, %v3789, %v3773
    %v3822 = vsel %vm1816, %v3790, %v3774
    %v3823 = vsel %vm1816, %v3791, %v3775
    %v3824 = vsel %vm1816, %v3792, %v3776
    %v3825 = vsel %vm1816, %v3793, %v3777
    %v3826 = vsel %vm1816, %v3794, %v3778
    %v3827 = vsel %vm1816, %v3795, %v3779
    %v3828 = vsel %vm1816, %v3796, %v3780
    %v3829 = vsel %vm1816, %v3797, %v3781
    %v3830 = vpack.c.bf16 %v3814, %v3798
    %v3831 = vpack.c.bf16 %v3815, %v3799
    %v3832 = vpack.c.bf16 %v3816, %v3800
    %v3833 = vpack.c.bf16 %v3817, %v3801
    %v3834 = vpack.c.bf16 %v3818, %v3802
    %v3835 = vpack.c.bf16 %v3819, %v3803
    %v3836 = vpack.c.bf16 %v3820, %v3804
    %v3837 = vpack.c.bf16 %v3821, %v3805
    %v3838 = vpack.c.bf16 %v3822, %v3806
    %v3839 = vpack.c.bf16 %v3823, %v3807
    %v3840 = vpack.c.bf16 %v3824, %v3808
    %v3841 = vpack.c.bf16 %v3825, %v3809
    %v3842 = vpack.c.bf16 %v3826, %v3810
    %v3843 = vpack.c.bf16 %v3827, %v3811
    %v3844 = vpack.c.bf16 %v3828, %v3812
    %v3845 = vpack.c.bf16 %v3829, %v3813
    %s3846 = scalar_lea.vmem [#allocation10], 64
    %v3847 = vld [vmem:[%s3846] sm:$0xf]
    %v3848 = vld [vmem:[%s3846 + $0x4] sm:$0xf]
    %v3849 = vld [vmem:[%s3846 + $0x8] sm:$0xf]
    %v3850 = vld [vmem:[%s3846 + $0xc] sm:$0xf]
    %v3855 = vunpack.c.l.b16 %v3847
    %v3856 = vunpack.c.l.b16 %v3848
    %v3857 = vunpack.c.l.b16 %v3849
    %v3858 = vunpack.c.l.b16 %v3850
    %v3859 = vpack.c.b16 %v3856, %v3855
    %v3860 = vpack.c.b16 %v3858, %v3857
    %v3864 = vsel %vm2574, %v3830, 0
    %v3867 = vsel %vm2574, %v3831, 0
    %v3870 = vsel %vm2574, %v3832, 0
    %v3873 = vsel %vm2574, %v3833, 0
    %v3876 = vsel %vm2574, %v3834, 0
    %v3879 = vsel %vm2574, %v3835, 0
    %v3882 = vsel %vm2574, %v3836, 0
    %v3885 = vsel %vm2574, %v3837, 0
    %v3888 = vsel %vm2574, %v3838, 0
    %v3891 = vsel %vm2574, %v3839, 0
    %v3894 = vsel %vm2574, %v3840, 0
    %v3897 = vsel %vm2574, %v3841, 0
    %v3900 = vsel %vm2574, %v3842, 0
    %v3903 = vsel %vm2574, %v3843, 0
    %v3906 = vsel %vm2574, %v3844, 0
    %v3909 = vsel %vm2574, %v3845, 0
    %3911 = vmatprep.subr.bf16.mxu0 0
    %3912 = vmatpush1.bf16.msra.mxu0 %v3859
    %3913 = vmatprep.subr.bf16.mxu0 0
    %3914 = vmatpush1.bf16.msra.mxu0 %v3860
    %3915 = vmatprep.subr.bf16.mxu0 0
    %3916 = vmatpush1.bf16.msra.mxu0 0
    %3917 = vmatprep.subr.bf16.mxu0 0
    %3918 = vmatpush1.bf16.msra.mxu0 0
    %3919 = vmatprep.subr.bf16.mxu0 0
    %3920 = vmatpush1.bf16.msra.mxu0 0
    %3921 = vmatprep.subr.bf16.mxu0 0
    %3922 = vmatpush1.bf16.msra.mxu0 0
    %3923 = vmatprep.subr.bf16.mxu0 0
    %3924 = vmatpush1.bf16.msra.mxu0 0
    %3925 = vmatprep.subr.bf16.mxu0 0
    %3926 = vmatpush1.bf16.msra.mxu0 0
    %3927 = vmatprep.subr.bf16.mxu0 0
    %3928 = vmatpush1.bf16.msra.mxu0 0
    %3929 = vmatprep.subr.bf16.mxu0 0
    %3930 = vmatpush1.bf16.msra.mxu0 0
    %3931 = vmatprep.subr.bf16.mxu0 0
    %3932 = vmatpush1.bf16.msra.mxu0 0
    %3933 = vmatprep.subr.bf16.mxu0 0
    %3934 = vmatpush1.bf16.msra.mxu0 0
    %3935 = vmatprep.subr.bf16.mxu0 0
    %3936 = vmatpush1.bf16.msra.mxu0 0
    %3937 = vmatprep.subr.bf16.mxu0 0
    %3938 = vmatpush1.bf16.msra.mxu0 0
    %3939 = vmatprep.subr.bf16.mxu0 0
    %3940 = vmatpush1.bf16.msra.mxu0 0
    %3941 = vmatprep.subr.bf16.mxu0 0
    %3942 = vmatpush1.bf16.msra.mxu0 0
    %3943 = vmatprep.mubr.bf16.mxu0 0
    %3944 = vmatmul.mubr.bf16.gmra.mrb[0].mxu0 %v3864
    %v3945 = vpop.f32.mrb[0].mxu0
    %v3946 = vadd.f32 0.0, %v3945
    %v3947 = vpop.f32.mrb[0].mxu0
    %v3948 = vpop.f32.mrb[0].mxu0
    %v3949 = vadd.f32 0.0, %v3948
    %v3950 = vpop.f32.mrb[0].mxu0
    %3951 = vmatprep.mubr.bf16.mxu0 0
    %3952 = vmatmul.mubr.bf16.gmra.mrb[0].mxu0 %v3867
    %v3953 = vpop.f32.mrb[0].mxu0
    %v3954 = vadd.f32 0.0, %v3953
    %v3955 = vpop.f32.mrb[0].mxu0
    %v3956 = vpop.f32.mrb[0].mxu0
    %v3957 = vadd.f32 0.0, %v3956
    %v3958 = vpop.f32.mrb[0].mxu0
    %3959 = vmatprep.mubr.bf16.mxu0 0
    %3960 = vmatmul.mubr.bf16.gmra.mrb[0].mxu0 %v3870
    %v3961 = vpop.f32.mrb[0].mxu0
    %v3962 = vadd.f32 0.0, %v3961
    %v3963 = vpop.f32.mrb[0].mxu0
    %v3964 = vpop.f32.mrb[0].mxu0
    %v3965 = vadd.f32 0.0, %v3964
    %v3966 = vpop.f32.mrb[0].mxu0
    %3967 = vmatprep.mubr.bf16.mxu0 0
    %3968 = vmatmul.mubr.bf16.gmra.mrb[0].mxu0 %v3873
    %v3969 = vpop.f32.mrb[0].mxu0
    %v3970 = vadd.f32 0.0, %v3969
    %v3971 = vpop.f32.mrb[0].mxu0
    %v3972 = vpop.f32.mrb[0].mxu0
    %v3973 = vadd.f32 0.0, %v3972
    %v3974 = vpop.f32.mrb[0].mxu0
    %3975 = vmatprep.mubr.bf16.mxu0 0
    %3976 = vmatmul.mubr.bf16.gmra.mrb[0].mxu0 %v3876
    %v3977 = vpop.f32.mrb[0].mxu0
    %v3978 = vadd.f32 0.0, %v3977
    %v3979 = vpop.f32.mrb[0].mxu0
    %v3980 = vpop.f32.mrb[0].mxu0
    %v3981 = vadd.f32 0.0, %v3980
    %v3982 = vpop.f32.mrb[0].mxu0
    %3983 = vmatprep.mubr.bf16.mxu0 0
    %3984 = vmatmul.mubr.bf16.gmra.mrb[0].mxu0 %v3879
    %v3985 = vpop.f32.mrb[0].mxu0
    %v3986 = vadd.f32 0.0, %v3985
    %v3987 = vpop.f32.mrb[0].mxu0
    %v3988 = vpop.f32.mrb[0].mxu0
    %v3989 = vadd.f32 0.0, %v3988
    %v3990 = vpop.f32.mrb[0].mxu0
    %3991 = vmatprep.mubr.bf16.mxu0 0
    %3992 = vmatmul.mubr.bf16.gmra.mrb[0].mxu0 %v3882
    %v3993 = vpop.f32.mrb[0].mxu0
    %v3994 = vadd.f32 0.0, %v3993
    %v3995 = vpop.f32.mrb[0].mxu0
    %v3996 = vpop.f32.mrb[0].mxu0
    %v3997 = vadd.f32 0.0, %v3996
    %v3998 = vpop.f32.mrb[0].mxu0
    %3999 = vmatprep.mubr.bf16.mxu0 0
    %4000 = vmatmul.mubr.bf16.gmra.mrb[0].mxu0 %v3885
    %v4001 = vpop.f32.mrb[0].mxu0
    %v4002 = vadd.f32 0.0, %v4001
    %v4003 = vpop.f32.mrb[0].mxu0
    %v4004 = vpop.f32.mrb[0].mxu0
    %v4005 = vadd.f32 0.0, %v4004
    %v4006 = vpop.f32.mrb[0].mxu0
    %4007 = vmatprep.mubr.bf16.mxu0 0
    %4008 = vmatmul.mubr.bf16.gmra.mrb[0].mxu0 %v3888
    %v4009 = vpop.f32.mrb[0].mxu0
    %v4010 = vadd.f32 0.0, %v4009
    %v4011 = vpop.f32.mrb[0].mxu0
    %v4012 = vpop.f32.mrb[0].mxu0
    %v4013 = vadd.f32 0.0, %v4012
    %v4014 = vpop.f32.mrb[0].mxu0
    %4015 = vmatprep.mubr.bf16.mxu0 0
    %4016 = vmatmul.mubr.bf16.gmra.mrb[0].mxu0 %v3891
    %v4017 = vpop.f32.mrb[0].mxu0
    %v4018 = vadd.f32 0.0, %v4017
    %v4019 = vpop.f32.mrb[0].mxu0
    %v4020 = vpop.f32.mrb[0].mxu0
    %v4021 = vadd.f32 0.0, %v4020
    %v4022 = vpop.f32.mrb[0].mxu0
    %4023 = vmatprep.mubr.bf16.mxu0 0
    %4024 = vmatmul.mubr.bf16.gmra.mrb[0].mxu0 %v3894
    %v4025 = vpop.f32.mrb[0].mxu0
    %v4026 = vadd.f32 0.0, %v4025
    %v4027 = vpop.f32.mrb[0].mxu0
    %v4028 = vpop.f32.mrb[0].mxu0
    %v4029 = vadd.f32 0.0, %v4028
    %v4030 = vpop.f32.mrb[0].mxu0
    %4031 = vmatprep.mubr.bf16.mxu0 0
    %4032 = vmatmul.mubr.bf16.gmra.mrb[0].mxu0 %v3897
    %v4033 = vpop.f32.mrb[0].mxu0
    %v4034 = vadd.f32 0.0, %v4033
    %v4035 = vpop.f32.mrb[0].mxu0
    %v4036 = vpop.f32.mrb[0].mxu0
    %v4037 = vadd.f32 0.0, %v4036
    %v4038 = vpop.f32.mrb[0].mxu0
    %4039 = vmatprep.mubr.bf16.mxu0 0
    %4040 = vmatmul.mubr.bf16.gmra.mrb[0].mxu0 %v3900
    %v4041 = vpop.f32.mrb[0].mxu0
    %v4042 = vadd.f32 0.0, %v4041
    %v4043 = vpop.f32.mrb[0].mxu0
    %v4044 = vpop.f32.mrb[0].mxu0
    %v4045 = vadd.f32 0.0, %v4044
    %v4046 = vpop.f32.mrb[0].mxu0
    %4047 = vmatprep.mubr.bf16.mxu0 0
    %4048 = vmatmul.mubr.bf16.gmra.mrb[0].mxu0 %v3903
    %v4049 = vpop.f32.mrb[0].mxu0
    %v4050 = vadd.f32 0.0, %v4049
    %v4051 = vpop.f32.mrb[0].mxu0
    %v4052 = vpop.f32.mrb[0].mxu0
    %v4053 = vadd.f32 0.0, %v4052
    %v4054 = vpop.f32.mrb[0].mxu0
    %4055 = vmatprep.mubr.bf16.mxu0 0
    %4056 = vmatmul.mubr.bf16.gmra.mrb[0].mxu0 %v3906
    %v4057 = vpop.f32.mrb[0].mxu0
    %v4058 = vadd.f32 0.0, %v4057
    %v4059 = vpop.f32.mrb[0].mxu0
    %v4060 = vpop.f32.mrb[0].mxu0
    %v4061 = vadd.f32 0.0, %v4060
    %v4062 = vpop.f32.mrb[0].mxu0
    %4063 = vmatprep.mubr.bf16.mxu0 0
    %4064 = vmatmul.mubr.bf16.gmra.mrb[0].mxu0 %v3909
    %v4065 = vpop.f32.mrb[0].mxu0
    %v4066 = vadd.f32 0.0, %v4065
    %v4067 = vpop.f32.mrb[0].mxu0
    %v4068 = vpop.f32.mrb[0].mxu0
    %v4069 = vadd.f32 0.0, %v4068
    %v4070 = vpop.f32.mrb[0].mxu0
    %4071 = vdwg.mxu0
    %v4072 = vadd.f32 %v3734, %v3946
    %v4073 = vadd.f32 %v3735, %v3949
    %v4074 = vadd.f32 %v3736, %v3954
    %v4075 = vadd.f32 %v3737, %v3957
    %v4076 = vadd.f32 %v3738, %v3962
    %v4077 = vadd.f32 %v3739, %v3965
    %v4078 = vadd.f32 %v3740, %v3970
    %v4079 = vadd.f32 %v3741, %v3973
    %v4080 = vadd.f32 %v3742, %v3978
    %v4081 = vadd.f32 %v3743, %v3981
    %v4082 = vadd.f32 %v3744, %v3986
    %v4083 = vadd.f32 %v3745, %v3989
    %v4084 = vadd.f32 %v3746, %v3994
    %v4085 = vadd.f32 %v3747, %v3997
    %v4086 = vadd.f32 %v3748, %v4002
    %v4087 = vadd.f32 %v3749, %v4005
    %v4088 = vadd.f32 %v3750, %v4010
    %v4089 = vadd.f32 %v3751, %v4013
    %v4090 = vadd.f32 %v3752, %v4018
    %v4091 = vadd.f32 %v3753, %v4021
    %v4092 = vadd.f32 %v3754, %v4026
    %v4093 = vadd.f32 %v3755, %v4029
    %v4094 = vadd.f32 %v3756, %v4034
    %v4095 = vadd.f32 %v3757, %v4037
    %v4096 = vadd.f32 %v3758, %v4042
    %v4097 = vadd.f32 %v3759, %v4045
    %v4098 = vadd.f32 %v3760, %v4050
    %v4099 = vadd.f32 %v3761, %v4053
    %v4100 = vadd.f32 %v3762, %v4058
    %v4101 = vadd.f32 %v3763, %v4061
    %v4102 = vadd.f32 %v3764, %v4066
    %v4103 = vadd.f32 %v3765, %v4069
    %v4104 = vmax.f32 %v4072, 0.0
    %v4105 = vmax.f32 %v4073, 0.0
    %v4106 = vmax.f32 %v4074, 0.0
    %v4107 = vmax.f32 %v4075, 0.0
    %v4108 = vmax.f32 %v4076, 0.0
    %v4109 = vmax.f32 %v4077, 0.0
    %v4110 = vmax.f32 %v4078, 0.0
    %v4111 = vmax.f32 %v4079, 0.0
    %v4112 = vmax.f32 %v4080, 0.0
    %v4113 = vmax.f32 %v4081, 0.0
    %v4114 = vmax.f32 %v4082, 0.0
    %v4115 = vmax.f32 %v4083, 0.0
    %v4116 = vmax.f32 %v4084, 0.0
    %v4117 = vmax.f32 %v4085, 0.0
    %v4118 = vmax.f32 %v4086, 0.0
    %v4119 = vmax.f32 %v4087, 0.0
    %v4120 = vmax.f32 %v4088, 0.0
    %v4121 = vmax.f32 %v4089, 0.0
    %v4122 = vmax.f32 %v4090, 0.0
    %v4123 = vmax.f32 %v4091, 0.0
    %v4124 = vmax.f32 %v4092, 0.0
    %v4125 = vmax.f32 %v4093, 0.0
    %v4126 = vmax.f32 %v4094, 0.0
    %v4127 = vmax.f32 %v4095, 0.0
    %v4128 = vmax.f32 %v4096, 0.0
    %v4129 = vmax.f32 %v4097, 0.0
    %v4130 = vmax.f32 %v4098, 0.0
    %v4131 = vmax.f32 %v4099, 0.0
    %v4132 = vmax.f32 %v4100, 0.0
    %v4133 = vmax.f32 %v4101, 0.0
    %v4134 = vmax.f32 %v4102, 0.0
    %v4135 = vmax.f32 %v4103, 0.0
    %v4136 = vld [vmem:[#allocation15] sm:$0x1]
    %v4138 = vlaneseq
    %v4139 = vshrl.u32 %v4138, 7
    %v4140 = vsub.s32 0, %v4139
    %v4141 = vrot.slane %v4136, %v4140
    %v4143 = vadd.f32 %v4141, 0.0
    %v4144 = vrot.slane %v4104, 7
    %v4145 = vrot.slane %v4106, 7
    %v4146 = vrot.slane %v4108, 7
    %v4147 = vrot.slane %v4110, 7
    %v4148 = vrot.slane %v4112, 7
    %v4149 = vrot.slane %v4114, 7
    %v4150 = vrot.slane %v4116, 7
    %v4151 = vrot.slane %v4118, 7
    %v4152 = vrot.slane %v4120, 7
    %v4153 = vrot.slane %v4122, 7
    %v4154 = vrot.slane %v4124, 7
    %v4155 = vrot.slane %v4126, 7
    %v4156 = vrot.slane %v4128, 7
    %v4157 = vrot.slane %v4130, 7
    %v4158 = vrot.slane %v4132, 7
    %v4159 = vrot.slane %v4134, 7
    %v4160 = vrot.slane %v4105, 7
    %v4161 = vrot.slane %v4107, 7
    %v4162 = vrot.slane %v4109, 7
    %v4163 = vrot.slane %v4111, 7
    %v4164 = vrot.slane %v4113, 7
    %v4165 = vrot.slane %v4115, 7
    %v4166 = vrot.slane %v4117, 7
    %v4167 = vrot.slane %v4119, 7
    %v4168 = vrot.slane %v4121, 7
    %v4169 = vrot.slane %v4123, 7
    %v4170 = vrot.slane %v4125, 7
    %v4171 = vrot.slane %v4127, 7
    %v4172 = vrot.slane %v4129, 7
    %v4173 = vrot.slane %v4131, 7
    %v4174 = vrot.slane %v4133, 7
    %v4175 = vrot.slane %v4135, 7
    %v4176 = vsel %vm900, %v4144, %v4160
    %v4177 = vsel %vm900, %v4145, %v4161
    %v4178 = vsel %vm900, %v4146, %v4162
    %v4179 = vsel %vm900, %v4147, %v4163
    %v4180 = vsel %vm900, %v4148, %v4164
    %v4181 = vsel %vm900, %v4149, %v4165
    %v4182 = vsel %vm900, %v4150, %v4166
    %v4183 = vsel %vm900, %v4151, %v4167
    %v4184 = vsel %vm900, %v4152, %v4168
    %v4185 = vsel %vm900, %v4153, %v4169
    %v4186 = vsel %vm900, %v4154, %v4170
    %v4187 = vsel %vm900, %v4155, %v4171
    %v4188 = vsel %vm900, %v4156, %v4172
    %v4189 = vsel %vm900, %v4157, %v4173
    %v4190 = vsel %vm900, %v4158, %v4174
    %v4191 = vsel %vm900, %v4159, %v4175
    %v4192 = vsel %vm900, %v4160, %v4144
    %v4193 = vsel %vm900, %v4161, %v4145
    %v4194 = vsel %vm900, %v4162, %v4146
    %v4195 = vsel %vm900, %v4163, %v4147
    %v4196 = vsel %vm900, %v4164, %v4148
    %v4197 = vsel %vm900, %v4165, %v4149
    %v4198 = vsel %vm900, %v4166, %v4150
    %v4199 = vsel %vm900, %v4167, %v4151
    %v4200 = vsel %vm900, %v4168, %v4152
    %v4201 = vsel %vm900, %v4169, %v4153
    %v4202 = vsel %vm900, %v4170, %v4154
    %v4203 = vsel %vm900, %v4171, %v4155
    %v4204 = vsel %vm900, %v4172, %v4156
    %v4205 = vsel %vm900, %v4173, %v4157
    %v4206 = vsel %vm900, %v4174, %v4158
    %v4207 = vsel %vm900, %v4175, %v4159
    %v4208 = vpack.c.bf16 %v4176, %v4192
    %v4209 = vpack.c.bf16 %v4177, %v4193
    %v4210 = vpack.c.bf16 %v4178, %v4194
    %v4211 = vpack.c.bf16 %v4179, %v4195
    %v4212 = vpack.c.bf16 %v4180, %v4196
    %v4213 = vpack.c.bf16 %v4181, %v4197
    %v4214 = vpack.c.bf16 %v4182, %v4198
    %v4215 = vpack.c.bf16 %v4183, %v4199
    %v4216 = vpack.c.bf16 %v4184, %v4200
    %v4217 = vpack.c.bf16 %v4185, %v4201
    %v4218 = vpack.c.bf16 %v4186, %v4202
    %v4219 = vpack.c.bf16 %v4187, %v4203
    %v4220 = vpack.c.bf16 %v4188, %v4204
    %v4221 = vpack.c.bf16 %v4189, %v4205
    %v4222 = vpack.c.bf16 %v4190, %v4206
    %v4223 = vpack.c.bf16 %v4191, %v4207
    %v4224 = vld [vmem:[#allocation13] sm:$0xf]
    %v4225 = vld [vmem:[#allocation13 + $0x4] sm:$0xf]
    %v4226 = vld [vmem:[#allocation13 + $0x8] sm:$0xf]
    %v4227 = vld [vmem:[#allocation13 + $0xc] sm:$0xf]
    %v4228 = vld [vmem:[#allocation13 + $0x10] sm:$0xf]
    %v4229 = vld [vmem:[#allocation13 + $0x14] sm:$0xf]
    %v4230 = vld [vmem:[#allocation13 + $0x18] sm:$0xf]
    %v4231 = vld [vmem:[#allocation13 + $0x1c] sm:$0xf]
    %v4240 = vunpack.c.l.b16 %v4224
    %v4241 = vunpack.c.l.b16 %v4225
    %v4242 = vunpack.c.l.b16 %v4226
    %v4243 = vunpack.c.l.b16 %v4227
    %v4244 = vunpack.c.l.b16 %v4228
    %v4245 = vunpack.c.l.b16 %v4229
    %v4246 = vunpack.c.l.b16 %v4230
    %v4247 = vunpack.c.l.b16 %v4231
    %v4248 = vpack.c.b16 %v4241, %v4240
    %v4249 = vpack.c.b16 %v4243, %v4242
    %v4250 = vpack.c.b16 %v4245, %v4244
    %v4251 = vpack.c.b16 %v4247, %v4246
    %vm4256 = vcmask 523264
    %v4258 = vsel %vm4256, %v4208, 0
    %v4261 = vsel %vm4256, %v4209, 0
    %v4264 = vsel %vm4256, %v4210, 0
    %v4267 = vsel %vm4256, %v4211, 0
    %v4270 = vsel %vm4256, %v4212, 0
    %v4273 = vsel %vm4256, %v4213, 0
    %v4276 = vsel %vm4256, %v4214, 0
    %v4279 = vsel %vm4256, %v4215, 0
    %v4282 = vsel %vm4256, %v4216, 0
    %v4285 = vsel %vm4256, %v4217, 0
    %v4288 = vsel %vm4256, %v4218, 0
    %v4291 = vsel %vm4256, %v4219, 0
    %v4294 = vsel %vm4256, %v4220, 0
    %v4297 = vsel %vm4256, %v4221, 0
    %v4300 = vsel %vm4256, %v4222, 0
    %v4303 = vsel %vm4256, %v4223, 0
    %4305 = vmatprep.subr.bf16.mxu0 0
    %4306 = vmatpush1.bf16.msra.mxu0 %v4248
    %4307 = vmatprep.subr.bf16.mxu0 0
    %4308 = vmatpush1.bf16.msra.mxu0 %v4249
    %4309 = vmatprep.subr.bf16.mxu0 0
    %4310 = vmatpush1.bf16.msra.mxu0 %v4250
    %4311 = vmatprep.subr.bf16.mxu0 0
    %4312 = vmatpush1.bf16.msra.mxu0 %v4251
    %4313 = vmatprep.subr.bf16.mxu0 0
    %4314 = vmatpush1.bf16.msra.mxu0 0
    %4315 = vmatprep.subr.bf16.mxu0 0
    %4316 = vmatpush1.bf16.msra.mxu0 0
    %4317 = vmatprep.subr.bf16.mxu0 0
    %4318 = vmatpush1.bf16.msra.mxu0 0
    %4319 = vmatprep.subr.bf16.mxu0 0
    %4320 = vmatpush1.bf16.msra.mxu0 0
    %4321 = vmatprep.subr.bf16.mxu0 0
    %4322 = vmatpush1.bf16.msra.mxu0 0
    %4323 = vmatprep.subr.bf16.mxu0 0
    %4324 = vmatpush1.bf16.msra.mxu0 0
    %4325 = vmatprep.subr.bf16.mxu0 0
    %4326 = vmatpush1.bf16.msra.mxu0 0
    %4327 = vmatprep.subr.bf16.mxu0 0
    %4328 = vmatpush1.bf16.msra.mxu0 0
    %4329 = vmatprep.subr.bf16.mxu0 0
    %4330 = vmatpush1.bf16.msra.mxu0 0
    %4331 = vmatprep.subr.bf16.mxu0 0
    %4332 = vmatpush1.bf16.msra.mxu0 0
    %4333 = vmatprep.subr.bf16.mxu0 0
    %4334 = vmatpush1.bf16.msra.mxu0 0
    %4335 = vmatprep.subr.bf16.mxu0 0
    %4336 = vmatpush1.bf16.msra.mxu0 0
    %4337 = vmatprep.mubr.bf16.mxu0 0
    %4338 = vmatmul.mubr.bf16.gmra.mrb[0].mxu0 %v4258
    %v4339 = vpop.f32.mrb[0].mxu0
    %v4340 = vadd.f32 0.0, %v4339
    %v4341 = vpop.f32.mrb[0].mxu0
    %v4342 = vpop.f32.mrb[0].mxu0
    %v4343 = vadd.f32 0.0, %v4342
    %v4344 = vpop.f32.mrb[0].mxu0
    %4345 = vmatprep.mubr.bf16.mxu0 0
    %4346 = vmatmul.mubr.bf16.gmra.mrb[0].mxu0 %v4261
    %v4347 = vpop.f32.mrb[0].mxu0
    %v4348 = vadd.f32 0.0, %v4347
    %v4349 = vpop.f32.mrb[0].mxu0
    %v4350 = vpop.f32.mrb[0].mxu0
    %v4351 = vadd.f32 0.0, %v4350
    %v4352 = vpop.f32.mrb[0].mxu0
    %4353 = vmatprep.mubr.bf16.mxu0 0
    %4354 = vmatmul.mubr.bf16.gmra.mrb[0].mxu0 %v4264
    %v4355 = vpop.f32.mrb[0].mxu0
    %v4356 = vadd.f32 0.0, %v4355
    %v4357 = vpop.f32.mrb[0].mxu0
    %v4358 = vpop.f32.mrb[0].mxu0
    %v4359 = vadd.f32 0.0, %v4358
    %v4360 = vpop.f32.mrb[0].mxu0
    %4361 = vmatprep.mubr.bf16.mxu0 0
    %4362 = vmatmul.mubr.bf16.gmra.mrb[0].mxu0 %v4267
    %v4363 = vpop.f32.mrb[0].mxu0
    %v4364 = vadd.f32 0.0, %v4363
    %v4365 = vpop.f32.mrb[0].mxu0
    %v4366 = vpop.f32.mrb[0].mxu0
    %v4367 = vadd.f32 0.0, %v4366
    %v4368 = vpop.f32.mrb[0].mxu0
    %4369 = vmatprep.mubr.bf16.mxu0 0
    %4370 = vmatmul.mubr.bf16.gmra.mrb[0].mxu0 %v4270
    %v4371 = vpop.f32.mrb[0].mxu0
    %v4372 = vadd.f32 0.0, %v4371
    %v4373 = vpop.f32.mrb[0].mxu0
    %v4374 = vpop.f32.mrb[0].mxu0
    %v4375 = vadd.f32 0.0, %v4374
    %v4376 = vpop.f32.mrb[0].mxu0
    %4377 = vmatprep.mubr.bf16.mxu0 0
    %4378 = vmatmul.mubr.bf16.gmra.mrb[0].mxu0 %v4273
    %v4379 = vpop.f32.mrb[0].mxu0
    %v4380 = vadd.f32 0.0, %v4379
    %v4381 = vpop.f32.mrb[0].mxu0
    %v4382 = vpop.f32.mrb[0].mxu0
    %v4383 = vadd.f32 0.0, %v4382
    %v4384 = vpop.f32.mrb[0].mxu0
    %4385 = vmatprep.mubr.bf16.mxu0 0
    %4386 = vmatmul.mubr.bf16.gmra.mrb[0].mxu0 %v4276
    %v4387 = vpop.f32.mrb[0].mxu0
    %v4388 = vadd.f32 0.0, %v4387
    %v4389 = vpop.f32.mrb[0].mxu0
    %v4390 = vpop.f32.mrb[0].mxu0
    %v4391 = vadd.f32 0.0, %v4390
    %v4392 = vpop.f32.mrb[0].mxu0
    %4393 = vmatprep.mubr.bf16.mxu0 0
    %4394 = vmatmul.mubr.bf16.gmra.mrb[0].mxu0 %v4279
    %v4395 = vpop.f32.mrb[0].mxu0
    %v4396 = vadd.f32 0.0, %v4395
    %v4397 = vpop.f32.mrb[0].mxu0
    %v4398 = vpop.f32.mrb[0].mxu0
    %v4399 = vadd.f32 0.0, %v4398
    %v4400 = vpop.f32.mrb[0].mxu0
    %4401 = vmatprep.mubr.bf16.mxu0 0
    %4402 = vmatmul.mubr.bf16.gmra.mrb[0].mxu0 %v4282
    %v4403 = vpop.f32.mrb[0].mxu0
    %v4404 = vadd.f32 0.0, %v4403
    %v4405 = vpop.f32.mrb[0].mxu0
    %v4406 = vpop.f32.mrb[0].mxu0
    %v4407 = vadd.f32 0.0, %v4406
    %v4408 = vpop.f32.mrb[0].mxu0
    %4409 = vmatprep.mubr.bf16.mxu0 0
    %4410 = vmatmul.mubr.bf16.gmra.mrb[0].mxu0 %v4285
    %v4411 = vpop.f32.mrb[0].mxu0
    %v4412 = vadd.f32 0.0, %v4411
    %v4413 = vpop.f32.mrb[0].mxu0
    %v4414 = vpop.f32.mrb[0].mxu0
    %v4415 = vadd.f32 0.0, %v4414
    %v4416 = vpop.f32.mrb[0].mxu0
    %4417 = vmatprep.mubr.bf16.mxu0 0
    %4418 = vmatmul.mubr.bf16.gmra.mrb[0].mxu0 %v4288
    %v4419 = vpop.f32.mrb[0].mxu0
    %v4420 = vadd.f32 0.0, %v4419
    %v4421 = vpop.f32.mrb[0].mxu0
    %v4422 = vpop.f32.mrb[0].mxu0
    %v4423 = vadd.f32 0.0, %v4422
    %v4424 = vpop.f32.mrb[0].mxu0
    %4425 = vmatprep.mubr.bf16.mxu0 0
    %4426 = vmatmul.mubr.bf16.gmra.mrb[0].mxu0 %v4291
    %v4427 = vpop.f32.mrb[0].mxu0
    %v4428 = vadd.f32 0.0, %v4427
    %v4429 = vpop.f32.mrb[0].mxu0
    %v4430 = vpop.f32.mrb[0].mxu0
    %v4431 = vadd.f32 0.0, %v4430
    %v4432 = vpop.f32.mrb[0].mxu0
    %4433 = vmatprep.mubr.bf16.mxu0 0
    %4434 = vmatmul.mubr.bf16.gmra.mrb[0].mxu0 %v4294
    %v4435 = vpop.f32.mrb[0].mxu0
    %v4436 = vadd.f32 0.0, %v4435
    %v4437 = vpop.f32.mrb[0].mxu0
    %v4438 = vpop.f32.mrb[0].mxu0
    %v4439 = vadd.f32 0.0, %v4438
    %v4440 = vpop.f32.mrb[0].mxu0
    %4441 = vmatprep.mubr.bf16.mxu0 0
    %4442 = vmatmul.mubr.bf16.gmra.mrb[0].mxu0 %v4297
    %v4443 = vpop.f32.mrb[0].mxu0
    %v4444 = vadd.f32 0.0, %v4443
    %v4445 = vpop.f32.mrb[0].mxu0
    %v4446 = vpop.f32.mrb[0].mxu0
    %v4447 = vadd.f32 0.0, %v4446
    %v4448 = vpop.f32.mrb[0].mxu0
    %4449 = vmatprep.mubr.bf16.mxu0 0
    %4450 = vmatmul.mubr.bf16.gmra.mrb[0].mxu0 %v4300
    %v4451 = vpop.f32.mrb[0].mxu0
    %v4452 = vadd.f32 0.0, %v4451
    %v4453 = vpop.f32.mrb[0].mxu0
    %v4454 = vpop.f32.mrb[0].mxu0
    %v4455 = vadd.f32 0.0, %v4454
    %v4456 = vpop.f32.mrb[0].mxu0
    %4457 = vmatprep.mubr.bf16.mxu0 0
    %4458 = vmatmul.mubr.bf16.gmra.mrb[0].mxu0 %v4303
    %v4459 = vpop.f32.mrb[0].mxu0
    %v4460 = vadd.f32 0.0, %v4459
    %v4461 = vpop.f32.mrb[0].mxu0
    %v4462 = vpop.f32.mrb[0].mxu0
    %v4463 = vadd.f32 0.0, %v4462
    %v4464 = vpop.f32.mrb[0].mxu0
    %4465 = vdwg.mxu0
    %v4466 = vadd.f32 %v4143, %v4340
    %v4467 = vadd.f32 %v4143, %v4343
    %v4468 = vadd.f32 %v4143, %v4348
    %v4469 = vadd.f32 %v4143, %v4351
    %v4470 = vadd.f32 %v4143, %v4356
    %v4471 = vadd.f32 %v4143, %v4359
    %v4472 = vadd.f32 %v4143, %v4364
    %v4473 = vadd.f32 %v4143, %v4367
    %v4474 = vadd.f32 %v4143, %v4372
    %v4475 = vadd.f32 %v4143, %v4375
    %v4476 = vadd.f32 %v4143, %v4380
    %v4477 = vadd.f32 %v4143, %v4383
    %v4478 = vadd.f32 %v4143, %v4388
    %v4479 = vadd.f32 %v4143, %v4391
    %v4480 = vadd.f32 %v4143, %v4396
    %v4481 = vadd.f32 %v4143, %v4399
    %v4482 = vadd.f32 %v4143, %v4404
    %v4483 = vadd.f32 %v4143, %v4407
    %v4484 = vadd.f32 %v4143, %v4412
    %v4485 = vadd.f32 %v4143, %v4415
    %v4486 = vadd.f32 %v4143, %v4420
    %v4487 = vadd.f32 %v4143, %v4423
    %v4488 = vadd.f32 %v4143, %v4428
    %v4489 = vadd.f32 %v4143, %v4431
    %v4490 = vadd.f32 %v4143, %v4436
    %v4491 = vadd.f32 %v4143, %v4439
    %v4492 = vadd.f32 %v4143, %v4444
    %v4493 = vadd.f32 %v4143, %v4447
    %v4494 = vadd.f32 %v4143, %v4452
    %v4495 = vadd.f32 %v4143, %v4455
    %v4496 = vadd.f32 %v4143, %v4460
    %v4497 = vadd.f32 %v4143, %v4463
    %v4498 = vpack.c.bf16 %v4105, %v4104
    %v4499 = vpack.c.bf16 %v4107, %v4106
    %v4500 = vpack.c.bf16 %v4109, %v4108
    %v4501 = vpack.c.bf16 %v4111, %v4110
    %v4502 = vpack.c.bf16 %v4113, %v4112
    %v4503 = vpack.c.bf16 %v4115, %v4114
    %v4504 = vpack.c.bf16 %v4117, %v4116
    %v4505 = vpack.c.bf16 %v4119, %v4118
    %v4506 = vpack.c.bf16 %v4121, %v4120
    %v4507 = vpack.c.bf16 %v4123, %v4122
    %v4508 = vpack.c.bf16 %v4125, %v4124
    %v4509 = vpack.c.bf16 %v4127, %v4126
    %v4510 = vpack.c.bf16 %v4129, %v4128
    %v4511 = vpack.c.bf16 %v4131, %v4130
    %v4512 = vpack.c.bf16 %v4133, %v4132
    %v4513 = vpack.c.bf16 %v4135, %v4134
    %s4514 = scalar_lea.vmem [#allocation13], 32
    %v4515 = vld [vmem:[%s4514] sm:$0xf]
    %v4516 = vld [vmem:[%s4514 + $0x4] sm:$0xf]
    %v4517 = vld [vmem:[%s4514 + $0x8] sm:$0xf]
    %v4518 = vld [vmem:[%s4514 + $0xc] sm:$0xf]
    %v4519 = vld [vmem:[%s4514 + $0x10] sm:$0xf]
    %v4520 = vld [vmem:[%s4514 + $0x14] sm:$0xf]
    %v4521 = vld [vmem:[%s4514 + $0x18] sm:$0xf]
    %v4522 = vld [vmem:[%s4514 + $0x1c] sm:$0xf]
    %v4531 = vunpack.c.l.b16 %v4515
    %v4532 = vunpack.c.l.b16 %v4516
    %v4533 = vunpack.c.l.b16 %v4517
    %v4534 = vunpack.c.l.b16 %v4518
    %v4535 = vunpack.c.l.b16 %v4519
    %v4536 = vunpack.c.l.b16 %v4520
    %v4537 = vunpack.c.l.b16 %v4521
    %v4538 = vunpack.c.l.b16 %v4522
    %v4539 = vpack.c.b16 %v4532, %v4531
    %v4540 = vpack.c.b16 %v4534, %v4533
    %v4541 = vpack.c.b16 %v4536, %v4535
    %v4542 = vpack.c.b16 %v4538, %v4537
    %v4548 = vsel %vm4256, %v4498, 0
    %v4551 = vsel %vm4256, %v4499, 0
    %v4554 = vsel %vm4256, %v4500, 0
    %v4557 = vsel %vm4256, %v4501, 0
    %v4560 = vsel %vm4256, %v4502, 0
    %v4563 = vsel %vm4256, %v4503, 0
    %v4566 = vsel %vm4256, %v4504, 0
    %v4569 = vsel %vm4256, %v4505, 0
    %v4572 = vsel %vm4256, %v4506, 0
    %v4575 = vsel %vm4256, %v4507, 0
    %v4578 = vsel %vm4256, %v4508, 0
    %v4581 = vsel %vm4256, %v4509, 0
    %v4584 = vsel %vm4256, %v4510, 0
    %v4587 = vsel %vm4256, %v4511, 0
    %v4590 = vsel %vm4256, %v4512, 0
    %v4593 = vsel %vm4256, %v4513, 0
    %4595 = vmatprep.subr.bf16.mxu0 0
    %4596 = vmatpush1.bf16.msra.mxu0 %v4539
    %4597 = vmatprep.subr.bf16.mxu0 0
    %4598 = vmatpush1.bf16.msra.mxu0 %v4540
    %4599 = vmatprep.subr.bf16.mxu0 0
    %4600 = vmatpush1.bf16.msra.mxu0 %v4541
    %4601 = vmatprep.subr.bf16.mxu0 0
    %4602 = vmatpush1.bf16.msra.mxu0 %v4542
    %4603 = vmatprep.subr.bf16.mxu0 0
    %4604 = vmatpush1.bf16.msra.mxu0 0
    %4605 = vmatprep.subr.bf16.mxu0 0
    %4606 = vmatpush1.bf16.msra.mxu0 0
    %4607 = vmatprep.subr.bf16.mxu0 0
    %4608 = vmatpush1.bf16.msra.mxu0 0
    %4609 = vmatprep.subr.bf16.mxu0 0
    %4610 = vmatpush1.bf16.msra.mxu0 0
    %4611 = vmatprep.subr.bf16.mxu0 0
    %4612 = vmatpush1.bf16.msra.mxu0 0
    %4613 = vmatprep.subr.bf16.mxu0 0
    %4614 = vmatpush1.bf16.msra.mxu0 0
    %4615 = vmatprep.subr.bf16.mxu0 0
    %4616 = vmatpush1.bf16.msra.mxu0 0
    %4617 = vmatprep.subr.bf16.mxu0 0
    %4618 = vmatpush1.bf16.msra.mxu0 0
    %4619 = vmatprep.subr.bf16.mxu0 0
    %4620 = vmatpush1.bf16.msra.mxu0 0
    %4621 = vmatprep.subr.bf16.mxu0 0
    %4622 = vmatpush1.bf16.msra.mxu0 0
    %4623 = vmatprep.subr.bf16.mxu0 0
    %4624 = vmatpush1.bf16.msra.mxu0 0
    %4625 = vmatprep.subr.bf16.mxu0 0
    %4626 = vmatpush1.bf16.msra.mxu0 0
    %4627 = vmatprep.mubr.bf16.mxu0 0
    %4628 = vmatmul.mubr.bf16.gmra.mrb[0].mxu0 %v4548
    %v4629 = vpop.f32.mrb[0].mxu0
    %v4630 = vadd.f32 0.0, %v4629
    %v4631 = vpop.f32.mrb[0].mxu0
    %v4632 = vpop.f32.mrb[0].mxu0
    %v4633 = vadd.f32 0.0, %v4632
    %v4634 = vpop.f32.mrb[0].mxu0
    %4635 = vmatprep.mubr.bf16.mxu0 0
    %4636 = vmatmul.mubr.bf16.gmra.mrb[0].mxu0 %v4551
    %v4637 = vpop.f32.mrb[0].mxu0
    %v4638 = vadd.f32 0.0, %v4637
    %v4639 = vpop.f32.mrb[0].mxu0
    %v4640 = vpop.f32.mrb[0].mxu0
    %v4641 = vadd.f32 0.0, %v4640
    %v4642 = vpop.f32.mrb[0].mxu0
    %4643 = vmatprep.mubr.bf16.mxu0 0
    %4644 = vmatmul.mubr.bf16.gmra.mrb[0].mxu0 %v4554
    %v4645 = vpop.f32.mrb[0].mxu0
    %v4646 = vadd.f32 0.0, %v4645
    %v4647 = vpop.f32.mrb[0].mxu0
    %v4648 = vpop.f32.mrb[0].mxu0
    %v4649 = vadd.f32 0.0, %v4648
    %v4650 = vpop.f32.mrb[0].mxu0
    %4651 = vmatprep.mubr.bf16.mxu0 0
    %4652 = vmatmul.mubr.bf16.gmra.mrb[0].mxu0 %v4557
    %v4653 = vpop.f32.mrb[0].mxu0
    %v4654 = vadd.f32 0.0, %v4653
    %v4655 = vpop.f32.mrb[0].mxu0
    %v4656 = vpop.f32.mrb[0].mxu0
    %v4657 = vadd.f32 0.0, %v4656
    %v4658 = vpop.f32.mrb[0].mxu0
    %4659 = vmatprep.mubr.bf16.mxu0 0
    %4660 = vmatmul.mubr.bf16.gmra.mrb[0].mxu0 %v4560
    %v4661 = vpop.f32.mrb[0].mxu0
    %v4662 = vadd.f32 0.0, %v4661
    %v4663 = vpop.f32.mrb[0].mxu0
    %v4664 = vpop.f32.mrb[0].mxu0
    %v4665 = vadd.f32 0.0, %v4664
    %v4666 = vpop.f32.mrb[0].mxu0
    %4667 = vmatprep.mubr.bf16.mxu0 0
    %4668 = vmatmul.mubr.bf16.gmra.mrb[0].mxu0 %v4563
    %v4669 = vpop.f32.mrb[0].mxu0
    %v4670 = vadd.f32 0.0, %v4669
    %v4671 = vpop.f32.mrb[0].mxu0
    %v4672 = vpop.f32.mrb[0].mxu0
    %v4673 = vadd.f32 0.0, %v4672
    %v4674 = vpop.f32.mrb[0].mxu0
    %4675 = vmatprep.mubr.bf16.mxu0 0
    %4676 = vmatmul.mubr.bf16.gmra.mrb[0].mxu0 %v4566
    %v4677 = vpop.f32.mrb[0].mxu0
    %v4678 = vadd.f32 0.0, %v4677
    %v4679 = vpop.f32.mrb[0].mxu0
    %v4680 = vpop.f32.mrb[0].mxu0
    %v4681 = vadd.f32 0.0, %v4680
    %v4682 = vpop.f32.mrb[0].mxu0
    %4683 = vmatprep.mubr.bf16.mxu0 0
    %4684 = vmatmul.mubr.bf16.gmra.mrb[0].mxu0 %v4569
    %v4685 = vpop.f32.mrb[0].mxu0
    %v4686 = vadd.f32 0.0, %v4685
    %v4687 = vpop.f32.mrb[0].mxu0
    %v4688 = vpop.f32.mrb[0].mxu0
    %v4689 = vadd.f32 0.0, %v4688
    %v4690 = vpop.f32.mrb[0].mxu0
    %4691 = vmatprep.mubr.bf16.mxu0 0
    %4692 = vmatmul.mubr.bf16.gmra.mrb[0].mxu0 %v4572
    %v4693 = vpop.f32.mrb[0].mxu0
    %v4694 = vadd.f32 0.0, %v4693
    %v4695 = vpop.f32.mrb[0].mxu0
    %v4696 = vpop.f32.mrb[0].mxu0
    %v4697 = vadd.f32 0.0, %v4696
    %v4698 = vpop.f32.mrb[0].mxu0
    %4699 = vmatprep.mubr.bf16.mxu0 0
    %4700 = vmatmul.mubr.bf16.gmra.mrb[0].mxu0 %v4575
    %v4701 = vpop.f32.mrb[0].mxu0
    %v4702 = vadd.f32 0.0, %v4701
    %v4703 = vpop.f32.mrb[0].mxu0
    %v4704 = vpop.f32.mrb[0].mxu0
    %v4705 = vadd.f32 0.0, %v4704
    %v4706 = vpop.f32.mrb[0].mxu0
    %4707 = vmatprep.mubr.bf16.mxu0 0
    %4708 = vmatmul.mubr.bf16.gmra.mrb[0].mxu0 %v4578
    %v4709 = vpop.f32.mrb[0].mxu0
    %v4710 = vadd.f32 0.0, %v4709
    %v4711 = vpop.f32.mrb[0].mxu0
    %v4712 = vpop.f32.mrb[0].mxu0
    %v4713 = vadd.f32 0.0, %v4712
    %v4714 = vpop.f32.mrb[0].mxu0
    %4715 = vmatprep.mubr.bf16.mxu0 0
    %4716 = vmatmul.mubr.bf16.gmra.mrb[0].mxu0 %v4581
    %v4717 = vpop.f32.mrb[0].mxu0
    %v4718 = vadd.f32 0.0, %v4717
    %v4719 = vpop.f32.mrb[0].mxu0
    %v4720 = vpop.f32.mrb[0].mxu0
    %v4721 = vadd.f32 0.0, %v4720
    %v4722 = vpop.f32.mrb[0].mxu0
    %4723 = vmatprep.mubr.bf16.mxu0 0
    %4724 = vmatmul.mubr.bf16.gmra.mrb[0].mxu0 %v4584
    %v4725 = vpop.f32.mrb[0].mxu0
    %v4726 = vadd.f32 0.0, %v4725
    %v4727 = vpop.f32.mrb[0].mxu0
    %v4728 = vpop.f32.mrb[0].mxu0
    %v4729 = vadd.f32 0.0, %v4728
    %v4730 = vpop.f32.mrb[0].mxu0
    %4731 = vmatprep.mubr.bf16.mxu0 0
    %4732 = vmatmul.mubr.bf16.gmra.mrb[0].mxu0 %v4587
    %v4733 = vpop.f32.mrb[0].mxu0
    %v4734 = vadd.f32 0.0, %v4733
    %v4735 = vpop.f32.mrb[0].mxu0
    %v4736 = vpop.f32.mrb[0].mxu0
    %v4737 = vadd.f32 0.0, %v4736
    %v4738 = vpop.f32.mrb[0].mxu0
    %4739 = vmatprep.mubr.bf16.mxu0 0
    %4740 = vmatmul.mubr.bf16.gmra.mrb[0].mxu0 %v4590
    %v4741 = vpop.f32.mrb[0].mxu0
    %v4742 = vadd.f32 0.0, %v4741
    %v4743 = vpop.f32.mrb[0].mxu0
    %v4744 = vpop.f32.mrb[0].mxu0
    %v4745 = vadd.f32 0.0, %v4744
    %v4746 = vpop.f32.mrb[0].mxu0
    %4747 = vmatprep.mubr.bf16.mxu0 0
    %4748 = vmatmul.mubr.bf16.gmra.mrb[0].mxu0 %v4593
    %v4749 = vpop.f32.mrb[0].mxu0
    %v4750 = vadd.f32 0.0, %v4749
    %v4751 = vpop.f32.mrb[0].mxu0
    %v4752 = vpop.f32.mrb[0].mxu0
    %v4753 = vadd.f32 0.0, %v4752
    %v4754 = vpop.f32.mrb[0].mxu0
    %4755 = vdwg.mxu0
    %v4756 = vadd.f32 %v4466, %v4630
    %v4757 = vadd.f32 %v4467, %v4633
    %v4758 = vadd.f32 %v4468, %v4638
    %v4759 = vadd.f32 %v4469, %v4641
    %v4760 = vadd.f32 %v4470, %v4646
    %v4761 = vadd.f32 %v4471, %v4649
    %v4762 = vadd.f32 %v4472, %v4654
    %v4763 = vadd.f32 %v4473, %v4657
    %v4764 = vadd.f32 %v4474, %v4662
    %v4765 = vadd.f32 %v4475, %v4665
    %v4766 = vadd.f32 %v4476, %v4670
    %v4767 = vadd.f32 %v4477, %v4673
    %v4768 = vadd.f32 %v4478, %v4678
    %v4769 = vadd.f32 %v4479, %v4681
    %v4770 = vadd.f32 %v4480, %v4686
    %v4771 = vadd.f32 %v4481, %v4689
    %v4772 = vadd.f32 %v4482, %v4694
    %v4773 = vadd.f32 %v4483, %v4697
    %v4774 = vadd.f32 %v4484, %v4702
    %v4775 = vadd.f32 %v4485, %v4705
    %v4776 = vadd.f32 %v4486, %v4710
    %v4777 = vadd.f32 %v4487, %v4713
    %v4778 = vadd.f32 %v4488, %v4718
    %v4779 = vadd.f32 %v4489, %v4721
    %v4780 = vadd.f32 %v4490, %v4726
    %v4781 = vadd.f32 %v4491, %v4729
    %v4782 = vadd.f32 %v4492, %v4734
    %v4783 = vadd.f32 %v4493, %v4737
    %v4784 = vadd.f32 %v4494, %v4742
    %v4785 = vadd.f32 %v4495, %v4745
    %v4786 = vadd.f32 %v4496, %v4750
    %v4787 = vadd.f32 %v4497, %v4753
    %v4788 = vrot.slane %v4104, 1
    %v4789 = vrot.slane %v4106, 1
    %v4790 = vrot.slane %v4108, 1
    %v4791 = vrot.slane %v4110, 1
    %v4792 = vrot.slane %v4112, 1
    %v4793 = vrot.slane %v4114, 1
    %v4794 = vrot.slane %v4116, 1
    %v4795 = vrot.slane %v4118, 1
    %v4796 = vrot.slane %v4120, 1
    %v4797 = vrot.slane %v4122, 1
    %v4798 = vrot.slane %v4124, 1
    %v4799 = vrot.slane %v4126, 1
    %v4800 = vrot.slane %v4128, 1
    %v4801 = vrot.slane %v4130, 1
    %v4802 = vrot.slane %v4132, 1
    %v4803 = vrot.slane %v4134, 1
    %v4804 = vrot.slane %v4105, 1
    %v4805 = vrot.slane %v4107, 1
    %v4806 = vrot.slane %v4109, 1
    %v4807 = vrot.slane %v4111, 1
    %v4808 = vrot.slane %v4113, 1
    %v4809 = vrot.slane %v4115, 1
    %v4810 = vrot.slane %v4117, 1
    %v4811 = vrot.slane %v4119, 1
    %v4812 = vrot.slane %v4121, 1
    %v4813 = vrot.slane %v4123, 1
    %v4814 = vrot.slane %v4125, 1
    %v4815 = vrot.slane %v4127, 1
    %v4816 = vrot.slane %v4129, 1
    %v4817 = vrot.slane %v4131, 1
    %v4818 = vrot.slane %v4133, 1
    %v4819 = vrot.slane %v4135, 1
    %v4820 = vsel %vm1489, %v4788, %v4804
    %v4821 = vsel %vm1489, %v4789, %v4805
    %v4822 = vsel %vm1489, %v4790, %v4806
    %v4823 = vsel %vm1489, %v4791, %v4807
    %v4824 = vsel %vm1489, %v4792, %v4808
    %v4825 = vsel %vm1489, %v4793, %v4809
    %v4826 = vsel %vm1489, %v4794, %v4810
    %v4827 = vsel %vm1489, %v4795, %v4811
    %v4828 = vsel %vm1489, %v4796, %v4812
    %v4829 = vsel %vm1489, %v4797, %v4813
    %v4830 = vsel %vm1489, %v4798, %v4814
    %v4831 = vsel %vm1489, %v4799, %v4815
    %v4832 = vsel %vm1489, %v4800, %v4816
    %v4833 = vsel %vm1489, %v4801, %v4817
    %v4834 = vsel %vm1489, %v4802, %v4818
    %v4835 = vsel %vm1489, %v4803, %v4819
    %v4836 = vsel %vm1489, %v4804, %v4788
    %v4837 = vsel %vm1489, %v4805, %v4789
    %v4838 = vsel %vm1489, %v4806, %v4790
    %v4839 = vsel %vm1489, %v4807, %v4791
    %v4840 = vsel %vm1489, %v4808, %v4792
    %v4841 = vsel %vm1489, %v4809, %v4793
    %v4842 = vsel %vm1489, %v4810, %v4794
    %v4843 = vsel %vm1489, %v4811, %v4795
    %v4844 = vsel %vm1489, %v4812, %v4796
    %v4845 = vsel %vm1489, %v4813, %v4797
    %v4846 = vsel %vm1489, %v4814, %v4798
    %v4847 = vsel %vm1489, %v4815, %v4799
    %v4848 = vsel %vm1489, %v4816, %v4800
    %v4849 = vsel %vm1489, %v4817, %v4801
    %v4850 = vsel %vm1489, %v4818, %v4802
    %v4851 = vsel %vm1489, %v4819, %v4803
    %v4852 = vpack.c.bf16 %v4836, %v4820
    %v4853 = vpack.c.bf16 %v4837, %v4821
    %v4854 = vpack.c.bf16 %v4838, %v4822
    %v4855 = vpack.c.bf16 %v4839, %v4823
    %v4856 = vpack.c.bf16 %v4840, %v4824
    %v4857 = vpack.c.bf16 %v4841, %v4825
    %v4858 = vpack.c.bf16 %v4842, %v4826
    %v4859 = vpack.c.bf16 %v4843, %v4827
    %v4860 = vpack.c.bf16 %v4844, %v4828
    %v4861 = vpack.c.bf16 %v4845, %v4829
    %v4862 = vpack.c.bf16 %v4846, %v4830
    %v4863 = vpack.c.bf16 %v4847, %v4831
    %v4864 = vpack.c.bf16 %v4848, %v4832
    %v4865 = vpack.c.bf16 %v4849, %v4833
    %v4866 = vpack.c.bf16 %v4850, %v4834
    %v4867 = vpack.c.bf16 %v4851, %v4835
    %s4868 = scalar_lea.vmem [#allocation13], 64
    %v4869 = vld [vmem:[%s4868] sm:$0xf]
    %v4870 = vld [vmem:[%s4868 + $0x4] sm:$0xf]
    %v4871 = vld [vmem:[%s4868 + $0x8] sm:$0xf]
    %v4872 = vld [vmem:[%s4868 + $0xc] sm:$0xf]
    %v4873 = vld [vmem:[%s4868 + $0x10] sm:$0xf]
    %v4874 = vld [vmem:[%s4868 + $0x14] sm:$0xf]
    %v4875 = vld [vmem:[%s4868 + $0x18] sm:$0xf]
    %v4876 = vld [vmem:[%s4868 + $0x1c] sm:$0xf]
    %v4885 = vunpack.c.l.b16 %v4869
    %v4886 = vunpack.c.l.b16 %v4870
    %v4887 = vunpack.c.l.b16 %v4871
    %v4888 = vunpack.c.l.b16 %v4872
    %v4889 = vunpack.c.l.b16 %v4873
    %v4890 = vunpack.c.l.b16 %v4874
    %v4891 = vunpack.c.l.b16 %v4875
    %v4892 = vunpack.c.l.b16 %v4876
    %v4893 = vpack.c.b16 %v4886, %v4885
    %v4894 = vpack.c.b16 %v4888, %v4887
    %v4895 = vpack.c.b16 %v4890, %v4889
    %v4896 = vpack.c.b16 %v4892, %v4891
    %v4902 = vsel %vm4256, %v4852, 0
    %v4905 = vsel %vm4256, %v4853, 0
    %v4908 = vsel %vm4256, %v4854, 0
    %v4911 = vsel %vm4256, %v4855, 0
    %v4914 = vsel %vm4256, %v4856, 0
    %v4917 = vsel %vm4256, %v4857, 0
    %v4920 = vsel %vm4256, %v4858, 0
    %v4923 = vsel %vm4256, %v4859, 0
    %v4926 = vsel %vm4256, %v4860, 0
    %v4929 = vsel %vm4256, %v4861, 0
    %v4932 = vsel %vm4256, %v4862, 0
    %v4935 = vsel %vm4256, %v4863, 0
    %v4938 = vsel %vm4256, %v4864, 0
    %v4941 = vsel %vm4256, %v4865, 0
    %v4944 = vsel %vm4256, %v4866, 0
    %v4947 = vsel %vm4256, %v4867, 0
    %4949 = vmatprep.subr.bf16.mxu0 0
    %4950 = vmatpush1.bf16.msra.mxu0 %v4893
    %4951 = vmatprep.subr.bf16.mxu0 0
    %4952 = vmatpush1.bf16.msra.mxu0 %v4894
    %4953 = vmatprep.subr.bf16.mxu0 0
    %4954 = vmatpush1.bf16.msra.mxu0 %v4895
    %4955 = vmatprep.subr.bf16.mxu0 0
    %4956 = vmatpush1.bf16.msra.mxu0 %v4896
    %4957 = vmatprep.subr.bf16.mxu0 0
    %4958 = vmatpush1.bf16.msra.mxu0 0
    %4959 = vmatprep.subr.bf16.mxu0 0
    %4960 = vmatpush1.bf16.msra.mxu0 0
    %4961 = vmatprep.subr.bf16.mxu0 0
    %4962 = vmatpush1.bf16.msra.mxu0 0
    %4963 = vmatprep.subr.bf16.mxu0 0
    %4964 = vmatpush1.bf16.msra.mxu0 0
    %4965 = vmatprep.subr.bf16.mxu0 0
    %4966 = vmatpush1.bf16.msra.mxu0 0
    %4967 = vmatprep.subr.bf16.mxu0 0
    %4968 = vmatpush1.bf16.msra.mxu0 0
    %4969 = vmatprep.subr.bf16.mxu0 0
    %4970 = vmatpush1.bf16.msra.mxu0 0
    %4971 = vmatprep.subr.bf16.mxu0 0
    %4972 = vmatpush1.bf16.msra.mxu0 0
    %4973 = vmatprep.subr.bf16.mxu0 0
    %4974 = vmatpush1.bf16.msra.mxu0 0
    %4975 = vmatprep.subr.bf16.mxu0 0
    %4976 = vmatpush1.bf16.msra.mxu0 0
    %4977 = vmatprep.subr.bf16.mxu0 0
    %4978 = vmatpush1.bf16.msra.mxu0 0
    %4979 = vmatprep.subr.bf16.mxu0 0
    %4980 = vmatpush1.bf16.msra.mxu0 0
    %4981 = vmatprep.mubr.bf16.mxu0 0
    %4982 = vmatmul.mubr.bf16.gmra.mrb[0].mxu0 %v4902
    %v4983 = vpop.f32.mrb[0].mxu0
    %v4984 = vadd.f32 0.0, %v4983
    %v4985 = vpop.f32.mrb[0].mxu0
    %v4986 = vpop.f32.mrb[0].mxu0
    %v4987 = vadd.f32 0.0, %v4986
    %v4988 = vpop.f32.mrb[0].mxu0
    %4989 = vmatprep.mubr.bf16.mxu0 0
    %4990 = vmatmul.mubr.bf16.gmra.mrb[0].mxu0 %v4905
    %v4991 = vpop.f32.mrb[0].mxu0
    %v4992 = vadd.f32 0.0, %v4991
    %v4993 = vpop.f32.mrb[0].mxu0
    %v4994 = vpop.f32.mrb[0].mxu0
    %v4995 = vadd.f32 0.0, %v4994
    %v4996 = vpop.f32.mrb[0].mxu0
    %4997 = vmatprep.mubr.bf16.mxu0 0
    %4998 = vmatmul.mubr.bf16.gmra.mrb[0].mxu0 %v4908
    %v4999 = vpop.f32.mrb[0].mxu0
    %v5000 = vadd.f32 0.0, %v4999
    %v5001 = vpop.f32.mrb[0].mxu0
    %v5002 = vpop.f32.mrb[0].mxu0
    %v5003 = vadd.f32 0.0, %v5002
    %v5004 = vpop.f32.mrb[0].mxu0
    %5005 = vmatprep.mubr.bf16.mxu0 0
    %5006 = vmatmul.mubr.bf16.gmra.mrb[0].mxu0 %v4911
    %v5007 = vpop.f32.mrb[0].mxu0
    %v5008 = vadd.f32 0.0, %v5007
    %v5009 = vpop.f32.mrb[0].mxu0
    %v5010 = vpop.f32.mrb[0].mxu0
    %v5011 = vadd.f32 0.0, %v5010
    %v5012 = vpop.f32.mrb[0].mxu0
    %5013 = vmatprep.mubr.bf16.mxu0 0
    %5014 = vmatmul.mubr.bf16.gmra.mrb[0].mxu0 %v4914
    %v5015 = vpop.f32.mrb[0].mxu0
    %v5016 = vadd.f32 0.0, %v5015
    %v5017 = vpop.f32.mrb[0].mxu0
    %v5018 = vpop.f32.mrb[0].mxu0
    %v5019 = vadd.f32 0.0, %v5018
    %v5020 = vpop.f32.mrb[0].mxu0
    %5021 = vmatprep.mubr.bf16.mxu0 0
    %5022 = vmatmul.mubr.bf16.gmra.mrb[0].mxu0 %v4917
    %v5023 = vpop.f32.mrb[0].mxu0
    %v5024 = vadd.f32 0.0, %v5023
    %v5025 = vpop.f32.mrb[0].mxu0
    %v5026 = vpop.f32.mrb[0].mxu0
    %v5027 = vadd.f32 0.0, %v5026
    %v5028 = vpop.f32.mrb[0].mxu0
    %5029 = vmatprep.mubr.bf16.mxu0 0
    %5030 = vmatmul.mubr.bf16.gmra.mrb[0].mxu0 %v4920
    %v5031 = vpop.f32.mrb[0].mxu0
    %v5032 = vadd.f32 0.0, %v5031
    %v5033 = vpop.f32.mrb[0].mxu0
    %v5034 = vpop.f32.mrb[0].mxu0
    %v5035 = vadd.f32 0.0, %v5034
    %v5036 = vpop.f32.mrb[0].mxu0
    %5037 = vmatprep.mubr.bf16.mxu0 0
    %5038 = vmatmul.mubr.bf16.gmra.mrb[0].mxu0 %v4923
    %v5039 = vpop.f32.mrb[0].mxu0
    %v5040 = vadd.f32 0.0, %v5039
    %v5041 = vpop.f32.mrb[0].mxu0
    %v5042 = vpop.f32.mrb[0].mxu0
    %v5043 = vadd.f32 0.0, %v5042
    %v5044 = vpop.f32.mrb[0].mxu0
    %5045 = vmatprep.mubr.bf16.mxu0 0
    %5046 = vmatmul.mubr.bf16.gmra.mrb[0].mxu0 %v4926
    %v5047 = vpop.f32.mrb[0].mxu0
    %v5048 = vadd.f32 0.0, %v5047
    %v5049 = vpop.f32.mrb[0].mxu0
    %v5050 = vpop.f32.mrb[0].mxu0
    %v5051 = vadd.f32 0.0, %v5050
    %v5052 = vpop.f32.mrb[0].mxu0
    %5053 = vmatprep.mubr.bf16.mxu0 0
    %5054 = vmatmul.mubr.bf16.gmra.mrb[0].mxu0 %v4929
    %v5055 = vpop.f32.mrb[0].mxu0
    %v5056 = vadd.f32 0.0, %v5055
    %v5057 = vpop.f32.mrb[0].mxu0
    %v5058 = vpop.f32.mrb[0].mxu0
    %v5059 = vadd.f32 0.0, %v5058
    %v5060 = vpop.f32.mrb[0].mxu0
    %5061 = vmatprep.mubr.bf16.mxu0 0
    %5062 = vmatmul.mubr.bf16.gmra.mrb[0].mxu0 %v4932
    %v5063 = vpop.f32.mrb[0].mxu0
    %v5064 = vadd.f32 0.0, %v5063
    %v5065 = vpop.f32.mrb[0].mxu0
    %v5066 = vpop.f32.mrb[0].mxu0
    %v5067 = vadd.f32 0.0, %v5066
    %v5068 = vpop.f32.mrb[0].mxu0
    %5069 = vmatprep.mubr.bf16.mxu0 0
    %5070 = vmatmul.mubr.bf16.gmra.mrb[0].mxu0 %v4935
    %v5071 = vpop.f32.mrb[0].mxu0
    %v5072 = vadd.f32 0.0, %v5071
    %v5073 = vpop.f32.mrb[0].mxu0
    %v5074 = vpop.f32.mrb[0].mxu0
    %v5075 = vadd.f32 0.0, %v5074
    %v5076 = vpop.f32.mrb[0].mxu0
    %5077 = vmatprep.mubr.bf16.mxu0 0
    %5078 = vmatmul.mubr.bf16.gmra.mrb[0].mxu0 %v4938
    %v5079 = vpop.f32.mrb[0].mxu0
    %v5080 = vadd.f32 0.0, %v5079
    %v5081 = vpop.f32.mrb[0].mxu0
    %v5082 = vpop.f32.mrb[0].mxu0
    %v5083 = vadd.f32 0.0, %v5082
    %v5084 = vpop.f32.mrb[0].mxu0
    %5085 = vmatprep.mubr.bf16.mxu0 0
    %5086 = vmatmul.mubr.bf16.gmra.mrb[0].mxu0 %v4941
    %v5087 = vpop.f32.mrb[0].mxu0
    %v5088 = vadd.f32 0.0, %v5087
    %v5089 = vpop.f32.mrb[0].mxu0
    %v5090 = vpop.f32.mrb[0].mxu0
    %v5091 = vadd.f32 0.0, %v5090
    %v5092 = vpop.f32.mrb[0].mxu0
    %5093 = vmatprep.mubr.bf16.mxu0 0
    %5094 = vmatmul.mubr.bf16.gmra.mrb[0].mxu0 %v4944
    %v5095 = vpop.f32.mrb[0].mxu0
    %v5096 = vadd.f32 0.0, %v5095
    %v5097 = vpop.f32.mrb[0].mxu0
    %v5098 = vpop.f32.mrb[0].mxu0
    %v5099 = vadd.f32 0.0, %v5098
    %v5100 = vpop.f32.mrb[0].mxu0
    %5101 = vmatprep.mubr.bf16.mxu0 0
    %5102 = vmatmul.mubr.bf16.gmra.mrb[0].mxu0 %v4947
    %v5103 = vpop.f32.mrb[0].mxu0
    %v5104 = vadd.f32 0.0, %v5103
    %v5105 = vpop.f32.mrb[0].mxu0
    %v5106 = vpop.f32.mrb[0].mxu0
    %v5107 = vadd.f32 0.0, %v5106
    %v5108 = vpop.f32.mrb[0].mxu0
    %5109 = vdwg.mxu0
    %v5110 = vadd.f32 %v4756, %v4984
    %v5111 = vadd.f32 %v4757, %v4987
    %v5112 = vadd.f32 %v4758, %v4992
    %v5113 = vadd.f32 %v4759, %v4995
    %v5114 = vadd.f32 %v4760, %v5000
    %v5115 = vadd.f32 %v4761, %v5003
    %v5116 = vadd.f32 %v4762, %v5008
    %v5117 = vadd.f32 %v4763, %v5011
    %v5118 = vadd.f32 %v4764, %v5016
    %v5119 = vadd.f32 %v4765, %v5019
    %v5120 = vadd.f32 %v4766, %v5024
    %v5121 = vadd.f32 %v4767, %v5027
    %v5122 = vadd.f32 %v4768, %v5032
    %v5123 = vadd.f32 %v4769, %v5035
    %v5124 = vadd.f32 %v4770, %v5040
    %v5125 = vadd.f32 %v4771, %v5043
    %v5126 = vadd.f32 %v4772, %v5048
    %v5127 = vadd.f32 %v4773, %v5051
    %v5128 = vadd.f32 %v4774, %v5056
    %v5129 = vadd.f32 %v4775, %v5059
    %v5130 = vadd.f32 %v4776, %v5064
    %v5131 = vadd.f32 %v4777, %v5067
    %v5132 = vadd.f32 %v4778, %v5072
    %v5133 = vadd.f32 %v4779, %v5075
    %v5134 = vadd.f32 %v4780, %v5080
    %v5135 = vadd.f32 %v4781, %v5083
    %v5136 = vadd.f32 %v4782, %v5088
    %v5137 = vadd.f32 %v4783, %v5091
    %v5138 = vadd.f32 %v4784, %v5096
    %v5139 = vadd.f32 %v4785, %v5099
    %v5140 = vadd.f32 %v4786, %v5104
    %v5141 = vadd.f32 %v4787, %v5107
    %v5142 = vmax.f32 %v5110, 0.0
    %v5143 = vmax.f32 %v5111, 0.0
    %v5144 = vmax.f32 %v5112, 0.0
    %v5145 = vmax.f32 %v5113, 0.0
    %v5146 = vmax.f32 %v5114, 0.0
    %v5147 = vmax.f32 %v5115, 0.0
    %v5148 = vmax.f32 %v5116, 0.0
    %v5149 = vmax.f32 %v5117, 0.0
    %v5150 = vmax.f32 %v5118, 0.0
    %v5151 = vmax.f32 %v5119, 0.0
    %v5152 = vmax.f32 %v5120, 0.0
    %v5153 = vmax.f32 %v5121, 0.0
    %v5154 = vmax.f32 %v5122, 0.0
    %v5155 = vmax.f32 %v5123, 0.0
    %v5156 = vmax.f32 %v5124, 0.0
    %v5157 = vmax.f32 %v5125, 0.0
    %v5158 = vmax.f32 %v5126, 0.0
    %v5159 = vmax.f32 %v5127, 0.0
    %v5160 = vmax.f32 %v5128, 0.0
    %v5161 = vmax.f32 %v5129, 0.0
    %v5162 = vmax.f32 %v5130, 0.0
    %v5163 = vmax.f32 %v5131, 0.0
    %v5164 = vmax.f32 %v5132, 0.0
    %v5165 = vmax.f32 %v5133, 0.0
    %v5166 = vmax.f32 %v5134, 0.0
    %v5167 = vmax.f32 %v5135, 0.0
    %v5168 = vmax.f32 %v5136, 0.0
    %v5169 = vmax.f32 %v5137, 0.0
    %v5170 = vmax.f32 %v5138, 0.0
    %v5171 = vmax.f32 %v5139, 0.0
    %v5172 = vmax.f32 %v5140, 0.0
    %v5173 = vmax.f32 %v5141, 0.0
    %v5174 = vpack.c.bf16 %v5143, %v5142
    %v5175 = vpack.c.bf16 %v5145, %v5144
    %v5176 = vpack.c.bf16 %v5147, %v5146
    %v5177 = vpack.c.bf16 %v5149, %v5148
    %v5178 = vpack.c.bf16 %v5151, %v5150
    %v5179 = vpack.c.bf16 %v5153, %v5152
    %v5180 = vpack.c.bf16 %v5155, %v5154
    %v5181 = vpack.c.bf16 %v5157, %v5156
    %v5182 = vpack.c.bf16 %v5159, %v5158
    %v5183 = vpack.c.bf16 %v5161, %v5160
    %v5184 = vpack.c.bf16 %v5163, %v5162
    %v5185 = vpack.c.bf16 %v5165, %v5164
    %v5186 = vpack.c.bf16 %v5167, %v5166
    %v5187 = vpack.c.bf16 %v5169, %v5168
    %v5188 = vpack.c.bf16 %v5171, %v5170
    %v5189 = vpack.c.bf16 %v5173, %v5172
    %v5190 = vld [vmem:[#allocation16] sm:$0xf]
    %v5191 = vld [vmem:[#allocation16 + $0x4] sm:$0xf]
    %v5192 = vld [vmem:[#allocation16 + $0x8] sm:$0xf]
    %v5193 = vld [vmem:[#allocation16 + $0xc] sm:$0xf]
    %v5194 = vld [vmem:[#allocation18] sm:$0x1]
    %v5196 = vlaneseq
    %v5197 = vshrl.u32 %v5196, 7
    %v5198 = vsub.s32 0, %v5197
    %v5199 = vrot.slane %v5194, %v5198
    %v5205 = vunpack.c.l.b16 %v5190
    %v5206 = vunpack.c.l.b16 %v5191
    %v5207 = vunpack.c.l.b16 %v5192
    %v5208 = vunpack.c.l.b16 %v5193
    %v5209 = vpack.c.b16 %v5206, %v5205
    %v5210 = vpack.c.b16 %v5208, %v5207
    %v5214 = vsel %vm2574, %v5174, 0
    %v5217 = vsel %vm2574, %v5175, 0
    %v5220 = vsel %vm2574, %v5176, 0
    %v5223 = vsel %vm2574, %v5177, 0
    %v5226 = vsel %vm2574, %v5178, 0
    %v5229 = vsel %vm2574, %v5179, 0
    %v5232 = vsel %vm2574, %v5180, 0
    %v5235 = vsel %vm2574, %v5181, 0
    %v5238 = vsel %vm2574, %v5182, 0
    %v5241 = vsel %vm2574, %v5183, 0
    %v5244 = vsel %vm2574, %v5184, 0
    %v5247 = vsel %vm2574, %v5185, 0
    %v5250 = vsel %vm2574, %v5186, 0
    %v5253 = vsel %vm2574, %v5187, 0
    %v5256 = vsel %vm2574, %v5188, 0
    %v5259 = vsel %vm2574, %v5189, 0
    %5261 = vmatprep.subr.bf16.mxu0 0
    %5262 = vmatpush1.bf16.msra.mxu0 %v5209
    %5263 = vmatprep.subr.bf16.mxu0 0
    %5264 = vmatpush1.bf16.msra.mxu0 %v5210
    %5265 = vmatprep.subr.bf16.mxu0 0
    %5266 = vmatpush1.bf16.msra.mxu0 0
    %5267 = vmatprep.subr.bf16.mxu0 0
    %5268 = vmatpush1.bf16.msra.mxu0 0
    %5269 = vmatprep.subr.bf16.mxu0 0
    %5270 = vmatpush1.bf16.msra.mxu0 0
    %5271 = vmatprep.subr.bf16.mxu0 0
    %5272 = vmatpush1.bf16.msra.mxu0 0
    %5273 = vmatprep.subr.bf16.mxu0 0
    %5274 = vmatpush1.bf16.msra.mxu0 0
    %5275 = vmatprep.subr.bf16.mxu0 0
    %5276 = vmatpush1.bf16.msra.mxu0 0
    %5277 = vmatprep.subr.bf16.mxu0 0
    %5278 = vmatpush1.bf16.msra.mxu0 0
    %5279 = vmatprep.subr.bf16.mxu0 0
    %5280 = vmatpush1.bf16.msra.mxu0 0
    %5281 = vmatprep.subr.bf16.mxu0 0
    %5282 = vmatpush1.bf16.msra.mxu0 0
    %5283 = vmatprep.subr.bf16.mxu0 0
    %5284 = vmatpush1.bf16.msra.mxu0 0
    %5285 = vmatprep.subr.bf16.mxu0 0
    %5286 = vmatpush1.bf16.msra.mxu0 0
    %5287 = vmatprep.subr.bf16.mxu0 0
    %5288 = vmatpush1.bf16.msra.mxu0 0
    %5289 = vmatprep.subr.bf16.mxu0 0
    %5290 = vmatpush1.bf16.msra.mxu0 0
    %5291 = vmatprep.subr.bf16.mxu0 0
    %5292 = vmatpush1.bf16.msra.mxu0 0
    %5293 = vmatprep.mubr.bf16.mxu0 0
    %5294 = vmatmul.mubr.bf16.gmra.mrb[0].mxu0 %v5214
    %v5295 = vpop.f32.mrb[0].mxu0
    %v5296 = vadd.f32 %v5199, %v5295
    %v5297 = vpop.f32.mrb[0].mxu0
    %v5298 = vpop.f32.mrb[0].mxu0
    %v5299 = vadd.f32 %v5199, %v5298
    %v5300 = vpop.f32.mrb[0].mxu0
    %5301 = vmatprep.mubr.bf16.mxu0 0
    %5302 = vmatmul.mubr.bf16.gmra.mrb[0].mxu0 %v5217
    %v5303 = vpop.f32.mrb[0].mxu0
    %v5304 = vadd.f32 %v5199, %v5303
    %v5305 = vpop.f32.mrb[0].mxu0
    %v5306 = vpop.f32.mrb[0].mxu0
    %v5307 = vadd.f32 %v5199, %v5306
    %v5308 = vpop.f32.mrb[0].mxu0
    %5309 = vmatprep.mubr.bf16.mxu0 0
    %5310 = vmatmul.mubr.bf16.gmra.mrb[0].mxu0 %v5220
    %v5311 = vpop.f32.mrb[0].mxu0
    %v5312 = vadd.f32 %v5199, %v5311
    %v5313 = vpop.f32.mrb[0].mxu0
    %v5314 = vpop.f32.mrb[0].mxu0
    %v5315 = vadd.f32 %v5199, %v5314
    %v5316 = vpop.f32.mrb[0].mxu0
    %5317 = vmatprep.mubr.bf16.mxu0 0
    %5318 = vmatmul.mubr.bf16.gmra.mrb[0].mxu0 %v5223
    %v5319 = vpop.f32.mrb[0].mxu0
    %v5320 = vadd.f32 %v5199, %v5319
    %v5321 = vpop.f32.mrb[0].mxu0
    %v5322 = vpop.f32.mrb[0].mxu0
    %v5323 = vadd.f32 %v5199, %v5322
    %v5324 = vpop.f32.mrb[0].mxu0
    %5325 = vmatprep.mubr.bf16.mxu0 0
    %5326 = vmatmul.mubr.bf16.gmra.mrb[0].mxu0 %v5226
    %v5327 = vpop.f32.mrb[0].mxu0
    %v5328 = vadd.f32 %v5199, %v5327
    %v5329 = vpop.f32.mrb[0].mxu0
    %v5330 = vpop.f32.mrb[0].mxu0
    %v5331 = vadd.f32 %v5199, %v5330
    %v5332 = vpop.f32.mrb[0].mxu0
    %5333 = vmatprep.mubr.bf16.mxu0 0
    %5334 = vmatmul.mubr.bf16.gmra.mrb[0].mxu0 %v5229
    %v5335 = vpop.f32.mrb[0].mxu0
    %v5336 = vadd.f32 %v5199, %v5335
    %v5337 = vpop.f32.mrb[0].mxu0
    %v5338 = vpop.f32.mrb[0].mxu0
    %v5339 = vadd.f32 %v5199, %v5338
    %v5340 = vpop.f32.mrb[0].mxu0
    %5341 = vmatprep.mubr.bf16.mxu0 0
    %5342 = vmatmul.mubr.bf16.gmra.mrb[0].mxu0 %v5232
    %v5343 = vpop.f32.mrb[0].mxu0
    %v5344 = vadd.f32 %v5199, %v5343
    %v5345 = vpop.f32.mrb[0].mxu0
    %v5346 = vpop.f32.mrb[0].mxu0
    %v5347 = vadd.f32 %v5199, %v5346
    %v5348 = vpop.f32.mrb[0].mxu0
    %5349 = vmatprep.mubr.bf16.mxu0 0
    %5350 = vmatmul.mubr.bf16.gmra.mrb[0].mxu0 %v5235
    %v5351 = vpop.f32.mrb[0].mxu0
    %v5352 = vadd.f32 %v5199, %v5351
    %v5353 = vpop.f32.mrb[0].mxu0
    %v5354 = vpop.f32.mrb[0].mxu0
    %v5355 = vadd.f32 %v5199, %v5354
    %v5356 = vpop.f32.mrb[0].mxu0
    %5357 = vmatprep.mubr.bf16.mxu0 0
    %5358 = vmatmul.mubr.bf16.gmra.mrb[0].mxu0 %v5238
    %v5359 = vpop.f32.mrb[0].mxu0
    %v5360 = vadd.f32 %v5199, %v5359
    %v5361 = vpop.f32.mrb[0].mxu0
    %v5362 = vpop.f32.mrb[0].mxu0
    %v5363 = vadd.f32 %v5199, %v5362
    %v5364 = vpop.f32.mrb[0].mxu0
    %5365 = vmatprep.mubr.bf16.mxu0 0
    %5366 = vmatmul.mubr.bf16.gmra.mrb[0].mxu0 %v5241
    %v5367 = vpop.f32.mrb[0].mxu0
    %v5368 = vadd.f32 %v5199, %v5367
    %v5369 = vpop.f32.mrb[0].mxu0
    %v5370 = vpop.f32.mrb[0].mxu0
    %v5371 = vadd.f32 %v5199, %v5370
    %v5372 = vpop.f32.mrb[0].mxu0
    %5373 = vmatprep.mubr.bf16.mxu0 0
    %5374 = vmatmul.mubr.bf16.gmra.mrb[0].mxu0 %v5244
    %v5375 = vpop.f32.mrb[0].mxu0
    %v5376 = vadd.f32 %v5199, %v5375
    %v5377 = vpop.f32.mrb[0].mxu0
    %v5378 = vpop.f32.mrb[0].mxu0
    %v5379 = vadd.f32 %v5199, %v5378
    %v5380 = vpop.f32.mrb[0].mxu0
    %5381 = vmatprep.mubr.bf16.mxu0 0
    %5382 = vmatmul.mubr.bf16.gmra.mrb[0].mxu0 %v5247
    %v5383 = vpop.f32.mrb[0].mxu0
    %v5384 = vadd.f32 %v5199, %v5383
    %v5385 = vpop.f32.mrb[0].mxu0
    %v5386 = vpop.f32.mrb[0].mxu0
    %v5387 = vadd.f32 %v5199, %v5386
    %v5388 = vpop.f32.mrb[0].mxu0
    %5389 = vmatprep.mubr.bf16.mxu0 0
    %5390 = vmatmul.mubr.bf16.gmra.mrb[0].mxu0 %v5250
    %v5391 = vpop.f32.mrb[0].mxu0
    %v5392 = vadd.f32 %v5199, %v5391
    %v5393 = vpop.f32.mrb[0].mxu0
    %v5394 = vpop.f32.mrb[0].mxu0
    %v5395 = vadd.f32 %v5199, %v5394
    %v5396 = vpop.f32.mrb[0].mxu0
    %5397 = vmatprep.mubr.bf16.mxu0 0
    %5398 = vmatmul.mubr.bf16.gmra.mrb[0].mxu0 %v5253
    %v5399 = vpop.f32.mrb[0].mxu0
    %v5400 = vadd.f32 %v5199, %v5399
    %v5401 = vpop.f32.mrb[0].mxu0
    %v5402 = vpop.f32.mrb[0].mxu0
    %v5403 = vadd.f32 %v5199, %v5402
    %v5404 = vpop.f32.mrb[0].mxu0
    %5405 = vmatprep.mubr.bf16.mxu0 0
    %5406 = vmatmul.mubr.bf16.gmra.mrb[0].mxu0 %v5256
    %v5407 = vpop.f32.mrb[0].mxu0
    %v5408 = vadd.f32 %v5199, %v5407
    %v5409 = vpop.f32.mrb[0].mxu0
    %v5410 = vpop.f32.mrb[0].mxu0
    %v5411 = vadd.f32 %v5199, %v5410
    %v5412 = vpop.f32.mrb[0].mxu0
    %5413 = vmatprep.mubr.bf16.mxu0 0
    %5414 = vmatmul.mubr.bf16.gmra.mrb[0].mxu0 %v5259
    %v5415 = vpop.f32.mrb[0].mxu0
    %v5416 = vadd.f32 %v5199, %v5415
    %v5417 = vpop.f32.mrb[0].mxu0
    %v5418 = vpop.f32.mrb[0].mxu0
    %v5419 = vadd.f32 %v5199, %v5418
    %v5420 = vpop.f32.mrb[0].mxu0
    %5421 = vdwg.mxu0
    %v5422 = vpack.c.bf16 %v5299, %v5296
    %v5423 = vpack.c.bf16 %v5307, %v5304
    %v5424 = vpack.c.bf16 %v5315, %v5312
    %v5425 = vpack.c.bf16 %v5323, %v5320
    %v5426 = vpack.c.bf16 %v5331, %v5328
    %v5427 = vpack.c.bf16 %v5339, %v5336
    %v5428 = vpack.c.bf16 %v5347, %v5344
    %v5429 = vpack.c.bf16 %v5355, %v5352
    %v5430 = vpack.c.bf16 %v5363, %v5360
    %v5431 = vpack.c.bf16 %v5371, %v5368
    %v5432 = vpack.c.bf16 %v5379, %v5376
    %v5433 = vpack.c.bf16 %v5387, %v5384
    %v5434 = vpack.c.bf16 %v5395, %v5392
    %v5435 = vpack.c.bf16 %v5403, %v5400
    %v5436 = vpack.c.bf16 %v5411, %v5408
    %v5437 = vpack.c.bf16 %v5419, %v5416
    %5439 = vrot.lane.b32.xlu0 %v5422, 124
    %v5440 = vpop.permute.xlu0 %5439
    %vm5441 = vcmask 31744
    %v5443 = vsel %vm5441, %v5422, 0
    %v5446 = vsel %vm5441, %v5440, 0
    %5448 = vmatprep.subr.bf16.mxu0 0
    %5449 = vmatpush1.bf16.xpose.msra.mxu0 %v5446
    %5450 = vmatprep.subr.bf16.mxu0 0
    %5451 = vmatpush1.bf16.xpose.msra.mxu0 0
    %5452 = vmatprep.subr.bf16.mxu0 0
    %5453 = vmatpush1.bf16.xpose.msra.mxu0 0
    %5454 = vmatprep.subr.bf16.mxu0 0
    %5455 = vmatpush1.bf16.xpose.msra.mxu0 0
    %5456 = vmatprep.subr.bf16.mxu0 0
    %5457 = vmatpush1.bf16.xpose.msra.mxu0 0
    %5458 = vmatprep.subr.bf16.mxu0 0
    %5459 = vmatpush1.bf16.xpose.msra.mxu0 0
    %5460 = vmatprep.subr.bf16.mxu0 0
    %5461 = vmatpush1.bf16.xpose.msra.mxu0 0
    %5462 = vmatprep.subr.bf16.mxu0 0
    %5463 = vmatpush1.bf16.xpose.msra.mxu0 0
    %5464 = vmatprep.subr.bf16.mxu0 0
    %5465 = vmatpush1.bf16.xpose.msra.mxu0 0
    %5466 = vmatprep.subr.bf16.mxu0 0
    %5467 = vmatpush1.bf16.xpose.msra.mxu0 0
    %5468 = vmatprep.subr.bf16.mxu0 0
    %5469 = vmatpush1.bf16.xpose.msra.mxu0 0
    %5470 = vmatprep.subr.bf16.mxu0 0
    %5471 = vmatpush1.bf16.xpose.msra.mxu0 0
    %5472 = vmatprep.subr.bf16.mxu0 0
    %5473 = vmatpush1.bf16.xpose.msra.mxu0 0
    %5474 = vmatprep.subr.bf16.mxu0 0
    %5475 = vmatpush1.bf16.xpose.msra.mxu0 0
    %5476 = vmatprep.subr.bf16.mxu0 0
    %5477 = vmatpush1.bf16.xpose.msra.mxu0 0
    %5478 = vmatprep.subr.bf16.mxu0 0
    %5479 = vmatpush1.bf16.xpose.msra.mxu0 0
    %5480 = vmatprep.mubr.bf16.mxu0 0
    %5481 = vmatmul.mubr.bf16.gmra.mrb[0].mxu0 %v5443
    %v5482 = vpop.f32.mrb[0].mxu0
    %v5483 = vadd.f32 0.0, %v5482
    %v5484 = vpop.f32.mrb[0].mxu0
    %v5485 = vpop.f32.mrb[0].mxu0
    %v5486 = vadd.f32 0.0, %v5485
    %v5487 = vpop.f32.mrb[0].mxu0
    %5488 = vdwg.mxu0
    %5490 = vrot.lane.b32.xlu0 %v5423, 124
    %v5491 = vpop.permute.xlu0 %5490
    %v5493 = vsel %vm5441, %v5423, 0
    %v5496 = vsel %vm5441, %v5491, 0
    %5498 = vmatprep.subr.bf16.mxu0 0
    %5499 = vmatpush1.bf16.xpose.msra.mxu0 %v5496
    %5500 = vmatprep.subr.bf16.mxu0 0
    %5501 = vmatpush1.bf16.xpose.msra.mxu0 0
    %5502 = vmatprep.subr.bf16.mxu0 0
    %5503 = vmatpush1.bf16.xpose.msra.mxu0 0
    %5504 = vmatprep.subr.bf16.mxu0 0
    %5505 = vmatpush1.bf16.xpose.msra.mxu0 0
    %5506 = vmatprep.subr.bf16.mxu0 0
    %5507 = vmatpush1.bf16.xpose.msra.mxu0 0
    %5508 = vmatprep.subr.bf16.mxu0 0
    %5509 = vmatpush1.bf16.xpose.msra.mxu0 0
    %5510 = vmatprep.subr.bf16.mxu0 0
    %5511 = vmatpush1.bf16.xpose.msra.mxu0 0
    %5512 = vmatprep.subr.bf16.mxu0 0
    %5513 = vmatpush1.bf16.xpose.msra.mxu0 0
    %5514 = vmatprep.subr.bf16.mxu0 0
    %5515 = vmatpush1.bf16.xpose.msra.mxu0 0
    %5516 = vmatprep.subr.bf16.mxu0 0
    %5517 = vmatpush1.bf16.xpose.msra.mxu0 0
    %5518 = vmatprep.subr.bf16.mxu0 0
    %5519 = vmatpush1.bf16.xpose.msra.mxu0 0
    %5520 = vmatprep.subr.bf16.mxu0 0
    %5521 = vmatpush1.bf16.xpose.msra.mxu0 0
    %5522 = vmatprep.subr.bf16.mxu0 0
    %5523 = vmatpush1.bf16.xpose.msra.mxu0 0
    %5524 = vmatprep.subr.bf16.mxu0 0
    %5525 = vmatpush1.bf16.xpose.msra.mxu0 0
    %5526 = vmatprep.subr.bf16.mxu0 0
    %5527 = vmatpush1.bf16.xpose.msra.mxu0 0
    %5528 = vmatprep.subr.bf16.mxu0 0
    %5529 = vmatpush1.bf16.xpose.msra.mxu0 0
    %5530 = vmatprep.mubr.bf16.mxu0 0
    %5531 = vmatmul.mubr.bf16.gmra.mrb[0].mxu0 %v5493
    %v5532 = vpop.f32.mrb[0].mxu0
    %v5533 = vadd.f32 0.0, %v5532
    %v5534 = vpop.f32.mrb[0].mxu0
    %v5535 = vpop.f32.mrb[0].mxu0
    %v5536 = vadd.f32 0.0, %v5535
    %v5537 = vpop.f32.mrb[0].mxu0
    %5538 = vdwg.mxu0
    %5540 = vrot.lane.b32.xlu0 %v5424, 124
    %v5541 = vpop.permute.xlu0 %5540
    %v5543 = vsel %vm5441, %v5424, 0
    %v5546 = vsel %vm5441, %v5541, 0
    %5548 = vmatprep.subr.bf16.mxu0 0
    %5549 = vmatpush1.bf16.xpose.msra.mxu0 %v5546
    %5550 = vmatprep.subr.bf16.mxu0 0
    %5551 = vmatpush1.bf16.xpose.msra.mxu0 0
    %5552 = vmatprep.subr.bf16.mxu0 0
    %5553 = vmatpush1.bf16.xpose.msra.mxu0 0
    %5554 = vmatprep.subr.bf16.mxu0 0
    %5555 = vmatpush1.bf16.xpose.msra.mxu0 0
    %5556 = vmatprep.subr.bf16.mxu0 0
    %5557 = vmatpush1.bf16.xpose.msra.mxu0 0
    %5558 = vmatprep.subr.bf16.mxu0 0
    %5559 = vmatpush1.bf16.xpose.msra.mxu0 0
    %5560 = vmatprep.subr.bf16.mxu0 0
    %5561 = vmatpush1.bf16.xpose.msra.mxu0 0
    %5562 = vmatprep.subr.bf16.mxu0 0
    %5563 = vmatpush1.bf16.xpose.msra.mxu0 0
    %5564 = vmatprep.subr.bf16.mxu0 0
    %5565 = vmatpush1.bf16.xpose.msra.mxu0 0
    %5566 = vmatprep.subr.bf16.mxu0 0
    %5567 = vmatpush1.bf16.xpose.msra.mxu0 0
    %5568 = vmatprep.subr.bf16.mxu0 0
    %5569 = vmatpush1.bf16.xpose.msra.mxu0 0
    %5570 = vmatprep.subr.bf16.mxu0 0
    %5571 = vmatpush1.bf16.xpose.msra.mxu0 0
    %5572 = vmatprep.subr.bf16.mxu0 0
    %5573 = vmatpush1.bf16.xpose.msra.mxu0 0
    %5574 = vmatprep.subr.bf16.mxu0 0
    %5575 = vmatpush1.bf16.xpose.msra.mxu0 0
    %5576 = vmatprep.subr.bf16.mxu0 0
    %5577 = vmatpush1.bf16.xpose.msra.mxu0 0
    %5578 = vmatprep.subr.bf16.mxu0 0
    %5579 = vmatpush1.bf16.xpose.msra.mxu0 0
    %5580 = vmatprep.mubr.bf16.mxu0 0
    %5581 = vmatmul.mubr.bf16.gmra.mrb[0].mxu0 %v5543
    %v5582 = vpop.f32.mrb[0].mxu0
    %v5583 = vadd.f32 0.0, %v5582
    %v5584 = vpop.f32.mrb[0].mxu0
    %v5585 = vpop.f32.mrb[0].mxu0
    %v5586 = vadd.f32 0.0, %v5585
    %v5587 = vpop.f32.mrb[0].mxu0
    %5588 = vdwg.mxu0
    %5590 = vrot.lane.b32.xlu0 %v5425, 124
    %v5591 = vpop.permute.xlu0 %5590
    %v5593 = vsel %vm5441, %v5425, 0
    %v5596 = vsel %vm5441, %v5591, 0
    %5598 = vmatprep.subr.bf16.mxu0 0
    %5599 = vmatpush1.bf16.xpose.msra.mxu0 %v5596
    %5600 = vmatprep.subr.bf16.mxu0 0
    %5601 = vmatpush1.bf16.xpose.msra.mxu0 0
    %5602 = vmatprep.subr.bf16.mxu0 0
    %5603 = vmatpush1.bf16.xpose.msra.mxu0 0
    %5604 = vmatprep.subr.bf16.mxu0 0
    %5605 = vmatpush1.bf16.xpose.msra.mxu0 0
    %5606 = vmatprep.subr.bf16.mxu0 0
    %5607 = vmatpush1.bf16.xpose.msra.mxu0 0
    %5608 = vmatprep.subr.bf16.mxu0 0
    %5609 = vmatpush1.bf16.xpose.msra.mxu0 0
    %5610 = vmatprep.subr.bf16.mxu0 0
    %5611 = vmatpush1.bf16.xpose.msra.mxu0 0
    %5612 = vmatprep.subr.bf16.mxu0 0
    %5613 = vmatpush1.bf16.xpose.msra.mxu0 0
    %5614 = vmatprep.subr.bf16.mxu0 0
    %5615 = vmatpush1.bf16.xpose.msra.mxu0 0
    %5616 = vmatprep.subr.bf16.mxu0 0
    %5617 = vmatpush1.bf16.xpose.msra.mxu0 0
    %5618 = vmatprep.subr.bf16.mxu0 0
    %5619 = vmatpush1.bf16.xpose.msra.mxu0 0
    %5620 = vmatprep.subr.bf16.mxu0 0
    %5621 = vmatpush1.bf16.xpose.msra.mxu0 0
    %5622 = vmatprep.subr.bf16.mxu0 0
    %5623 = vmatpush1.bf16.xpose.msra.mxu0 0
    %5624 = vmatprep.subr.bf16.mxu0 0
    %5625 = vmatpush1.bf16.xpose.msra.mxu0 0
    %5626 = vmatprep.subr.bf16.mxu0 0
    %5627 = vmatpush1.bf16.xpose.msra.mxu0 0
    %5628 = vmatprep.subr.bf16.mxu0 0
    %5629 = vmatpush1.bf16.xpose.msra.mxu0 0
    %5630 = vmatprep.mubr.bf16.mxu0 0
    %5631 = vmatmul.mubr.bf16.gmra.mrb[0].mxu0 %v5593
    %v5632 = vpop.f32.mrb[0].mxu0
    %v5633 = vadd.f32 0.0, %v5632
    %v5634 = vpop.f32.mrb[0].mxu0
    %v5635 = vpop.f32.mrb[0].mxu0
    %v5636 = vadd.f32 0.0, %v5635
    %v5637 = vpop.f32.mrb[0].mxu0
    %5638 = vdwg.mxu0
    %5640 = vrot.lane.b32.xlu0 %v5426, 124
    %v5641 = vpop.permute.xlu0 %5640
    %v5643 = vsel %vm5441, %v5426, 0
    %v5646 = vsel %vm5441, %v5641, 0
    %5648 = vmatprep.subr.bf16.mxu0 0
    %5649 = vmatpush1.bf16.xpose.msra.mxu0 %v5646
    %5650 = vmatprep.subr.bf16.mxu0 0
    %5651 = vmatpush1.bf16.xpose.msra.mxu0 0
    %5652 = vmatprep.subr.bf16.mxu0 0
    %5653 = vmatpush1.bf16.xpose.msra.mxu0 0
    %5654 = vmatprep.subr.bf16.mxu0 0
    %5655 = vmatpush1.bf16.xpose.msra.mxu0 0
    %5656 = vmatprep.subr.bf16.mxu0 0
    %5657 = vmatpush1.bf16.xpose.msra.mxu0 0
    %5658 = vmatprep.subr.bf16.mxu0 0
    %5659 = vmatpush1.bf16.xpose.msra.mxu0 0
    %5660 = vmatprep.subr.bf16.mxu0 0
    %5661 = vmatpush1.bf16.xpose.msra.mxu0 0
    %5662 = vmatprep.subr.bf16.mxu0 0
    %5663 = vmatpush1.bf16.xpose.msra.mxu0 0
    %5664 = vmatprep.subr.bf16.mxu0 0
    %5665 = vmatpush1.bf16.xpose.msra.mxu0 0
    %5666 = vmatprep.subr.bf16.mxu0 0
    %5667 = vmatpush1.bf16.xpose.msra.mxu0 0
    %5668 = vmatprep.subr.bf16.mxu0 0
    %5669 = vmatpush1.bf16.xpose.msra.mxu0 0
    %5670 = vmatprep.subr.bf16.mxu0 0
    %5671 = vmatpush1.bf16.xpose.msra.mxu0 0
    %5672 = vmatprep.subr.bf16.mxu0 0
    %5673 = vmatpush1.bf16.xpose.msra.mxu0 0
    %5674 = vmatprep.subr.bf16.mxu0 0
    %5675 = vmatpush1.bf16.xpose.msra.mxu0 0
    %5676 = vmatprep.subr.bf16.mxu0 0
    %5677 = vmatpush1.bf16.xpose.msra.mxu0 0
    %5678 = vmatprep.subr.bf16.mxu0 0
    %5679 = vmatpush1.bf16.xpose.msra.mxu0 0
    %5680 = vmatprep.mubr.bf16.mxu0 0
    %5681 = vmatmul.mubr.bf16.gmra.mrb[0].mxu0 %v5643
    %v5682 = vpop.f32.mrb[0].mxu0
    %v5683 = vadd.f32 0.0, %v5682
    %v5684 = vpop.f32.mrb[0].mxu0
    %v5685 = vpop.f32.mrb[0].mxu0
    %v5686 = vadd.f32 0.0, %v5685
    %v5687 = vpop.f32.mrb[0].mxu0
    %5688 = vdwg.mxu0
    %5690 = vrot.lane.b32.xlu0 %v5427, 124
    %v5691 = vpop.permute.xlu0 %5690
    %v5693 = vsel %vm5441, %v5427, 0
    %v5696 = vsel %vm5441, %v5691, 0
    %5698 = vmatprep.subr.bf16.mxu0 0
    %5699 = vmatpush1.bf16.xpose.msra.mxu0 %v5696
    %5700 = vmatprep.subr.bf16.mxu0 0
    %5701 = vmatpush1.bf16.xpose.msra.mxu0 0
    %5702 = vmatprep.subr.bf16.mxu0 0
    %5703 = vmatpush1.bf16.xpose.msra.mxu0 0
    %5704 = vmatprep.subr.bf16.mxu0 0
    %5705 = vmatpush1.bf16.xpose.msra.mxu0 0
    %5706 = vmatprep.subr.bf16.mxu0 0
    %5707 = vmatpush1.bf16.xpose.msra.mxu0 0
    %5708 = vmatprep.subr.bf16.mxu0 0
    %5709 = vmatpush1.bf16.xpose.msra.mxu0 0
    %5710 = vmatprep.subr.bf16.mxu0 0
    %5711 = vmatpush1.bf16.xpose.msra.mxu0 0
    %5712 = vmatprep.subr.bf16.mxu0 0
    %5713 = vmatpush1.bf16.xpose.msra.mxu0 0
    %5714 = vmatprep.subr.bf16.mxu0 0
    %5715 = vmatpush1.bf16.xpose.msra.mxu0 0
    %5716 = vmatprep.subr.bf16.mxu0 0
    %5717 = vmatpush1.bf16.xpose.msra.mxu0 0
    %5718 = vmatprep.subr.bf16.mxu0 0
    %5719 = vmatpush1.bf16.xpose.msra.mxu0 0
    %5720 = vmatprep.subr.bf16.mxu0 0
    %5721 = vmatpush1.bf16.xpose.msra.mxu0 0
    %5722 = vmatprep.subr.bf16.mxu0 0
    %5723 = vmatpush1.bf16.xpose.msra.mxu0 0
    %5724 = vmatprep.subr.bf16.mxu0 0
    %5725 = vmatpush1.bf16.xpose.msra.mxu0 0
    %5726 = vmatprep.subr.bf16.mxu0 0
    %5727 = vmatpush1.bf16.xpose.msra.mxu0 0
    %5728 = vmatprep.subr.bf16.mxu0 0
    %5729 = vmatpush1.bf16.xpose.msra.mxu0 0
    %5730 = vmatprep.mubr.bf16.mxu0 0
    %5731 = vmatmul.mubr.bf16.gmra.mrb[0].mxu0 %v5693
    %v5732 = vpop.f32.mrb[0].mxu0
    %v5733 = vadd.f32 0.0, %v5732
    %v5734 = vpop.f32.mrb[0].mxu0
    %v5735 = vpop.f32.mrb[0].mxu0
    %v5736 = vadd.f32 0.0, %v5735
    %v5737 = vpop.f32.mrb[0].mxu0
    %5738 = vdwg.mxu0
    %5740 = vrot.lane.b32.xlu0 %v5428, 124
    %v5741 = vpop.permute.xlu0 %5740
    %v5743 = vsel %vm5441, %v5428, 0
    %v5746 = vsel %vm5441, %v5741, 0
    %5748 = vmatprep.subr.bf16.mxu0 0
    %5749 = vmatpush1.bf16.xpose.msra.mxu0 %v5746
    %5750 = vmatprep.subr.bf16.mxu0 0
    %5751 = vmatpush1.bf16.xpose.msra.mxu0 0
    %5752 = vmatprep.subr.bf16.mxu0 0
    %5753 = vmatpush1.bf16.xpose.msra.mxu0 0
    %5754 = vmatprep.subr.bf16.mxu0 0
    %5755 = vmatpush1.bf16.xpose.msra.mxu0 0
    %5756 = vmatprep.subr.bf16.mxu0 0
    %5757 = vmatpush1.bf16.xpose.msra.mxu0 0
    %5758 = vmatprep.subr.bf16.mxu0 0
    %5759 = vmatpush1.bf16.xpose.msra.mxu0 0
    %5760 = vmatprep.subr.bf16.mxu0 0
    %5761 = vmatpush1.bf16.xpose.msra.mxu0 0
    %5762 = vmatprep.subr.bf16.mxu0 0
    %5763 = vmatpush1.bf16.xpose.msra.mxu0 0
    %5764 = vmatprep.subr.bf16.mxu0 0
    %5765 = vmatpush1.bf16.xpose.msra.mxu0 0
    %5766 = vmatprep.subr.bf16.mxu0 0
    %5767 = vmatpush1.bf16.xpose.msra.mxu0 0
    %5768 = vmatprep.subr.bf16.mxu0 0
    %5769 = vmatpush1.bf16.xpose.msra.mxu0 0
    %5770 = vmatprep.subr.bf16.mxu0 0
    %5771 = vmatpush1.bf16.xpose.msra.mxu0 0
    %5772 = vmatprep.subr.bf16.mxu0 0
    %5773 = vmatpush1.bf16.xpose.msra.mxu0 0
    %5774 = vmatprep.subr.bf16.mxu0 0
    %5775 = vmatpush1.bf16.xpose.msra.mxu0 0
    %5776 = vmatprep.subr.bf16.mxu0 0
    %5777 = vmatpush1.bf16.xpose.msra.mxu0 0
    %5778 = vmatprep.subr.bf16.mxu0 0
    %5779 = vmatpush1.bf16.xpose.msra.mxu0 0
    %5780 = vmatprep.mubr.bf16.mxu0 0
    %5781 = vmatmul.mubr.bf16.gmra.mrb[0].mxu0 %v5743
    %v5782 = vpop.f32.mrb[0].mxu0
    %v5783 = vadd.f32 0.0, %v5782
    %v5784 = vpop.f32.mrb[0].mxu0
    %v5785 = vpop.f32.mrb[0].mxu0
    %v5786 = vadd.f32 0.0, %v5785
    %v5787 = vpop.f32.mrb[0].mxu0
    %5788 = vdwg.mxu0
    %5790 = vrot.lane.b32.xlu0 %v5429, 124
    %v5791 = vpop.permute.xlu0 %5790
    %v5793 = vsel %vm5441, %v5429, 0
    %v5796 = vsel %vm5441, %v5791, 0
    %5798 = vmatprep.subr.bf16.mxu0 0
    %5799 = vmatpush1.bf16.xpose.msra.mxu0 %v5796
    %5800 = vmatprep.subr.bf16.mxu0 0
    %5801 = vmatpush1.bf16.xpose.msra.mxu0 0
    %5802 = vmatprep.subr.bf16.mxu0 0
    %5803 = vmatpush1.bf16.xpose.msra.mxu0 0
    %5804 = vmatprep.subr.bf16.mxu0 0
    %5805 = vmatpush1.bf16.xpose.msra.mxu0 0
    %5806 = vmatprep.subr.bf16.mxu0 0
    %5807 = vmatpush1.bf16.xpose.msra.mxu0 0
    %5808 = vmatprep.subr.bf16.mxu0 0
    %5809 = vmatpush1.bf16.xpose.msra.mxu0 0
    %5810 = vmatprep.subr.bf16.mxu0 0
    %5811 = vmatpush1.bf16.xpose.msra.mxu0 0
    %5812 = vmatprep.subr.bf16.mxu0 0
    %5813 = vmatpush1.bf16.xpose.msra.mxu0 0
    %5814 = vmatprep.subr.bf16.mxu0 0
    %5815 = vmatpush1.bf16.xpose.msra.mxu0 0
    %5816 = vmatprep.subr.bf16.mxu0 0
    %5817 = vmatpush1.bf16.xpose.msra.mxu0 0
    %5818 = vmatprep.subr.bf16.mxu0 0
    %5819 = vmatpush1.bf16.xpose.msra.mxu0 0
    %5820 = vmatprep.subr.bf16.mxu0 0
    %5821 = vmatpush1.bf16.xpose.msra.mxu0 0
    %5822 = vmatprep.subr.bf16.mxu0 0
    %5823 = vmatpush1.bf16.xpose.msra.mxu0 0
    %5824 = vmatprep.subr.bf16.mxu0 0
    %5825 = vmatpush1.bf16.xpose.msra.mxu0 0
    %5826 = vmatprep.subr.bf16.mxu0 0
    %5827 = vmatpush1.bf16.xpose.msra.mxu0 0
    %5828 = vmatprep.subr.bf16.mxu0 0
    %5829 = vmatpush1.bf16.xpose.msra.mxu0 0
    %5830 = vmatprep.mubr.bf16.mxu0 0
    %5831 = vmatmul.mubr.bf16.gmra.mrb[0].mxu0 %v5793
    %v5832 = vpop.f32.mrb[0].mxu0
    %v5833 = vadd.f32 0.0, %v5832
    %v5834 = vpop.f32.mrb[0].mxu0
    %v5835 = vpop.f32.mrb[0].mxu0
    %v5836 = vadd.f32 0.0, %v5835
    %v5837 = vpop.f32.mrb[0].mxu0
    %5838 = vdwg.mxu0
    %5840 = vrot.lane.b32.xlu0 %v5430, 124
    %v5841 = vpop.permute.xlu0 %5840
    %v5843 = vsel %vm5441, %v5430, 0
    %v5846 = vsel %vm5441, %v5841, 0
    %5848 = vmatprep.subr.bf16.mxu0 0
    %5849 = vmatpush1.bf16.xpose.msra.mxu0 %v5846
    %5850 = vmatprep.subr.bf16.mxu0 0
    %5851 = vmatpush1.bf16.xpose.msra.mxu0 0
    %5852 = vmatprep.subr.bf16.mxu0 0
    %5853 = vmatpush1.bf16.xpose.msra.mxu0 0
    %5854 = vmatprep.subr.bf16.mxu0 0
    %5855 = vmatpush1.bf16.xpose.msra.mxu0 0
    %5856 = vmatprep.subr.bf16.mxu0 0
    %5857 = vmatpush1.bf16.xpose.msra.mxu0 0
    %5858 = vmatprep.subr.bf16.mxu0 0
    %5859 = vmatpush1.bf16.xpose.msra.mxu0 0
    %5860 = vmatprep.subr.bf16.mxu0 0
    %5861 = vmatpush1.bf16.xpose.msra.mxu0 0
    %5862 = vmatprep.subr.bf16.mxu0 0
    %5863 = vmatpush1.bf16.xpose.msra.mxu0 0
    %5864 = vmatprep.subr.bf16.mxu0 0
    %5865 = vmatpush1.bf16.xpose.msra.mxu0 0
    %5866 = vmatprep.subr.bf16.mxu0 0
    %5867 = vmatpush1.bf16.xpose.msra.mxu0 0
    %5868 = vmatprep.subr.bf16.mxu0 0
    %5869 = vmatpush1.bf16.xpose.msra.mxu0 0
    %5870 = vmatprep.subr.bf16.mxu0 0
    %5871 = vmatpush1.bf16.xpose.msra.mxu0 0
    %5872 = vmatprep.subr.bf16.mxu0 0
    %5873 = vmatpush1.bf16.xpose.msra.mxu0 0
    %5874 = vmatprep.subr.bf16.mxu0 0
    %5875 = vmatpush1.bf16.xpose.msra.mxu0 0
    %5876 = vmatprep.subr.bf16.mxu0 0
    %5877 = vmatpush1.bf16.xpose.msra.mxu0 0
    %5878 = vmatprep.subr.bf16.mxu0 0
    %5879 = vmatpush1.bf16.xpose.msra.mxu0 0
    %5880 = vmatprep.mubr.bf16.mxu0 0
    %5881 = vmatmul.mubr.bf16.gmra.mrb[0].mxu0 %v5843
    %v5882 = vpop.f32.mrb[0].mxu0
    %v5883 = vadd.f32 0.0, %v5882
    %v5884 = vpop.f32.mrb[0].mxu0
    %v5885 = vpop.f32.mrb[0].mxu0
    %v5886 = vadd.f32 0.0, %v5885
    %v5887 = vpop.f32.mrb[0].mxu0
    %5888 = vdwg.mxu0
    %5890 = vrot.lane.b32.xlu0 %v5431, 124
    %v5891 = vpop.permute.xlu0 %5890
    %v5893 = vsel %vm5441, %v5431, 0
    %v5896 = vsel %vm5441, %v5891, 0
    %5898 = vmatprep.subr.bf16.mxu0 0
    %5899 = vmatpush1.bf16.xpose.msra.mxu0 %v5896
    %5900 = vmatprep.subr.bf16.mxu0 0
    %5901 = vmatpush1.bf16.xpose.msra.mxu0 0
    %5902 = vmatprep.subr.bf16.mxu0 0
    %5903 = vmatpush1.bf16.xpose.msra.mxu0 0
    %5904 = vmatprep.subr.bf16.mxu0 0
    %5905 = vmatpush1.bf16.xpose.msra.mxu0 0
    %5906 = vmatprep.subr.bf16.mxu0 0
    %5907 = vmatpush1.bf16.xpose.msra.mxu0 0
    %5908 = vmatprep.subr.bf16.mxu0 0
    %5909 = vmatpush1.bf16.xpose.msra.mxu0 0
    %5910 = vmatprep.subr.bf16.mxu0 0
    %5911 = vmatpush1.bf16.xpose.msra.mxu0 0
    %5912 = vmatprep.subr.bf16.mxu0 0
    %5913 = vmatpush1.bf16.xpose.msra.mxu0 0
    %5914 = vmatprep.subr.bf16.mxu0 0
    %5915 = vmatpush1.bf16.xpose.msra.mxu0 0
    %5916 = vmatprep.subr.bf16.mxu0 0
    %5917 = vmatpush1.bf16.xpose.msra.mxu0 0
    %5918 = vmatprep.subr.bf16.mxu0 0
    %5919 = vmatpush1.bf16.xpose.msra.mxu0 0
    %5920 = vmatprep.subr.bf16.mxu0 0
    %5921 = vmatpush1.bf16.xpose.msra.mxu0 0
    %5922 = vmatprep.subr.bf16.mxu0 0
    %5923 = vmatpush1.bf16.xpose.msra.mxu0 0
    %5924 = vmatprep.subr.bf16.mxu0 0
    %5925 = vmatpush1.bf16.xpose.msra.mxu0 0
    %5926 = vmatprep.subr.bf16.mxu0 0
    %5927 = vmatpush1.bf16.xpose.msra.mxu0 0
    %5928 = vmatprep.subr.bf16.mxu0 0
    %5929 = vmatpush1.bf16.xpose.msra.mxu0 0
    %5930 = vmatprep.mubr.bf16.mxu0 0
    %5931 = vmatmul.mubr.bf16.gmra.mrb[0].mxu0 %v5893
    %v5932 = vpop.f32.mrb[0].mxu0
    %v5933 = vadd.f32 0.0, %v5932
    %v5934 = vpop.f32.mrb[0].mxu0
    %v5935 = vpop.f32.mrb[0].mxu0
    %v5936 = vadd.f32 0.0, %v5935
    %v5937 = vpop.f32.mrb[0].mxu0
    %5938 = vdwg.mxu0
    %5940 = vrot.lane.b32.xlu0 %v5432, 124
    %v5941 = vpop.permute.xlu0 %5940
    %v5943 = vsel %vm5441, %v5432, 0
    %v5946 = vsel %vm5441, %v5941, 0
    %5948 = vmatprep.subr.bf16.mxu0 0
    %5949 = vmatpush1.bf16.xpose.msra.mxu0 %v5946
    %5950 = vmatprep.subr.bf16.mxu0 0
    %5951 = vmatpush1.bf16.xpose.msra.mxu0 0
    %5952 = vmatprep.subr.bf16.mxu0 0
    %5953 = vmatpush1.bf16.xpose.msra.mxu0 0
    %5954 = vmatprep.subr.bf16.mxu0 0
    %5955 = vmatpush1.bf16.xpose.msra.mxu0 0
    %5956 = vmatprep.subr.bf16.mxu0 0
    %5957 = vmatpush1.bf16.xpose.msra.mxu0 0
    %5958 = vmatprep.subr.bf16.mxu0 0
    %5959 = vmatpush1.bf16.xpose.msra.mxu0 0
    %5960 = vmatprep.subr.bf16.mxu0 0
    %5961 = vmatpush1.bf16.xpose.msra.mxu0 0
    %5962 = vmatprep.subr.bf16.mxu0 0
    %5963 = vmatpush1.bf16.xpose.msra.mxu0 0
    %5964 = vmatprep.subr.bf16.mxu0 0
    %5965 = vmatpush1.bf16.xpose.msra.mxu0 0
    %5966 = vmatprep.subr.bf16.mxu0 0
    %5967 = vmatpush1.bf16.xpose.msra.mxu0 0
    %5968 = vmatprep.subr.bf16.mxu0 0
    %5969 = vmatpush1.bf16.xpose.msra.mxu0 0
    %5970 = vmatprep.subr.bf16.mxu0 0
    %5971 = vmatpush1.bf16.xpose.msra.mxu0 0
    %5972 = vmatprep.subr.bf16.mxu0 0
    %5973 = vmatpush1.bf16.xpose.msra.mxu0 0
    %5974 = vmatprep.subr.bf16.mxu0 0
    %5975 = vmatpush1.bf16.xpose.msra.mxu0 0
    %5976 = vmatprep.subr.bf16.mxu0 0
    %5977 = vmatpush1.bf16.xpose.msra.mxu0 0
    %5978 = vmatprep.subr.bf16.mxu0 0
    %5979 = vmatpush1.bf16.xpose.msra.mxu0 0
    %5980 = vmatprep.mubr.bf16.mxu0 0
    %5981 = vmatmul.mubr.bf16.gmra.mrb[0].mxu0 %v5943
    %v5982 = vpop.f32.mrb[0].mxu0
    %v5983 = vadd.f32 0.0, %v5982
    %v5984 = vpop.f32.mrb[0].mxu0
    %v5985 = vpop.f32.mrb[0].mxu0
    %v5986 = vadd.f32 0.0, %v5985
    %v5987 = vpop.f32.mrb[0].mxu0
    %5988 = vdwg.mxu0
    %5990 = vrot.lane.b32.xlu0 %v5433, 124
    %v5991 = vpop.permute.xlu0 %5990
    %v5993 = vsel %vm5441, %v5433, 0
    %v5996 = vsel %vm5441, %v5991, 0
    %5998 = vmatprep.subr.bf16.mxu0 0
    %5999 = vmatpush1.bf16.xpose.msra.mxu0 %v5996
    %6000 = vmatprep.subr.bf16.mxu0 0
    %6001 = vmatpush1.bf16.xpose.msra.mxu0 0
    %6002 = vmatprep.subr.bf16.mxu0 0
    %6003 = vmatpush1.bf16.xpose.msra.mxu0 0
    %6004 = vmatprep.subr.bf16.mxu0 0
    %6005 = vmatpush1.bf16.xpose.msra.mxu0 0
    %6006 = vmatprep.subr.bf16.mxu0 0
    %6007 = vmatpush1.bf16.xpose.msra.mxu0 0
    %6008 = vmatprep.subr.bf16.mxu0 0
    %6009 = vmatpush1.bf16.xpose.msra.mxu0 0
    %6010 = vmatprep.subr.bf16.mxu0 0
    %6011 = vmatpush1.bf16.xpose.msra.mxu0 0
    %6012 = vmatprep.subr.bf16.mxu0 0
    %6013 = vmatpush1.bf16.xpose.msra.mxu0 0
    %6014 = vmatprep.subr.bf16.mxu0 0
    %6015 = vmatpush1.bf16.xpose.msra.mxu0 0
    %6016 = vmatprep.subr.bf16.mxu0 0
    %6017 = vmatpush1.bf16.xpose.msra.mxu0 0
    %6018 = vmatprep.subr.bf16.mxu0 0
    %6019 = vmatpush1.bf16.xpose.msra.mxu0 0
    %6020 = vmatprep.subr.bf16.mxu0 0
    %6021 = vmatpush1.bf16.xpose.msra.mxu0 0
    %6022 = vmatprep.subr.bf16.mxu0 0
    %6023 = vmatpush1.bf16.xpose.msra.mxu0 0
    %6024 = vmatprep.subr.bf16.mxu0 0
    %6025 = vmatpush1.bf16.xpose.msra.mxu0 0
    %6026 = vmatprep.subr.bf16.mxu0 0
    %6027 = vmatpush1.bf16.xpose.msra.mxu0 0
    %6028 = vmatprep.subr.bf16.mxu0 0
    %6029 = vmatpush1.bf16.xpose.msra.mxu0 0
    %6030 = vmatprep.mubr.bf16.mxu0 0
    %6031 = vmatmul.mubr.bf16.gmra.mrb[0].mxu0 %v5993
    %v6032 = vpop.f32.mrb[0].mxu0
    %v6033 = vadd.f32 0.0, %v6032
    %v6034 = vpop.f32.mrb[0].mxu0
    %v6035 = vpop.f32.mrb[0].mxu0
    %v6036 = vadd.f32 0.0, %v6035
    %v6037 = vpop.f32.mrb[0].mxu0
    %6038 = vdwg.mxu0
    %6040 = vrot.lane.b32.xlu0 %v5434, 124
    %v6041 = vpop.permute.xlu0 %6040
    %v6043 = vsel %vm5441, %v5434, 0
    %v6046 = vsel %vm5441, %v6041, 0
    %6048 = vmatprep.subr.bf16.mxu0 0
    %6049 = vmatpush1.bf16.xpose.msra.mxu0 %v6046
    %6050 = vmatprep.subr.bf16.mxu0 0
    %6051 = vmatpush1.bf16.xpose.msra.mxu0 0
    %6052 = vmatprep.subr.bf16.mxu0 0
    %6053 = vmatpush1.bf16.xpose.msra.mxu0 0
    %6054 = vmatprep.subr.bf16.mxu0 0
    %6055 = vmatpush1.bf16.xpose.msra.mxu0 0
    %6056 = vmatprep.subr.bf16.mxu0 0
    %6057 = vmatpush1.bf16.xpose.msra.mxu0 0
    %6058 = vmatprep.subr.bf16.mxu0 0
    %6059 = vmatpush1.bf16.xpose.msra.mxu0 0
    %6060 = vmatprep.subr.bf16.mxu0 0
    %6061 = vmatpush1.bf16.xpose.msra.mxu0 0
    %6062 = vmatprep.subr.bf16.mxu0 0
    %6063 = vmatpush1.bf16.xpose.msra.mxu0 0
    %6064 = vmatprep.subr.bf16.mxu0 0
    %6065 = vmatpush1.bf16.xpose.msra.mxu0 0
    %6066 = vmatprep.subr.bf16.mxu0 0
    %6067 = vmatpush1.bf16.xpose.msra.mxu0 0
    %6068 = vmatprep.subr.bf16.mxu0 0
    %6069 = vmatpush1.bf16.xpose.msra.mxu0 0
    %6070 = vmatprep.subr.bf16.mxu0 0
    %6071 = vmatpush1.bf16.xpose.msra.mxu0 0
    %6072 = vmatprep.subr.bf16.mxu0 0
    %6073 = vmatpush1.bf16.xpose.msra.mxu0 0
    %6074 = vmatprep.subr.bf16.mxu0 0
    %6075 = vmatpush1.bf16.xpose.msra.mxu0 0
    %6076 = vmatprep.subr.bf16.mxu0 0
    %6077 = vmatpush1.bf16.xpose.msra.mxu0 0
    %6078 = vmatprep.subr.bf16.mxu0 0
    %6079 = vmatpush1.bf16.xpose.msra.mxu0 0
    %6080 = vmatprep.mubr.bf16.mxu0 0
    %6081 = vmatmul.mubr.bf16.gmra.mrb[0].mxu0 %v6043
    %v6082 = vpop.f32.mrb[0].mxu0
    %v6083 = vadd.f32 0.0, %v6082
    %v6084 = vpop.f32.mrb[0].mxu0
    %v6085 = vpop.f32.mrb[0].mxu0
    %v6086 = vadd.f32 0.0, %v6085
    %v6087 = vpop.f32.mrb[0].mxu0
    %6088 = vdwg.mxu0
    %6090 = vrot.lane.b32.xlu0 %v5435, 124
    %v6091 = vpop.permute.xlu0 %6090
    %v6093 = vsel %vm5441, %v5435, 0
    %v6096 = vsel %vm5441, %v6091, 0
    %6098 = vmatprep.subr.bf16.mxu0 0
    %6099 = vmatpush1.bf16.xpose.msra.mxu0 %v6096
    %6100 = vmatprep.subr.bf16.mxu0 0
    %6101 = vmatpush1.bf16.xpose.msra.mxu0 0
    %6102 = vmatprep.subr.bf16.mxu0 0
    %6103 = vmatpush1.bf16.xpose.msra.mxu0 0
    %6104 = vmatprep.subr.bf16.mxu0 0
    %6105 = vmatpush1.bf16.xpose.msra.mxu0 0
    %6106 = vmatprep.subr.bf16.mxu0 0
    %6107 = vmatpush1.bf16.xpose.msra.mxu0 0
    %6108 = vmatprep.subr.bf16.mxu0 0
    %6109 = vmatpush1.bf16.xpose.msra.mxu0 0
    %6110 = vmatprep.subr.bf16.mxu0 0
    %6111 = vmatpush1.bf16.xpose.msra.mxu0 0
    %6112 = vmatprep.subr.bf16.mxu0 0
    %6113 = vmatpush1.bf16.xpose.msra.mxu0 0
    %6114 = vmatprep.subr.bf16.mxu0 0
    %6115 = vmatpush1.bf16.xpose.msra.mxu0 0
    %6116 = vmatprep.subr.bf16.mxu0 0
    %6117 = vmatpush1.bf16.xpose.msra.mxu0 0
    %6118 = vmatprep.subr.bf16.mxu0 0
    %6119 = vmatpush1.bf16.xpose.msra.mxu0 0
    %6120 = vmatprep.subr.bf16.mxu0 0
    %6121 = vmatpush1.bf16.xpose.msra.mxu0 0
    %6122 = vmatprep.subr.bf16.mxu0 0
    %6123 = vmatpush1.bf16.xpose.msra.mxu0 0
    %6124 = vmatprep.subr.bf16.mxu0 0
    %6125 = vmatpush1.bf16.xpose.msra.mxu0 0
    %6126 = vmatprep.subr.bf16.mxu0 0
    %6127 = vmatpush1.bf16.xpose.msra.mxu0 0
    %6128 = vmatprep.subr.bf16.mxu0 0
    %6129 = vmatpush1.bf16.xpose.msra.mxu0 0
    %6130 = vmatprep.mubr.bf16.mxu0 0
    %6131 = vmatmul.mubr.bf16.gmra.mrb[0].mxu0 %v6093
    %v6132 = vpop.f32.mrb[0].mxu0
    %v6133 = vadd.f32 0.0, %v6132
    %v6134 = vpop.f32.mrb[0].mxu0
    %v6135 = vpop.f32.mrb[0].mxu0
    %v6136 = vadd.f32 0.0, %v6135
    %v6137 = vpop.f32.mrb[0].mxu0
    %6138 = vdwg.mxu0
    %6140 = vrot.lane.b32.xlu0 %v5436, 124
    %v6141 = vpop.permute.xlu0 %6140
    %v6143 = vsel %vm5441, %v5436, 0
    %v6146 = vsel %vm5441, %v6141, 0
    %6148 = vmatprep.subr.bf16.mxu0 0
    %6149 = vmatpush1.bf16.xpose.msra.mxu0 %v6146
    %6150 = vmatprep.subr.bf16.mxu0 0
    %6151 = vmatpush1.bf16.xpose.msra.mxu0 0
    %6152 = vmatprep.subr.bf16.mxu0 0
    %6153 = vmatpush1.bf16.xpose.msra.mxu0 0
    %6154 = vmatprep.subr.bf16.mxu0 0
    %6155 = vmatpush1.bf16.xpose.msra.mxu0 0
    %6156 = vmatprep.subr.bf16.mxu0 0
    %6157 = vmatpush1.bf16.xpose.msra.mxu0 0
    %6158 = vmatprep.subr.bf16.mxu0 0
    %6159 = vmatpush1.bf16.xpose.msra.mxu0 0
    %6160 = vmatprep.subr.bf16.mxu0 0
    %6161 = vmatpush1.bf16.xpose.msra.mxu0 0
    %6162 = vmatprep.subr.bf16.mxu0 0
    %6163 = vmatpush1.bf16.xpose.msra.mxu0 0
    %6164 = vmatprep.subr.bf16.mxu0 0
    %6165 = vmatpush1.bf16.xpose.msra.mxu0 0
    %6166 = vmatprep.subr.bf16.mxu0 0
    %6167 = vmatpush1.bf16.xpose.msra.mxu0 0
    %6168 = vmatprep.subr.bf16.mxu0 0
    %6169 = vmatpush1.bf16.xpose.msra.mxu0 0
    %6170 = vmatprep.subr.bf16.mxu0 0
    %6171 = vmatpush1.bf16.xpose.msra.mxu0 0
    %6172 = vmatprep.subr.bf16.mxu0 0
    %6173 = vmatpush1.bf16.xpose.msra.mxu0 0
    %6174 = vmatprep.subr.bf16.mxu0 0
    %6175 = vmatpush1.bf16.xpose.msra.mxu0 0
    %6176 = vmatprep.subr.bf16.mxu0 0
    %6177 = vmatpush1.bf16.xpose.msra.mxu0 0
    %6178 = vmatprep.subr.bf16.mxu0 0
    %6179 = vmatpush1.bf16.xpose.msra.mxu0 0
    %6180 = vmatprep.mubr.bf16.mxu0 0
    %6181 = vmatmul.mubr.bf16.gmra.mrb[0].mxu0 %v6143
    %v6182 = vpop.f32.mrb[0].mxu0
    %v6183 = vadd.f32 0.0, %v6182
    %v6184 = vpop.f32.mrb[0].mxu0
    %v6185 = vpop.f32.mrb[0].mxu0
    %v6186 = vadd.f32 0.0, %v6185
    %v6187 = vpop.f32.mrb[0].mxu0
    %6188 = vdwg.mxu0
    %6190 = vrot.lane.b32.xlu0 %v5437, 124
    %v6191 = vpop.permute.xlu0 %6190
    %v6193 = vsel %vm5441, %v5437, 0
    %v6196 = vsel %vm5441, %v6191, 0
    %6198 = vmatprep.subr.bf16.mxu0 0
    %6199 = vmatpush1.bf16.xpose.msra.mxu0 %v6196
    %6200 = vmatprep.subr.bf16.mxu0 0
    %6201 = vmatpush1.bf16.xpose.msra.mxu0 0
    %6202 = vmatprep.subr.bf16.mxu0 0
    %6203 = vmatpush1.bf16.xpose.msra.mxu0 0
    %6204 = vmatprep.subr.bf16.mxu0 0
    %6205 = vmatpush1.bf16.xpose.msra.mxu0 0
    %6206 = vmatprep.subr.bf16.mxu0 0
    %6207 = vmatpush1.bf16.xpose.msra.mxu0 0
    %6208 = vmatprep.subr.bf16.mxu0 0
    %6209 = vmatpush1.bf16.xpose.msra.mxu0 0
    %6210 = vmatprep.subr.bf16.mxu0 0
    %6211 = vmatpush1.bf16.xpose.msra.mxu0 0
    %6212 = vmatprep.subr.bf16.mxu0 0
    %6213 = vmatpush1.bf16.xpose.msra.mxu0 0
    %6214 = vmatprep.subr.bf16.mxu0 0
    %6215 = vmatpush1.bf16.xpose.msra.mxu0 0
    %6216 = vmatprep.subr.bf16.mxu0 0
    %6217 = vmatpush1.bf16.xpose.msra.mxu0 0
    %6218 = vmatprep.subr.bf16.mxu0 0
    %6219 = vmatpush1.bf16.xpose.msra.mxu0 0
    %6220 = vmatprep.subr.bf16.mxu0 0
    %6221 = vmatpush1.bf16.xpose.msra.mxu0 0
    %6222 = vmatprep.subr.bf16.mxu0 0
    %6223 = vmatpush1.bf16.xpose.msra.mxu0 0
    %6224 = vmatprep.subr.bf16.mxu0 0
    %6225 = vmatpush1.bf16.xpose.msra.mxu0 0
    %6226 = vmatprep.subr.bf16.mxu0 0
    %6227 = vmatpush1.bf16.xpose.msra.mxu0 0
    %6228 = vmatprep.subr.bf16.mxu0 0
    %6229 = vmatpush1.bf16.xpose.msra.mxu0 0
    %6230 = vmatprep.mubr.bf16.mxu0 0
    %6231 = vmatmul.mubr.bf16.gmra.mrb[0].mxu0 %v6193
    %v6232 = vpop.f32.mrb[0].mxu0
    %v6233 = vadd.f32 0.0, %v6232
    %v6234 = vpop.f32.mrb[0].mxu0
    %v6235 = vpop.f32.mrb[0].mxu0
    %v6236 = vadd.f32 0.0, %v6235
    %v6237 = vpop.f32.mrb[0].mxu0
    %6238 = vdwg.mxu0
    %vm6239 = vcmask 130048
    %v6240 = vsel %vm6239, %v5483, -inf
    %6241 = vmax.xlane.f32.xlu0 %v6240
    %v6242 = vpop.xlane.xlu0 %6241
    %v6243 = vsel %vm6239, %v5486, -inf
    %6244 = vmax.xlane.f32.xlu0 %v6243
    %v6245 = vpop.xlane.xlu0 %6244
    %v6246 = vsel %vm6239, %v5533, -inf
    %6247 = vmax.xlane.f32.xlu0 %v6246
    %v6248 = vpop.xlane.xlu0 %6247
    %v6249 = vsel %vm6239, %v5536, -inf
    %6250 = vmax.xlane.f32.xlu0 %v6249
    %v6251 = vpop.xlane.xlu0 %6250
    %v6252 = vsel %vm6239, %v5583, -inf
    %6253 = vmax.xlane.f32.xlu0 %v6252
    %v6254 = vpop.xlane.xlu0 %6253
    %v6255 = vsel %vm6239, %v5586, -inf
    %6256 = vmax.xlane.f32.xlu0 %v6255
    %v6257 = vpop.xlane.xlu0 %6256
    %v6258 = vsel %vm6239, %v5633, -inf
    %6259 = vmax.xlane.f32.xlu0 %v6258
    %v6260 = vpop.xlane.xlu0 %6259
    %v6261 = vsel %vm6239, %v5636, -inf
    %6262 = vmax.xlane.f32.xlu0 %v6261
    %v6263 = vpop.xlane.xlu0 %6262
    %v6264 = vsel %vm6239, %v5683, -inf
    %6265 = vmax.xlane.f32.xlu0 %v6264
    %v6266 = vpop.xlane.xlu0 %6265
    %v6267 = vsel %vm6239, %v5686, -inf
    %6268 = vmax.xlane.f32.xlu0 %v6267
    %v6269 = vpop.xlane.xlu0 %6268
    %v6270 = vsel %vm6239, %v5733, -inf
    %6271 = vmax.xlane.f32.xlu0 %v6270
    %v6272 = vpop.xlane.xlu0 %6271
    %v6273 = vsel %vm6239, %v5736, -inf
    %6274 = vmax.xlane.f32.xlu0 %v6273
    %v6275 = vpop.xlane.xlu0 %6274
    %v6276 = vsel %vm6239, %v5783, -inf
    %6277 = vmax.xlane.f32.xlu0 %v6276
    %v6278 = vpop.xlane.xlu0 %6277
    %v6279 = vsel %vm6239, %v5786, -inf
    %6280 = vmax.xlane.f32.xlu0 %v6279
    %v6281 = vpop.xlane.xlu0 %6280
    %v6282 = vsel %vm6239, %v5833, -inf
    %6283 = vmax.xlane.f32.xlu0 %v6282
    %v6284 = vpop.xlane.xlu0 %6283
    %v6285 = vsel %vm6239, %v5836, -inf
    %6286 = vmax.xlane.f32.xlu0 %v6285
    %v6287 = vpop.xlane.xlu0 %6286
    %v6288 = vsel %vm6239, %v5883, -inf
    %6289 = vmax.xlane.f32.xlu0 %v6288
    %v6290 = vpop.xlane.xlu0 %6289
    %v6291 = vsel %vm6239, %v5886, -inf
    %6292 = vmax.xlane.f32.xlu0 %v6291
    %v6293 = vpop.xlane.xlu0 %6292
    %v6294 = vsel %vm6239, %v5933, -inf
    %6295 = vmax.xlane.f32.xlu0 %v6294
    %v6296 = vpop.xlane.xlu0 %6295
    %v6297 = vsel %vm6239, %v5936, -inf
    %6298 = vmax.xlane.f32.xlu0 %v6297
    %v6299 = vpop.xlane.xlu0 %6298
    %v6300 = vsel %vm6239, %v5983, -inf
    %6301 = vmax.xlane.f32.xlu0 %v6300
    %v6302 = vpop.xlane.xlu0 %6301
    %v6303 = vsel %vm6239, %v5986, -inf
    %6304 = vmax.xlane.f32.xlu0 %v6303
    %v6305 = vpop.xlane.xlu0 %6304
    %v6306 = vsel %vm6239, %v6033, -inf
    %6307 = vmax.xlane.f32.xlu0 %v6306
    %v6308 = vpop.xlane.xlu0 %6307
    %v6309 = vsel %vm6239, %v6036, -inf
    %6310 = vmax.xlane.f32.xlu0 %v6309
    %v6311 = vpop.xlane.xlu0 %6310
    %v6312 = vsel %vm6239, %v6083, -inf
    %6313 = vmax.xlane.f32.xlu0 %v6312
    %v6314 = vpop.xlane.xlu0 %6313
    %v6315 = vsel %vm6239, %v6086, -inf
    %6316 = vmax.xlane.f32.xlu0 %v6315
    %v6317 = vpop.xlane.xlu0 %6316
    %v6318 = vsel %vm6239, %v6133, -inf
    %6319 = vmax.xlane.f32.xlu0 %v6318
    %v6320 = vpop.xlane.xlu0 %6319
    %v6321 = vsel %vm6239, %v6136, -inf
    %6322 = vmax.xlane.f32.xlu0 %v6321
    %v6323 = vpop.xlane.xlu0 %6322
    %v6324 = vsel %vm6239, %v6183, -inf
    %6325 = vmax.xlane.f32.xlu0 %v6324
    %v6326 = vpop.xlane.xlu0 %6325
    %v6327 = vsel %vm6239, %v6186, -inf
    %6328 = vmax.xlane.f32.xlu0 %v6327
    %v6329 = vpop.xlane.xlu0 %6328
    %v6330 = vsel %vm6239, %v6233, -inf
    %6331 = vmax.xlane.f32.xlu0 %v6330
    %v6332 = vpop.xlane.xlu0 %6331
    %v6333 = vsel %vm6239, %v6236, -inf
    %6334 = vmax.xlane.f32.xlu0 %v6333
    %v6335 = vpop.xlane.xlu0 %6334
    %v6336 = vsub.f32 %v5483, %v6242
    %v6337 = vsub.f32 %v5486, %v6245
    %v6338 = vsub.f32 %v5533, %v6248
    %v6339 = vsub.f32 %v5536, %v6251
    %v6340 = vsub.f32 %v5583, %v6254
    %v6341 = vsub.f32 %v5586, %v6257
    %v6342 = vsub.f32 %v5633, %v6260
    %v6343 = vsub.f32 %v5636, %v6263
    %v6344 = vsub.f32 %v5683, %v6266
    %v6345 = vsub.f32 %v5686, %v6269
    %v6346 = vsub.f32 %v5733, %v6272
    %v6347 = vsub.f32 %v5736, %v6275
    %v6348 = vsub.f32 %v5783, %v6278
    %v6349 = vsub.f32 %v5786, %v6281
    %v6350 = vsub.f32 %v5833, %v6284
    %v6351 = vsub.f32 %v5836, %v6287
    %v6352 = vsub.f32 %v5883, %v6290
    %v6353 = vsub.f32 %v5886, %v6293
    %v6354 = vsub.f32 %v5933, %v6296
    %v6355 = vsub.f32 %v5936, %v6299
    %v6356 = vsub.f32 %v5983, %v6302
    %v6357 = vsub.f32 %v5986, %v6305
    %v6358 = vsub.f32 %v6033, %v6308
    %v6359 = vsub.f32 %v6036, %v6311
    %v6360 = vsub.f32 %v6083, %v6314
    %v6361 = vsub.f32 %v6086, %v6317
    %v6362 = vsub.f32 %v6133, %v6320
    %v6363 = vsub.f32 %v6136, %v6323
    %v6364 = vsub.f32 %v6183, %v6326
    %v6365 = vsub.f32 %v6186, %v6329
    %v6366 = vsub.f32 %v6233, %v6332
    %v6367 = vsub.f32 %v6236, %v6335
    %v6368 = vmul.f32 %v6336, 1.442695
    %v6369 = vpow.pop %v6368
    %v6370 = vmul.f32 %v6337, 1.442695
    %v6371 = vpow.pop %v6370
    %v6372 = vmul.f32 %v6338, 1.442695
    %v6373 = vpow.pop %v6372
    %v6374 = vmul.f32 %v6339, 1.442695
    %v6375 = vpow.pop %v6374
    %v6376 = vmul.f32 %v6340, 1.442695
    %v6377 = vpow.pop %v6376
    %v6378 = vmul.f32 %v6341, 1.442695
    %v6379 = vpow.pop %v6378
    %v6380 = vmul.f32 %v6342, 1.442695
    %v6381 = vpow.pop %v6380
    %v6382 = vmul.f32 %v6343, 1.442695
    %v6383 = vpow.pop %v6382
    %v6384 = vmul.f32 %v6344, 1.442695
    %v6385 = vpow.pop %v6384
    %v6386 = vmul.f32 %v6345, 1.442695
    %v6387 = vpow.pop %v6386
    %v6388 = vmul.f32 %v6346, 1.442695
    %v6389 = vpow.pop %v6388
    %v6390 = vmul.f32 %v6347, 1.442695
    %v6391 = vpow.pop %v6390
    %v6392 = vmul.f32 %v6348, 1.442695
    %v6393 = vpow.pop %v6392
    %v6394 = vmul.f32 %v6349, 1.442695
    %v6395 = vpow.pop %v6394
    %v6396 = vmul.f32 %v6350, 1.442695
    %v6397 = vpow.pop %v6396
    %v6398 = vmul.f32 %v6351, 1.442695
    %v6399 = vpow.pop %v6398
    %v6400 = vmul.f32 %v6352, 1.442695
    %v6401 = vpow.pop %v6400
    %v6402 = vmul.f32 %v6353, 1.442695
    %v6403 = vpow.pop %v6402
    %v6404 = vmul.f32 %v6354, 1.442695
    %v6405 = vpow.pop %v6404
    %v6406 = vmul.f32 %v6355, 1.442695
    %v6407 = vpow.pop %v6406
    %v6408 = vmul.f32 %v6356, 1.442695
    %v6409 = vpow.pop %v6408
    %v6410 = vmul.f32 %v6357, 1.442695
    %v6411 = vpow.pop %v6410
    %v6412 = vmul.f32 %v6358, 1.442695
    %v6413 = vpow.pop %v6412
    %v6414 = vmul.f32 %v6359, 1.442695
    %v6415 = vpow.pop %v6414
    %v6416 = vmul.f32 %v6360, 1.442695
    %v6417 = vpow.pop %v6416
    %v6418 = vmul.f32 %v6361, 1.442695
    %v6419 = vpow.pop %v6418
    %v6420 = vmul.f32 %v6362, 1.442695
    %v6421 = vpow.pop %v6420
    %v6422 = vmul.f32 %v6363, 1.442695
    %v6423 = vpow.pop %v6422
    %v6424 = vmul.f32 %v6364, 1.442695
    %v6425 = vpow.pop %v6424
    %v6426 = vmul.f32 %v6365, 1.442695
    %v6427 = vpow.pop %v6426
    %v6428 = vmul.f32 %v6366, 1.442695
    %v6429 = vpow.pop %v6428
    %v6430 = vmul.f32 %v6367, 1.442695
    %v6431 = vpow.pop %v6430
    %v6432 = vsel %vm6239, %v6369, 0.0
    %6433 = vadd.xlane.f32.xlu0 %v6432
    %v6434 = vpop.xlane.xlu0 %6433
    %v6435 = vsel %vm6239, %v6371, 0.0
    %6436 = vadd.xlane.f32.xlu0 %v6435
    %v6437 = vpop.xlane.xlu0 %6436
    %v6438 = vsel %vm6239, %v6373, 0.0
    %6439 = vadd.xlane.f32.xlu0 %v6438
    %v6440 = vpop.xlane.xlu0 %6439
    %v6441 = vsel %vm6239, %v6375, 0.0
    %6442 = vadd.xlane.f32.xlu0 %v6441
    %v6443 = vpop.xlane.xlu0 %6442
    %v6444 = vsel %vm6239, %v6377, 0.0
    %6445 = vadd.xlane.f32.xlu0 %v6444
    %v6446 = vpop.xlane.xlu0 %6445
    %v6447 = vsel %vm6239, %v6379, 0.0
    %6448 = vadd.xlane.f32.xlu0 %v6447
    %v6449 = vpop.xlane.xlu0 %6448
    %v6450 = vsel %vm6239, %v6381, 0.0
    %6451 = vadd.xlane.f32.xlu0 %v6450
    %v6452 = vpop.xlane.xlu0 %6451
    %v6453 = vsel %vm6239, %v6383, 0.0
    %6454 = vadd.xlane.f32.xlu0 %v6453
    %v6455 = vpop.xlane.xlu0 %6454
    %v6456 = vsel %vm6239, %v6385, 0.0
    %6457 = vadd.xlane.f32.xlu0 %v6456
    %v6458 = vpop.xlane.xlu0 %6457
    %v6459 = vsel %vm6239, %v6387, 0.0
    %6460 = vadd.xlane.f32.xlu0 %v6459
    %v6461 = vpop.xlane.xlu0 %6460
    %v6462 = vsel %vm6239, %v6389, 0.0
    %6463 = vadd.xlane.f32.xlu0 %v6462
    %v6464 = vpop.xlane.xlu0 %6463
    %v6465 = vsel %vm6239, %v6391, 0.0
    %6466 = vadd.xlane.f32.xlu0 %v6465
    %v6467 = vpop.xlane.xlu0 %6466
    %v6468 = vsel %vm6239, %v6393, 0.0
    %6469 = vadd.xlane.f32.xlu0 %v6468
    %v6470 = vpop.xlane.xlu0 %6469
    %v6471 = vsel %vm6239, %v6395, 0.0
    %6472 = vadd.xlane.f32.xlu0 %v6471
    %v6473 = vpop.xlane.xlu0 %6472
    %v6474 = vsel %vm6239, %v6397, 0.0
    %6475 = vadd.xlane.f32.xlu0 %v6474
    %v6476 = vpop.xlane.xlu0 %6475
    %v6477 = vsel %vm6239, %v6399, 0.0
    %6478 = vadd.xlane.f32.xlu0 %v6477
    %v6479 = vpop.xlane.xlu0 %6478
    %v6480 = vsel %vm6239, %v6401, 0.0
    %6481 = vadd.xlane.f32.xlu0 %v6480
    %v6482 = vpop.xlane.xlu0 %6481
    %v6483 = vsel %vm6239, %v6403, 0.0
    %6484 = vadd.xlane.f32.xlu0 %v6483
    %v6485 = vpop.xlane.xlu0 %6484
    %v6486 = vsel %vm6239, %v6405, 0.0
    %6487 = vadd.xlane.f32.xlu0 %v6486
    %v6488 = vpop.xlane.xlu0 %6487
    %v6489 = vsel %vm6239, %v6407, 0.0
    %6490 = vadd.xlane.f32.xlu0 %v6489
    %v6491 = vpop.xlane.xlu0 %6490
    %v6492 = vsel %vm6239, %v6409, 0.0
    %6493 = vadd.xlane.f32.xlu0 %v6492
    %v6494 = vpop.xlane.xlu0 %6493
    %v6495 = vsel %vm6239, %v6411, 0.0
    %6496 = vadd.xlane.f32.xlu0 %v6495
    %v6497 = vpop.xlane.xlu0 %6496
    %v6498 = vsel %vm6239, %v6413, 0.0
    %6499 = vadd.xlane.f32.xlu0 %v6498
    %v6500 = vpop.xlane.xlu0 %6499
    %v6501 = vsel %vm6239, %v6415, 0.0
    %6502 = vadd.xlane.f32.xlu0 %v6501
    %v6503 = vpop.xlane.xlu0 %6502
    %v6504 = vsel %vm6239, %v6417, 0.0
    %6505 = vadd.xlane.f32.xlu0 %v6504
    %v6506 = vpop.xlane.xlu0 %6505
    %v6507 = vsel %vm6239, %v6419, 0.0
    %6508 = vadd.xlane.f32.xlu0 %v6507
    %v6509 = vpop.xlane.xlu0 %6508
    %v6510 = vsel %vm6239, %v6421, 0.0
    %6511 = vadd.xlane.f32.xlu0 %v6510
    %v6512 = vpop.xlane.xlu0 %6511
    %v6513 = vsel %vm6239, %v6423, 0.0
    %6514 = vadd.xlane.f32.xlu0 %v6513
    %v6515 = vpop.xlane.xlu0 %6514
    %v6516 = vsel %vm6239, %v6425, 0.0
    %6517 = vadd.xlane.f32.xlu0 %v6516
    %v6518 = vpop.xlane.xlu0 %6517
    %v6519 = vsel %vm6239, %v6427, 0.0
    %6520 = vadd.xlane.f32.xlu0 %v6519
    %v6521 = vpop.xlane.xlu0 %6520
    %v6522 = vsel %vm6239, %v6429, 0.0
    %6523 = vadd.xlane.f32.xlu0 %v6522
    %v6524 = vpop.xlane.xlu0 %6523
    %v6525 = vsel %vm6239, %v6431, 0.0
    %6526 = vadd.xlane.f32.xlu0 %v6525
    %v6527 = vpop.xlane.xlu0 %6526
    %v6528 = vrcp.pop %v6434
    %v6529 = vrcp.pop %v6437
    %v6530 = vrcp.pop %v6440
    %v6531 = vrcp.pop %v6443
    %v6532 = vrcp.pop %v6446
    %v6533 = vrcp.pop %v6449
    %v6534 = vrcp.pop %v6452
    %v6535 = vrcp.pop %v6455
    %v6536 = vrcp.pop %v6458
    %v6537 = vrcp.pop %v6461
    %v6538 = vrcp.pop %v6464
    %v6539 = vrcp.pop %v6467
    %v6540 = vrcp.pop %v6470
    %v6541 = vrcp.pop %v6473
    %v6542 = vrcp.pop %v6476
    %v6543 = vrcp.pop %v6479
    %v6544 = vrcp.pop %v6482
    %v6545 = vrcp.pop %v6485
    %v6546 = vrcp.pop %v6488
    %v6547 = vrcp.pop %v6491
    %v6548 = vrcp.pop %v6494
    %v6549 = vrcp.pop %v6497
    %v6550 = vrcp.pop %v6500
    %v6551 = vrcp.pop %v6503
    %v6552 = vrcp.pop %v6506
    %v6553 = vrcp.pop %v6509
    %v6554 = vrcp.pop %v6512
    %v6555 = vrcp.pop %v6515
    %v6556 = vrcp.pop %v6518
    %v6557 = vrcp.pop %v6521
    %v6558 = vrcp.pop %v6524
    %v6559 = vrcp.pop %v6527
    %v6560 = vmul.f32 %v6369, %v6528
    %v6561 = vmul.f32 %v6371, %v6529
    %v6562 = vmul.f32 %v6373, %v6530
    %v6563 = vmul.f32 %v6375, %v6531
    %v6564 = vmul.f32 %v6377, %v6532
    %v6565 = vmul.f32 %v6379, %v6533
    %v6566 = vmul.f32 %v6381, %v6534
    %v6567 = vmul.f32 %v6383, %v6535
    %v6568 = vmul.f32 %v6385, %v6536
    %v6569 = vmul.f32 %v6387, %v6537
    %v6570 = vmul.f32 %v6389, %v6538
    %v6571 = vmul.f32 %v6391, %v6539
    %v6572 = vmul.f32 %v6393, %v6540
    %v6573 = vmul.f32 %v6395, %v6541
    %v6574 = vmul.f32 %v6397, %v6542
    %v6575 = vmul.f32 %v6399, %v6543
    %v6576 = vmul.f32 %v6401, %v6544
    %v6577 = vmul.f32 %v6403, %v6545
    %v6578 = vmul.f32 %v6405, %v6546
    %v6579 = vmul.f32 %v6407, %v6547
    %v6580 = vmul.f32 %v6409, %v6548
    %v6581 = vmul.f32 %v6411, %v6549
    %v6582 = vmul.f32 %v6413, %v6550
    %v6583 = vmul.f32 %v6415, %v6551
    %v6584 = vmul.f32 %v6417, %v6552
    %v6585 = vmul.f32 %v6419, %v6553
    %v6586 = vmul.f32 %v6421, %v6554
    %v6587 = vmul.f32 %v6423, %v6555
    %v6588 = vmul.f32 %v6425, %v6556
    %v6589 = vmul.f32 %v6427, %v6557
    %v6590 = vmul.f32 %v6429, %v6558
    %v6591 = vmul.f32 %v6431, %v6559
    %v6592 = vpack.c.bf16 %v6561, %v6560
    %v6593 = vpack.c.bf16 %v6563, %v6562
    %v6594 = vpack.c.bf16 %v6565, %v6564
    %v6595 = vpack.c.bf16 %v6567, %v6566
    %v6596 = vpack.c.bf16 %v6569, %v6568
    %v6597 = vpack.c.bf16 %v6571, %v6570
    %v6598 = vpack.c.bf16 %v6573, %v6572
    %v6599 = vpack.c.bf16 %v6575, %v6574
    %v6600 = vpack.c.bf16 %v6577, %v6576
    %v6601 = vpack.c.bf16 %v6579, %v6578
    %v6602 = vpack.c.bf16 %v6581, %v6580
    %v6603 = vpack.c.bf16 %v6583, %v6582
    %v6604 = vpack.c.bf16 %v6585, %v6584
    %v6605 = vpack.c.bf16 %v6587, %v6586
    %v6606 = vpack.c.bf16 %v6589, %v6588
    %v6607 = vpack.c.bf16 %v6591, %v6590
    %6608 = vrot.lane.b32.xlu0 %v5422, 120
    %v6609 = vpop.permute.xlu0 %6608
    %v6612 = vsel %vm6239, %v6592, 0
    %6614 = vmatprep.subr.bf16.mxu0 0
    %6615 = vmatpush1.bf16.msra.mxu0 %v6609
    %6616 = vmatprep.subr.bf16.mxu0 0
    %6617 = vmatpush1.bf16.msra.mxu0 0
    %6618 = vmatprep.subr.bf16.mxu0 0
    %6619 = vmatpush1.bf16.msra.mxu0 0
    %6620 = vmatprep.subr.bf16.mxu0 0
    %6621 = vmatpush1.bf16.msra.mxu0 0
    %6622 = vmatprep.subr.bf16.mxu0 0
    %6623 = vmatpush1.bf16.msra.mxu0 0
    %6624 = vmatprep.subr.bf16.mxu0 0
    %6625 = vmatpush1.bf16.msra.mxu0 0
    %6626 = vmatprep.subr.bf16.mxu0 0
    %6627 = vmatpush1.bf16.msra.mxu0 0
    %6628 = vmatprep.subr.bf16.mxu0 0
    %6629 = vmatpush1.bf16.msra.mxu0 0
    %6630 = vmatprep.subr.bf16.mxu0 0
    %6631 = vmatpush1.bf16.msra.mxu0 0
    %6632 = vmatprep.subr.bf16.mxu0 0
    %6633 = vmatpush1.bf16.msra.mxu0 0
    %6634 = vmatprep.subr.bf16.mxu0 0
    %6635 = vmatpush1.bf16.msra.mxu0 0
    %6636 = vmatprep.subr.bf16.mxu0 0
    %6637 = vmatpush1.bf16.msra.mxu0 0
    %6638 = vmatprep.subr.bf16.mxu0 0
    %6639 = vmatpush1.bf16.msra.mxu0 0
    %6640 = vmatprep.subr.bf16.mxu0 0
    %6641 = vmatpush1.bf16.msra.mxu0 0
    %6642 = vmatprep.subr.bf16.mxu0 0
    %6643 = vmatpush1.bf16.msra.mxu0 0
    %6644 = vmatprep.subr.bf16.mxu0 0
    %6645 = vmatpush1.bf16.msra.mxu0 0
    %6646 = vmatprep.mubr.bf16.mxu0 0
    %6647 = vmatmul.mubr.bf16.gmra.mrb[0].mxu0 %v6612
    %v6648 = vpop.f32.mrb[0].mxu0
    %v6649 = vadd.f32 0.0, %v6648
    %v6650 = vpop.f32.mrb[0].mxu0
    %v6651 = vpop.f32.mrb[0].mxu0
    %v6652 = vadd.f32 0.0, %v6651
    %v6653 = vpop.f32.mrb[0].mxu0
    %6654 = vdwg.mxu0
    %6655 = vrot.lane.b32.xlu0 %v5423, 120
    %v6656 = vpop.permute.xlu0 %6655
    %v6659 = vsel %vm6239, %v6593, 0
    %6661 = vmatprep.subr.bf16.mxu0 0
    %6662 = vmatpush1.bf16.msra.mxu0 %v6656
    %6663 = vmatprep.subr.bf16.mxu0 0
    %6664 = vmatpush1.bf16.msra.mxu0 0
    %6665 = vmatprep.subr.bf16.mxu0 0
    %6666 = vmatpush1.bf16.msra.mxu0 0
    %6667 = vmatprep.subr.bf16.mxu0 0
    %6668 = vmatpush1.bf16.msra.mxu0 0
    %6669 = vmatprep.subr.bf16.mxu0 0
    %6670 = vmatpush1.bf16.msra.mxu0 0
    %6671 = vmatprep.subr.bf16.mxu0 0
    %6672 = vmatpush1.bf16.msra.mxu0 0
    %6673 = vmatprep.subr.bf16.mxu0 0
    %6674 = vmatpush1.bf16.msra.mxu0 0
    %6675 = vmatprep.subr.bf16.mxu0 0
    %6676 = vmatpush1.bf16.msra.mxu0 0
    %6677 = vmatprep.subr.bf16.mxu0 0
    %6678 = vmatpush1.bf16.msra.mxu0 0
    %6679 = vmatprep.subr.bf16.mxu0 0
    %6680 = vmatpush1.bf16.msra.mxu0 0
    %6681 = vmatprep.subr.bf16.mxu0 0
    %6682 = vmatpush1.bf16.msra.mxu0 0
    %6683 = vmatprep.subr.bf16.mxu0 0
    %6684 = vmatpush1.bf16.msra.mxu0 0
    %6685 = vmatprep.subr.bf16.mxu0 0
    %6686 = vmatpush1.bf16.msra.mxu0 0
    %6687 = vmatprep.subr.bf16.mxu0 0
    %6688 = vmatpush1.bf16.msra.mxu0 0
    %6689 = vmatprep.subr.bf16.mxu0 0
    %6690 = vmatpush1.bf16.msra.mxu0 0
    %6691 = vmatprep.subr.bf16.mxu0 0
    %6692 = vmatpush1.bf16.msra.mxu0 0
    %6693 = vmatprep.mubr.bf16.mxu0 0
    %6694 = vmatmul.mubr.bf16.gmra.mrb[0].mxu0 %v6659
    %v6695 = vpop.f32.mrb[0].mxu0
    %v6696 = vadd.f32 0.0, %v6695
    %v6697 = vpop.f32.mrb[0].mxu0
    %v6698 = vpop.f32.mrb[0].mxu0
    %v6699 = vadd.f32 0.0, %v6698
    %v6700 = vpop.f32.mrb[0].mxu0
    %6701 = vdwg.mxu0
    %6702 = vrot.lane.b32.xlu0 %v5424, 120
    %v6703 = vpop.permute.xlu0 %6702
    %v6706 = vsel %vm6239, %v6594, 0
    %6708 = vmatprep.subr.bf16.mxu0 0
    %6709 = vmatpush1.bf16.msra.mxu0 %v6703
    %6710 = vmatprep.subr.bf16.mxu0 0
    %6711 = vmatpush1.bf16.msra.mxu0 0
    %6712 = vmatprep.subr.bf16.mxu0 0
    %6713 = vmatpush1.bf16.msra.mxu0 0
    %6714 = vmatprep.subr.bf16.mxu0 0
    %6715 = vmatpush1.bf16.msra.mxu0 0
    %6716 = vmatprep.subr.bf16.mxu0 0
    %6717 = vmatpush1.bf16.msra.mxu0 0
    %6718 = vmatprep.subr.bf16.mxu0 0
    %6719 = vmatpush1.bf16.msra.mxu0 0
    %6720 = vmatprep.subr.bf16.mxu0 0
    %6721 = vmatpush1.bf16.msra.mxu0 0
    %6722 = vmatprep.subr.bf16.mxu0 0
    %6723 = vmatpush1.bf16.msra.mxu0 0
    %6724 = vmatprep.subr.bf16.mxu0 0
    %6725 = vmatpush1.bf16.msra.mxu0 0
    %6726 = vmatprep.subr.bf16.mxu0 0
    %6727 = vmatpush1.bf16.msra.mxu0 0
    %6728 = vmatprep.subr.bf16.mxu0 0
    %6729 = vmatpush1.bf16.msra.mxu0 0
    %6730 = vmatprep.subr.bf16.mxu0 0
    %6731 = vmatpush1.bf16.msra.mxu0 0
    %6732 = vmatprep.subr.bf16.mxu0 0
    %6733 = vmatpush1.bf16.msra.mxu0 0
    %6734 = vmatprep.subr.bf16.mxu0 0
    %6735 = vmatpush1.bf16.msra.mxu0 0
    %6736 = vmatprep.subr.bf16.mxu0 0
    %6737 = vmatpush1.bf16.msra.mxu0 0
    %6738 = vmatprep.subr.bf16.mxu0 0
    %6739 = vmatpush1.bf16.msra.mxu0 0
    %6740 = vmatprep.mubr.bf16.mxu0 0
    %6741 = vmatmul.mubr.bf16.gmra.mrb[0].mxu0 %v6706
    %v6742 = vpop.f32.mrb[0].mxu0
    %v6743 = vadd.f32 0.0, %v6742
    %v6744 = vpop.f32.mrb[0].mxu0
    %v6745 = vpop.f32.mrb[0].mxu0
    %v6746 = vadd.f32 0.0, %v6745
    %v6747 = vpop.f32.mrb[0].mxu0
    %6748 = vdwg.mxu0
    %6749 = vrot.lane.b32.xlu0 %v5425, 120
    %v6750 = vpop.permute.xlu0 %6749
    %v6753 = vsel %vm6239, %v6595, 0
    %6755 = vmatprep.subr.bf16.mxu0 0
    %6756 = vmatpush1.bf16.msra.mxu0 %v6750
    %6757 = vmatprep.subr.bf16.mxu0 0
    %6758 = vmatpush1.bf16.msra.mxu0 0
    %6759 = vmatprep.subr.bf16.mxu0 0
    %6760 = vmatpush1.bf16.msra.mxu0 0
    %6761 = vmatprep.subr.bf16.mxu0 0
    %6762 = vmatpush1.bf16.msra.mxu0 0
    %6763 = vmatprep.subr.bf16.mxu0 0
    %6764 = vmatpush1.bf16.msra.mxu0 0
    %6765 = vmatprep.subr.bf16.mxu0 0
    %6766 = vmatpush1.bf16.msra.mxu0 0
    %6767 = vmatprep.subr.bf16.mxu0 0
    %6768 = vmatpush1.bf16.msra.mxu0 0
    %6769 = vmatprep.subr.bf16.mxu0 0
    %6770 = vmatpush1.bf16.msra.mxu0 0
    %6771 = vmatprep.subr.bf16.mxu0 0
    %6772 = vmatpush1.bf16.msra.mxu0 0
    %6773 = vmatprep.subr.bf16.mxu0 0
    %6774 = vmatpush1.bf16.msra.mxu0 0
    %6775 = vmatprep.subr.bf16.mxu0 0
    %6776 = vmatpush1.bf16.msra.mxu0 0
    %6777 = vmatprep.subr.bf16.mxu0 0
    %6778 = vmatpush1.bf16.msra.mxu0 0
    %6779 = vmatprep.subr.bf16.mxu0 0
    %6780 = vmatpush1.bf16.msra.mxu0 0
    %6781 = vmatprep.subr.bf16.mxu0 0
    %6782 = vmatpush1.bf16.msra.mxu0 0
    %6783 = vmatprep.subr.bf16.mxu0 0
    %6784 = vmatpush1.bf16.msra.mxu0 0
    %6785 = vmatprep.subr.bf16.mxu0 0
    %6786 = vmatpush1.bf16.msra.mxu0 0
    %6787 = vmatprep.mubr.bf16.mxu0 0
    %6788 = vmatmul.mubr.bf16.gmra.mrb[0].mxu0 %v6753
    %v6789 = vpop.f32.mrb[0].mxu0
    %v6790 = vadd.f32 0.0, %v6789
    %v6791 = vpop.f32.mrb[0].mxu0
    %v6792 = vpop.f32.mrb[0].mxu0
    %v6793 = vadd.f32 0.0, %v6792
    %v6794 = vpop.f32.mrb[0].mxu0
    %6795 = vdwg.mxu0
    %6796 = vrot.lane.b32.xlu0 %v5426, 120
    %v6797 = vpop.permute.xlu0 %6796
    %v6800 = vsel %vm6239, %v6596, 0
    %6802 = vmatprep.subr.bf16.mxu0 0
    %6803 = vmatpush1.bf16.msra.mxu0 %v6797
    %6804 = vmatprep.subr.bf16.mxu0 0
    %6805 = vmatpush1.bf16.msra.mxu0 0
    %6806 = vmatprep.subr.bf16.mxu0 0
    %6807 = vmatpush1.bf16.msra.mxu0 0
    %6808 = vmatprep.subr.bf16.mxu0 0
    %6809 = vmatpush1.bf16.msra.mxu0 0
    %6810 = vmatprep.subr.bf16.mxu0 0
    %6811 = vmatpush1.bf16.msra.mxu0 0
    %6812 = vmatprep.subr.bf16.mxu0 0
    %6813 = vmatpush1.bf16.msra.mxu0 0
    %6814 = vmatprep.subr.bf16.mxu0 0
    %6815 = vmatpush1.bf16.msra.mxu0 0
    %6816 = vmatprep.subr.bf16.mxu0 0
    %6817 = vmatpush1.bf16.msra.mxu0 0
    %6818 = vmatprep.subr.bf16.mxu0 0
    %6819 = vmatpush1.bf16.msra.mxu0 0
    %6820 = vmatprep.subr.bf16.mxu0 0
    %6821 = vmatpush1.bf16.msra.mxu0 0
    %6822 = vmatprep.subr.bf16.mxu0 0
    %6823 = vmatpush1.bf16.msra.mxu0 0
    %6824 = vmatprep.subr.bf16.mxu0 0
    %6825 = vmatpush1.bf16.msra.mxu0 0
    %6826 = vmatprep.subr.bf16.mxu0 0
    %6827 = vmatpush1.bf16.msra.mxu0 0
    %6828 = vmatprep.subr.bf16.mxu0 0
    %6829 = vmatpush1.bf16.msra.mxu0 0
    %6830 = vmatprep.subr.bf16.mxu0 0
    %6831 = vmatpush1.bf16.msra.mxu0 0
    %6832 = vmatprep.subr.bf16.mxu0 0
    %6833 = vmatpush1.bf16.msra.mxu0 0
    %6834 = vmatprep.mubr.bf16.mxu0 0
    %6835 = vmatmul.mubr.bf16.gmra.mrb[0].mxu0 %v6800
    %v6836 = vpop.f32.mrb[0].mxu0
    %v6837 = vadd.f32 0.0, %v6836
    %v6838 = vpop.f32.mrb[0].mxu0
    %v6839 = vpop.f32.mrb[0].mxu0
    %v6840 = vadd.f32 0.0, %v6839
    %v6841 = vpop.f32.mrb[0].mxu0
    %6842 = vdwg.mxu0
    %6843 = vrot.lane.b32.xlu0 %v5427, 120
    %v6844 = vpop.permute.xlu0 %6843
    %v6847 = vsel %vm6239, %v6597, 0
    %6849 = vmatprep.subr.bf16.mxu0 0
    %6850 = vmatpush1.bf16.msra.mxu0 %v6844
    %6851 = vmatprep.subr.bf16.mxu0 0
    %6852 = vmatpush1.bf16.msra.mxu0 0
    %6853 = vmatprep.subr.bf16.mxu0 0
    %6854 = vmatpush1.bf16.msra.mxu0 0
    %6855 = vmatprep.subr.bf16.mxu0 0
    %6856 = vmatpush1.bf16.msra.mxu0 0
    %6857 = vmatprep.subr.bf16.mxu0 0
    %6858 = vmatpush1.bf16.msra.mxu0 0
    %6859 = vmatprep.subr.bf16.mxu0 0
    %6860 = vmatpush1.bf16.msra.mxu0 0
    %6861 = vmatprep.subr.bf16.mxu0 0
    %6862 = vmatpush1.bf16.msra.mxu0 0
    %6863 = vmatprep.subr.bf16.mxu0 0
    %6864 = vmatpush1.bf16.msra.mxu0 0
    %6865 = vmatprep.subr.bf16.mxu0 0
    %6866 = vmatpush1.bf16.msra.mxu0 0
    %6867 = vmatprep.subr.bf16.mxu0 0
    %6868 = vmatpush1.bf16.msra.mxu0 0
    %6869 = vmatprep.subr.bf16.mxu0 0
    %6870 = vmatpush1.bf16.msra.mxu0 0
    %6871 = vmatprep.subr.bf16.mxu0 0
    %6872 = vmatpush1.bf16.msra.mxu0 0
    %6873 = vmatprep.subr.bf16.mxu0 0
    %6874 = vmatpush1.bf16.msra.mxu0 0
    %6875 = vmatprep.subr.bf16.mxu0 0
    %6876 = vmatpush1.bf16.msra.mxu0 0
    %6877 = vmatprep.subr.bf16.mxu0 0
    %6878 = vmatpush1.bf16.msra.mxu0 0
    %6879 = vmatprep.subr.bf16.mxu0 0
    %6880 = vmatpush1.bf16.msra.mxu0 0
    %6881 = vmatprep.mubr.bf16.mxu0 0
    %6882 = vmatmul.mubr.bf16.gmra.mrb[0].mxu0 %v6847
    %v6883 = vpop.f32.mrb[0].mxu0
    %v6884 = vadd.f32 0.0, %v6883
    %v6885 = vpop.f32.mrb[0].mxu0
    %v6886 = vpop.f32.mrb[0].mxu0
    %v6887 = vadd.f32 0.0, %v6886
    %v6888 = vpop.f32.mrb[0].mxu0
    %6889 = vdwg.mxu0
    %6890 = vrot.lane.b32.xlu0 %v5428, 120
    %v6891 = vpop.permute.xlu0 %6890
    %v6894 = vsel %vm6239, %v6598, 0
    %6896 = vmatprep.subr.bf16.mxu0 0
    %6897 = vmatpush1.bf16.msra.mxu0 %v6891
    %6898 = vmatprep.subr.bf16.mxu0 0
    %6899 = vmatpush1.bf16.msra.mxu0 0
    %6900 = vmatprep.subr.bf16.mxu0 0
    %6901 = vmatpush1.bf16.msra.mxu0 0
    %6902 = vmatprep.subr.bf16.mxu0 0
    %6903 = vmatpush1.bf16.msra.mxu0 0
    %6904 = vmatprep.subr.bf16.mxu0 0
    %6905 = vmatpush1.bf16.msra.mxu0 0
    %6906 = vmatprep.subr.bf16.mxu0 0
    %6907 = vmatpush1.bf16.msra.mxu0 0
    %6908 = vmatprep.subr.bf16.mxu0 0
    %6909 = vmatpush1.bf16.msra.mxu0 0
    %6910 = vmatprep.subr.bf16.mxu0 0
    %6911 = vmatpush1.bf16.msra.mxu0 0
    %6912 = vmatprep.subr.bf16.mxu0 0
    %6913 = vmatpush1.bf16.msra.mxu0 0
    %6914 = vmatprep.subr.bf16.mxu0 0
    %6915 = vmatpush1.bf16.msra.mxu0 0
    %6916 = vmatprep.subr.bf16.mxu0 0
    %6917 = vmatpush1.bf16.msra.mxu0 0
    %6918 = vmatprep.subr.bf16.mxu0 0
    %6919 = vmatpush1.bf16.msra.mxu0 0
    %6920 = vmatprep.subr.bf16.mxu0 0
    %6921 = vmatpush1.bf16.msra.mxu0 0
    %6922 = vmatprep.subr.bf16.mxu0 0
    %6923 = vmatpush1.bf16.msra.mxu0 0
    %6924 = vmatprep.subr.bf16.mxu0 0
    %6925 = vmatpush1.bf16.msra.mxu0 0
    %6926 = vmatprep.subr.bf16.mxu0 0
    %6927 = vmatpush1.bf16.msra.mxu0 0
    %6928 = vmatprep.mubr.bf16.mxu0 0
    %6929 = vmatmul.mubr.bf16.gmra.mrb[0].mxu0 %v6894
    %v6930 = vpop.f32.mrb[0].mxu0
    %v6931 = vadd.f32 0.0, %v6930
    %v6932 = vpop.f32.mrb[0].mxu0
    %v6933 = vpop.f32.mrb[0].mxu0
    %v6934 = vadd.f32 0.0, %v6933
    %v6935 = vpop.f32.mrb[0].mxu0
    %6936 = vdwg.mxu0
    %6937 = vrot.lane.b32.xlu0 %v5429, 120
    %v6938 = vpop.permute.xlu0 %6937
    %v6941 = vsel %vm6239, %v6599, 0
    %6943 = vmatprep.subr.bf16.mxu0 0
    %6944 = vmatpush1.bf16.msra.mxu0 %v6938
    %6945 = vmatprep.subr.bf16.mxu0 0
    %6946 = vmatpush1.bf16.msra.mxu0 0
    %6947 = vmatprep.subr.bf16.mxu0 0
    %6948 = vmatpush1.bf16.msra.mxu0 0
    %6949 = vmatprep.subr.bf16.mxu0 0
    %6950 = vmatpush1.bf16.msra.mxu0 0
    %6951 = vmatprep.subr.bf16.mxu0 0
    %6952 = vmatpush1.bf16.msra.mxu0 0
    %6953 = vmatprep.subr.bf16.mxu0 0
    %6954 = vmatpush1.bf16.msra.mxu0 0
    %6955 = vmatprep.subr.bf16.mxu0 0
    %6956 = vmatpush1.bf16.msra.mxu0 0
    %6957 = vmatprep.subr.bf16.mxu0 0
    %6958 = vmatpush1.bf16.msra.mxu0 0
    %6959 = vmatprep.subr.bf16.mxu0 0
    %6960 = vmatpush1.bf16.msra.mxu0 0
    %6961 = vmatprep.subr.bf16.mxu0 0
    %6962 = vmatpush1.bf16.msra.mxu0 0
    %6963 = vmatprep.subr.bf16.mxu0 0
    %6964 = vmatpush1.bf16.msra.mxu0 0
    %6965 = vmatprep.subr.bf16.mxu0 0
    %6966 = vmatpush1.bf16.msra.mxu0 0
    %6967 = vmatprep.subr.bf16.mxu0 0
    %6968 = vmatpush1.bf16.msra.mxu0 0
    %6969 = vmatprep.subr.bf16.mxu0 0
    %6970 = vmatpush1.bf16.msra.mxu0 0
    %6971 = vmatprep.subr.bf16.mxu0 0
    %6972 = vmatpush1.bf16.msra.mxu0 0
    %6973 = vmatprep.subr.bf16.mxu0 0
    %6974 = vmatpush1.bf16.msra.mxu0 0
    %6975 = vmatprep.mubr.bf16.mxu0 0
    %6976 = vmatmul.mubr.bf16.gmra.mrb[0].mxu0 %v6941
    %v6977 = vpop.f32.mrb[0].mxu0
    %v6978 = vadd.f32 0.0, %v6977
    %v6979 = vpop.f32.mrb[0].mxu0
    %v6980 = vpop.f32.mrb[0].mxu0
    %v6981 = vadd.f32 0.0, %v6980
    %v6982 = vpop.f32.mrb[0].mxu0
    %6983 = vdwg.mxu0
    %6984 = vrot.lane.b32.xlu0 %v5430, 120
    %v6985 = vpop.permute.xlu0 %6984
    %v6988 = vsel %vm6239, %v6600, 0
    %6990 = vmatprep.subr.bf16.mxu0 0
    %6991 = vmatpush1.bf16.msra.mxu0 %v6985
    %6992 = vmatprep.subr.bf16.mxu0 0
    %6993 = vmatpush1.bf16.msra.mxu0 0
    %6994 = vmatprep.subr.bf16.mxu0 0
    %6995 = vmatpush1.bf16.msra.mxu0 0
    %6996 = vmatprep.subr.bf16.mxu0 0
    %6997 = vmatpush1.bf16.msra.mxu0 0
    %6998 = vmatprep.subr.bf16.mxu0 0
    %6999 = vmatpush1.bf16.msra.mxu0 0
    %7000 = vmatprep.subr.bf16.mxu0 0
    %7001 = vmatpush1.bf16.msra.mxu0 0
    %7002 = vmatprep.subr.bf16.mxu0 0
    %7003 = vmatpush1.bf16.msra.mxu0 0
    %7004 = vmatprep.subr.bf16.mxu0 0
    %7005 = vmatpush1.bf16.msra.mxu0 0
    %7006 = vmatprep.subr.bf16.mxu0 0
    %7007 = vmatpush1.bf16.msra.mxu0 0
    %7008 = vmatprep.subr.bf16.mxu0 0
    %7009 = vmatpush1.bf16.msra.mxu0 0
    %7010 = vmatprep.subr.bf16.mxu0 0
    %7011 = vmatpush1.bf16.msra.mxu0 0
    %7012 = vmatprep.subr.bf16.mxu0 0
    %7013 = vmatpush1.bf16.msra.mxu0 0
    %7014 = vmatprep.subr.bf16.mxu0 0
    %7015 = vmatpush1.bf16.msra.mxu0 0
    %7016 = vmatprep.subr.bf16.mxu0 0
    %7017 = vmatpush1.bf16.msra.mxu0 0
    %7018 = vmatprep.subr.bf16.mxu0 0
    %7019 = vmatpush1.bf16.msra.mxu0 0
    %7020 = vmatprep.subr.bf16.mxu0 0
    %7021 = vmatpush1.bf16.msra.mxu0 0
    %7022 = vmatprep.mubr.bf16.mxu0 0
    %7023 = vmatmul.mubr.bf16.gmra.mrb[0].mxu0 %v6988
    %v7024 = vpop.f32.mrb[0].mxu0
    %v7025 = vadd.f32 0.0, %v7024
    %v7026 = vpop.f32.mrb[0].mxu0
    %v7027 = vpop.f32.mrb[0].mxu0
    %v7028 = vadd.f32 0.0, %v7027
    %v7029 = vpop.f32.mrb[0].mxu0
    %7030 = vdwg.mxu0
    %7031 = vrot.lane.b32.xlu0 %v5431, 120
    %v7032 = vpop.permute.xlu0 %7031
    %v7035 = vsel %vm6239, %v6601, 0
    %7037 = vmatprep.subr.bf16.mxu0 0
    %7038 = vmatpush1.bf16.msra.mxu0 %v7032
    %7039 = vmatprep.subr.bf16.mxu0 0
    %7040 = vmatpush1.bf16.msra.mxu0 0
    %7041 = vmatprep.subr.bf16.mxu0 0
    %7042 = vmatpush1.bf16.msra.mxu0 0
    %7043 = vmatprep.subr.bf16.mxu0 0
    %7044 = vmatpush1.bf16.msra.mxu0 0
    %7045 = vmatprep.subr.bf16.mxu0 0
    %7046 = vmatpush1.bf16.msra.mxu0 0
    %7047 = vmatprep.subr.bf16.mxu0 0
    %7048 = vmatpush1.bf16.msra.mxu0 0
    %7049 = vmatprep.subr.bf16.mxu0 0
    %7050 = vmatpush1.bf16.msra.mxu0 0
    %7051 = vmatprep.subr.bf16.mxu0 0
    %7052 = vmatpush1.bf16.msra.mxu0 0
    %7053 = vmatprep.subr.bf16.mxu0 0
    %7054 = vmatpush1.bf16.msra.mxu0 0
    %7055 = vmatprep.subr.bf16.mxu0 0
    %7056 = vmatpush1.bf16.msra.mxu0 0
    %7057 = vmatprep.subr.bf16.mxu0 0
    %7058 = vmatpush1.bf16.msra.mxu0 0
    %7059 = vmatprep.subr.bf16.mxu0 0
    %7060 = vmatpush1.bf16.msra.mxu0 0
    %7061 = vmatprep.subr.bf16.mxu0 0
    %7062 = vmatpush1.bf16.msra.mxu0 0
    %7063 = vmatprep.subr.bf16.mxu0 0
    %7064 = vmatpush1.bf16.msra.mxu0 0
    %7065 = vmatprep.subr.bf16.mxu0 0
    %7066 = vmatpush1.bf16.msra.mxu0 0
    %7067 = vmatprep.subr.bf16.mxu0 0
    %7068 = vmatpush1.bf16.msra.mxu0 0
    %7069 = vmatprep.mubr.bf16.mxu0 0
    %7070 = vmatmul.mubr.bf16.gmra.mrb[0].mxu0 %v7035
    %v7071 = vpop.f32.mrb[0].mxu0
    %v7072 = vadd.f32 0.0, %v7071
    %v7073 = vpop.f32.mrb[0].mxu0
    %v7074 = vpop.f32.mrb[0].mxu0
    %v7075 = vadd.f32 0.0, %v7074
    %v7076 = vpop.f32.mrb[0].mxu0
    %7077 = vdwg.mxu0
    %7078 = vrot.lane.b32.xlu0 %v5432, 120
    %v7079 = vpop.permute.xlu0 %7078
    %v7082 = vsel %vm6239, %v6602, 0
    %7084 = vmatprep.subr.bf16.mxu0 0
    %7085 = vmatpush1.bf16.msra.mxu0 %v7079
    %7086 = vmatprep.subr.bf16.mxu0 0
    %7087 = vmatpush1.bf16.msra.mxu0 0
    %7088 = vmatprep.subr.bf16.mxu0 0
    %7089 = vmatpush1.bf16.msra.mxu0 0
    %7090 = vmatprep.subr.bf16.mxu0 0
    %7091 = vmatpush1.bf16.msra.mxu0 0
    %7092 = vmatprep.subr.bf16.mxu0 0
    %7093 = vmatpush1.bf16.msra.mxu0 0
    %7094 = vmatprep.subr.bf16.mxu0 0
    %7095 = vmatpush1.bf16.msra.mxu0 0
    %7096 = vmatprep.subr.bf16.mxu0 0
    %7097 = vmatpush1.bf16.msra.mxu0 0
    %7098 = vmatprep.subr.bf16.mxu0 0
    %7099 = vmatpush1.bf16.msra.mxu0 0
    %7100 = vmatprep.subr.bf16.mxu0 0
    %7101 = vmatpush1.bf16.msra.mxu0 0
    %7102 = vmatprep.subr.bf16.mxu0 0
    %7103 = vmatpush1.bf16.msra.mxu0 0
    %7104 = vmatprep.subr.bf16.mxu0 0
    %7105 = vmatpush1.bf16.msra.mxu0 0
    %7106 = vmatprep.subr.bf16.mxu0 0
    %7107 = vmatpush1.bf16.msra.mxu0 0
    %7108 = vmatprep.subr.bf16.mxu0 0
    %7109 = vmatpush1.bf16.msra.mxu0 0
    %7110 = vmatprep.subr.bf16.mxu0 0
    %7111 = vmatpush1.bf16.msra.mxu0 0
    %7112 = vmatprep.subr.bf16.mxu0 0
    %7113 = vmatpush1.bf16.msra.mxu0 0
    %7114 = vmatprep.subr.bf16.mxu0 0
    %7115 = vmatpush1.bf16.msra.mxu0 0
    %7116 = vmatprep.mubr.bf16.mxu0 0
    %7117 = vmatmul.mubr.bf16.gmra.mrb[0].mxu0 %v7082
    %v7118 = vpop.f32.mrb[0].mxu0
    %v7119 = vadd.f32 0.0, %v7118
    %v7120 = vpop.f32.mrb[0].mxu0
    %v7121 = vpop.f32.mrb[0].mxu0
    %v7122 = vadd.f32 0.0, %v7121
    %v7123 = vpop.f32.mrb[0].mxu0
    %7124 = vdwg.mxu0
    %7125 = vrot.lane.b32.xlu0 %v5433, 120
    %v7126 = vpop.permute.xlu0 %7125
    %v7129 = vsel %vm6239, %v6603, 0
    %7131 = vmatprep.subr.bf16.mxu0 0
    %7132 = vmatpush1.bf16.msra.mxu0 %v7126
    %7133 = vmatprep.subr.bf16.mxu0 0
    %7134 = vmatpush1.bf16.msra.mxu0 0
    %7135 = vmatprep.subr.bf16.mxu0 0
    %7136 = vmatpush1.bf16.msra.mxu0 0
    %7137 = vmatprep.subr.bf16.mxu0 0
    %7138 = vmatpush1.bf16.msra.mxu0 0
    %7139 = vmatprep.subr.bf16.mxu0 0
    %7140 = vmatpush1.bf16.msra.mxu0 0
    %7141 = vmatprep.subr.bf16.mxu0 0
    %7142 = vmatpush1.bf16.msra.mxu0 0
    %7143 = vmatprep.subr.bf16.mxu0 0
    %7144 = vmatpush1.bf16.msra.mxu0 0
    %7145 = vmatprep.subr.bf16.mxu0 0
    %7146 = vmatpush1.bf16.msra.mxu0 0
    %7147 = vmatprep.subr.bf16.mxu0 0
    %7148 = vmatpush1.bf16.msra.mxu0 0
    %7149 = vmatprep.subr.bf16.mxu0 0
    %7150 = vmatpush1.bf16.msra.mxu0 0
    %7151 = vmatprep.subr.bf16.mxu0 0
    %7152 = vmatpush1.bf16.msra.mxu0 0
    %7153 = vmatprep.subr.bf16.mxu0 0
    %7154 = vmatpush1.bf16.msra.mxu0 0
    %7155 = vmatprep.subr.bf16.mxu0 0
    %7156 = vmatpush1.bf16.msra.mxu0 0
    %7157 = vmatprep.subr.bf16.mxu0 0
    %7158 = vmatpush1.bf16.msra.mxu0 0
    %7159 = vmatprep.subr.bf16.mxu0 0
    %7160 = vmatpush1.bf16.msra.mxu0 0
    %7161 = vmatprep.subr.bf16.mxu0 0
    %7162 = vmatpush1.bf16.msra.mxu0 0
    %7163 = vmatprep.mubr.bf16.mxu0 0
    %7164 = vmatmul.mubr.bf16.gmra.mrb[0].mxu0 %v7129
    %v7165 = vpop.f32.mrb[0].mxu0
    %v7166 = vadd.f32 0.0, %v7165
    %v7167 = vpop.f32.mrb[0].mxu0
    %v7168 = vpop.f32.mrb[0].mxu0
    %v7169 = vadd.f32 0.0, %v7168
    %v7170 = vpop.f32.mrb[0].mxu0
    %7171 = vdwg.mxu0
    %7172 = vrot.lane.b32.xlu0 %v5434, 120
    %v7173 = vpop.permute.xlu0 %7172
    %v7176 = vsel %vm6239, %v6604, 0
    %7178 = vmatprep.subr.bf16.mxu0 0
    %7179 = vmatpush1.bf16.msra.mxu0 %v7173
    %7180 = vmatprep.subr.bf16.mxu0 0
    %7181 = vmatpush1.bf16.msra.mxu0 0
    %7182 = vmatprep.subr.bf16.mxu0 0
    %7183 = vmatpush1.bf16.msra.mxu0 0
    %7184 = vmatprep.subr.bf16.mxu0 0
    %7185 = vmatpush1.bf16.msra.mxu0 0
    %7186 = vmatprep.subr.bf16.mxu0 0
    %7187 = vmatpush1.bf16.msra.mxu0 0
    %7188 = vmatprep.subr.bf16.mxu0 0
    %7189 = vmatpush1.bf16.msra.mxu0 0
    %7190 = vmatprep.subr.bf16.mxu0 0
    %7191 = vmatpush1.bf16.msra.mxu0 0
    %7192 = vmatprep.subr.bf16.mxu0 0
    %7193 = vmatpush1.bf16.msra.mxu0 0
    %7194 = vmatprep.subr.bf16.mxu0 0
    %7195 = vmatpush1.bf16.msra.mxu0 0
    %7196 = vmatprep.subr.bf16.mxu0 0
    %7197 = vmatpush1.bf16.msra.mxu0 0
    %7198 = vmatprep.subr.bf16.mxu0 0
    %7199 = vmatpush1.bf16.msra.mxu0 0
    %7200 = vmatprep.subr.bf16.mxu0 0
    %7201 = vmatpush1.bf16.msra.mxu0 0
    %7202 = vmatprep.subr.bf16.mxu0 0
    %7203 = vmatpush1.bf16.msra.mxu0 0
    %7204 = vmatprep.subr.bf16.mxu0 0
    %7205 = vmatpush1.bf16.msra.mxu0 0
    %7206 = vmatprep.subr.bf16.mxu0 0
    %7207 = vmatpush1.bf16.msra.mxu0 0
    %7208 = vmatprep.subr.bf16.mxu0 0
    %7209 = vmatpush1.bf16.msra.mxu0 0
    %7210 = vmatprep.mubr.bf16.mxu0 0
    %7211 = vmatmul.mubr.bf16.gmra.mrb[0].mxu0 %v7176
    %v7212 = vpop.f32.mrb[0].mxu0
    %v7213 = vadd.f32 0.0, %v7212
    %v7214 = vpop.f32.mrb[0].mxu0
    %v7215 = vpop.f32.mrb[0].mxu0
    %v7216 = vadd.f32 0.0, %v7215
    %v7217 = vpop.f32.mrb[0].mxu0
    %7218 = vdwg.mxu0
    %7219 = vrot.lane.b32.xlu0 %v5435, 120
    %v7220 = vpop.permute.xlu0 %7219
    %v7223 = vsel %vm6239, %v6605, 0
    %7225 = vmatprep.subr.bf16.mxu0 0
    %7226 = vmatpush1.bf16.msra.mxu0 %v7220
    %7227 = vmatprep.subr.bf16.mxu0 0
    %7228 = vmatpush1.bf16.msra.mxu0 0
    %7229 = vmatprep.subr.bf16.mxu0 0
    %7230 = vmatpush1.bf16.msra.mxu0 0
    %7231 = vmatprep.subr.bf16.mxu0 0
    %7232 = vmatpush1.bf16.msra.mxu0 0
    %7233 = vmatprep.subr.bf16.mxu0 0
    %7234 = vmatpush1.bf16.msra.mxu0 0
    %7235 = vmatprep.subr.bf16.mxu0 0
    %7236 = vmatpush1.bf16.msra.mxu0 0
    %7237 = vmatprep.subr.bf16.mxu0 0
    %7238 = vmatpush1.bf16.msra.mxu0 0
    %7239 = vmatprep.subr.bf16.mxu0 0
    %7240 = vmatpush1.bf16.msra.mxu0 0
    %7241 = vmatprep.subr.bf16.mxu0 0
    %7242 = vmatpush1.bf16.msra.mxu0 0
    %7243 = vmatprep.subr.bf16.mxu0 0
    %7244 = vmatpush1.bf16.msra.mxu0 0
    %7245 = vmatprep.subr.bf16.mxu0 0
    %7246 = vmatpush1.bf16.msra.mxu0 0
    %7247 = vmatprep.subr.bf16.mxu0 0
    %7248 = vmatpush1.bf16.msra.mxu0 0
    %7249 = vmatprep.subr.bf16.mxu0 0
    %7250 = vmatpush1.bf16.msra.mxu0 0
    %7251 = vmatprep.subr.bf16.mxu0 0
    %7252 = vmatpush1.bf16.msra.mxu0 0
    %7253 = vmatprep.subr.bf16.mxu0 0
    %7254 = vmatpush1.bf16.msra.mxu0 0
    %7255 = vmatprep.subr.bf16.mxu0 0
    %7256 = vmatpush1.bf16.msra.mxu0 0
    %7257 = vmatprep.mubr.bf16.mxu0 0
    %7258 = vmatmul.mubr.bf16.gmra.mrb[0].mxu0 %v7223
    %v7259 = vpop.f32.mrb[0].mxu0
    %v7260 = vadd.f32 0.0, %v7259
    %v7261 = vpop.f32.mrb[0].mxu0
    %v7262 = vpop.f32.mrb[0].mxu0
    %v7263 = vadd.f32 0.0, %v7262
    %v7264 = vpop.f32.mrb[0].mxu0
    %7265 = vdwg.mxu0
    %7266 = vrot.lane.b32.xlu0 %v5436, 120
    %v7267 = vpop.permute.xlu0 %7266
    %v7270 = vsel %vm6239, %v6606, 0
    %7272 = vmatprep.subr.bf16.mxu0 0
    %7273 = vmatpush1.bf16.msra.mxu0 %v7267
    %7274 = vmatprep.subr.bf16.mxu0 0
    %7275 = vmatpush1.bf16.msra.mxu0 0
    %7276 = vmatprep.subr.bf16.mxu0 0
    %7277 = vmatpush1.bf16.msra.mxu0 0
    %7278 = vmatprep.subr.bf16.mxu0 0
    %7279 = vmatpush1.bf16.msra.mxu0 0
    %7280 = vmatprep.subr.bf16.mxu0 0
    %7281 = vmatpush1.bf16.msra.mxu0 0
    %7282 = vmatprep.subr.bf16.mxu0 0
    %7283 = vmatpush1.bf16.msra.mxu0 0
    %7284 = vmatprep.subr.bf16.mxu0 0
    %7285 = vmatpush1.bf16.msra.mxu0 0
    %7286 = vmatprep.subr.bf16.mxu0 0
    %7287 = vmatpush1.bf16.msra.mxu0 0
    %7288 = vmatprep.subr.bf16.mxu0 0
    %7289 = vmatpush1.bf16.msra.mxu0 0
    %7290 = vmatprep.subr.bf16.mxu0 0
    %7291 = vmatpush1.bf16.msra.mxu0 0
    %7292 = vmatprep.subr.bf16.mxu0 0
    %7293 = vmatpush1.bf16.msra.mxu0 0
    %7294 = vmatprep.subr.bf16.mxu0 0
    %7295 = vmatpush1.bf16.msra.mxu0 0
    %7296 = vmatprep.subr.bf16.mxu0 0
    %7297 = vmatpush1.bf16.msra.mxu0 0
    %7298 = vmatprep.subr.bf16.mxu0 0
    %7299 = vmatpush1.bf16.msra.mxu0 0
    %7300 = vmatprep.subr.bf16.mxu0 0
    %7301 = vmatpush1.bf16.msra.mxu0 0
    %7302 = vmatprep.subr.bf16.mxu0 0
    %7303 = vmatpush1.bf16.msra.mxu0 0
    %7304 = vmatprep.mubr.bf16.mxu0 0
    %7305 = vmatmul.mubr.bf16.gmra.mrb[0].mxu0 %v7270
    %v7306 = vpop.f32.mrb[0].mxu0
    %v7307 = vadd.f32 0.0, %v7306
    %v7308 = vpop.f32.mrb[0].mxu0
    %v7309 = vpop.f32.mrb[0].mxu0
    %v7310 = vadd.f32 0.0, %v7309
    %v7311 = vpop.f32.mrb[0].mxu0
    %7312 = vdwg.mxu0
    %7313 = vrot.lane.b32.xlu0 %v5437, 120
    %v7314 = vpop.permute.xlu0 %7313
    %v7317 = vsel %vm6239, %v6607, 0
    %7319 = vmatprep.subr.bf16.mxu0 0
    %7320 = vmatpush1.bf16.msra.mxu0 %v7314
    %7321 = vmatprep.subr.bf16.mxu0 0
    %7322 = vmatpush1.bf16.msra.mxu0 0
    %7323 = vmatprep.subr.bf16.mxu0 0
    %7324 = vmatpush1.bf16.msra.mxu0 0
    %7325 = vmatprep.subr.bf16.mxu0 0
    %7326 = vmatpush1.bf16.msra.mxu0 0
    %7327 = vmatprep.subr.bf16.mxu0 0
    %7328 = vmatpush1.bf16.msra.mxu0 0
    %7329 = vmatprep.subr.bf16.mxu0 0
    %7330 = vmatpush1.bf16.msra.mxu0 0
    %7331 = vmatprep.subr.bf16.mxu0 0
    %7332 = vmatpush1.bf16.msra.mxu0 0
    %7333 = vmatprep.subr.bf16.mxu0 0
    %7334 = vmatpush1.bf16.msra.mxu0 0
    %7335 = vmatprep.subr.bf16.mxu0 0
    %7336 = vmatpush1.bf16.msra.mxu0 0
    %7337 = vmatprep.subr.bf16.mxu0 0
    %7338 = vmatpush1.bf16.msra.mxu0 0
    %7339 = vmatprep.subr.bf16.mxu0 0
    %7340 = vmatpush1.bf16.msra.mxu0 0
    %7341 = vmatprep.subr.bf16.mxu0 0
    %7342 = vmatpush1.bf16.msra.mxu0 0
    %7343 = vmatprep.subr.bf16.mxu0 0
    %7344 = vmatpush1.bf16.msra.mxu0 0
    %7345 = vmatprep.subr.bf16.mxu0 0
    %7346 = vmatpush1.bf16.msra.mxu0 0
    %7347 = vmatprep.subr.bf16.mxu0 0
    %7348 = vmatpush1.bf16.msra.mxu0 0
    %7349 = vmatprep.subr.bf16.mxu0 0
    %7350 = vmatpush1.bf16.msra.mxu0 0
    %7351 = vmatprep.mubr.bf16.mxu0 0
    %7352 = vmatmul.mubr.bf16.gmra.mrb[0].mxu0 %v7317
    %v7353 = vpop.f32.mrb[0].mxu0
    %v7354 = vadd.f32 0.0, %v7353
    %v7355 = vpop.f32.mrb[0].mxu0
    %v7356 = vpop.f32.mrb[0].mxu0
    %v7357 = vadd.f32 0.0, %v7356
    %v7358 = vpop.f32.mrb[0].mxu0
    %7359 = vdwg.mxu0
    %s7360 = sld [smem:[#allocation2]]
    %v7361 = vstv %s7360
    %v7362 = vmul.f32 %v7361, %v6649
    %v7363 = vmul.f32 %v7361, %v6652
    %v7364 = vmul.f32 %v7361, %v6696
    %v7365 = vmul.f32 %v7361, %v6699
    %v7366 = vmul.f32 %v7361, %v6743
    %v7367 = vmul.f32 %v7361, %v6746
    %v7368 = vmul.f32 %v7361, %v6790
    %v7369 = vmul.f32 %v7361, %v6793
    %v7370 = vmul.f32 %v7361, %v6837
    %v7371 = vmul.f32 %v7361, %v6840
    %v7372 = vmul.f32 %v7361, %v6884
    %v7373 = vmul.f32 %v7361, %v6887
    %v7374 = vmul.f32 %v7361, %v6931
    %v7375 = vmul.f32 %v7361, %v6934
    %v7376 = vmul.f32 %v7361, %v6978
    %v7377 = vmul.f32 %v7361, %v6981
    %v7378 = vmul.f32 %v7361, %v7025
    %v7379 = vmul.f32 %v7361, %v7028
    %v7380 = vmul.f32 %v7361, %v7072
    %v7381 = vmul.f32 %v7361, %v7075
    %v7382 = vmul.f32 %v7361, %v7119
    %v7383 = vmul.f32 %v7361, %v7122
    %v7384 = vmul.f32 %v7361, %v7166
    %v7385 = vmul.f32 %v7361, %v7169
    %v7386 = vmul.f32 %v7361, %v7213
    %v7387 = vmul.f32 %v7361, %v7216
    %v7388 = vmul.f32 %v7361, %v7260
    %v7389 = vmul.f32 %v7361, %v7263
    %v7390 = vmul.f32 %v7361, %v7307
    %v7391 = vmul.f32 %v7361, %v7310
    %v7392 = vmul.f32 %v7361, %v7354
    %v7393 = vmul.f32 %v7361, %v7357
    %v7394 = vadd.f32 %v7362, %v5142
    %v7395 = vadd.f32 %v7363, %v5143
    %v7396 = vadd.f32 %v7364, %v5144
    %v7397 = vadd.f32 %v7365, %v5145
    %v7398 = vadd.f32 %v7366, %v5146
    %v7399 = vadd.f32 %v7367, %v5147
    %v7400 = vadd.f32 %v7368, %v5148
    %v7401 = vadd.f32 %v7369, %v5149
    %v7402 = vadd.f32 %v7370, %v5150
    %v7403 = vadd.f32 %v7371, %v5151
    %v7404 = vadd.f32 %v7372, %v5152
    %v7405 = vadd.f32 %v7373, %v5153
    %v7406 = vadd.f32 %v7374, %v5154
    %v7407 = vadd.f32 %v7375, %v5155
    %v7408 = vadd.f32 %v7376, %v5156
    %v7409 = vadd.f32 %v7377, %v5157
    %v7410 = vadd.f32 %v7378, %v5158
    %v7411 = vadd.f32 %v7379, %v5159
    %v7412 = vadd.f32 %v7380, %v5160
    %v7413 = vadd.f32 %v7381, %v5161
    %v7414 = vadd.f32 %v7382, %v5162
    %v7415 = vadd.f32 %v7383, %v5163
    %v7416 = vadd.f32 %v7384, %v5164
    %v7417 = vadd.f32 %v7385, %v5165
    %v7418 = vadd.f32 %v7386, %v5166
    %v7419 = vadd.f32 %v7387, %v5167
    %v7420 = vadd.f32 %v7388, %v5168
    %v7421 = vadd.f32 %v7389, %v5169
    %v7422 = vadd.f32 %v7390, %v5170
    %v7423 = vadd.f32 %v7391, %v5171
    %v7424 = vadd.f32 %v7392, %v5172
    %v7425 = vadd.f32 %v7393, %v5173
    %v7426 = vsel %vm2574, %v7394, 0.0
    %v7427 = vsel %vm2574, %v7395, 0.0
    %v7428 = vadd.f32 %v7426, %v7427
    %v7429 = vrot.slane %v7428, 4
    %v7430 = vadd.f32 %v7428, %v7429
    %v7431 = vrot.slane %v7430, 2
    %v7432 = vadd.f32 %v7430, %v7431
    %v7433 = vrot.slane %v7432, 1
    %v7434 = vadd.f32 %v7432, %v7433
    %v7435 = vsel %vm2574, %v7396, 0.0
    %v7436 = vsel %vm2574, %v7397, 0.0
    %v7437 = vadd.f32 %v7435, %v7436
    %v7438 = vrot.slane %v7437, 4
    %v7439 = vadd.f32 %v7437, %v7438
    %v7440 = vrot.slane %v7439, 2
    %v7441 = vadd.f32 %v7439, %v7440
    %v7442 = vrot.slane %v7441, 1
    %v7443 = vadd.f32 %v7441, %v7442
    %v7444 = vsel %vm2574, %v7398, 0.0
    %v7445 = vsel %vm2574, %v7399, 0.0
    %v7446 = vadd.f32 %v7444, %v7445
    %v7447 = vrot.slane %v7446, 4
    %v7448 = vadd.f32 %v7446, %v7447
    %v7449 = vrot.slane %v7448, 2
    %v7450 = vadd.f32 %v7448, %v7449
    %v7451 = vrot.slane %v7450, 1
    %v7452 = vadd.f32 %v7450, %v7451
    %v7453 = vsel %vm2574, %v7400, 0.0
    %v7454 = vsel %vm2574, %v7401, 0.0
    %v7455 = vadd.f32 %v7453, %v7454
    %v7456 = vrot.slane %v7455, 4
    %v7457 = vadd.f32 %v7455, %v7456
    %v7458 = vrot.slane %v7457, 2
    %v7459 = vadd.f32 %v7457, %v7458
    %v7460 = vrot.slane %v7459, 1
    %v7461 = vadd.f32 %v7459, %v7460
    %v7462 = vsel %vm2574, %v7402, 0.0
    %v7463 = vsel %vm2574, %v7403, 0.0
    %v7464 = vadd.f32 %v7462, %v7463
    %v7465 = vrot.slane %v7464, 4
    %v7466 = vadd.f32 %v7464, %v7465
    %v7467 = vrot.slane %v7466, 2
    %v7468 = vadd.f32 %v7466, %v7467
    %v7469 = vrot.slane %v7468, 1
    %v7470 = vadd.f32 %v7468, %v7469
    %v7471 = vsel %vm2574, %v7404, 0.0
    %v7472 = vsel %vm2574, %v7405, 0.0
    %v7473 = vadd.f32 %v7471, %v7472
    %v7474 = vrot.slane %v7473, 4
    %v7475 = vadd.f32 %v7473, %v7474
    %v7476 = vrot.slane %v7475, 2
    %v7477 = vadd.f32 %v7475, %v7476
    %v7478 = vrot.slane %v7477, 1
    %v7479 = vadd.f32 %v7477, %v7478
    %v7480 = vsel %vm2574, %v7406, 0.0
    %v7481 = vsel %vm2574, %v7407, 0.0
    %v7482 = vadd.f32 %v7480, %v7481
    %v7483 = vrot.slane %v7482, 4
    %v7484 = vadd.f32 %v7482, %v7483
    %v7485 = vrot.slane %v7484, 2
    %v7486 = vadd.f32 %v7484, %v7485
    %v7487 = vrot.slane %v7486, 1
    %v7488 = vadd.f32 %v7486, %v7487
    %v7489 = vsel %vm2574, %v7408, 0.0
    %v7490 = vsel %vm2574, %v7409, 0.0
    %v7491 = vadd.f32 %v7489, %v7490
    %v7492 = vrot.slane %v7491, 4
    %v7493 = vadd.f32 %v7491, %v7492
    %v7494 = vrot.slane %v7493, 2
    %v7495 = vadd.f32 %v7493, %v7494
    %v7496 = vrot.slane %v7495, 1
    %v7497 = vadd.f32 %v7495, %v7496
    %v7498 = vsel %vm2574, %v7410, 0.0
    %v7499 = vsel %vm2574, %v7411, 0.0
    %v7500 = vadd.f32 %v7498, %v7499
    %v7501 = vrot.slane %v7500, 4
    %v7502 = vadd.f32 %v7500, %v7501
    %v7503 = vrot.slane %v7502, 2
    %v7504 = vadd.f32 %v7502, %v7503
    %v7505 = vrot.slane %v7504, 1
    %v7506 = vadd.f32 %v7504, %v7505
    %v7507 = vsel %vm2574, %v7412, 0.0
    %v7508 = vsel %vm2574, %v7413, 0.0
    %v7509 = vadd.f32 %v7507, %v7508
    %v7510 = vrot.slane %v7509, 4
    %v7511 = vadd.f32 %v7509, %v7510
    %v7512 = vrot.slane %v7511, 2
    %v7513 = vadd.f32 %v7511, %v7512
    %v7514 = vrot.slane %v7513, 1
    %v7515 = vadd.f32 %v7513, %v7514
    %v7516 = vsel %vm2574, %v7414, 0.0
    %v7517 = vsel %vm2574, %v7415, 0.0
    %v7518 = vadd.f32 %v7516, %v7517
    %v7519 = vrot.slane %v7518, 4
    %v7520 = vadd.f32 %v7518, %v7519
    %v7521 = vrot.slane %v7520, 2
    %v7522 = vadd.f32 %v7520, %v7521
    %v7523 = vrot.slane %v7522, 1
    %v7524 = vadd.f32 %v7522, %v7523
    %v7525 = vsel %vm2574, %v7416, 0.0
    %v7526 = vsel %vm2574, %v7417, 0.0
    %v7527 = vadd.f32 %v7525, %v7526
    %v7528 = vrot.slane %v7527, 4
    %v7529 = vadd.f32 %v7527, %v7528
    %v7530 = vrot.slane %v7529, 2
    %v7531 = vadd.f32 %v7529, %v7530
    %v7532 = vrot.slane %v7531, 1
    %v7533 = vadd.f32 %v7531, %v7532
    %v7534 = vsel %vm2574, %v7418, 0.0
    %v7535 = vsel %vm2574, %v7419, 0.0
    %v7536 = vadd.f32 %v7534, %v7535
    %v7537 = vrot.slane %v7536, 4
    %v7538 = vadd.f32 %v7536, %v7537
    %v7539 = vrot.slane %v7538, 2
    %v7540 = vadd.f32 %v7538, %v7539
    %v7541 = vrot.slane %v7540, 1
    %v7542 = vadd.f32 %v7540, %v7541
    %v7543 = vsel %vm2574, %v7420, 0.0
    %v7544 = vsel %vm2574, %v7421, 0.0
    %v7545 = vadd.f32 %v7543, %v7544
    %v7546 = vrot.slane %v7545, 4
    %v7547 = vadd.f32 %v7545, %v7546
    %v7548 = vrot.slane %v7547, 2
    %v7549 = vadd.f32 %v7547, %v7548
    %v7550 = vrot.slane %v7549, 1
    %v7551 = vadd.f32 %v7549, %v7550
    %v7552 = vsel %vm2574, %v7422, 0.0
    %v7553 = vsel %vm2574, %v7423, 0.0
    %v7554 = vadd.f32 %v7552, %v7553
    %v7555 = vrot.slane %v7554, 4
    %v7556 = vadd.f32 %v7554, %v7555
    %v7557 = vrot.slane %v7556, 2
    %v7558 = vadd.f32 %v7556, %v7557
    %v7559 = vrot.slane %v7558, 1
    %v7560 = vadd.f32 %v7558, %v7559
    %v7561 = vsel %vm2574, %v7424, 0.0
    %v7562 = vsel %vm2574, %v7425, 0.0
    %v7563 = vadd.f32 %v7561, %v7562
    %v7564 = vrot.slane %v7563, 4
    %v7565 = vadd.f32 %v7563, %v7564
    %v7566 = vrot.slane %v7565, 2
    %v7567 = vadd.f32 %v7565, %v7566
    %v7568 = vrot.slane %v7567, 1
    %v7569 = vadd.f32 %v7567, %v7568
    %v7570 = vmul.f32 %v7434, 0.0625
    %v7571 = vmul.f32 %v7443, 0.0625
    %v7572 = vmul.f32 %v7452, 0.0625
    %v7573 = vmul.f32 %v7461, 0.0625
    %v7574 = vmul.f32 %v7470, 0.0625
    %v7575 = vmul.f32 %v7479, 0.0625
    %v7576 = vmul.f32 %v7488, 0.0625
    %v7577 = vmul.f32 %v7497, 0.0625
    %v7578 = vmul.f32 %v7506, 0.0625
    %v7579 = vmul.f32 %v7515, 0.0625
    %v7580 = vmul.f32 %v7524, 0.0625
    %v7581 = vmul.f32 %v7533, 0.0625
    %v7582 = vmul.f32 %v7542, 0.0625
    %v7583 = vmul.f32 %v7551, 0.0625
    %v7584 = vmul.f32 %v7560, 0.0625
    %v7585 = vmul.f32 %v7569, 0.0625
    %v7586 = vld [vmem:[#allocation19] sm:$0x1]
    %v7588 = vlaneseq
    %v7589 = vshrl.u32 %v7588, 7
    %v7590 = vsub.s32 0, %v7589
    %v7591 = vrot.slane %v7586, %v7590
    %v7593 = vmul.f32 %v7570, %v7591
    %v7594 = vmul.f32 %v7571, %v7591
    %v7595 = vmul.f32 %v7572, %v7591
    %v7596 = vmul.f32 %v7573, %v7591
    %v7597 = vmul.f32 %v7574, %v7591
    %v7598 = vmul.f32 %v7575, %v7591
    %v7599 = vmul.f32 %v7576, %v7591
    %v7600 = vmul.f32 %v7577, %v7591
    %v7601 = vmul.f32 %v7578, %v7591
    %v7602 = vmul.f32 %v7579, %v7591
    %v7603 = vmul.f32 %v7580, %v7591
    %v7604 = vmul.f32 %v7581, %v7591
    %v7605 = vmul.f32 %v7582, %v7591
    %v7606 = vmul.f32 %v7583, %v7591
    %v7607 = vmul.f32 %v7584, %v7591
    %v7608 = vmul.f32 %v7585, %v7591
    %v7625 = vrot.slane %v7594, 7
    %vm7626 = vcmask 1041409
    %v7627 = vsel %vm7626, %v7625, %v7593
    %v7628 = vrot.slane %v7595, 6
    %vm7629 = vcmask 1042434
    %v7630 = vsel %vm7629, %v7628, %v7627
    %v7631 = vrot.slane %v7596, 5
    %vm7632 = vcmask 1043459
    %v7633 = vsel %vm7632, %v7631, %v7630
    %v7634 = vrot.slane %v7597, 4
    %vm7635 = vcmask 1044484
    %v7636 = vsel %vm7635, %v7634, %v7633
    %v7637 = vrot.slane %v7598, 3
    %vm7638 = vcmask 1045509
    %v7639 = vsel %vm7638, %v7637, %v7636
    %v7640 = vrot.slane %v7599, 2
    %vm7641 = vcmask 1046534
    %v7642 = vsel %vm7641, %v7640, %v7639
    %v7643 = vrot.slane %v7600, 1
    %vm7644 = vcmask 1047559
    %v7645 = vsel %vm7644, %v7643, %v7642
    %v7646 = vrot.slane %v7602, 7
    %v7647 = vsel %vm7626, %v7646, %v7601
    %v7648 = vrot.slane %v7603, 6
    %v7649 = vsel %vm7629, %v7648, %v7647
    %v7650 = vrot.slane %v7604, 5
    %v7651 = vsel %vm7632, %v7650, %v7649
    %v7652 = vrot.slane %v7605, 4
    %v7653 = vsel %vm7635, %v7652, %v7651
    %v7654 = vrot.slane %v7606, 3
    %v7655 = vsel %vm7638, %v7654, %v7653
    %v7656 = vrot.slane %v7607, 2
    %v7657 = vsel %vm7641, %v7656, %v7655
    %v7658 = vrot.slane %v7608, 1
    %v7659 = vsel %vm7644, %v7658, %v7657
    %v7662 = vsel %vm2574, %v7645, 0.0
    %7663 = vadd.xlane.f32.xlu0 %v7662
    %v7664 = vpop.xlane.xlu0 %7663
    %v7665 = vsel %vm2574, %v7659, 0.0
    %7666 = vadd.xlane.f32.xlu0 %v7665
    %v7667 = vpop.xlane.xlu0 %7666
    %s7668 = sld [smem:[#allocation3]]
    %v7669 = vstv %s7668
    %v7670 = vadd.f32 %v7664, %v7669
    %v7671 = vadd.f32 %v7667, %v7669
    %v7672 = vxor.u32 %v7670, 2147483648
    %v7673 = vxor.u32 %v7671, 2147483648
    %v7674 = vmul.f32 %v7672, 1.442695
    %v7675 = vpow.pop %v7674
    %v7676 = vmul.f32 %v7673, 1.442695
    %v7677 = vpow.pop %v7676
    %v7678 = vadd.f32 %v7675, 1.0
    %v7679 = vadd.f32 %v7677, 1.0
    %v7680 = vrcp.pop %v7678
    %v7681 = vmul.f32 1.0, %v7680
    %v7682 = vrcp.pop %v7679
    %v7683 = vmul.f32 1.0, %v7682
    %vm7684 = vcmask 7168
    %7685 = vst.msk [vmem:[#allocation21] sm:$0xff] %vm7684, %v7681
    %7686 = vst.msk [vmem:[#allocation21 + $0x8] sm:$0xff] %vm7684, %v7683
    // Predicated region
    $region90: #{tpu_custom_call.1} parent=1 // pred_check
      _
    $region91: #{tpu_custom_call.1} parent=1 // pred_check_branch
      %7688 = sbr.rel (0) target = $region93
    $region92: #{tpu_custom_call.1} parent=1 // pred_region
      %s7690 = ssub.s32 256, 256
      %7691 = vsyncadd [#allocation6], %s7690
      %s7692 = sshll.u32 [#allocation21], 4
      %s7693 = int_to_ptr.vmem [resolvable:$true] %s7692
      %7698 = dma.vmem_to_hbm [thread:$0]  %s7693, 256, %s12, [#allocation6], 128, 128, 8
    $region93: #{tpu_custom_call.1} parent=1 // pred_fallthru
      _
    // Predicated region
    $region94: #{tpu_custom_call.1} parent=1 // pred_check
      _
    $region95: #{tpu_custom_call.1} parent=1 // pred_check_branch
      %7700 = sbr.rel (0) target = $region97
    $region96: #{tpu_custom_call.1} parent=1 // pred_region
      %7701 = dma.done [#allocation6], 256
    $region97: #{tpu_custom_call.1} parent=1 // pred_fallthru
      _
    %7702 = vsyncpa [#allocation5], 1
    %7703 = vsyncpa [#allocation8], 1
    %7704 = vsyncpa [#allocation11], 1
    %7705 = vsyncpa [#allocation14], 1
    %7706 = vsyncpa [#allocation17], 1
    %7707 = vsyncpa [#allocation20], 1
    %7708 = vsyncpa [#allocation6], 1

</llo_original>
